<compile_context>
chip_gen: v6e
topology: v6e:2x2x1
jax: 0.10.0
libtpu: 0.0.40
codegen_flags: <defaults>
</compile_context>

<pallas_src>
import functools
import math

import jax
import jax.numpy as jnp
from jax.experimental import pallas as pl
from jax.experimental.pallas import tpu as pltpu

LANE = 128          # output-channel padding target -> lane-dense epilogue/stores
KPACK = 16          # bf16 sublane packing for the contraction dim
TM_MAX = 512        # fixed M-tile (rows of the im2col matmul) per grid step


def _round_up(x, m):
    return (x + m - 1) // m * m


# ----------------------------------------------------------------------------
# Pallas kernels
# ----------------------------------------------------------------------------
def _conv_mm_kernel(p_ref, w_ref, scale_ref, shift_ref, o_ref, *, relu):
    """im2col 3x3 conv block: one (TM, Kp) x (Kp, 128) bf16 MXU matmul with f32
    accumulation; fused BatchNorm-affine (+ optional ReLU) epilogue in f32 and a
    lane-dense (TM, 128) store cast to the output dtype (bf16 intermediates)."""
    y = jnp.dot(p_ref[...], w_ref[...], preferred_element_type=jnp.float32)
    y = y * scale_ref[...] + shift_ref[...]
    if relu:
        y = jnp.maximum(y, 0.0)
    o_ref[...] = y.astype(o_ref.dtype)


def conv3x3(x, layer, cout, *, relu, out_dtype=jnp.bfloat16):
    """3x3 'same' conv + folded-BN affine (+ReLU) over the whole NHWC batch.

    x:     (N, H, W, Cin) bf16
    layer: (wk (Kp, Cp) bf16, scale (1, Cp) f32, shift (1, Cp) f32)
    returns (N, H, W, cout) out_dtype
    """
    wk, scale, shift = layer
    N, H, W, Cin = x.shape
    K = 9 * Cin
    Kp, Cp = wk.shape
    M = N * H * W

    # TODO(synk): at realistic image sizes the im2col patch gather should move
    # inside the kernel (halo row-tile DMA) to avoid the ~9x HBM read inflation;
    # kept in the wrapper here (XLA-fused, bf16) for simplicity at these sizes.
    xp = jnp.pad(x, ((0, 0), (1, 1), (1, 1), (0, 0)))
    cols = [xp[:, kh:kh + H, kw:kw + W, :] for kh in range(3) for kw in range(3)]
    patches = jnp.concatenate(cols, axis=-1).reshape(M, K)
    if Kp != K:                                    # bf16 sublane-pack aligned K
        patches = jnp.pad(patches, ((0, 0), (0, Kp - K)))
    patches = patches.astype(jnp.bfloat16)         # no-op: activations already bf16

    # Fixed M-tiling: >= 2 "parallel" blocks whenever possible (both v7x TCs get
    # work), capped at TM_MAX rows so per-step VMEM does not scale with image size.
    tm = max(8, min(TM_MAX, _round_up(-(-M // 2), 8)))
    Mp = _round_up(M, tm)
    if Mp != M:
        patches = jnp.pad(patches, ((0, Mp - M), (0, 0)))
    grid = Mp // tm

    y = pl.pallas_call(
        functools.partial(_conv_mm_kernel, relu=relu),
        out_shape=jax.ShapeDtypeStruct((Mp, Cp), out_dtype),
        grid=(grid,),
        in_specs=[
            pl.BlockSpec((tm, Kp), lambda i: (i, 0)),
            pl.BlockSpec((Kp, Cp), lambda i: (0, 0)),   # weight resident across steps
            pl.BlockSpec((1, Cp), lambda i: (0, 0)),
            pl.BlockSpec((1, Cp), lambda i: (0, 0)),
        ],
        out_specs=pl.BlockSpec((tm, Cp), lambda i: (i, 0)),
        compiler_params=pltpu.CompilerParams(
            dimension_semantics=("parallel",),
            vmem_limit_bytes=32 * 1024 * 1024),
    )(patches, wk, scale, shift)

    # Strip M/channel padding; reshape back to NHWC (metadata only, cout static).
    return y[:M, :cout].reshape(N, H, W, cout)


def _heads_kernel(x_ref, wc_ref, bc_ref, ws_ref, bs_ref,
                  lwc_ref, lbc_ref, lws_ref, lbs_ref,
                  cls_ref, slc_ref):
    """Fused classification heads (everything resident in VMEM).

    pooled  = mean over spatial of x          (AdaptiveAvgPool2d(1), XLU reduce)
    cls     = pooled @ Wc + bc                (ClassificationHead, dropout = id)
    slc     = pooled @ Ws + bs                (multilabel ClassificationHead)
    cls_out = Lc @ cls + lbc                  (== nn.Linear(cls.T).T)
    slc_out = Ls @ slc + lbs
    """
    x = x_ref[...].astype(jnp.float32)                        # (N, S, C)
    pooled = jnp.mean(x, axis=1).astype(jnp.bfloat16)         # (N, C)
    cls = jnp.dot(pooled, wc_ref[...],
                  preferred_element_type=jnp.float32) + bc_ref[...]
    slc = jnp.dot(pooled, ws_ref[...],
                  preferred_element_type=jnp.float32) + bs_ref[...]
    cls_ref[...] = jnp.dot(lwc_ref[...], cls.astype(jnp.bfloat16),
                           preferred_element_type=jnp.float32) + lbc_ref[...]
    slc_ref[...] = jnp.dot(lws_ref[...], slc.astype(jnp.bfloat16),
                           preferred_element_type=jnp.float32) + lbs_ref[...]


def fused_heads(feat, params, *, batch_size):
    """feat: (N, h, w, C) bf16 -> (cls_logits (B, num_classes), slc_logits (B, n_slices))."""
    N, h, w, C = feat.shape
    x = feat.reshape(N, h * w, C)
    wc, bc = params['cls_lin']
    ws, bs = params['slc_lin']
    lwc, lbc = params['lin_cls']
    lws, lbs = params['lin_slc']

    vmem = pl.BlockSpec(memory_space=pltpu.MemorySpace.VMEM)
    return pl.pallas_call(
        _heads_kernel,
        out_shape=(jax.ShapeDtypeStruct((batch_size, wc.shape[1]), jnp.float32),
                   jax.ShapeDtypeStruct((batch_size, ws.shape[1]), jnp.float32)),
        in_specs=[vmem] * 9,
        out_specs=(vmem, vmem),
    )(x, wc, bc, ws, bs, lwc, lbc, lws, lbs)


# ----------------------------------------------------------------------------
# Plain-JAX glue (memory movement only; XLA fuses it with the im2col gather)
# TODO(synk): fold maxpool/upsample/concat into the conv kernels' patch gather
# at realistic image sizes to remove the extra full-slab HBM round trips.
# ----------------------------------------------------------------------------
def maxpool2(x):
    N, H, W, C = x.shape
    return jnp.max(x.reshape(N, H // 2, 2, W // 2, 2, C), axis=(2, 4))


def upsample2(x):
    # F.interpolate(scale_factor=2, mode="nearest")
    return jnp.repeat(jnp.repeat(x, 2, axis=1), 2, axis=2)


# ----------------------------------------------------------------------------
# Deterministic parameter construction (synthetic; shapes follow the module).
# Arrays only — all static shape metadata stays in `cfg`.
# ----------------------------------------------------------------------------
def init_params(key, cfg):
    keys = iter(jax.random.split(key, 32))
    p = {}

    def conv_entry(cin, cout, *, bias=False):
        k = 9 * cin
        kp = _round_up(k, KPACK)                       # bf16 sublane packing
        cp = _round_up(max(cout, LANE), LANE)          # lane-dense output channels
        w = jax.random.normal(next(keys), (3, 3, cin, cout), jnp.float32)
        w = w * (1.0 / math.sqrt(k))
        wk = w.reshape(k, cout)                        # im2col layout (kh,kw,cin) x cout
        wk = jnp.pad(wk, ((0, kp - k), (0, cp - cout))).astype(jnp.bfloat16)
        if bias:
            # SegmentationHead conv: bias (initialize_head -> 0), no BN
            scale = jnp.ones((cout,), jnp.float32)
            shift = jnp.zeros((cout,), jnp.float32)
        else:
            # BatchNorm2d (inference) fold: scale = gamma/sqrt(var+eps),
            # shift = beta - mean*scale.  Synthetic init: gamma=1, beta=0,
            # running_mean=0, running_var=1.
            gamma = jnp.ones((cout,), jnp.float32)
            beta = jnp.zeros((cout,), jnp.float32)
            mean = jnp.zeros((cout,), jnp.float32)
            var = jnp.ones((cout,), jnp.float32)
            scale = gamma / jnp.sqrt(var + 1e-5)
            shift = beta - mean * scale
        scale = jnp.pad(scale, (0, cp - cout)).reshape(1, cp)
        shift = jnp.pad(shift, (0, cp - cout)).reshape(1, cp)
        return (wk, scale, shift)

    def linear_t(fan_in, fan_out):
        # stored pre-transposed (bf16): y = x @ wt + b
        wt = jax.random.normal(next(keys), (fan_in, fan_out), jnp.float32)
        wt = (wt * (1.0 / math.sqrt(fan_in))).astype(jnp.bfloat16)
        return (wt, jnp.zeros((1, fan_out), jnp.float32))

    def linear_lhs(fan_in, fan_out):
        # stored as (out, in) bf16: W @ x + b[:, None]  ==  nn.Linear(x.T).T
        w = jax.random.normal(next(keys), (fan_out, fan_in), jnp.float32)
        w = (w * (1.0 / math.sqrt(fan_in))).astype(jnp.bfloat16)
        return (w, jnp.zeros((fan_out, 1), jnp.float32))

    in_ch = cfg['in_ch']
    e1, e2, e3 = cfg['enc_ch']
    d0, d1, d2 = cfg['dec_ch']

    # encoder stand-in (out_channels = (in_ch, e1, e2, e3), depth = 3)
    p['enc1'] = conv_entry(in_ch, e1)
    p['enc2'] = conv_entry(e1, e2)
    p['enc3'] = conv_entry(e2, e3)

    # UnetDecoder channel arithmetic (smp): in=[e3, d0, d1], skip=[e2, e1, 0], out=[d0, d1, d2]
    p['dec0_c1'] = conv_entry(e3 + e2, d0)
    p['dec0_c2'] = conv_entry(d0, d0)
    p['dec1_c1'] = conv_entry(d0 + e1, d1)
    p['dec1_c2'] = conv_entry(d1, d1)
    p['dec2_c1'] = conv_entry(d1, d2)
    p['dec2_c2'] = conv_entry(d2, d2)

    p['seg'] = conv_entry(d2, cfg['n_maps'], bias=True)          # SegmentationHead conv

    p['cls_lin'] = linear_t(e3, cfg['num_classes'])               # ClassificationHead linear
    p['slc_lin'] = linear_t(e3, cfg['n_slices'])                  # multilabel head linear
    p['lin_cls'] = linear_lhs(cfg['n_slices'] * cfg['batch_size'], cfg['batch_size'])
    p['lin_slc'] = linear_lhs(cfg['n_slices'] * cfg['batch_size'], cfg['batch_size'])
    return p


# ----------------------------------------------------------------------------
# Forward pass (mirrors UnetSeq.forward); `cfg` is static (closed over via partial)
# ----------------------------------------------------------------------------
def unet_seq_forward(ct, params, *, cfg):
    B, Z, C, H, W = ct.shape
    # ct = ct.view(-1, C, H, W); NCHW -> NHWC; bf16 activations throughout
    x = ct.reshape(B * Z, C, H, W).transpose(0, 2, 3, 1).astype(jnp.bfloat16)

    e1, e2, e3 = cfg['enc_ch']
    d0, d1, d2 = cfg['dec_ch']

    # ----- encoder stand-in: feature pyramid at strides 2, 4, 8 -----
    f1 = maxpool2(conv3x3(x, params['enc1'], e1, relu=True))     # (N, H/2, W/2, e1)
    f2 = maxpool2(conv3x3(f1, params['enc2'], e2, relu=True))    # (N, H/4, W/4, e2)
    f3 = maxpool2(conv3x3(f2, params['enc3'], e3, relu=True))    # (N, H/8, W/8, e3)

    # ----- UnetDecoder (center=False, attention_type=None) -----
    d = f3
    for i, (skip, co) in enumerate(zip([f2, f1, None], [d0, d1, d2])):
        d = upsample2(d)
        if skip is not None:
            d = jnp.concatenate([d, skip], axis=-1)
        d = conv3x3(d, params[f'dec{i}_c1'], co, relu=True)
        d = conv3x3(d, params[f'dec{i}_c2'], co, relu=True)

    # ----- SegmentationHead (3x3 conv, identity activation, upsampling=1) -----
    masks = conv3x3(d, params['seg'], cfg['n_maps'], relu=False,
                    out_dtype=jnp.bfloat16)                      # (N, H, W, 1) bf16

    # ----- classification heads on features[-1] (one fused Pallas kernel) -----
    cls_logits, slc_logits = fused_heads(f3, params, batch_size=B)

    return {
        'masks': masks[..., 0].astype(jnp.float32).reshape(
            B, Z, cfg['img_size'], cfg['img_size']),
        'cls_logits': cls_logits,
        'slc_logits': slc_logits,
    }


# ----------------------------------------------------------------------------
if __name__ == "__main__":
    cfg = dict(
        batch_size=2, n_slices=4, in_ch=1, img_size=16,
        num_classes=3, n_maps=1,
        enc_ch=(8, 16, 32),     # encoder.out_channels[1:]
        dec_ch=(32, 16, 8),     # args.decoder_channels (depth = 3)
    )

    key = jax.random.PRNGKey(0)
    k_x, k_p = jax.random.split(key)
    ct = jax.random.normal(
        k_x, (cfg['batch_size'], cfg['n_slices'], cfg['in_ch'],
              cfg['img_size'], cfg['img_size']), jnp.float32)
    params = init_params(k_p, cfg)

    fwd = jax.jit(functools.partial(unet_seq_forward, cfg=cfg))
    out = fwd(ct, params)
    out = jax.block_until_ready(out)

    assert out['masks'].shape == (cfg['batch_size'], cfg['n_slices'],
                                  cfg['img_size'], cfg['img_size'])
    assert out['cls_logits'].shape == (cfg['batch_size'], cfg['num_classes'])
    assert out['slc_logits'].shape == (cfg['batch_size'], cfg['n_slices'])
    print("KERNEL_OK")
</pallas_src>

<mosaic_0001>
module attributes {stable_mosaic.version = 11 : i64} {
  func.func @_conv_mm_kernel(%arg0: i32, %arg1: memref<512x16xbf16, #tpu.memory_space<vmem>>, %arg2: memref<16x128xbf16, #tpu.memory_space<vmem>>, %arg3: memref<1x128xf32, #tpu.memory_space<vmem>>, %arg4: memref<1x128xf32, #tpu.memory_space<vmem>>, %arg5: memref<512x128xbf16, #tpu.memory_space<vmem>>) attributes {dimension_semantics = [#tpu.dimension_semantics<parallel>], iteration_bounds = array<i64: 4>, scalar_prefetch = 0 : i64, scratch_operands = 0 : i64, tpu.core_type = #tpu.core_type<tc>, window_params = [{transform_indices = @transform_0, window_bounds = array<i64: 512, 16>}, {pipeline_mode = #tpu.pipeline_mode<synchronous>, transform_indices = @transform_1, window_bounds = array<i64: 16, 128>}, {pipeline_mode = #tpu.pipeline_mode<synchronous>, transform_indices = @transform_2, window_bounds = array<i64: 1, 128>}, {pipeline_mode = #tpu.pipeline_mode<synchronous>, transform_indices = @transform_3, window_bounds = array<i64: 1, 128>}, {transform_indices = @transform_4, window_bounds = array<i64: 512, 128>}]} {
    %c0 = arith.constant 0 : index
    %c0_0 = arith.constant 0 : index
    %0 = vector.load %arg1[%c0, %c0_0] : memref<512x16xbf16, #tpu.memory_space<vmem>>, vector<512x16xbf16>
    %c0_1 = arith.constant 0 : index
    %c0_2 = arith.constant 0 : index
    %1 = vector.load %arg2[%c0_1, %c0_2] : memref<16x128xbf16, #tpu.memory_space<vmem>>, vector<16x128xbf16>
    %cst = arith.constant dense<0.000000e+00> : vector<512x128xf32>
    %2 = tpu.matmul %0, %1, %cst {dimension_numbers = #tpu.dot_dimension_numbers<[1], [0], [0], [1], [0, 0, 1, 1], [], []>} : vector<512x16xbf16>, vector<16x128xbf16>, vector<512x128xf32> -> vector<512x128xf32>
    %c0_3 = arith.constant 0 : index
    %c0_4 = arith.constant 0 : index
    %3 = vector.load %arg3[%c0_3, %c0_4] : memref<1x128xf32, #tpu.memory_space<vmem>>, vector<1x128xf32>
    %4 = vector.broadcast %3 : vector<1x128xf32> to vector<512x128xf32>
    %5 = arith.mulf %2, %4 : vector<512x128xf32>
    %c0_5 = arith.constant 0 : index
    %c0_6 = arith.constant 0 : index
    %6 = vector.load %arg4[%c0_5, %c0_6] : memref<1x128xf32, #tpu.memory_space<vmem>>, vector<1x128xf32>
    %7 = vector.broadcast %6 : vector<1x128xf32> to vector<512x128xf32>
    %8 = arith.addf %5, %7 : vector<512x128xf32>
    %cst_7 = arith.constant 0.000000e+00 : f32
    %9 = vector.broadcast %cst_7 : f32 to vector<512x128xf32>
    %10 = arith.maximumf %8, %9 : vector<512x128xf32>
    %11 = arith.truncf %10 : vector<512x128xf32> to vector<512x128xbf16>
    %c0_8 = arith.constant 0 : index
    %c0_9 = arith.constant 0 : index
    %12 = vector.load %arg5[%c0_8, %c0_9] : memref<512x128xbf16, #tpu.memory_space<vmem>>, vector<512x128xbf16>
    tpu.vector_store %arg5[%c0_8, %c0_9], %11 {strides = array<i32>} : memref<512x128xbf16, #tpu.memory_space<vmem>>, vector<512x128xbf16>,
    return
  }
  func.func @transform_0(%arg0: i32) -> (i32, i32) {
    %c0_i32 = arith.constant 0 : i32
    %c0_i32_0 = arith.constant 0 : i32
    return %arg0, %c0_i32 : i32, i32
  }
  func.func @transform_1(%arg0: i32) -> (i32, i32) {
    %c0_i32 = arith.constant 0 : i32
    %c0_i32_0 = arith.constant 0 : i32
    %c0_i32_1 = arith.constant 0 : i32
    return %c0_i32, %c0_i32_0 : i32, i32
  }
  func.func @transform_2(%arg0: i32) -> (i32, i32) {
    %c0_i32 = arith.constant 0 : i32
    %c0_i32_0 = arith.constant 0 : i32
    %c0_i32_1 = arith.constant 0 : i32
    return %c0_i32, %c0_i32_0 : i32, i32
  }
  func.func @transform_3(%arg0: i32) -> (i32, i32) {
    %c0_i32 = arith.constant 0 : i32
    %c0_i32_0 = arith.constant 0 : i32
    %c0_i32_1 = arith.constant 0 : i32
    return %c0_i32, %c0_i32_0 : i32, i32
  }
  func.func @transform_4(%arg0: i32) -> (i32, i32) {
    %c0_i32 = arith.constant 0 : i32
    %c0_i32_0 = arith.constant 0 : i32
    return %arg0, %c0_i32 : i32, i32
  }
}

module attributes {stable_mosaic.version = 11 : i64} {
  func.func @_conv_mm_kernel(%arg0: i32, %arg1: memref<256x80xbf16, #tpu.memory_space<vmem>>, %arg2: memref<80x128xbf16, #tpu.memory_space<vmem>>, %arg3: memref<1x128xf32, #tpu.memory_space<vmem>>, %arg4: memref<1x128xf32, #tpu.memory_space<vmem>>, %arg5: memref<256x128xbf16, #tpu.memory_space<vmem>>) attributes {dimension_semantics = [#tpu.dimension_semantics<parallel>], iteration_bounds = array<i64: 2>, scalar_prefetch = 0 : i64, scratch_operands = 0 : i64, tpu.core_type = #tpu.core_type<tc>, window_params = [{transform_indices = @transform_0, window_bounds = array<i64: 256, 80>}, {pipeline_mode = #tpu.pipeline_mode<synchronous>, transform_indices = @transform_1, window_bounds = array<i64: 80, 128>}, {pipeline_mode = #tpu.pipeline_mode<synchronous>, transform_indices = @transform_2, window_bounds = array<i64: 1, 128>}, {pipeline_mode = #tpu.pipeline_mode<synchronous>, transform_indices = @transform_3, window_bounds = array<i64: 1, 128>}, {transform_indices = @transform_4, window_bounds = array<i64: 256, 128>}]} {
    %c0 = arith.constant 0 : index
    %c0_0 = arith.constant 0 : index
    %0 = vector.load %arg1[%c0, %c0_0] : memref<256x80xbf16, #tpu.memory_space<vmem>>, vector<256x80xbf16>
    %c0_1 = arith.constant 0 : index
    %c0_2 = arith.constant 0 : index
    %1 = vector.load %arg2[%c0_1, %c0_2] : memref<80x128xbf16, #tpu.memory_space<vmem>>, vector<80x128xbf16>
    %cst = arith.constant dense<0.000000e+00> : vector<256x128xf32>
    %2 = tpu.matmul %0, %1, %cst {dimension_numbers = #tpu.dot_dimension_numbers<[1], [0], [0], [1], [0, 0, 1, 1], [], []>} : vector<256x80xbf16>, vector<80x128xbf16>, vector<256x128xf32> -> vector<256x128xf32>
    %c0_3 = arith.constant 0 : index
    %c0_4 = arith.constant 0 : index
    %3 = vector.load %arg3[%c0_3, %c0_4] : memref<1x128xf32, #tpu.memory_space<vmem>>, vector<1x128xf32>
    %4 = vector.broadcast %3 : vector<1x128xf32> to vector<256x128xf32>
    %5 = arith.mulf %2, %4 : vector<256x128xf32>
    %c0_5 = arith.constant 0 : index
    %c0_6 = arith.constant 0 : index
    %6 = vector.load %arg4[%c0_5, %c0_6] : memref<1x128xf32, #tpu.memory_space<vmem>>, vector<1x128xf32>
    %7 = vector.broadcast %6 : vector<1x128xf32> to vector<256x128xf32>
    %8 = arith.addf %5, %7 : vector<256x128xf32>
    %cst_7 = arith.constant 0.000000e+00 : f32
    %9 = vector.broadcast %cst_7 : f32 to vector<256x128xf32>
    %10 = arith.maximumf %8, %9 : vector<256x128xf32>
    %11 = arith.truncf %10 : vector<256x128xf32> to vector<256x128xbf16>
    %c0_8 = arith.constant 0 : index
    %c0_9 = arith.constant 0 : index
    %12 = vector.load %arg5[%c0_8, %c0_9] : memref<256x128xbf16, #tpu.memory_space<vmem>>, vector<256x128xbf16>
    tpu.vector_store %arg5[%c0_8, %c0_9], %11 {strides = array<i32>} : memref<256x128xbf16, #tpu.memory_space<vmem>>, vector<256x128xbf16>,
    return
  }
  func.func @transform_0(%arg0: i32) -> (i32, i32) {
    %c0_i32 = arith.constant 0 : i32
    %c0_i32_0 = arith.constant 0 : i32
    return %arg0, %c0_i32 : i32, i32
  }
  func.func @transform_1(%arg0: i32) -> (i32, i32) {
    %c0_i32 = arith.constant 0 : i32
    %c0_i32_0 = arith.constant 0 : i32
    %c0_i32_1 = arith.constant 0 : i32
    return %c0_i32, %c0_i32_0 : i32, i32
  }
  func.func @transform_2(%arg0: i32) -> (i32, i32) {
    %c0_i32 = arith.constant 0 : i32
    %c0_i32_0 = arith.constant 0 : i32
    %c0_i32_1 = arith.constant 0 : i32
    return %c0_i32, %c0_i32_0 : i32, i32
  }
  func.func @transform_3(%arg0: i32) -> (i32, i32) {
    %c0_i32 = arith.constant 0 : i32
    %c0_i32_0 = arith.constant 0 : i32
    %c0_i32_1 = arith.constant 0 : i32
    return %c0_i32, %c0_i32_0 : i32, i32
  }
  func.func @transform_4(%arg0: i32) -> (i32, i32) {
    %c0_i32 = arith.constant 0 : i32
    %c0_i32_0 = arith.constant 0 : i32
    return %arg0, %c0_i32 : i32, i32
  }
}

module attributes {stable_mosaic.version = 11 : i64} {
  func.func @_conv_mm_kernel(%arg0: i32, %arg1: memref<64x144xbf16, #tpu.memory_space<vmem>>, %arg2: memref<144x128xbf16, #tpu.memory_space<vmem>>, %arg3: memref<1x128xf32, #tpu.memory_space<vmem>>, %arg4: memref<1x128xf32, #tpu.memory_space<vmem>>, %arg5: memref<64x128xbf16, #tpu.memory_space<vmem>>) attributes {dimension_semantics = [#tpu.dimension_semantics<parallel>], iteration_bounds = array<i64: 2>, scalar_prefetch = 0 : i64, scratch_operands = 0 : i64, tpu.core_type = #tpu.core_type<tc>, window_params = [{transform_indices = @transform_0, window_bounds = array<i64: 64, 144>}, {pipeline_mode = #tpu.pipeline_mode<synchronous>, transform_indices = @transform_1, window_bounds = array<i64: 144, 128>}, {pipeline_mode = #tpu.pipeline_mode<synchronous>, transform_indices = @transform_2, window_bounds = array<i64: 1, 128>}, {pipeline_mode = #tpu.pipeline_mode<synchronous>, transform_indices = @transform_3, window_bounds = array<i64: 1, 128>}, {transform_indices = @transform_4, window_bounds = array<i64: 64, 128>}]} {
    %c0 = arith.constant 0 : index
    %c0_0 = arith.constant 0 : index
    %0 = vector.load %arg1[%c0, %c0_0] : memref<64x144xbf16, #tpu.memory_space<vmem>>, vector<64x144xbf16>
    %c0_1 = arith.constant 0 : index
    %c0_2 = arith.constant 0 : index
    %1 = vector.load %arg2[%c0_1, %c0_2] : memref<144x128xbf16, #tpu.memory_space<vmem>>, vector<144x128xbf16>
    %cst = arith.constant dense<0.000000e+00> : vector<64x128xf32>
    %2 = tpu.matmul %0, %1, %cst {dimension_numbers = #tpu.dot_dimension_numbers<[1], [0], [0], [1], [0, 0, 1, 1], [], []>} : vector<64x144xbf16>, vector<144x128xbf16>, vector<64x128xf32> -> vector<64x128xf32>
    %c0_3 = arith.constant 0 : index
    %c0_4 = arith.constant 0 : index
    %3 = vector.load %arg3[%c0_3, %c0_4] : memref<1x128xf32, #tpu.memory_space<vmem>>, vector<1x128xf32>
    %4 = vector.broadcast %3 : vector<1x128xf32> to vector<64x128xf32>
    %5 = arith.mulf %2, %4 : vector<64x128xf32>
    %c0_5 = arith.constant 0 : index
    %c0_6 = arith.constant 0 : index
    %6 = vector.load %arg4[%c0_5, %c0_6] : memref<1x128xf32, #tpu.memory_space<vmem>>, vector<1x128xf32>
    %7 = vector.broadcast %6 : vector<1x128xf32> to vector<64x128xf32>
    %8 = arith.addf %5, %7 : vector<64x128xf32>
    %cst_7 = arith.constant 0.000000e+00 : f32
    %9 = vector.broadcast %cst_7 : f32 to vector<64x128xf32>
    %10 = arith.maximumf %8, %9 : vector<64x128xf32>
    %11 = arith.truncf %10 : vector<64x128xf32> to vector<64x128xbf16>
    %c0_8 = arith.constant 0 : index
    %c0_9 = arith.constant 0 : index
    %12 = vector.load %arg5[%c0_8, %c0_9] : memref<64x128xbf16, #tpu.memory_space<vmem>>, vector<64x128xbf16>
    tpu.vector_store %arg5[%c0_8, %c0_9], %11 {strides = array<i32>} : memref<64x128xbf16, #tpu.memory_space<vmem>>, vector<64x128xbf16>,
    return
  }
  func.func @transform_0(%arg0: i32) -> (i32, i32) {
    %c0_i32 = arith.constant 0 : i32
    %c0_i32_0 = arith.constant 0 : i32
    return %arg0, %c0_i32 : i32, i32
  }
  func.func @transform_1(%arg0: i32) -> (i32, i32) {
    %c0_i32 = arith.constant 0 : i32
    %c0_i32_0 = arith.constant 0 : i32
    %c0_i32_1 = arith.constant 0 : i32
    return %c0_i32, %c0_i32_0 : i32, i32
  }
  func.func @transform_2(%arg0: i32) -> (i32, i32) {
    %c0_i32 = arith.constant 0 : i32
    %c0_i32_0 = arith.constant 0 : i32
    %c0_i32_1 = arith.constant 0 : i32
    return %c0_i32, %c0_i32_0 : i32, i32
  }
  func.func @transform_3(%arg0: i32) -> (i32, i32) {
    %c0_i32 = arith.constant 0 : i32
    %c0_i32_0 = arith.constant 0 : i32
    %c0_i32_1 = arith.constant 0 : i32
    return %c0_i32, %c0_i32_0 : i32, i32
  }
  func.func @transform_4(%arg0: i32) -> (i32, i32) {
    %c0_i32 = arith.constant 0 : i32
    %c0_i32_0 = arith.constant 0 : i32
    return %arg0, %c0_i32 : i32, i32
  }
}

module attributes {stable_mosaic.version = 11 : i64} {
  func.func @_heads_kernel(%arg0: memref<8x4x32xbf16, #tpu.memory_space<vmem>>, %arg1: memref<32x3xbf16, #tpu.memory_space<vmem>>, %arg2: memref<1x3xf32, #tpu.memory_space<vmem>>, %arg3: memref<32x4xbf16, #tpu.memory_space<vmem>>, %arg4: memref<1x4xf32, #tpu.memory_space<vmem>>, %arg5: memref<2x8xbf16, #tpu.memory_space<vmem>>, %arg6: memref<2x1xf32, #tpu.memory_space<vmem>>, %arg7: memref<2x8xbf16, #tpu.memory_space<vmem>>, %arg8: memref<2x1xf32, #tpu.memory_space<vmem>>, %arg9: memref<2x3xf32, #tpu.memory_space<vmem>>, %arg10: memref<2x4xf32, #tpu.memory_space<vmem>>) attributes {dimension_semantics = [], scalar_prefetch = 0 : i64, scratch_operands = 0 : i64, tpu.core_type = #tpu.core_type<tc>} {
    %c0 = arith.constant 0 : index
    %c0_0 = arith.constant 0 : index
    %c0_1 = arith.constant 0 : index
    %0 = vector.load %arg0[%c0, %c0_0, %c0_1] : memref<8x4x32xbf16, #tpu.memory_space<vmem>>, vector<8x4x32xbf16>
    %1 = arith.extf %0 : vector<8x4x32xbf16> to vector<8x4x32xf32>
    %cst = arith.constant dense<0.000000e+00> : vector<8x32xf32>
    %2 = vector.multi_reduction <add>, %1, %cst [1] : vector<8x4x32xf32> to vector<8x32xf32>
    %cst_2 = arith.constant 4.000000e+00 : f32
    %3 = vector.broadcast %cst_2 : f32 to vector<8x32xf32>
    %4 = arith.divf %2, %3 : vector<8x32xf32>
    %5 = arith.truncf %4 : vector<8x32xf32> to vector<8x32xbf16>
    %c0_3 = arith.constant 0 : index
    %c0_4 = arith.constant 0 : index
    %6 = vector.load %arg1[%c0_3, %c0_4] : memref<32x3xbf16, #tpu.memory_space<vmem>>, vector<32x3xbf16>
    %cst_5 = arith.constant dense<0.000000e+00> : vector<8x3xf32>
    %7 = tpu.matmul %5, %6, %cst_5 {dimension_numbers = #tpu.dot_dimension_numbers<[1], [0], [0], [1], [0, 0, 1, 1], [], []>} : vector<8x32xbf16>, vector<32x3xbf16>, vector<8x3xf32> -> vector<8x3xf32>
    %c0_6 = arith.constant 0 : index
    %c0_7 = arith.constant 0 : index
    %8 = vector.load %arg2[%c0_6, %c0_7] : memref<1x3xf32, #tpu.memory_space<vmem>>, vector<1x3xf32>
    %9 = vector.broadcast %8 : vector<1x3xf32> to vector<8x3xf32>
    %10 = arith.addf %7, %9 : vector<8x3xf32>
    %c0_8 = arith.constant 0 : index
    %c0_9 = arith.constant 0 : index
    %11 = vector.load %arg3[%c0_8, %c0_9] : memref<32x4xbf16, #tpu.memory_space<vmem>>, vector<32x4xbf16>
    %cst_10 = arith.constant dense<0.000000e+00> : vector<8x4xf32>
    %12 = tpu.matmul %5, %11, %cst_10 {dimension_numbers = #tpu.dot_dimension_numbers<[1], [0], [0], [1], [0, 0, 1, 1], [], []>} : vector<8x32xbf16>, vector<32x4xbf16>, vector<8x4xf32> -> vector<8x4xf32>
    %c0_11 = arith.constant 0 : index
    %c0_12 = arith.constant 0 : index
    %13 = vector.load %arg4[%c0_11, %c0_12] : memref<1x4xf32, #tpu.memory_space<vmem>>, vector<1x4xf32>
    %14 = vector.broadcast %13 : vector<1x4xf32> to vector<8x4xf32>
    %15 = arith.addf %12, %14 : vector<8x4xf32>
    %c0_13 = arith.constant 0 : index
    %c0_14 = arith.constant 0 : index
    %16 = vector.load %arg5[%c0_13, %c0_14] : memref<2x8xbf16, #tpu.memory_space<vmem>>, vector<2x8xbf16>
    %17 = arith.truncf %10 : vector<8x3xf32> to vector<8x3xbf16>
    %cst_15 = arith.constant dense<0.000000e+00> : vector<2x3xf32>
    %18 = tpu.matmul %16, %17, %cst_15 {dimension_numbers = #tpu.dot_dimension_numbers<[1], [0], [0], [1], [0, 0, 1, 1], [], []>} : vector<2x8xbf16>, vector<8x3xbf16>, vector<2x3xf32> -> vector<2x3xf32>
    %c0_16 = arith.constant 0 : index
    %c0_17 = arith.constant 0 : index
    %19 = vector.load %arg6[%c0_16, %c0_17] : memref<2x1xf32, #tpu.memory_space<vmem>>, vector<2x1xf32>
    %20 = vector.broadcast %19 : vector<2x1xf32> to vector<2x3xf32>
    %21 = arith.addf %18, %20 : vector<2x3xf32>
    %c0_18 = arith.constant 0 : index
    %c0_19 = arith.constant 0 : index
    %22 = vector.load %arg9[%c0_18, %c0_19] : memref<2x3xf32, #tpu.memory_space<vmem>>, vector<2x3xf32>
    tpu.vector_store %arg9[%c0_18, %c0_19], %21 {strides = array<i32>} : memref<2x3xf32, #tpu.memory_space<vmem>>, vector<2x3xf32>,
    %c0_20 = arith.constant 0 : index
    %c0_21 = arith.constant 0 : index
    %23 = vector.load %arg7[%c0_20, %c0_21] : memref<2x8xbf16, #tpu.memory_space<vmem>>, vector<2x8xbf16>
    %24 = arith.truncf %15 : vector<8x4xf32> to vector<8x4xbf16>
    %cst_22 = arith.constant dense<0.000000e+00> : vector<2x4xf32>
    %25 = tpu.matmul %23, %24, %cst_22 {dimension_numbers = #tpu.dot_dimension_numbers<[1], [0], [0], [1], [0, 0, 1, 1], [], []>} : vector<2x8xbf16>, vector<8x4xbf16>, vector<2x4xf32> -> vector<2x4xf32>
    %c0_23 = arith.constant 0 : index
    %c0_24 = arith.constant 0 : index
    %26 = vector.load %arg8[%c0_23, %c0_24] : memref<2x1xf32, #tpu.memory_space<vmem>>, vector<2x1xf32>
    %27 = vector.broadcast %26 : vector<2x1xf32> to vector<2x4xf32>
    %28 = arith.addf %25, %27 : vector<2x4xf32>
    %c0_25 = arith.constant 0 : index
    %c0_26 = arith.constant 0 : index
    %29 = vector.load %arg10[%c0_25, %c0_26] : memref<2x4xf32, #tpu.memory_space<vmem>>, vector<2x4xf32>
    tpu.vector_store %arg10[%c0_25, %c0_26], %28 {strides = array<i32>} : memref<2x4xf32, #tpu.memory_space<vmem>>, vector<2x4xf32>,
    return
  }
}

module attributes {stable_mosaic.version = 11 : i64} {
  func.func @_conv_mm_kernel(%arg0: i32, %arg1: memref<64x432xbf16, #tpu.memory_space<vmem>>, %arg2: memref<432x128xbf16, #tpu.memory_space<vmem>>, %arg3: memref<1x128xf32, #tpu.memory_space<vmem>>, %arg4: memref<1x128xf32, #tpu.memory_space<vmem>>, %arg5: memref<64x128xbf16, #tpu.memory_space<vmem>>) attributes {dimension_semantics = [#tpu.dimension_semantics<parallel>], iteration_bounds = array<i64: 2>, scalar_prefetch = 0 : i64, scratch_operands = 0 : i64, tpu.core_type = #tpu.core_type<tc>, window_params = [{transform_indices = @transform_0, window_bounds = array<i64: 64, 432>}, {pipeline_mode = #tpu.pipeline_mode<synchronous>, transform_indices = @transform_1, window_bounds = array<i64: 432, 128>}, {pipeline_mode = #tpu.pipeline_mode<synchronous>, transform_indices = @transform_2, window_bounds = array<i64: 1, 128>}, {pipeline_mode = #tpu.pipeline_mode<synchronous>, transform_indices = @transform_3, window_bounds = array<i64: 1, 128>}, {transform_indices = @transform_4, window_bounds = array<i64: 64, 128>}]} {
    %c0 = arith.constant 0 : index
    %c0_0 = arith.constant 0 : index
    %0 = vector.load %arg1[%c0, %c0_0] : memref<64x432xbf16, #tpu.memory_space<vmem>>, vector<64x432xbf16>
    %c0_1 = arith.constant 0 : index
    %c0_2 = arith.constant 0 : index
    %1 = vector.load %arg2[%c0_1, %c0_2] : memref<432x128xbf16, #tpu.memory_space<vmem>>, vector<432x128xbf16>
    %cst = arith.constant dense<0.000000e+00> : vector<64x128xf32>
    %2 = tpu.matmul %0, %1, %cst {dimension_numbers = #tpu.dot_dimension_numbers<[1], [0], [0], [1], [0, 0, 1, 1], [], []>} : vector<64x432xbf16>, vector<432x128xbf16>, vector<64x128xf32> -> vector<64x128xf32>
    %c0_3 = arith.constant 0 : index
    %c0_4 = arith.constant 0 : index
    %3 = vector.load %arg3[%c0_3, %c0_4] : memref<1x128xf32, #tpu.memory_space<vmem>>, vector<1x128xf32>
    %4 = vector.broadcast %3 : vector<1x128xf32> to vector<64x128xf32>
    %5 = arith.mulf %2, %4 : vector<64x128xf32>
    %c0_5 = arith.constant 0 : index
    %c0_6 = arith.constant 0 : index
    %6 = vector.load %arg4[%c0_5, %c0_6] : memref<1x128xf32, #tpu.memory_space<vmem>>, vector<1x128xf32>
    %7 = vector.broadcast %6 : vector<1x128xf32> to vector<64x128xf32>
    %8 = arith.addf %5, %7 : vector<64x128xf32>
    %cst_7 = arith.constant 0.000000e+00 : f32
    %9 = vector.broadcast %cst_7 : f32 to vector<64x128xf32>
    %10 = arith.maximumf %8, %9 : vector<64x128xf32>
    %11 = arith.truncf %10 : vector<64x128xf32> to vector<64x128xbf16>
    %c0_8 = arith.constant 0 : index
    %c0_9 = arith.constant 0 : index
    %12 = vector.load %arg5[%c0_8, %c0_9] : memref<64x128xbf16, #tpu.memory_space<vmem>>, vector<64x128xbf16>
    tpu.vector_store %arg5[%c0_8, %c0_9], %11 {strides = array<i32>} : memref<64x128xbf16, #tpu.memory_space<vmem>>, vector<64x128xbf16>,
    return
  }
  func.func @transform_0(%arg0: i32) -> (i32, i32) {
    %c0_i32 = arith.constant 0 : i32
    %c0_i32_0 = arith.constant 0 : i32
    return %arg0, %c0_i32 : i32, i32
  }
  func.func @transform_1(%arg0: i32) -> (i32, i32) {
    %c0_i32 = arith.constant 0 : i32
    %c0_i32_0 = arith.constant 0 : i32
    %c0_i32_1 = arith.constant 0 : i32
    return %c0_i32, %c0_i32_0 : i32, i32
  }
  func.func @transform_2(%arg0: i32) -> (i32, i32) {
    %c0_i32 = arith.constant 0 : i32
    %c0_i32_0 = arith.constant 0 : i32
    %c0_i32_1 = arith.constant 0 : i32
    return %c0_i32, %c0_i32_0 : i32, i32
  }
  func.func @transform_3(%arg0: i32) -> (i32, i32) {
    %c0_i32 = arith.constant 0 : i32
    %c0_i32_0 = arith.constant 0 : i32
    %c0_i32_1 = arith.constant 0 : i32
    return %c0_i32, %c0_i32_0 : i32, i32
  }
  func.func @transform_4(%arg0: i32) -> (i32, i32) {
    %c0_i32 = arith.constant 0 : i32
    %c0_i32_0 = arith.constant 0 : i32
    return %arg0, %c0_i32 : i32, i32
  }
}

module attributes {stable_mosaic.version = 11 : i64} {
  func.func @_conv_mm_kernel(%arg0: i32, %arg1: memref<64x288xbf16, #tpu.memory_space<vmem>>, %arg2: memref<288x128xbf16, #tpu.memory_space<vmem>>, %arg3: memref<1x128xf32, #tpu.memory_space<vmem>>, %arg4: memref<1x128xf32, #tpu.memory_space<vmem>>, %arg5: memref<64x128xbf16, #tpu.memory_space<vmem>>) attributes {dimension_semantics = [#tpu.dimension_semantics<parallel>], iteration_bounds = array<i64: 2>, scalar_prefetch = 0 : i64, scratch_operands = 0 : i64, tpu.core_type = #tpu.core_type<tc>, window_params = [{transform_indices = @transform_0, window_bounds = array<i64: 64, 288>}, {pipeline_mode = #tpu.pipeline_mode<synchronous>, transform_indices = @transform_1, window_bounds = array<i64: 288, 128>}, {pipeline_mode = #tpu.pipeline_mode<synchronous>, transform_indices = @transform_2, window_bounds = array<i64: 1, 128>}, {pipeline_mode = #tpu.pipeline_mode<synchronous>, transform_indices = @transform_3, window_bounds = array<i64: 1, 128>}, {transform_indices = @transform_4, window_bounds = array<i64: 64, 128>}]} {
    %c0 = arith.constant 0 : index
    %c0_0 = arith.constant 0 : index
    %0 = vector.load %arg1[%c0, %c0_0] : memref<64x288xbf16, #tpu.memory_space<vmem>>, vector<64x288xbf16>
    %c0_1 = arith.constant 0 : index
    %c0_2 = arith.constant 0 : index
    %1 = vector.load %arg2[%c0_1, %c0_2] : memref<288x128xbf16, #tpu.memory_space<vmem>>, vector<288x128xbf16>
    %cst = arith.constant dense<0.000000e+00> : vector<64x128xf32>
    %2 = tpu.matmul %0, %1, %cst {dimension_numbers = #tpu.dot_dimension_numbers<[1], [0], [0], [1], [0, 0, 1, 1], [], []>} : vector<64x288xbf16>, vector<288x128xbf16>, vector<64x128xf32> -> vector<64x128xf32>
    %c0_3 = arith.constant 0 : index
    %c0_4 = arith.constant 0 : index
    %3 = vector.load %arg3[%c0_3, %c0_4] : memref<1x128xf32, #tpu.memory_space<vmem>>, vector<1x128xf32>
    %4 = vector.broadcast %3 : vector<1x128xf32> to vector<64x128xf32>
    %5 = arith.mulf %2, %4 : vector<64x128xf32>
    %c0_5 = arith.constant 0 : index
    %c0_6 = arith.constant 0 : index
    %6 = vector.load %arg4[%c0_5, %c0_6] : memref<1x128xf32, #tpu.memory_space<vmem>>, vector<1x128xf32>
    %7 = vector.broadcast %6 : vector<1x128xf32> to vector<64x128xf32>
    %8 = arith.addf %5, %7 : vector<64x128xf32>
    %cst_7 = arith.constant 0.000000e+00 : f32
    %9 = vector.broadcast %cst_7 : f32 to vector<64x128xf32>
    %10 = arith.maximumf %8, %9 : vector<64x128xf32>
    %11 = arith.truncf %10 : vector<64x128xf32> to vector<64x128xbf16>
    %c0_8 = arith.constant 0 : index
    %c0_9 = arith.constant 0 : index
    %12 = vector.load %arg5[%c0_8, %c0_9] : memref<64x128xbf16, #tpu.memory_space<vmem>>, vector<64x128xbf16>
    tpu.vector_store %arg5[%c0_8, %c0_9], %11 {strides = array<i32>} : memref<64x128xbf16, #tpu.memory_space<vmem>>, vector<64x128xbf16>,
    return
  }
  func.func @transform_0(%arg0: i32) -> (i32, i32) {
    %c0_i32 = arith.constant 0 : i32
    %c0_i32_0 = arith.constant 0 : i32
    return %arg0, %c0_i32 : i32, i32
  }
  func.func @transform_1(%arg0: i32) -> (i32, i32) {
    %c0_i32 = arith.constant 0 : i32
    %c0_i32_0 = arith.constant 0 : i32
    %c0_i32_1 = arith.constant 0 : i32
    return %c0_i32, %c0_i32_0 : i32, i32
  }
  func.func @transform_2(%arg0: i32) -> (i32, i32) {
    %c0_i32 = arith.constant 0 : i32
    %c0_i32_0 = arith.constant 0 : i32
    %c0_i32_1 = arith.constant 0 : i32
    return %c0_i32, %c0_i32_0 : i32, i32
  }
  func.func @transform_3(%arg0: i32) -> (i32, i32) {
    %c0_i32 = arith.constant 0 : i32
    %c0_i32_0 = arith.constant 0 : i32
    %c0_i32_1 = arith.constant 0 : i32
    return %c0_i32, %c0_i32_0 : i32, i32
  }
  func.func @transform_4(%arg0: i32) -> (i32, i32) {
    %c0_i32 = arith.constant 0 : i32
    %c0_i32_0 = arith.constant 0 : i32
    return %arg0, %c0_i32 : i32, i32
  }
}

module attributes {stable_mosaic.version = 11 : i64} {
  func.func @_conv_mm_kernel(%arg0: i32, %arg1: memref<256x368xbf16, #tpu.memory_space<vmem>>, %arg2: memref<368x128xbf16, #tpu.memory_space<vmem>>, %arg3: memref<1x128xf32, #tpu.memory_space<vmem>>, %arg4: memref<1x128xf32, #tpu.memory_space<vmem>>, %arg5: memref<256x128xbf16, #tpu.memory_space<vmem>>) attributes {dimension_semantics = [#tpu.dimension_semantics<parallel>], iteration_bounds = array<i64: 2>, scalar_prefetch = 0 : i64, scratch_operands = 0 : i64, tpu.core_type = #tpu.core_type<tc>, window_params = [{transform_indices = @transform_0, window_bounds = array<i64: 256, 368>}, {pipeline_mode = #tpu.pipeline_mode<synchronous>, transform_indices = @transform_1, window_bounds = array<i64: 368, 128>}, {pipeline_mode = #tpu.pipeline_mode<synchronous>, transform_indices = @transform_2, window_bounds = array<i64: 1, 128>}, {pipeline_mode = #tpu.pipeline_mode<synchronous>, transform_indices = @transform_3, window_bounds = array<i64: 1, 128>}, {transform_indices = @transform_4, window_bounds = array<i64: 256, 128>}]} {
    %c0 = arith.constant 0 : index
    %c0_0 = arith.constant 0 : index
    %0 = vector.load %arg1[%c0, %c0_0] : memref<256x368xbf16, #tpu.memory_space<vmem>>, vector<256x368xbf16>
    %c0_1 = arith.constant 0 : index
    %c0_2 = arith.constant 0 : index
    %1 = vector.load %arg2[%c0_1, %c0_2] : memref<368x128xbf16, #tpu.memory_space<vmem>>, vector<368x128xbf16>
    %cst = arith.constant dense<0.000000e+00> : vector<256x128xf32>
    %2 = tpu.matmul %0, %1, %cst {dimension_numbers = #tpu.dot_dimension_numbers<[1], [0], [0], [1], [0, 0, 1, 1], [], []>} : vector<256x368xbf16>, vector<368x128xbf16>, vector<256x128xf32> -> vector<256x128xf32>
    %c0_3 = arith.constant 0 : index
    %c0_4 = arith.constant 0 : index
    %3 = vector.load %arg3[%c0_3, %c0_4] : memref<1x128xf32, #tpu.memory_space<vmem>>, vector<1x128xf32>
    %4 = vector.broadcast %3 : vector<1x128xf32> to vector<256x128xf32>
    %5 = arith.mulf %2, %4 : vector<256x128xf32>
    %c0_5 = arith.constant 0 : index
    %c0_6 = arith.constant 0 : index
    %6 = vector.load %arg4[%c0_5, %c0_6] : memref<1x128xf32, #tpu.memory_space<vmem>>, vector<1x128xf32>
    %7 = vector.broadcast %6 : vector<1x128xf32> to vector<256x128xf32>
    %8 = arith.addf %5, %7 : vector<256x128xf32>
    %cst_7 = arith.constant 0.000000e+00 : f32
    %9 = vector.broadcast %cst_7 : f32 to vector<256x128xf32>
    %10 = arith.maximumf %8, %9 : vector<256x128xf32>
    %11 = arith.truncf %10 : vector<256x128xf32> to vector<256x128xbf16>
    %c0_8 = arith.constant 0 : index
    %c0_9 = arith.constant 0 : index
    %12 = vector.load %arg5[%c0_8, %c0_9] : memref<256x128xbf16, #tpu.memory_space<vmem>>, vector<256x128xbf16>
    tpu.vector_store %arg5[%c0_8, %c0_9], %11 {strides = array<i32>} : memref<256x128xbf16, #tpu.memory_space<vmem>>, vector<256x128xbf16>,
    return
  }
  func.func @transform_0(%arg0: i32) -> (i32, i32) {
    %c0_i32 = arith.constant 0 : i32
    %c0_i32_0 = arith.constant 0 : i32
    return %arg0, %c0_i32 : i32, i32
  }
  func.func @transform_1(%arg0: i32) -> (i32, i32) {
    %c0_i32 = arith.constant 0 : i32
    %c0_i32_0 = arith.constant 0 : i32
    %c0_i32_1 = arith.constant 0 : i32
    return %c0_i32, %c0_i32_0 : i32, i32
  }
  func.func @transform_2(%arg0: i32) -> (i32, i32) {
    %c0_i32 = arith.constant 0 : i32
    %c0_i32_0 = arith.constant 0 : i32
    %c0_i32_1 = arith.constant 0 : i32
    return %c0_i32, %c0_i32_0 : i32, i32
  }
  func.func @transform_3(%arg0: i32) -> (i32, i32) {
    %c0_i32 = arith.constant 0 : i32
    %c0_i32_0 = arith.constant 0 : i32
    %c0_i32_1 = arith.constant 0 : i32
    return %c0_i32, %c0_i32_0 : i32, i32
  }
  func.func @transform_4(%arg0: i32) -> (i32, i32) {
    %c0_i32 = arith.constant 0 : i32
    %c0_i32_0 = arith.constant 0 : i32
    return %arg0, %c0_i32 : i32, i32
  }
}

module attributes {stable_mosaic.version = 11 : i64} {
  func.func @_conv_mm_kernel(%arg0: i32, %arg1: memref<256x144xbf16, #tpu.memory_space<vmem>>, %arg2: memref<144x128xbf16, #tpu.memory_space<vmem>>, %arg3: memref<1x128xf32, #tpu.memory_space<vmem>>, %arg4: memref<1x128xf32, #tpu.memory_space<vmem>>, %arg5: memref<256x128xbf16, #tpu.memory_space<vmem>>) attributes {dimension_semantics = [#tpu.dimension_semantics<parallel>], iteration_bounds = array<i64: 2>, scalar_prefetch = 0 : i64, scratch_operands = 0 : i64, tpu.core_type = #tpu.core_type<tc>, window_params = [{transform_indices = @transform_0, window_bounds = array<i64: 256, 144>}, {pipeline_mode = #tpu.pipeline_mode<synchronous>, transform_indices = @transform_1, window_bounds = array<i64: 144, 128>}, {pipeline_mode = #tpu.pipeline_mode<synchronous>, transform_indices = @transform_2, window_bounds = array<i64: 1, 128>}, {pipeline_mode = #tpu.pipeline_mode<synchronous>, transform_indices = @transform_3, window_bounds = array<i64: 1, 128>}, {transform_indices = @transform_4, window_bounds = array<i64: 256, 128>}]} {
    %c0 = arith.constant 0 : index
    %c0_0 = arith.constant 0 : index
    %0 = vector.load %arg1[%c0, %c0_0] : memref<256x144xbf16, #tpu.memory_space<vmem>>, vector<256x144xbf16>
    %c0_1 = arith.constant 0 : index
    %c0_2 = arith.constant 0 : index
    %1 = vector.load %arg2[%c0_1, %c0_2] : memref<144x128xbf16, #tpu.memory_space<vmem>>, vector<144x128xbf16>
    %cst = arith.constant dense<0.000000e+00> : vector<256x128xf32>
    %2 = tpu.matmul %0, %1, %cst {dimension_numbers = #tpu.dot_dimension_numbers<[1], [0], [0], [1], [0, 0, 1, 1], [], []>} : vector<256x144xbf16>, vector<144x128xbf16>, vector<256x128xf32> -> vector<256x128xf32>
    %c0_3 = arith.constant 0 : index
    %c0_4 = arith.constant 0 : index
    %3 = vector.load %arg3[%c0_3, %c0_4] : memref<1x128xf32, #tpu.memory_space<vmem>>, vector<1x128xf32>
    %4 = vector.broadcast %3 : vector<1x128xf32> to vector<256x128xf32>
    %5 = arith.mulf %2, %4 : vector<256x128xf32>
    %c0_5 = arith.constant 0 : index
    %c0_6 = arith.constant 0 : index
    %6 = vector.load %arg4[%c0_5, %c0_6] : memref<1x128xf32, #tpu.memory_space<vmem>>, vector<1x128xf32>
    %7 = vector.broadcast %6 : vector<1x128xf32> to vector<256x128xf32>
    %8 = arith.addf %5, %7 : vector<256x128xf32>
    %cst_7 = arith.constant 0.000000e+00 : f32
    %9 = vector.broadcast %cst_7 : f32 to vector<256x128xf32>
    %10 = arith.maximumf %8, %9 : vector<256x128xf32>
    %11 = arith.truncf %10 : vector<256x128xf32> to vector<256x128xbf16>
    %c0_8 = arith.constant 0 : index
    %c0_9 = arith.constant 0 : index
    %12 = vector.load %arg5[%c0_8, %c0_9] : memref<256x128xbf16, #tpu.memory_space<vmem>>, vector<256x128xbf16>
    tpu.vector_store %arg5[%c0_8, %c0_9], %11 {strides = array<i32>} : memref<256x128xbf16, #tpu.memory_space<vmem>>, vector<256x128xbf16>,
    return
  }
  func.func @transform_0(%arg0: i32) -> (i32, i32) {
    %c0_i32 = arith.constant 0 : i32
    %c0_i32_0 = arith.constant 0 : i32
    return %arg0, %c0_i32 : i32, i32
  }
  func.func @transform_1(%arg0: i32) -> (i32, i32) {
    %c0_i32 = arith.constant 0 : i32
    %c0_i32_0 = arith.constant 0 : i32
    %c0_i32_1 = arith.constant 0 : i32
    return %c0_i32, %c0_i32_0 : i32, i32
  }
  func.func @transform_2(%arg0: i32) -> (i32, i32) {
    %c0_i32 = arith.constant 0 : i32
    %c0_i32_0 = arith.constant 0 : i32
    %c0_i32_1 = arith.constant 0 : i32
    return %c0_i32, %c0_i32_0 : i32, i32
  }
  func.func @transform_3(%arg0: i32) -> (i32, i32) {
    %c0_i32 = arith.constant 0 : i32
    %c0_i32_0 = arith.constant 0 : i32
    %c0_i32_1 = arith.constant 0 : i32
    return %c0_i32, %c0_i32_0 : i32, i32
  }
  func.func @transform_4(%arg0: i32) -> (i32, i32) {
    %c0_i32 = arith.constant 0 : i32
    %c0_i32_0 = arith.constant 0 : i32
    return %arg0, %c0_i32 : i32, i32
  }
}

module attributes {stable_mosaic.version = 11 : i64} {
  func.func @_conv_mm_kernel(%arg0: i32, %arg1: memref<512x144xbf16, #tpu.memory_space<vmem>>, %arg2: memref<144x128xbf16, #tpu.memory_space<vmem>>, %arg3: memref<1x128xf32, #tpu.memory_space<vmem>>, %arg4: memref<1x128xf32, #tpu.memory_space<vmem>>, %arg5: memref<512x128xbf16, #tpu.memory_space<vmem>>) attributes {dimension_semantics = [#tpu.dimension_semantics<parallel>], iteration_bounds = array<i64: 4>, scalar_prefetch = 0 : i64, scratch_operands = 0 : i64, tpu.core_type = #tpu.core_type<tc>, window_params = [{transform_indices = @transform_0, window_bounds = array<i64: 512, 144>}, {pipeline_mode = #tpu.pipeline_mode<synchronous>, transform_indices = @transform_1, window_bounds = array<i64: 144, 128>}, {pipeline_mode = #tpu.pipeline_mode<synchronous>, transform_indices = @transform_2, window_bounds = array<i64: 1, 128>}, {pipeline_mode = #tpu.pipeline_mode<synchronous>, transform_indices = @transform_3, window_bounds = array<i64: 1, 128>}, {transform_indices = @transform_4, window_bounds = array<i64: 512, 128>}]} {
    %c0 = arith.constant 0 : index
    %c0_0 = arith.constant 0 : index
    %0 = vector.load %arg1[%c0, %c0_0] : memref<512x144xbf16, #tpu.memory_space<vmem>>, vector<512x144xbf16>
    %c0_1 = arith.constant 0 : index
    %c0_2 = arith.constant 0 : index
    %1 = vector.load %arg2[%c0_1, %c0_2] : memref<144x128xbf16, #tpu.memory_space<vmem>>, vector<144x128xbf16>
    %cst = arith.constant dense<0.000000e+00> : vector<512x128xf32>
    %2 = tpu.matmul %0, %1, %cst {dimension_numbers = #tpu.dot_dimension_numbers<[1], [0], [0], [1], [0, 0, 1, 1], [], []>} : vector<512x144xbf16>, vector<144x128xbf16>, vector<512x128xf32> -> vector<512x128xf32>
    %c0_3 = arith.constant 0 : index
    %c0_4 = arith.constant 0 : index
    %3 = vector.load %arg3[%c0_3, %c0_4] : memref<1x128xf32, #tpu.memory_space<vmem>>, vector<1x128xf32>
    %4 = vector.broadcast %3 : vector<1x128xf32> to vector<512x128xf32>
    %5 = arith.mulf %2, %4 : vector<512x128xf32>
    %c0_5 = arith.constant 0 : index
    %c0_6 = arith.constant 0 : index
    %6 = vector.load %arg4[%c0_5, %c0_6] : memref<1x128xf32, #tpu.memory_space<vmem>>, vector<1x128xf32>
    %7 = vector.broadcast %6 : vector<1x128xf32> to vector<512x128xf32>
    %8 = arith.addf %5, %7 : vector<512x128xf32>
    %cst_7 = arith.constant 0.000000e+00 : f32
    %9 = vector.broadcast %cst_7 : f32 to vector<512x128xf32>
    %10 = arith.maximumf %8, %9 : vector<512x128xf32>
    %11 = arith.truncf %10 : vector<512x128xf32> to vector<512x128xbf16>
    %c0_8 = arith.constant 0 : index
    %c0_9 = arith.constant 0 : index
    %12 = vector.load %arg5[%c0_8, %c0_9] : memref<512x128xbf16, #tpu.memory_space<vmem>>, vector<512x128xbf16>
    tpu.vector_store %arg5[%c0_8, %c0_9], %11 {strides = array<i32>} : memref<512x128xbf16, #tpu.memory_space<vmem>>, vector<512x128xbf16>,
    return
  }
  func.func @transform_0(%arg0: i32) -> (i32, i32) {
    %c0_i32 = arith.constant 0 : i32
    %c0_i32_0 = arith.constant 0 : i32
    return %arg0, %c0_i32 : i32, i32
  }
  func.func @transform_1(%arg0: i32) -> (i32, i32) {
    %c0_i32 = arith.constant 0 : i32
    %c0_i32_0 = arith.constant 0 : i32
    %c0_i32_1 = arith.constant 0 : i32
    return %c0_i32, %c0_i32_0 : i32, i32
  }
  func.func @transform_2(%arg0: i32) -> (i32, i32) {
    %c0_i32 = arith.constant 0 : i32
    %c0_i32_0 = arith.constant 0 : i32
    %c0_i32_1 = arith.constant 0 : i32
    return %c0_i32, %c0_i32_0 : i32, i32
  }
  func.func @transform_3(%arg0: i32) -> (i32, i32) {
    %c0_i32 = arith.constant 0 : i32
    %c0_i32_0 = arith.constant 0 : i32
    %c0_i32_1 = arith.constant 0 : i32
    return %c0_i32, %c0_i32_0 : i32, i32
  }
  func.func @transform_4(%arg0: i32) -> (i32, i32) {
    %c0_i32 = arith.constant 0 : i32
    %c0_i32_0 = arith.constant 0 : i32
    return %arg0, %c0_i32 : i32, i32
  }
}

module attributes {stable_mosaic.version = 11 : i64} {
  func.func @_conv_mm_kernel(%arg0: i32, %arg1: memref<512x80xbf16, #tpu.memory_space<vmem>>, %arg2: memref<80x128xbf16, #tpu.memory_space<vmem>>, %arg3: memref<1x128xf32, #tpu.memory_space<vmem>>, %arg4: memref<1x128xf32, #tpu.memory_space<vmem>>, %arg5: memref<512x128xbf16, #tpu.memory_space<vmem>>) attributes {dimension_semantics = [#tpu.dimension_semantics<parallel>], iteration_bounds = array<i64: 4>, scalar_prefetch = 0 : i64, scratch_operands = 0 : i64, tpu.core_type = #tpu.core_type<tc>, window_params = [{transform_indices = @transform_0, window_bounds = array<i64: 512, 80>}, {pipeline_mode = #tpu.pipeline_mode<synchronous>, transform_indices = @transform_1, window_bounds = array<i64: 80, 128>}, {pipeline_mode = #tpu.pipeline_mode<synchronous>, transform_indices = @transform_2, window_bounds = array<i64: 1, 128>}, {pipeline_mode = #tpu.pipeline_mode<synchronous>, transform_indices = @transform_3, window_bounds = array<i64: 1, 128>}, {transform_indices = @transform_4, window_bounds = array<i64: 512, 128>}]} {
    %c0 = arith.constant 0 : index
    %c0_0 = arith.constant 0 : index
    %0 = vector.load %arg1[%c0, %c0_0] : memref<512x80xbf16, #tpu.memory_space<vmem>>, vector<512x80xbf16>
    %c0_1 = arith.constant 0 : index
    %c0_2 = arith.constant 0 : index
    %1 = vector.load %arg2[%c0_1, %c0_2] : memref<80x128xbf16, #tpu.memory_space<vmem>>, vector<80x128xbf16>
    %cst = arith.constant dense<0.000000e+00> : vector<512x128xf32>
    %2 = tpu.matmul %0, %1, %cst {dimension_numbers = #tpu.dot_dimension_numbers<[1], [0], [0], [1], [0, 0, 1, 1], [], []>} : vector<512x80xbf16>, vector<80x128xbf16>, vector<512x128xf32> -> vector<512x128xf32>
    %c0_3 = arith.constant 0 : index
    %c0_4 = arith.constant 0 : index
    %3 = vector.load %arg3[%c0_3, %c0_4] : memref<1x128xf32, #tpu.memory_space<vmem>>, vector<1x128xf32>
    %4 = vector.broadcast %3 : vector<1x128xf32> to vector<512x128xf32>
    %5 = arith.mulf %2, %4 : vector<512x128xf32>
    %c0_5 = arith.constant 0 : index
    %c0_6 = arith.constant 0 : index
    %6 = vector.load %arg4[%c0_5, %c0_6] : memref<1x128xf32, #tpu.memory_space<vmem>>, vector<1x128xf32>
    %7 = vector.broadcast %6 : vector<1x128xf32> to vector<512x128xf32>
    %8 = arith.addf %5, %7 : vector<512x128xf32>
    %cst_7 = arith.constant 0.000000e+00 : f32
    %9 = vector.broadcast %cst_7 : f32 to vector<512x128xf32>
    %10 = arith.maximumf %8, %9 : vector<512x128xf32>
    %11 = arith.truncf %10 : vector<512x128xf32> to vector<512x128xbf16>
    %c0_8 = arith.constant 0 : index
    %c0_9 = arith.constant 0 : index
    %12 = vector.load %arg5[%c0_8, %c0_9] : memref<512x128xbf16, #tpu.memory_space<vmem>>, vector<512x128xbf16>
    tpu.vector_store %arg5[%c0_8, %c0_9], %11 {strides = array<i32>} : memref<512x128xbf16, #tpu.memory_space<vmem>>, vector<512x128xbf16>,
    return
  }
  func.func @transform_0(%arg0: i32) -> (i32, i32) {
    %c0_i32 = arith.constant 0 : i32
    %c0_i32_0 = arith.constant 0 : i32
    return %arg0, %c0_i32 : i32, i32
  }
  func.func @transform_1(%arg0: i32) -> (i32, i32) {
    %c0_i32 = arith.constant 0 : i32
    %c0_i32_0 = arith.constant 0 : i32
    %c0_i32_1 = arith.constant 0 : i32
    return %c0_i32, %c0_i32_0 : i32, i32
  }
  func.func @transform_2(%arg0: i32) -> (i32, i32) {
    %c0_i32 = arith.constant 0 : i32
    %c0_i32_0 = arith.constant 0 : i32
    %c0_i32_1 = arith.constant 0 : i32
    return %c0_i32, %c0_i32_0 : i32, i32
  }
  func.func @transform_3(%arg0: i32) -> (i32, i32) {
    %c0_i32 = arith.constant 0 : i32
    %c0_i32_0 = arith.constant 0 : i32
    %c0_i32_1 = arith.constant 0 : i32
    return %c0_i32, %c0_i32_0 : i32, i32
  }
  func.func @transform_4(%arg0: i32) -> (i32, i32) {
    %c0_i32 = arith.constant 0 : i32
    %c0_i32_0 = arith.constant 0 : i32
    return %arg0, %c0_i32 : i32, i32
  }
}

module attributes {stable_mosaic.version = 11 : i64} {
  func.func @_conv_mm_kernel(%arg0: i32, %arg1: memref<512x80xbf16, #tpu.memory_space<vmem>>, %arg2: memref<80x128xbf16, #tpu.memory_space<vmem>>, %arg3: memref<1x128xf32, #tpu.memory_space<vmem>>, %arg4: memref<1x128xf32, #tpu.memory_space<vmem>>, %arg5: memref<512x128xbf16, #tpu.memory_space<vmem>>) attributes {dimension_semantics = [#tpu.dimension_semantics<parallel>], iteration_bounds = array<i64: 4>, scalar_prefetch = 0 : i64, scratch_operands = 0 : i64, tpu.core_type = #tpu.core_type<tc>, window_params = [{transform_indices = @transform_0, window_bounds = array<i64: 512, 80>}, {pipeline_mode = #tpu.pipeline_mode<synchronous>, transform_indices = @transform_1, window_bounds = array<i64: 80, 128>}, {pipeline_mode = #tpu.pipeline_mode<synchronous>, transform_indices = @transform_2, window_bounds = array<i64: 1, 128>}, {pipeline_mode = #tpu.pipeline_mode<synchronous>, transform_indices = @transform_3, window_bounds = array<i64: 1, 128>}, {transform_indices = @transform_4, window_bounds = array<i64: 512, 128>}]} {
    %c0 = arith.constant 0 : index
    %c0_0 = arith.constant 0 : index
    %0 = vector.load %arg1[%c0, %c0_0] : memref<512x80xbf16, #tpu.memory_space<vmem>>, vector<512x80xbf16>
    %c0_1 = arith.constant 0 : index
    %c0_2 = arith.constant 0 : index
    %1 = vector.load %arg2[%c0_1, %c0_2] : memref<80x128xbf16, #tpu.memory_space<vmem>>, vector<80x128xbf16>
    %cst = arith.constant dense<0.000000e+00> : vector<512x128xf32>
    %2 = tpu.matmul %0, %1, %cst {dimension_numbers = #tpu.dot_dimension_numbers<[1], [0], [0], [1], [0, 0, 1, 1], [], []>} : vector<512x80xbf16>, vector<80x128xbf16>, vector<512x128xf32> -> vector<512x128xf32>
    %c0_3 = arith.constant 0 : index
    %c0_4 = arith.constant 0 : index
    %3 = vector.load %arg3[%c0_3, %c0_4] : memref<1x128xf32, #tpu.memory_space<vmem>>, vector<1x128xf32>
    %4 = vector.broadcast %3 : vector<1x128xf32> to vector<512x128xf32>
    %5 = arith.mulf %2, %4 : vector<512x128xf32>
    %c0_5 = arith.constant 0 : index
    %c0_6 = arith.constant 0 : index
    %6 = vector.load %arg4[%c0_5, %c0_6] : memref<1x128xf32, #tpu.memory_space<vmem>>, vector<1x128xf32>
    %7 = vector.broadcast %6 : vector<1x128xf32> to vector<512x128xf32>
    %8 = arith.addf %5, %7 : vector<512x128xf32>
    %9 = arith.truncf %8 : vector<512x128xf32> to vector<512x128xbf16>
    %c0_7 = arith.constant 0 : index
    %c0_8 = arith.constant 0 : index
    %10 = vector.load %arg5[%c0_7, %c0_8] : memref<512x128xbf16, #tpu.memory_space<vmem>>, vector<512x128xbf16>
    tpu.vector_store %arg5[%c0_7, %c0_8], %9 {strides = array<i32>} : memref<512x128xbf16, #tpu.memory_space<vmem>>, vector<512x128xbf16>,
    return
  }
  func.func @transform_0(%arg0: i32) -> (i32, i32) {
    %c0_i32 = arith.constant 0 : i32
    %c0_i32_0 = arith.constant 0 : i32
    return %arg0, %c0_i32 : i32, i32
  }
  func.func @transform_1(%arg0: i32) -> (i32, i32) {
    %c0_i32 = arith.constant 0 : i32
    %c0_i32_0 = arith.constant 0 : i32
    %c0_i32_1 = arith.constant 0 : i32
    return %c0_i32, %c0_i32_0 : i32, i32
  }
  func.func @transform_2(%arg0: i32) -> (i32, i32) {
    %c0_i32 = arith.constant 0 : i32
    %c0_i32_0 = arith.constant 0 : i32
    %c0_i32_1 = arith.constant 0 : i32
    return %c0_i32, %c0_i32_0 : i32, i32
  }
  func.func @transform_3(%arg0: i32) -> (i32, i32) {
    %c0_i32 = arith.constant 0 : i32
    %c0_i32_0 = arith.constant 0 : i32
    %c0_i32_1 = arith.constant 0 : i32
    return %c0_i32, %c0_i32_0 : i32, i32
  }
  func.func @transform_4(%arg0: i32) -> (i32, i32) {
    %c0_i32 = arith.constant 0 : i32
    %c0_i32_0 = arith.constant 0 : i32
    return %arg0, %c0_i32 : i32, i32
  }
}

</mosaic_0001>

<llo_original>
// kernel: unet_seq_forward.11
$region0: #{unet_seq_forward.11}
  #allocation0 [shape = 'u32[]', space=smem, size = 0x4, offset = 0x4, fixed_abs, tag = 'smem constant byte address 0x4 - core index']
  #allocation1 [shape = 'u32[144,128]{1,0:T(1,128)}', space=vmem, size = 0x12000, scoped, tag = 'internal scratch']
  %s0 = inlined_call_operand.vmem [shape: bf16[2048,16], index: 0, kind: input, shape index: {}]
  %s1 = inlined_call_operand.vmem [shape: bf16[16,128], index: 1, kind: input, shape index: {}]
  %s2 = inlined_call_operand.vmem [shape: f32[1,128], index: 2, kind: input, shape index: {}]
  %s3 = inlined_call_operand.vmem [shape: f32[1,128], index: 3, kind: input, shape index: {}]
  %s4 = inlined_call_operand.vmem [shape: bf16[2048,128], index: 4, kind: output, shape index: {}]
  %s5 = sld [smem:[#allocation0]]
  $region49: #{unet_seq_forward.11} parent=0
    _
  %s7 = ssub.s32 1, %s5
  %s8 = scalar_select 0, %s7, %s5
  loop: start=0, step=1, limit=6
  $region2: #{unet_seq_forward.11} parent=0 // loop_pre_header
    _
  $region3: #{unet_seq_forward.11} parent=0 // loop_header
    %s10 = sphi 0, %s14
    %p11 = scmp.ge.s32.totalorder %s10, 6
    %s20 = sphi 0, %s22
    %s23 = sphi 0, %s20
    %s24 = sphi 0, %s23
    %s40 = sphi 0, %s24
    %s44 = sphi 0, %s44
    %s46 = sphi 0, %s44
    %s47 = sphi 0, %s46
    %s61 = sphi 0, %s47
    %s65 = sphi 0, %s65
    %s67 = sphi 0, %s65
    %s68 = sphi 0, %s67
    %s82 = sphi 0, %s68
    %s86 = sphi 0, %s86
    %s88 = sphi 0, %s86
    %s89 = sphi 0, %s88
    %s103 = sphi 0, %s89
    %s109 = sphi 0, %s111
    %s112 = sphi 0, %s109
    %s113 = sphi 0, %s112
    %s129 = sphi 0, %s113
  $region4: #{unet_seq_forward.11} parent=0 // loop_header_branch
    %13 = sbr.rel (%p11) target = $region8
  $region5: #{unet_seq_forward.11} parent=0 // loop_body
    %s15 = ssub.s32 %s10, 1
    %s16 = ssub.s32 %s10, 2
    %s17 = sadd.s32 %s10, 1
    %s18 = ssub.s32 %s10, %s17
    %p19 = scmp.eq.s32.totalorder %s18, 0
    %s21 = sadd.s32 %s20, 1
    %s22 = scalar_select %p19, %s20, %s21
    %p25 = pneg %p19
    %p26 = scmp.eq.s32.totalorder %s10, 3
    %p27 = por %p25, %p26
    %p28 = scmp.ne.s32.totalorder %s20, %s23
    %p29 = scmp.eq.s32.totalorder %s10, 0
    %p30 = por %p28, %p29
    %p31 = scmp.ne.s32.totalorder %s20, %s23
    %p32 = scmp.eq.s32.totalorder %s15, 3
    %p33 = por %p31, %p32
    %p34 = scmp.ne.s32.totalorder %s23, %s24
    %p35 = scmp.eq.s32.totalorder %s15, 0
    %p36 = por %p34, %p35
    %p37 = scmp.ne.s32.totalorder %s23, %s24
    %p38 = scmp.eq.s32.totalorder %s16, 3
    %p39 = por %p37, %p38
    %p41 = scmp.ne.s32.totalorder %s24, %s40
    %p42 = scmp.eq.s32.totalorder %s16, 0
    %p43 = por %p41, %p42
    %s45 = sadd.s32 %s44, 1
    %p48 = scmp.eq.s32.totalorder %s10, 3
    %p49 = scmp.ne.s32.totalorder %s44, %s46
    %p50 = scmp.eq.s32.totalorder %s10, 0
    %p51 = por %p49, %p50
    %p52 = scmp.ne.s32.totalorder %s44, %s46
    %p53 = scmp.eq.s32.totalorder %s15, 3
    %p54 = por %p52, %p53
    %p55 = scmp.ne.s32.totalorder %s46, %s47
    %p56 = scmp.eq.s32.totalorder %s15, 0
    %p57 = por %p55, %p56
    %p58 = scmp.ne.s32.totalorder %s46, %s47
    %p59 = scmp.eq.s32.totalorder %s16, 3
    %p60 = por %p58, %p59
    %p62 = scmp.ne.s32.totalorder %s47, %s61
    %p63 = scmp.eq.s32.totalorder %s16, 0
    %p64 = por %p62, %p63
    %s66 = sadd.s32 %s65, 1
    %p69 = scmp.eq.s32.totalorder %s10, 3
    %p70 = scmp.ne.s32.totalorder %s65, %s67
    %p71 = scmp.eq.s32.totalorder %s10, 0
    %p72 = por %p70, %p71
    %p73 = scmp.ne.s32.totalorder %s65, %s67
    %p74 = scmp.eq.s32.totalorder %s15, 3
    %p75 = por %p73, %p74
    %p76 = scmp.ne.s32.totalorder %s67, %s68
    %p77 = scmp.eq.s32.totalorder %s15, 0
    %p78 = por %p76, %p77
    %p79 = scmp.ne.s32.totalorder %s67, %s68
    %p80 = scmp.eq.s32.totalorder %s16, 3
    %p81 = por %p79, %p80
    %p83 = scmp.ne.s32.totalorder %s68, %s82
    %p84 = scmp.eq.s32.totalorder %s16, 0
    %p85 = por %p83, %p84
    %s87 = sadd.s32 %s86, 1
    %p90 = scmp.eq.s32.totalorder %s10, 3
    %p91 = scmp.ne.s32.totalorder %s86, %s88
    %p92 = scmp.eq.s32.totalorder %s10, 0
    %p93 = por %p91, %p92
    %p94 = scmp.ne.s32.totalorder %s86, %s88
    %p95 = scmp.eq.s32.totalorder %s15, 3
    %p96 = por %p94, %p95
    %p97 = scmp.ne.s32.totalorder %s88, %s89
    %p98 = scmp.eq.s32.totalorder %s15, 0
    %p99 = por %p97, %p98
    %p100 = scmp.ne.s32.totalorder %s88, %s89
    %p101 = scmp.eq.s32.totalorder %s16, 3
    %p102 = por %p100, %p101
    %p104 = scmp.ne.s32.totalorder %s89, %s103
    %p105 = scmp.eq.s32.totalorder %s16, 0
    %p106 = por %p104, %p105
    %s107 = ssub.s32 %s10, %s17
    %p108 = scmp.eq.s32.totalorder %s107, 0
    %s110 = sadd.s32 %s109, 1
    %s111 = scalar_select %p108, %s109, %s110
    %p114 = pneg %p108
    %p115 = scmp.eq.s32.totalorder %s10, 3
    %p116 = por %p114, %p115
    %p117 = scmp.ne.s32.totalorder %s109, %s112
    %p118 = scmp.eq.s32.totalorder %s10, 0
    %p119 = por %p117, %p118
    %p120 = scmp.ne.s32.totalorder %s109, %s112
    %p121 = scmp.eq.s32.totalorder %s15, 3
    %p122 = por %p120, %p121
    %p123 = scmp.ne.s32.totalorder %s112, %s113
    %p124 = scmp.eq.s32.totalorder %s15, 0
    %p125 = por %p123, %p124
    %p126 = scmp.ne.s32.totalorder %s112, %s113
    %p127 = scmp.eq.s32.totalorder %s16, 3
    %p128 = por %p126, %p127
    %p130 = scmp.ne.s32.totalorder %s113, %s129
    %p131 = scmp.eq.s32.totalorder %s16, 0
    %p132 = por %p130, %p131
    %p133 = scmp.le.s32.totalorder 1, %s10
    %p134 = scmp.lt.s32.totalorder %s10, 5
    %p135 = pnand %p133, %p134
    %p136 = pneg %p135
    // Predicated region
    $region9: #{unet_seq_forward.11} parent=5 // pred_check
      _
    $region10: #{unet_seq_forward.11} parent=5 // pred_check_branch
      %138 = sbr.rel (%p135) target = $region12
    $region11: #{unet_seq_forward.11} parent=5 // pred_region
      %s139 = ssub.s32 %s10, 1
      // Predicated region
      $region13: #{unet_seq_forward.11} parent=11 // pred_check
        %p140 = pneg %p57
      $region14: #{unet_seq_forward.11} parent=11 // pred_check_branch
        %142 = sbr.rel (%p140) target = $region16
      $region15: #{unet_seq_forward.11} parent=11 // pred_region
        _
      $region16: #{unet_seq_forward.11} parent=11 // pred_fallthru
        _
      // Predicated region
      $region17: #{unet_seq_forward.11} parent=11 // pred_check
        %p143 = pneg %p78
      $region18: #{unet_seq_forward.11} parent=11 // pred_check_branch
        %145 = sbr.rel (%p143) target = $region20
      $region19: #{unet_seq_forward.11} parent=11 // pred_region
        _
      $region20: #{unet_seq_forward.11} parent=11 // pred_fallthru
        _
      // Predicated region
      $region21: #{unet_seq_forward.11} parent=11 // pred_check
        %p146 = pneg %p99
      $region22: #{unet_seq_forward.11} parent=11 // pred_check_branch
        %148 = sbr.rel (%p146) target = $region24
      $region23: #{unet_seq_forward.11} parent=11 // pred_region
        _
      $region24: #{unet_seq_forward.11} parent=11 // pred_fallthru
        _
    $region12: #{unet_seq_forward.11} parent=5 // pred_fallthru
      _
    %p149 = scmp.lt.s32.totalorder %s10, 4
    // Predicated region
    $region25: #{unet_seq_forward.11} parent=5 // pred_check
      %p150 = pneg %p149
    $region26: #{unet_seq_forward.11} parent=5 // pred_check_branch
      %152 = sbr.rel (%p150) target = $region28
    $region27: #{unet_seq_forward.11} parent=5 // pred_region
      // Predicated region
      $region29: #{unet_seq_forward.11} parent=27 // pred_check
        %p153 = pneg %p30
      $region30: #{unet_seq_forward.11} parent=27 // pred_check_branch
        %155 = sbr.rel (%p153) target = $region32
      $region31: #{unet_seq_forward.11} parent=27 // pred_region
        %s156 = smul.u32 64, %s10
        %p157 = scmp.lt.s32.totalorder %s156, 255
        %s158 = scalar_select %p157, %s156, 255
        %s159 = smul.addr %s158, 4
        %s160 = scalar_lea.vmem %s0, %s159
        %s161 = smul.u32 64, %s10
      $region32: #{unet_seq_forward.11} parent=27 // pred_fallthru
        _
    $region28: #{unet_seq_forward.11} parent=5 // pred_fallthru
      _
    %p162 = scmp.le.s32.totalorder 1, %s10
    %p163 = scmp.lt.s32.totalorder %s10, 5
    %p164 = pnand %p162, %p163
    %p165 = pneg %p164
    // Predicated region
    $region33: #{unet_seq_forward.11} parent=5 // pred_check
      _
    $region34: #{unet_seq_forward.11} parent=5 // pred_check_branch
      %167 = sbr.rel (%p164) target = $region36
    $region35: #{unet_seq_forward.11} parent=5 // pred_region
      %s168 = ssub.s32 %s10, 1
      %s169 = smul.u32 64, %s15
      %p170 = scmp.lt.s32.totalorder %s169, 255
      %s171 = scalar_select %p170, %s169, 255
      %s172 = smul.addr %s171, 4
      %s173 = scalar_lea.vmem %s0, %s172
      %p174 = pneg %p36
      %p175 = pneg %p33
      %p176 = pneg %p57
      %p177 = pneg %p54
      %p178 = pneg %p78
      %p179 = pneg %p75
      %p180 = pneg %p99
      %p181 = pneg %p96
      %p182 = pneg %p125
      %p183 = pneg %p122
      %s184 = smul.u32 64, %s15
      %p185 = scmp.lt.s32.totalorder %s184, 255
      %s186 = scalar_select %p185, %s184, 255
      %s187 = smul.addr %s186, 4
      %s188 = scalar_lea.vmem %s4, %s187
      %s189 = smul.u32 64, %s15
      %p190 = scmp.lt.s32.totalorder %s189, 255
      %s191 = scalar_select %p190, %s189, 255
      %s192 = smul.addr %s191, 4
      %s193 = scalar_lea.vmem %s0, %s192
      %s194 = smul.u32 64, %s15
      %s195 = smul.u32 64, %s15
      %p196 = scmp.lt.s32.totalorder %s195, 255
      %s197 = scalar_select %p196, %s195, 255
      %s198 = smul.addr %s197, 4
      %s199 = scalar_lea.vmem %s4, %s198
      %s200 = smul.u32 64, %s15
      %v202 = vld [vmem:[%s193] sm:$0xf]
      %v203 = vld [vmem:[%s193 + $0x4] sm:$0xf]
      %v204 = vld [vmem:[%s193 + $0x8] sm:$0xf]
      %v205 = vld [vmem:[%s193 + $0xc] sm:$0xf]
      %v206 = vld [vmem:[%s193 + $0x10] sm:$0xf]
      %v207 = vld [vmem:[%s193 + $0x14] sm:$0xf]
      %v208 = vld [vmem:[%s193 + $0x18] sm:$0xf]
      %v209 = vld [vmem:[%s193 + $0x1c] sm:$0xf]
      %v210 = vld [vmem:[%s193 + $0x20] sm:$0xf]
      %v211 = vld [vmem:[%s193 + $0x24] sm:$0xf]
      %v212 = vld [vmem:[%s193 + $0x28] sm:$0xf]
      %v213 = vld [vmem:[%s193 + $0x2c] sm:$0xf]
      %v214 = vld [vmem:[%s193 + $0x30] sm:$0xf]
      %v215 = vld [vmem:[%s193 + $0x34] sm:$0xf]
      %v216 = vld [vmem:[%s193 + $0x38] sm:$0xf]
      %v217 = vld [vmem:[%s193 + $0x3c] sm:$0xf]
      %v218 = vld [vmem:[%s193 + $0x40] sm:$0xf]
      %v219 = vld [vmem:[%s193 + $0x44] sm:$0xf]
      %v220 = vld [vmem:[%s193 + $0x48] sm:$0xf]
      %v221 = vld [vmem:[%s193 + $0x4c] sm:$0xf]
      %v222 = vld [vmem:[%s193 + $0x50] sm:$0xf]
      %v223 = vld [vmem:[%s193 + $0x54] sm:$0xf]
      %v224 = vld [vmem:[%s193 + $0x58] sm:$0xf]
      %v225 = vld [vmem:[%s193 + $0x5c] sm:$0xf]
      %v226 = vld [vmem:[%s193 + $0x60] sm:$0xf]
      %v227 = vld [vmem:[%s193 + $0x64] sm:$0xf]
      %v228 = vld [vmem:[%s193 + $0x68] sm:$0xf]
      %v229 = vld [vmem:[%s193 + $0x6c] sm:$0xf]
      %v230 = vld [vmem:[%s193 + $0x70] sm:$0xf]
      %v231 = vld [vmem:[%s193 + $0x74] sm:$0xf]
      %v232 = vld [vmem:[%s193 + $0x78] sm:$0xf]
      %v233 = vld [vmem:[%s193 + $0x7c] sm:$0xf]
      %v234 = vld [vmem:[%s193 + $0x80] sm:$0xf]
      %v235 = vld [vmem:[%s193 + $0x84] sm:$0xf]
      %v236 = vld [vmem:[%s193 + $0x88] sm:$0xf]
      %v237 = vld [vmem:[%s193 + $0x8c] sm:$0xf]
      %v238 = vld [vmem:[%s193 + $0x90] sm:$0xf]
      %v239 = vld [vmem:[%s193 + $0x94] sm:$0xf]
      %v240 = vld [vmem:[%s193 + $0x98] sm:$0xf]
      %v241 = vld [vmem:[%s193 + $0x9c] sm:$0xf]
      %v242 = vld [vmem:[%s193 + $0xa0] sm:$0xf]
      %v243 = vld [vmem:[%s193 + $0xa4] sm:$0xf]
      %v244 = vld [vmem:[%s193 + $0xa8] sm:$0xf]
      %v245 = vld [vmem:[%s193 + $0xac] sm:$0xf]
      %v246 = vld [vmem:[%s193 + $0xb0] sm:$0xf]
      %v247 = vld [vmem:[%s193 + $0xb4] sm:$0xf]
      %v248 = vld [vmem:[%s193 + $0xb8] sm:$0xf]
      %v249 = vld [vmem:[%s193 + $0xbc] sm:$0xf]
      %v250 = vld [vmem:[%s193 + $0xc0] sm:$0xf]
      %v251 = vld [vmem:[%s193 + $0xc4] sm:$0xf]
      %v252 = vld [vmem:[%s193 + $0xc8] sm:$0xf]
      %v253 = vld [vmem:[%s193 + $0xcc] sm:$0xf]
      %v254 = vld [vmem:[%s193 + $0xd0] sm:$0xf]
      %v255 = vld [vmem:[%s193 + $0xd4] sm:$0xf]
      %v256 = vld [vmem:[%s193 + $0xd8] sm:$0xf]
      %v257 = vld [vmem:[%s193 + $0xdc] sm:$0xf]
      %v258 = vld [vmem:[%s193 + $0xe0] sm:$0xf]
      %v259 = vld [vmem:[%s193 + $0xe4] sm:$0xf]
      %v260 = vld [vmem:[%s193 + $0xe8] sm:$0xf]
      %v261 = vld [vmem:[%s193 + $0xec] sm:$0xf]
      %v262 = vld [vmem:[%s193 + $0xf0] sm:$0xf]
      %v263 = vld [vmem:[%s193 + $0xf4] sm:$0xf]
      %v264 = vld [vmem:[%s193 + $0xf8] sm:$0xf]
      %v265 = vld [vmem:[%s193 + $0xfc] sm:$0xf]
      %v266 = vld [vmem:[%s1] sm:$0xf]
      %v267 = vld [vmem:[%s1 + $0x4] sm:$0xf]
      %v332 = vunpack.c.l.b16 %v202
      %v333 = vunpack.c.l.b16 %v203
      %v334 = vunpack.c.l.b16 %v204
      %v335 = vunpack.c.l.b16 %v205
      %v336 = vunpack.c.l.b16 %v206
      %v337 = vunpack.c.l.b16 %v207
      %v338 = vunpack.c.l.b16 %v208
      %v339 = vunpack.c.l.b16 %v209
      %v340 = vunpack.c.l.b16 %v210
      %v341 = vunpack.c.l.b16 %v211
      %v342 = vunpack.c.l.b16 %v212
      %v343 = vunpack.c.l.b16 %v213
      %v344 = vunpack.c.l.b16 %v214
      %v345 = vunpack.c.l.b16 %v215
      %v346 = vunpack.c.l.b16 %v216
      %v347 = vunpack.c.l.b16 %v217
      %v348 = vunpack.c.l.b16 %v218
      %v349 = vunpack.c.l.b16 %v219
      %v350 = vunpack.c.l.b16 %v220
      %v351 = vunpack.c.l.b16 %v221
      %v352 = vunpack.c.l.b16 %v222
      %v353 = vunpack.c.l.b16 %v223
      %v354 = vunpack.c.l.b16 %v224
      %v355 = vunpack.c.l.b16 %v225
      %v356 = vunpack.c.l.b16 %v226
      %v357 = vunpack.c.l.b16 %v227
      %v358 = vunpack.c.l.b16 %v228
      %v359 = vunpack.c.l.b16 %v229
      %v360 = vunpack.c.l.b16 %v230
      %v361 = vunpack.c.l.b16 %v231
      %v362 = vunpack.c.l.b16 %v232
      %v363 = vunpack.c.l.b16 %v233
      %v364 = vunpack.c.l.b16 %v234
      %v365 = vunpack.c.l.b16 %v235
      %v366 = vunpack.c.l.b16 %v236
      %v367 = vunpack.c.l.b16 %v237
      %v368 = vunpack.c.l.b16 %v238
      %v369 = vunpack.c.l.b16 %v239
      %v370 = vunpack.c.l.b16 %v240
      %v371 = vunpack.c.l.b16 %v241
      %v372 = vunpack.c.l.b16 %v242
      %v373 = vunpack.c.l.b16 %v243
      %v374 = vunpack.c.l.b16 %v244
      %v375 = vunpack.c.l.b16 %v245
      %v376 = vunpack.c.l.b16 %v246
      %v377 = vunpack.c.l.b16 %v247
      %v378 = vunpack.c.l.b16 %v248
      %v379 = vunpack.c.l.b16 %v249
      %v380 = vunpack.c.l.b16 %v250
      %v381 = vunpack.c.l.b16 %v251
      %v382 = vunpack.c.l.b16 %v252
      %v383 = vunpack.c.l.b16 %v253
      %v384 = vunpack.c.l.b16 %v254
      %v385 = vunpack.c.l.b16 %v255
      %v386 = vunpack.c.l.b16 %v256
      %v387 = vunpack.c.l.b16 %v257
      %v388 = vunpack.c.l.b16 %v258
      %v389 = vunpack.c.l.b16 %v259
      %v390 = vunpack.c.l.b16 %v260
      %v391 = vunpack.c.l.b16 %v261
      %v392 = vunpack.c.l.b16 %v262
      %v393 = vunpack.c.l.b16 %v263
      %v394 = vunpack.c.l.b16 %v264
      %v395 = vunpack.c.l.b16 %v265
      %v396 = vpack.c.b16 %v333, %v332
      %v397 = vpack.c.b16 %v335, %v334
      %v398 = vpack.c.b16 %v337, %v336
      %v399 = vpack.c.b16 %v339, %v338
      %v400 = vpack.c.b16 %v341, %v340
      %v401 = vpack.c.b16 %v343, %v342
      %v402 = vpack.c.b16 %v345, %v344
      %v403 = vpack.c.b16 %v347, %v346
      %v404 = vpack.c.b16 %v349, %v348
      %v405 = vpack.c.b16 %v351, %v350
      %v406 = vpack.c.b16 %v353, %v352
      %v407 = vpack.c.b16 %v355, %v354
      %v408 = vpack.c.b16 %v357, %v356
      %v409 = vpack.c.b16 %v359, %v358
      %v410 = vpack.c.b16 %v361, %v360
      %v411 = vpack.c.b16 %v363, %v362
      %v412 = vpack.c.b16 %v365, %v364
      %v413 = vpack.c.b16 %v367, %v366
      %v414 = vpack.c.b16 %v369, %v368
      %v415 = vpack.c.b16 %v371, %v370
      %v416 = vpack.c.b16 %v373, %v372
      %v417 = vpack.c.b16 %v375, %v374
      %v418 = vpack.c.b16 %v377, %v376
      %v419 = vpack.c.b16 %v379, %v378
      %v420 = vpack.c.b16 %v381, %v380
      %v421 = vpack.c.b16 %v383, %v382
      %v422 = vpack.c.b16 %v385, %v384
      %v423 = vpack.c.b16 %v387, %v386
      %v424 = vpack.c.b16 %v389, %v388
      %v425 = vpack.c.b16 %v391, %v390
      %v426 = vpack.c.b16 %v393, %v392
      %v427 = vpack.c.b16 %v395, %v394
      %v430 = vunpack.c.l.b16 %v266
      %v431 = vunpack.c.l.b16 %v267
      %v432 = vpack.c.b16 %v431, %v430
      %vm434 = vcmask 130048
      %v436 = vsel %vm434, %v396, 0
      %v439 = vsel %vm434, %v397, 0
      %v442 = vsel %vm434, %v398, 0
      %v445 = vsel %vm434, %v399, 0
      %v448 = vsel %vm434, %v400, 0
      %v451 = vsel %vm434, %v401, 0
      %v454 = vsel %vm434, %v402, 0
      %v457 = vsel %vm434, %v403, 0
      %v460 = vsel %vm434, %v404, 0
      %v463 = vsel %vm434, %v405, 0
      %v466 = vsel %vm434, %v406, 0
      %v469 = vsel %vm434, %v407, 0
      %v472 = vsel %vm434, %v408, 0
      %v475 = vsel %vm434, %v409, 0
      %v478 = vsel %vm434, %v410, 0
      %v481 = vsel %vm434, %v411, 0
      %v484 = vsel %vm434, %v412, 0
      %v487 = vsel %vm434, %v413, 0
      %v490 = vsel %vm434, %v414, 0
      %v493 = vsel %vm434, %v415, 0
      %v496 = vsel %vm434, %v416, 0
      %v499 = vsel %vm434, %v417, 0
      %v502 = vsel %vm434, %v418, 0
      %v505 = vsel %vm434, %v419, 0
      %v508 = vsel %vm434, %v420, 0
      %v511 = vsel %vm434, %v421, 0
      %v514 = vsel %vm434, %v422, 0
      %v517 = vsel %vm434, %v423, 0
      %v520 = vsel %vm434, %v424, 0
      %v523 = vsel %vm434, %v425, 0
      %v526 = vsel %vm434, %v426, 0
      %v529 = vsel %vm434, %v427, 0
      %531 = vmatprep.subr.bf16.mxu0 0
      %532 = vmatpush1.bf16.msra.mxu0 0
      %533 = vmatprep.subr.bf16.mxu0 0
      %534 = vmatpush1.bf16.msra.mxu0 0
      %535 = vmatprep.subr.bf16.mxu0 0
      %536 = vmatpush1.bf16.msra.mxu0 0
      %537 = vmatprep.subr.bf16.mxu0 0
      %538 = vmatpush1.bf16.msra.mxu0 0
      %539 = vmatprep.subr.bf16.mxu0 0
      %540 = vmatpush1.bf16.msra.mxu0 0
      %541 = vmatprep.subr.bf16.mxu0 0
      %542 = vmatpush1.bf16.msra.mxu0 0
      %543 = vmatprep.subr.bf16.mxu0 0
      %544 = vmatpush1.bf16.msra.mxu0 0
      %545 = vmatprep.subr.bf16.mxu0 0
      %546 = vmatpush1.bf16.msra.mxu0 %v432
      %547 = vmatprep.subr.bf16.mxu0 0
      %548 = vmatpush2.bf16.msra.mxu0 0
      %549 = vmatprep.subr.bf16.mxu0 0
      %550 = vmatpush2.bf16.msra.mxu0 0
      %551 = vmatprep.subr.bf16.mxu0 0
      %552 = vmatpush2.bf16.msra.mxu0 0
      %553 = vmatprep.subr.bf16.mxu0 0
      %554 = vmatpush2.bf16.msra.mxu0 0
      %555 = vmatprep.subr.bf16.mxu0 0
      %556 = vmatpush2.bf16.msra.mxu0 0
      %557 = vmatprep.subr.bf16.mxu0 0
      %558 = vmatpush2.bf16.msra.mxu0 0
      %559 = vmatprep.subr.bf16.mxu0 0
      %560 = vmatpush2.bf16.msra.mxu0 0
      %561 = vmatprep.subr.bf16.mxu0 0
      %562 = vmatpush2.bf16.msra.mxu0 0
      %563 = vmatprep.mubr.bf16.mxu0 0
      %564 = vmatmul.mubr.bf16.gmra.mxu0 %v436
      %v565 = vpop.f32.mrf.mxu0
      %v566 = vadd.f32 0.0, %v565
      %v567 = vpop.f32.mrf.mxu0
      %v568 = vpop.f32.mrf.mxu0
      %v569 = vadd.f32 0.0, %v568
      %v570 = vpop.f32.mrf.mxu0
      %571 = vmatprep.mubr.bf16.mxu0 0
      %572 = vmatmul.mubr.bf16.gmra.mxu0 %v439
      %v573 = vpop.f32.mrf.mxu0
      %v574 = vadd.f32 0.0, %v573
      %v575 = vpop.f32.mrf.mxu0
      %v576 = vpop.f32.mrf.mxu0
      %v577 = vadd.f32 0.0, %v576
      %v578 = vpop.f32.mrf.mxu0
      %579 = vmatprep.mubr.bf16.mxu0 0
      %580 = vmatmul.mubr.bf16.gmra.mxu0 %v442
      %v581 = vpop.f32.mrf.mxu0
      %v582 = vadd.f32 0.0, %v581
      %v583 = vpop.f32.mrf.mxu0
      %v584 = vpop.f32.mrf.mxu0
      %v585 = vadd.f32 0.0, %v584
      %v586 = vpop.f32.mrf.mxu0
      %587 = vmatprep.mubr.bf16.mxu0 0
      %588 = vmatmul.mubr.bf16.gmra.mxu0 %v445
      %v589 = vpop.f32.mrf.mxu0
      %v590 = vadd.f32 0.0, %v589
      %v591 = vpop.f32.mrf.mxu0
      %v592 = vpop.f32.mrf.mxu0
      %v593 = vadd.f32 0.0, %v592
      %v594 = vpop.f32.mrf.mxu0
      %595 = vmatprep.mubr.bf16.mxu0 0
      %596 = vmatmul.mubr.bf16.gmra.mxu0 %v448
      %v597 = vpop.f32.mrf.mxu0
      %v598 = vadd.f32 0.0, %v597
      %v599 = vpop.f32.mrf.mxu0
      %v600 = vpop.f32.mrf.mxu0
      %v601 = vadd.f32 0.0, %v600
      %v602 = vpop.f32.mrf.mxu0
      %603 = vmatprep.mubr.bf16.mxu0 0
      %604 = vmatmul.mubr.bf16.gmra.mxu0 %v451
      %v605 = vpop.f32.mrf.mxu0
      %v606 = vadd.f32 0.0, %v605
      %v607 = vpop.f32.mrf.mxu0
      %v608 = vpop.f32.mrf.mxu0
      %v609 = vadd.f32 0.0, %v608
      %v610 = vpop.f32.mrf.mxu0
      %611 = vmatprep.mubr.bf16.mxu0 0
      %612 = vmatmul.mubr.bf16.gmra.mxu0 %v454
      %v613 = vpop.f32.mrf.mxu0
      %v614 = vadd.f32 0.0, %v613
      %v615 = vpop.f32.mrf.mxu0
      %v616 = vpop.f32.mrf.mxu0
      %v617 = vadd.f32 0.0, %v616
      %v618 = vpop.f32.mrf.mxu0
      %619 = vmatprep.mubr.bf16.mxu0 0
      %620 = vmatmul.mubr.bf16.gmra.mxu0 %v457
      %v621 = vpop.f32.mrf.mxu0
      %v622 = vadd.f32 0.0, %v621
      %v623 = vpop.f32.mrf.mxu0
      %v624 = vpop.f32.mrf.mxu0
      %v625 = vadd.f32 0.0, %v624
      %v626 = vpop.f32.mrf.mxu0
      %627 = vmatprep.mubr.bf16.mxu0 0
      %628 = vmatmul.mubr.bf16.gmra.mxu0 %v460
      %v629 = vpop.f32.mrf.mxu0
      %v630 = vadd.f32 0.0, %v629
      %v631 = vpop.f32.mrf.mxu0
      %v632 = vpop.f32.mrf.mxu0
      %v633 = vadd.f32 0.0, %v632
      %v634 = vpop.f32.mrf.mxu0
      %635 = vmatprep.mubr.bf16.mxu0 0
      %636 = vmatmul.mubr.bf16.gmra.mxu0 %v463
      %v637 = vpop.f32.mrf.mxu0
      %v638 = vadd.f32 0.0, %v637
      %v639 = vpop.f32.mrf.mxu0
      %v640 = vpop.f32.mrf.mxu0
      %v641 = vadd.f32 0.0, %v640
      %v642 = vpop.f32.mrf.mxu0
      %643 = vmatprep.mubr.bf16.mxu0 0
      %644 = vmatmul.mubr.bf16.gmra.mxu0 %v466
      %v645 = vpop.f32.mrf.mxu0
      %v646 = vadd.f32 0.0, %v645
      %v647 = vpop.f32.mrf.mxu0
      %v648 = vpop.f32.mrf.mxu0
      %v649 = vadd.f32 0.0, %v648
      %v650 = vpop.f32.mrf.mxu0
      %651 = vmatprep.mubr.bf16.mxu0 0
      %652 = vmatmul.mubr.bf16.gmra.mxu0 %v469
      %v653 = vpop.f32.mrf.mxu0
      %v654 = vadd.f32 0.0, %v653
      %v655 = vpop.f32.mrf.mxu0
      %v656 = vpop.f32.mrf.mxu0
      %v657 = vadd.f32 0.0, %v656
      %v658 = vpop.f32.mrf.mxu0
      %659 = vmatprep.mubr.bf16.mxu0 0
      %660 = vmatmul.mubr.bf16.gmra.mxu0 %v472
      %v661 = vpop.f32.mrf.mxu0
      %v662 = vadd.f32 0.0, %v661
      %v663 = vpop.f32.mrf.mxu0
      %v664 = vpop.f32.mrf.mxu0
      %v665 = vadd.f32 0.0, %v664
      %v666 = vpop.f32.mrf.mxu0
      %667 = vmatprep.mubr.bf16.mxu0 0
      %668 = vmatmul.mubr.bf16.gmra.mxu0 %v475
      %v669 = vpop.f32.mrf.mxu0
      %v670 = vadd.f32 0.0, %v669
      %v671 = vpop.f32.mrf.mxu0
      %v672 = vpop.f32.mrf.mxu0
      %v673 = vadd.f32 0.0, %v672
      %v674 = vpop.f32.mrf.mxu0
      %675 = vmatprep.mubr.bf16.mxu0 0
      %676 = vmatmul.mubr.bf16.gmra.mxu0 %v478
      %v677 = vpop.f32.mrf.mxu0
      %v678 = vadd.f32 0.0, %v677
      %v679 = vpop.f32.mrf.mxu0
      %v680 = vpop.f32.mrf.mxu0
      %v681 = vadd.f32 0.0, %v680
      %v682 = vpop.f32.mrf.mxu0
      %683 = vmatprep.mubr.bf16.mxu0 0
      %684 = vmatmul.mubr.bf16.gmra.mxu0 %v481
      %v685 = vpop.f32.mrf.mxu0
      %v686 = vadd.f32 0.0, %v685
      %v687 = vpop.f32.mrf.mxu0
      %v688 = vpop.f32.mrf.mxu0
      %v689 = vadd.f32 0.0, %v688
      %v690 = vpop.f32.mrf.mxu0
      %691 = vmatprep.mubr.bf16.mxu0 0
      %692 = vmatmul.mubr.bf16.gmra.mxu0 %v484
      %v693 = vpop.f32.mrf.mxu0
      %v694 = vadd.f32 0.0, %v693
      %v695 = vpop.f32.mrf.mxu0
      %v696 = vpop.f32.mrf.mxu0
      %v697 = vadd.f32 0.0, %v696
      %v698 = vpop.f32.mrf.mxu0
      %699 = vmatprep.mubr.bf16.mxu0 0
      %700 = vmatmul.mubr.bf16.gmra.mxu0 %v487
      %v701 = vpop.f32.mrf.mxu0
      %v702 = vadd.f32 0.0, %v701
      %v703 = vpop.f32.mrf.mxu0
      %v704 = vpop.f32.mrf.mxu0
      %v705 = vadd.f32 0.0, %v704
      %v706 = vpop.f32.mrf.mxu0
      %707 = vmatprep.mubr.bf16.mxu0 0
      %708 = vmatmul.mubr.bf16.gmra.mxu0 %v490
      %v709 = vpop.f32.mrf.mxu0
      %v710 = vadd.f32 0.0, %v709
      %v711 = vpop.f32.mrf.mxu0
      %v712 = vpop.f32.mrf.mxu0
      %v713 = vadd.f32 0.0, %v712
      %v714 = vpop.f32.mrf.mxu0
      %715 = vmatprep.mubr.bf16.mxu0 0
      %716 = vmatmul.mubr.bf16.gmra.mxu0 %v493
      %v717 = vpop.f32.mrf.mxu0
      %v718 = vadd.f32 0.0, %v717
      %v719 = vpop.f32.mrf.mxu0
      %v720 = vpop.f32.mrf.mxu0
      %v721 = vadd.f32 0.0, %v720
      %v722 = vpop.f32.mrf.mxu0
      %723 = vmatprep.mubr.bf16.mxu0 0
      %724 = vmatmul.mubr.bf16.gmra.mxu0 %v496
      %v725 = vpop.f32.mrf.mxu0
      %v726 = vadd.f32 0.0, %v725
      %v727 = vpop.f32.mrf.mxu0
      %v728 = vpop.f32.mrf.mxu0
      %v729 = vadd.f32 0.0, %v728
      %v730 = vpop.f32.mrf.mxu0
      %731 = vmatprep.mubr.bf16.mxu0 0
      %732 = vmatmul.mubr.bf16.gmra.mxu0 %v499
      %v733 = vpop.f32.mrf.mxu0
      %v734 = vadd.f32 0.0, %v733
      %v735 = vpop.f32.mrf.mxu0
      %v736 = vpop.f32.mrf.mxu0
      %v737 = vadd.f32 0.0, %v736
      %v738 = vpop.f32.mrf.mxu0
      %739 = vmatprep.mubr.bf16.mxu0 0
      %740 = vmatmul.mubr.bf16.gmra.mxu0 %v502
      %v741 = vpop.f32.mrf.mxu0
      %v742 = vadd.f32 0.0, %v741
      %v743 = vpop.f32.mrf.mxu0
      %v744 = vpop.f32.mrf.mxu0
      %v745 = vadd.f32 0.0, %v744
      %v746 = vpop.f32.mrf.mxu0
      %747 = vmatprep.mubr.bf16.mxu0 0
      %748 = vmatmul.mubr.bf16.gmra.mxu0 %v505
      %v749 = vpop.f32.mrf.mxu0
      %v750 = vadd.f32 0.0, %v749
      %v751 = vpop.f32.mrf.mxu0
      %v752 = vpop.f32.mrf.mxu0
      %v753 = vadd.f32 0.0, %v752
      %v754 = vpop.f32.mrf.mxu0
      %755 = vmatprep.mubr.bf16.mxu0 0
      %756 = vmatmul.mubr.bf16.gmra.mxu0 %v508
      %v757 = vpop.f32.mrf.mxu0
      %v758 = vadd.f32 0.0, %v757
      %v759 = vpop.f32.mrf.mxu0
      %v760 = vpop.f32.mrf.mxu0
      %v761 = vadd.f32 0.0, %v760
      %v762 = vpop.f32.mrf.mxu0
      %763 = vmatprep.mubr.bf16.mxu0 0
      %764 = vmatmul.mubr.bf16.gmra.mxu0 %v511
      %v765 = vpop.f32.mrf.mxu0
      %v766 = vadd.f32 0.0, %v765
      %v767 = vpop.f32.mrf.mxu0
      %v768 = vpop.f32.mrf.mxu0
      %v769 = vadd.f32 0.0, %v768
      %v770 = vpop.f32.mrf.mxu0
      %771 = vmatprep.mubr.bf16.mxu0 0
      %772 = vmatmul.mubr.bf16.gmra.mxu0 %v514
      %v773 = vpop.f32.mrf.mxu0
      %v774 = vadd.f32 0.0, %v773
      %v775 = vpop.f32.mrf.mxu0
      %v776 = vpop.f32.mrf.mxu0
      %v777 = vadd.f32 0.0, %v776
      %v778 = vpop.f32.mrf.mxu0
      %779 = vmatprep.mubr.bf16.mxu0 0
      %780 = vmatmul.mubr.bf16.gmra.mxu0 %v517
      %v781 = vpop.f32.mrf.mxu0
      %v782 = vadd.f32 0.0, %v781
      %v783 = vpop.f32.mrf.mxu0
      %v784 = vpop.f32.mrf.mxu0
      %v785 = vadd.f32 0.0, %v784
      %v786 = vpop.f32.mrf.mxu0
      %787 = vmatprep.mubr.bf16.mxu0 0
      %788 = vmatmul.mubr.bf16.gmra.mxu0 %v520
      %v789 = vpop.f32.mrf.mxu0
      %v790 = vadd.f32 0.0, %v789
      %v791 = vpop.f32.mrf.mxu0
      %v792 = vpop.f32.mrf.mxu0
      %v793 = vadd.f32 0.0, %v792
      %v794 = vpop.f32.mrf.mxu0
      %795 = vmatprep.mubr.bf16.mxu0 0
      %796 = vmatmul.mubr.bf16.gmra.mxu0 %v523
      %v797 = vpop.f32.mrf.mxu0
      %v798 = vadd.f32 0.0, %v797
      %v799 = vpop.f32.mrf.mxu0
      %v800 = vpop.f32.mrf.mxu0
      %v801 = vadd.f32 0.0, %v800
      %v802 = vpop.f32.mrf.mxu0
      %803 = vmatprep.mubr.bf16.mxu0 0
      %804 = vmatmul.mubr.bf16.gmra.mxu0 %v526
      %v805 = vpop.f32.mrf.mxu0
      %v806 = vadd.f32 0.0, %v805
      %v807 = vpop.f32.mrf.mxu0
      %v808 = vpop.f32.mrf.mxu0
      %v809 = vadd.f32 0.0, %v808
      %v810 = vpop.f32.mrf.mxu0
      %811 = vmatprep.mubr.bf16.mxu0 0
      %812 = vmatmul.mubr.bf16.gmra.mxu0 %v529
      %v813 = vpop.f32.mrf.mxu0
      %v814 = vadd.f32 0.0, %v813
      %v815 = vpop.f32.mrf.mxu0
      %v816 = vpop.f32.mrf.mxu0
      %v817 = vadd.f32 0.0, %v816
      %v818 = vpop.f32.mrf.mxu0
      %819 = vdwg.mxu0
      %v820 = vld [vmem:[%s2] sm:$0x1]
      %v822 = vlaneseq
      %v823 = vshrl.u32 %v822, 7
      %v824 = vsub.s32 0, %v823
      %v825 = vrot.slane %v820, %v824
      %v827 = vmul.f32 %v566, %v825
      %v828 = vmul.f32 %v569, %v825
      %v829 = vmul.f32 %v574, %v825
      %v830 = vmul.f32 %v577, %v825
      %v831 = vmul.f32 %v582, %v825
      %v832 = vmul.f32 %v585, %v825
      %v833 = vmul.f32 %v590, %v825
      %v834 = vmul.f32 %v593, %v825
      %v835 = vmul.f32 %v598, %v825
      %v836 = vmul.f32 %v601, %v825
      %v837 = vmul.f32 %v606, %v825
      %v838 = vmul.f32 %v609, %v825
      %v839 = vmul.f32 %v614, %v825
      %v840 = vmul.f32 %v617, %v825
      %v841 = vmul.f32 %v622, %v825
      %v842 = vmul.f32 %v625, %v825
      %v843 = vmul.f32 %v630, %v825
      %v844 = vmul.f32 %v633, %v825
      %v845 = vmul.f32 %v638, %v825
      %v846 = vmul.f32 %v641, %v825
      %v847 = vmul.f32 %v646, %v825
      %v848 = vmul.f32 %v649, %v825
      %v849 = vmul.f32 %v654, %v825
      %v850 = vmul.f32 %v657, %v825
      %v851 = vmul.f32 %v662, %v825
      %v852 = vmul.f32 %v665, %v825
      %v853 = vmul.f32 %v670, %v825
      %v854 = vmul.f32 %v673, %v825
      %v855 = vmul.f32 %v678, %v825
      %v856 = vmul.f32 %v681, %v825
      %v857 = vmul.f32 %v686, %v825
      %v858 = vmul.f32 %v689, %v825
      %v859 = vmul.f32 %v694, %v825
      %v860 = vmul.f32 %v697, %v825
      %v861 = vmul.f32 %v702, %v825
      %v862 = vmul.f32 %v705, %v825
      %v863 = vmul.f32 %v710, %v825
      %v864 = vmul.f32 %v713, %v825
      %v865 = vmul.f32 %v718, %v825
      %v866 = vmul.f32 %v721, %v825
      %v867 = vmul.f32 %v726, %v825
      %v868 = vmul.f32 %v729, %v825
      %v869 = vmul.f32 %v734, %v825
      %v870 = vmul.f32 %v737, %v825
      %v871 = vmul.f32 %v742, %v825
      %v872 = vmul.f32 %v745, %v825
      %v873 = vmul.f32 %v750, %v825
      %v874 = vmul.f32 %v753, %v825
      %v875 = vmul.f32 %v758, %v825
      %v876 = vmul.f32 %v761, %v825
      %v877 = vmul.f32 %v766, %v825
      %v878 = vmul.f32 %v769, %v825
      %v879 = vmul.f32 %v774, %v825
      %v880 = vmul.f32 %v777, %v825
      %v881 = vmul.f32 %v782, %v825
      %v882 = vmul.f32 %v785, %v825
      %v883 = vmul.f32 %v790, %v825
      %v884 = vmul.f32 %v793, %v825
      %v885 = vmul.f32 %v798, %v825
      %v886 = vmul.f32 %v801, %v825
      %v887 = vmul.f32 %v806, %v825
      %v888 = vmul.f32 %v809, %v825
      %v889 = vmul.f32 %v814, %v825
      %v890 = vmul.f32 %v817, %v825
      %v891 = vld [vmem:[%s3] sm:$0x1]
      %v893 = vlaneseq
      %v894 = vshrl.u32 %v893, 7
      %v895 = vsub.s32 0, %v894
      %v896 = vrot.slane %v891, %v895
      %v898 = vadd.f32 %v827, %v896
      %v899 = vadd.f32 %v828, %v896
      %v900 = vadd.f32 %v829, %v896
      %v901 = vadd.f32 %v830, %v896
      %v902 = vadd.f32 %v831, %v896
      %v903 = vadd.f32 %v832, %v896
      %v904 = vadd.f32 %v833, %v896
      %v905 = vadd.f32 %v834, %v896
      %v906 = vadd.f32 %v835, %v896
      %v907 = vadd.f32 %v836, %v896
      %v908 = vadd.f32 %v837, %v896
      %v909 = vadd.f32 %v838, %v896
      %v910 = vadd.f32 %v839, %v896
      %v911 = vadd.f32 %v840, %v896
      %v912 = vadd.f32 %v841, %v896
      %v913 = vadd.f32 %v842, %v896
      %v914 = vadd.f32 %v843, %v896
      %v915 = vadd.f32 %v844, %v896
      %v916 = vadd.f32 %v845, %v896
      %v917 = vadd.f32 %v846, %v896
      %v918 = vadd.f32 %v847, %v896
      %v919 = vadd.f32 %v848, %v896
      %v920 = vadd.f32 %v849, %v896
      %v921 = vadd.f32 %v850, %v896
      %v922 = vadd.f32 %v851, %v896
      %v923 = vadd.f32 %v852, %v896
      %v924 = vadd.f32 %v853, %v896
      %v925 = vadd.f32 %v854, %v896
      %v926 = vadd.f32 %v855, %v896
      %v927 = vadd.f32 %v856, %v896
      %v928 = vadd.f32 %v857, %v896
      %v929 = vadd.f32 %v858, %v896
      %v930 = vadd.f32 %v859, %v896
      %v931 = vadd.f32 %v860, %v896
      %v932 = vadd.f32 %v861, %v896
      %v933 = vadd.f32 %v862, %v896
      %v934 = vadd.f32 %v863, %v896
      %v935 = vadd.f32 %v864, %v896
      %v936 = vadd.f32 %v865, %v896
      %v937 = vadd.f32 %v866, %v896
      %v938 = vadd.f32 %v867, %v896
      %v939 = vadd.f32 %v868, %v896
      %v940 = vadd.f32 %v869, %v896
      %v941 = vadd.f32 %v870, %v896
      %v942 = vadd.f32 %v871, %v896
      %v943 = vadd.f32 %v872, %v896
      %v944 = vadd.f32 %v873, %v896
      %v945 = vadd.f32 %v874, %v896
      %v946 = vadd.f32 %v875, %v896
      %v947 = vadd.f32 %v876, %v896
      %v948 = vadd.f32 %v877, %v896
      %v949 = vadd.f32 %v878, %v896
      %v950 = vadd.f32 %v879, %v896
      %v951 = vadd.f32 %v880, %v896
      %v952 = vadd.f32 %v881, %v896
      %v953 = vadd.f32 %v882, %v896
      %v954 = vadd.f32 %v883, %v896
      %v955 = vadd.f32 %v884, %v896
      %v956 = vadd.f32 %v885, %v896
      %v957 = vadd.f32 %v886, %v896
      %v958 = vadd.f32 %v887, %v896
      %v959 = vadd.f32 %v888, %v896
      %v960 = vadd.f32 %v889, %v896
      %v961 = vadd.f32 %v890, %v896
      %v962 = vmax.f32 %v898, 0.0
      %v963 = vmax.f32 %v899, 0.0
      %v964 = vmax.f32 %v900, 0.0
      %v965 = vmax.f32 %v901, 0.0
      %v966 = vmax.f32 %v902, 0.0
      %v967 = vmax.f32 %v903, 0.0
      %v968 = vmax.f32 %v904, 0.0
      %v969 = vmax.f32 %v905, 0.0
      %v970 = vmax.f32 %v906, 0.0
      %v971 = vmax.f32 %v907, 0.0
      %v972 = vmax.f32 %v908, 0.0
      %v973 = vmax.f32 %v909, 0.0
      %v974 = vmax.f32 %v910, 0.0
      %v975 = vmax.f32 %v911, 0.0
      %v976 = vmax.f32 %v912, 0.0
      %v977 = vmax.f32 %v913, 0.0
      %v978 = vmax.f32 %v914, 0.0
      %v979 = vmax.f32 %v915, 0.0
      %v980 = vmax.f32 %v916, 0.0
      %v981 = vmax.f32 %v917, 0.0
      %v982 = vmax.f32 %v918, 0.0
      %v983 = vmax.f32 %v919, 0.0
      %v984 = vmax.f32 %v920, 0.0
      %v985 = vmax.f32 %v921, 0.0
      %v986 = vmax.f32 %v922, 0.0
      %v987 = vmax.f32 %v923, 0.0
      %v988 = vmax.f32 %v924, 0.0
      %v989 = vmax.f32 %v925, 0.0
      %v990 = vmax.f32 %v926, 0.0
      %v991 = vmax.f32 %v927, 0.0
      %v992 = vmax.f32 %v928, 0.0
      %v993 = vmax.f32 %v929, 0.0
      %v994 = vmax.f32 %v930, 0.0
      %v995 = vmax.f32 %v931, 0.0
      %v996 = vmax.f32 %v932, 0.0
      %v997 = vmax.f32 %v933, 0.0
      %v998 = vmax.f32 %v934, 0.0
      %v999 = vmax.f32 %v935, 0.0
      %v1000 = vmax.f32 %v936, 0.0
      %v1001 = vmax.f32 %v937, 0.0
      %v1002 = vmax.f32 %v938, 0.0
      %v1003 = vmax.f32 %v939, 0.0
      %v1004 = vmax.f32 %v940, 0.0
      %v1005 = vmax.f32 %v941, 0.0
      %v1006 = vmax.f32 %v942, 0.0
      %v1007 = vmax.f32 %v943, 0.0
      %v1008 = vmax.f32 %v944, 0.0
      %v1009 = vmax.f32 %v945, 0.0
      %v1010 = vmax.f32 %v946, 0.0
      %v1011 = vmax.f32 %v947, 0.0
      %v1012 = vmax.f32 %v948, 0.0
      %v1013 = vmax.f32 %v949, 0.0
      %v1014 = vmax.f32 %v950, 0.0
      %v1015 = vmax.f32 %v951, 0.0
      %v1016 = vmax.f32 %v952, 0.0
      %v1017 = vmax.f32 %v953, 0.0
      %v1018 = vmax.f32 %v954, 0.0
      %v1019 = vmax.f32 %v955, 0.0
      %v1020 = vmax.f32 %v956, 0.0
      %v1021 = vmax.f32 %v957, 0.0
      %v1022 = vmax.f32 %v958, 0.0
      %v1023 = vmax.f32 %v959, 0.0
      %v1024 = vmax.f32 %v960, 0.0
      %v1025 = vmax.f32 %v961, 0.0
      %v1026 = vpack.c.bf16 %v963, %v962
      %v1027 = vpack.c.bf16 %v965, %v964
      %v1028 = vpack.c.bf16 %v967, %v966
      %v1029 = vpack.c.bf16 %v969, %v968
      %v1030 = vpack.c.bf16 %v971, %v970
      %v1031 = vpack.c.bf16 %v973, %v972
      %v1032 = vpack.c.bf16 %v975, %v974
      %v1033 = vpack.c.bf16 %v977, %v976
      %v1034 = vpack.c.bf16 %v979, %v978
      %v1035 = vpack.c.bf16 %v981, %v980
      %v1036 = vpack.c.bf16 %v983, %v982
      %v1037 = vpack.c.bf16 %v985, %v984
      %v1038 = vpack.c.bf16 %v987, %v986
      %v1039 = vpack.c.bf16 %v989, %v988
      %v1040 = vpack.c.bf16 %v991, %v990
      %v1041 = vpack.c.bf16 %v993, %v992
      %v1042 = vpack.c.bf16 %v995, %v994
      %v1043 = vpack.c.bf16 %v997, %v996
      %v1044 = vpack.c.bf16 %v999, %v998
      %v1045 = vpack.c.bf16 %v1001, %v1000
      %v1046 = vpack.c.bf16 %v1003, %v1002
      %v1047 = vpack.c.bf16 %v1005, %v1004
      %v1048 = vpack.c.bf16 %v1007, %v1006
      %v1049 = vpack.c.bf16 %v1009, %v1008
      %v1050 = vpack.c.bf16 %v1011, %v1010
      %v1051 = vpack.c.bf16 %v1013, %v1012
      %v1052 = vpack.c.bf16 %v1015, %v1014
      %v1053 = vpack.c.bf16 %v1017, %v1016
      %v1054 = vpack.c.bf16 %v1019, %v1018
      %v1055 = vpack.c.bf16 %v1021, %v1020
      %v1056 = vpack.c.bf16 %v1023, %v1022
      %v1057 = vpack.c.bf16 %v1025, %v1024
      %v1090 = vunpack.c.l.b16 %v1026
      %v1091 = vunpack.c.h.b16 %v1026
      %v1092 = vunpack.c.l.b16 %v1027
      %v1093 = vunpack.c.h.b16 %v1027
      %v1094 = vunpack.c.l.b16 %v1028
      %v1095 = vunpack.c.h.b16 %v1028
      %v1096 = vunpack.c.l.b16 %v1029
      %v1097 = vunpack.c.h.b16 %v1029
      %v1098 = vunpack.c.l.b16 %v1030
      %v1099 = vunpack.c.h.b16 %v1030
      %v1100 = vunpack.c.l.b16 %v1031
      %v1101 = vunpack.c.h.b16 %v1031
      %v1102 = vunpack.c.l.b16 %v1032
      %v1103 = vunpack.c.h.b16 %v1032
      %v1104 = vunpack.c.l.b16 %v1033
      %v1105 = vunpack.c.h.b16 %v1033
      %v1106 = vunpack.c.l.b16 %v1034
      %v1107 = vunpack.c.h.b16 %v1034
      %v1108 = vunpack.c.l.b16 %v1035
      %v1109 = vunpack.c.h.b16 %v1035
      %v1110 = vunpack.c.l.b16 %v1036
      %v1111 = vunpack.c.h.b16 %v1036
      %v1112 = vunpack.c.l.b16 %v1037
      %v1113 = vunpack.c.h.b16 %v1037
      %v1114 = vunpack.c.l.b16 %v1038
      %v1115 = vunpack.c.h.b16 %v1038
      %v1116 = vunpack.c.l.b16 %v1039
      %v1117 = vunpack.c.h.b16 %v1039
      %v1118 = vunpack.c.l.b16 %v1040
      %v1119 = vunpack.c.h.b16 %v1040
      %v1120 = vunpack.c.l.b16 %v1041
      %v1121 = vunpack.c.h.b16 %v1041
      %v1122 = vunpack.c.l.b16 %v1042
      %v1123 = vunpack.c.h.b16 %v1042
      %v1124 = vunpack.c.l.b16 %v1043
      %v1125 = vunpack.c.h.b16 %v1043
      %v1126 = vunpack.c.l.b16 %v1044
      %v1127 = vunpack.c.h.b16 %v1044
      %v1128 = vunpack.c.l.b16 %v1045
      %v1129 = vunpack.c.h.b16 %v1045
      %v1130 = vunpack.c.l.b16 %v1046
      %v1131 = vunpack.c.h.b16 %v1046
      %v1132 = vunpack.c.l.b16 %v1047
      %v1133 = vunpack.c.h.b16 %v1047
      %v1134 = vunpack.c.l.b16 %v1048
      %v1135 = vunpack.c.h.b16 %v1048
      %v1136 = vunpack.c.l.b16 %v1049
      %v1137 = vunpack.c.h.b16 %v1049
      %v1138 = vunpack.c.l.b16 %v1050
      %v1139 = vunpack.c.h.b16 %v1050
      %v1140 = vunpack.c.l.b16 %v1051
      %v1141 = vunpack.c.h.b16 %v1051
      %v1142 = vunpack.c.l.b16 %v1052
      %v1143 = vunpack.c.h.b16 %v1052
      %v1144 = vunpack.c.l.b16 %v1053
      %v1145 = vunpack.c.h.b16 %v1053
      %v1146 = vunpack.c.l.b16 %v1054
      %v1147 = vunpack.c.h.b16 %v1054
      %v1148 = vunpack.c.l.b16 %v1055
      %v1149 = vunpack.c.h.b16 %v1055
      %v1150 = vunpack.c.l.b16 %v1056
      %v1151 = vunpack.c.h.b16 %v1056
      %v1152 = vunpack.c.l.b16 %v1057
      %v1153 = vunpack.c.h.b16 %v1057
      %v1154 = vpack.c.b16 %v1090, %v1090
      %v1155 = vpack.c.b16 %v1091, %v1091
      %v1156 = vpack.c.b16 %v1092, %v1092
      %v1157 = vpack.c.b16 %v1093, %v1093
      %v1158 = vpack.c.b16 %v1094, %v1094
      %v1159 = vpack.c.b16 %v1095, %v1095
      %v1160 = vpack.c.b16 %v1096, %v1096
      %v1161 = vpack.c.b16 %v1097, %v1097
      %v1162 = vpack.c.b16 %v1098, %v1098
      %v1163 = vpack.c.b16 %v1099, %v1099
      %v1164 = vpack.c.b16 %v1100, %v1100
      %v1165 = vpack.c.b16 %v1101, %v1101
      %v1166 = vpack.c.b16 %v1102, %v1102
      %v1167 = vpack.c.b16 %v1103, %v1103
      %v1168 = vpack.c.b16 %v1104, %v1104
      %v1169 = vpack.c.b16 %v1105, %v1105
      %v1170 = vpack.c.b16 %v1106, %v1106
      %v1171 = vpack.c.b16 %v1107, %v1107
      %v1172 = vpack.c.b16 %v1108, %v1108
      %v1173 = vpack.c.b16 %v1109, %v1109
      %v1174 = vpack.c.b16 %v1110, %v1110
      %v1175 = vpack.c.b16 %v1111, %v1111
      %v1176 = vpack.c.b16 %v1112, %v1112
      %v1177 = vpack.c.b16 %v1113, %v1113
      %v1178 = vpack.c.b16 %v1114, %v1114
      %v1179 = vpack.c.b16 %v1115, %v1115
      %v1180 = vpack.c.b16 %v1116, %v1116
      %v1181 = vpack.c.b16 %v1117, %v1117
      %v1182 = vpack.c.b16 %v1118, %v1118
      %v1183 = vpack.c.b16 %v1119, %v1119
      %v1184 = vpack.c.b16 %v1120, %v1120
      %v1185 = vpack.c.b16 %v1121, %v1121
      %v1186 = vpack.c.b16 %v1122, %v1122
      %v1187 = vpack.c.b16 %v1123, %v1123
      %v1188 = vpack.c.b16 %v1124, %v1124
      %v1189 = vpack.c.b16 %v1125, %v1125
      %v1190 = vpack.c.b16 %v1126, %v1126
      %v1191 = vpack.c.b16 %v1127, %v1127
      %v1192 = vpack.c.b16 %v1128, %v1128
      %v1193 = vpack.c.b16 %v1129, %v1129
      %v1194 = vpack.c.b16 %v1130, %v1130
      %v1195 = vpack.c.b16 %v1131, %v1131
      %v1196 = vpack.c.b16 %v1132, %v1132
      %v1197 = vpack.c.b16 %v1133, %v1133
      %v1198 = vpack.c.b16 %v1134, %v1134
      %v1199 = vpack.c.b16 %v1135, %v1135
      %v1200 = vpack.c.b16 %v1136, %v1136
      %v1201 = vpack.c.b16 %v1137, %v1137
      %v1202 = vpack.c.b16 %v1138, %v1138
      %v1203 = vpack.c.b16 %v1139, %v1139
      %v1204 = vpack.c.b16 %v1140, %v1140
      %v1205 = vpack.c.b16 %v1141, %v1141
      %v1206 = vpack.c.b16 %v1142, %v1142
      %v1207 = vpack.c.b16 %v1143, %v1143
      %v1208 = vpack.c.b16 %v1144, %v1144
      %v1209 = vpack.c.b16 %v1145, %v1145
      %v1210 = vpack.c.b16 %v1146, %v1146
      %v1211 = vpack.c.b16 %v1147, %v1147
      %v1212 = vpack.c.b16 %v1148, %v1148
      %v1213 = vpack.c.b16 %v1149, %v1149
      %v1214 = vpack.c.b16 %v1150, %v1150
      %v1215 = vpack.c.b16 %v1151, %v1151
      %v1216 = vpack.c.b16 %v1152, %v1152
      %v1217 = vpack.c.b16 %v1153, %v1153
      %1282 = vst [vmem:[%s199] sm:$0xf] %v1154
      %1283 = vst [vmem:[%s199 + $0x4] sm:$0xf] %v1155
      %1284 = vst [vmem:[%s199 + $0x8] sm:$0xf] %v1156
      %1285 = vst [vmem:[%s199 + $0xc] sm:$0xf] %v1157
      %1286 = vst [vmem:[%s199 + $0x10] sm:$0xf] %v1158
      %1287 = vst [vmem:[%s199 + $0x14] sm:$0xf] %v1159
      %1288 = vst [vmem:[%s199 + $0x18] sm:$0xf] %v1160
      %1289 = vst [vmem:[%s199 + $0x1c] sm:$0xf] %v1161
      %1290 = vst [vmem:[%s199 + $0x20] sm:$0xf] %v1162
      %1291 = vst [vmem:[%s199 + $0x24] sm:$0xf] %v1163
      %1292 = vst [vmem:[%s199 + $0x28] sm:$0xf] %v1164
      %1293 = vst [vmem:[%s199 + $0x2c] sm:$0xf] %v1165
      %1294 = vst [vmem:[%s199 + $0x30] sm:$0xf] %v1166
      %1295 = vst [vmem:[%s199 + $0x34] sm:$0xf] %v1167
      %1296 = vst [vmem:[%s199 + $0x38] sm:$0xf] %v1168
      %1297 = vst [vmem:[%s199 + $0x3c] sm:$0xf] %v1169
      %1298 = vst [vmem:[%s199 + $0x40] sm:$0xf] %v1170
      %1299 = vst [vmem:[%s199 + $0x44] sm:$0xf] %v1171
      %1300 = vst [vmem:[%s199 + $0x48] sm:$0xf] %v1172
      %1301 = vst [vmem:[%s199 + $0x4c] sm:$0xf] %v1173
      %1302 = vst [vmem:[%s199 + $0x50] sm:$0xf] %v1174
      %1303 = vst [vmem:[%s199 + $0x54] sm:$0xf] %v1175
      %1304 = vst [vmem:[%s199 + $0x58] sm:$0xf] %v1176
      %1305 = vst [vmem:[%s199 + $0x5c] sm:$0xf] %v1177
      %1306 = vst [vmem:[%s199 + $0x60] sm:$0xf] %v1178
      %1307 = vst [vmem:[%s199 + $0x64] sm:$0xf] %v1179
      %1308 = vst [vmem:[%s199 + $0x68] sm:$0xf] %v1180
      %1309 = vst [vmem:[%s199 + $0x6c] sm:$0xf] %v1181
      %1310 = vst [vmem:[%s199 + $0x70] sm:$0xf] %v1182
      %1311 = vst [vmem:[%s199 + $0x74] sm:$0xf] %v1183
      %1312 = vst [vmem:[%s199 + $0x78] sm:$0xf] %v1184
      %1313 = vst [vmem:[%s199 + $0x7c] sm:$0xf] %v1185
      %1314 = vst [vmem:[%s199 + $0x80] sm:$0xf] %v1186
      %1315 = vst [vmem:[%s199 + $0x84] sm:$0xf] %v1187
      %1316 = vst [vmem:[%s199 + $0x88] sm:$0xf] %v1188
      %1317 = vst [vmem:[%s199 + $0x8c] sm:$0xf] %v1189
      %1318 = vst [vmem:[%s199 + $0x90] sm:$0xf] %v1190
      %1319 = vst [vmem:[%s199 + $0x94] sm:$0xf] %v1191
      %1320 = vst [vmem:[%s199 + $0x98] sm:$0xf] %v1192
      %1321 = vst [vmem:[%s199 + $0x9c] sm:$0xf] %v1193
      %1322 = vst [vmem:[%s199 + $0xa0] sm:$0xf] %v1194
      %1323 = vst [vmem:[%s199 + $0xa4] sm:$0xf] %v1195
      %1324 = vst [vmem:[%s199 + $0xa8] sm:$0xf] %v1196
      %1325 = vst [vmem:[%s199 + $0xac] sm:$0xf] %v1197
      %1326 = vst [vmem:[%s199 + $0xb0] sm:$0xf] %v1198
      %1327 = vst [vmem:[%s199 + $0xb4] sm:$0xf] %v1199
      %1328 = vst [vmem:[%s199 + $0xb8] sm:$0xf] %v1200
      %1329 = vst [vmem:[%s199 + $0xbc] sm:$0xf] %v1201
      %1330 = vst [vmem:[%s199 + $0xc0] sm:$0xf] %v1202
      %1331 = vst [vmem:[%s199 + $0xc4] sm:$0xf] %v1203
      %1332 = vst [vmem:[%s199 + $0xc8] sm:$0xf] %v1204
      %1333 = vst [vmem:[%s199 + $0xcc] sm:$0xf] %v1205
      %1334 = vst [vmem:[%s199 + $0xd0] sm:$0xf] %v1206
      %1335 = vst [vmem:[%s199 + $0xd4] sm:$0xf] %v1207
      %1336 = vst [vmem:[%s199 + $0xd8] sm:$0xf] %v1208
      %1337 = vst [vmem:[%s199 + $0xdc] sm:$0xf] %v1209
      %1338 = vst [vmem:[%s199 + $0xe0] sm:$0xf] %v1210
      %1339 = vst [vmem:[%s199 + $0xe4] sm:$0xf] %v1211
      %1340 = vst [vmem:[%s199 + $0xe8] sm:$0xf] %v1212
      %1341 = vst [vmem:[%s199 + $0xec] sm:$0xf] %v1213
      %1342 = vst [vmem:[%s199 + $0xf0] sm:$0xf] %v1214
      %1343 = vst [vmem:[%s199 + $0xf4] sm:$0xf] %v1215
      %1344 = vst [vmem:[%s199 + $0xf8] sm:$0xf] %v1216
      %1345 = vst [vmem:[%s199 + $0xfc] sm:$0xf] %v1217
      %s1346 = smul.u32 64, %s15
      %p1347 = scmp.lt.s32.totalorder %s1346, 255
      %s1348 = scalar_select %p1347, %s1346, 255
      %s1349 = smul.addr %s1348, 4
      %s1350 = scalar_lea.vmem %s4, %s1349
      // Predicated region
      $region37: #{unet_seq_forward.11} parent=35 // pred_check
        %p1351 = pneg %p122
      $region38: #{unet_seq_forward.11} parent=35 // pred_check_branch
        %1353 = sbr.rel (%p1351) target = $region40
      $region39: #{unet_seq_forward.11} parent=35 // pred_region
        %s1354 = smul.u32 64, %s15
      $region40: #{unet_seq_forward.11} parent=35 // pred_fallthru
        _
    $region36: #{unet_seq_forward.11} parent=5 // pred_fallthru
      _
    %p1355 = scmp.le.s32.totalorder 2, %s10
    // Predicated region
    $region41: #{unet_seq_forward.11} parent=5 // pred_check
      %p1356 = pneg %p1355
    $region42: #{unet_seq_forward.11} parent=5 // pred_check_branch
      %1358 = sbr.rel (%p1356) target = $region44
    $region43: #{unet_seq_forward.11} parent=5 // pred_region
      %s1359 = ssub.s32 %s10, 2
      // Predicated region
      $region45: #{unet_seq_forward.11} parent=43 // pred_check
        %p1360 = pneg %p128
      $region46: #{unet_seq_forward.11} parent=43 // pred_check_branch
        %1362 = sbr.rel (%p1360) target = $region48
      $region47: #{unet_seq_forward.11} parent=43 // pred_region
        %s1363 = smul.u32 64, %s16
        %p1364 = scmp.lt.s32.totalorder %s1363, 255
        %s1365 = scalar_select %p1364, %s1363, 255
        %s1366 = smul.addr %s1365, 4
        %s1367 = scalar_lea.vmem %s4, %s1366
      $region48: #{unet_seq_forward.11} parent=43 // pred_fallthru
        _
    $region44: #{unet_seq_forward.11} parent=5 // pred_fallthru
      _
  $region6: #{unet_seq_forward.11} parent=0 // loop_footer
    %s14 = sadd.s32 1, %s10
  $region7: #{unet_seq_forward.11} parent=0 // loop_footer_branch
    %9 = sbr.rel target = $region3
  $region8: #{unet_seq_forward.11} parent=0 // loop_exit
    _

// kernel: unet_seq_forward.12
$region0: #{unet_seq_forward.12}
  #allocation0 [shape = 'u32[]', space=smem, size = 0x4, offset = 0x4, fixed_abs, tag = 'smem constant byte address 0x4 - core index']
  #allocation1 [shape = 'u32[144,128]{1,0:T(1,128)}', space=vmem, size = 0x12000, scoped, tag = 'internal scratch']
  %s0 = inlined_call_operand.vmem [shape: bf16[512,80], index: 0, kind: input, shape index: {}]
  %s1 = inlined_call_operand.vmem [shape: bf16[80,128], index: 1, kind: input, shape index: {}]
  %s2 = inlined_call_operand.vmem [shape: f32[1,128], index: 2, kind: input, shape index: {}]
  %s3 = inlined_call_operand.vmem [shape: f32[1,128], index: 3, kind: input, shape index: {}]
  %s4 = inlined_call_operand.vmem [shape: bf16[512,128], index: 4, kind: output, shape index: {}]
  %s5 = sld [smem:[#allocation0]]
  $region49: #{unet_seq_forward.12} parent=0
    _
  %s7 = ssub.s32 1, %s5
  %s8 = scalar_select 0, %s7, %s5
  loop: start=0, step=1, limit=4
  $region2: #{unet_seq_forward.12} parent=0 // loop_pre_header
    _
  $region3: #{unet_seq_forward.12} parent=0 // loop_header
    %s10 = sphi 0, %s14
    %p11 = scmp.ge.s32.totalorder %s10, 4
    %s20 = sphi 0, %s22
    %s23 = sphi 0, %s20
    %s24 = sphi 0, %s23
    %s40 = sphi 0, %s24
    %s44 = sphi 0, %s44
    %s46 = sphi 0, %s44
    %s47 = sphi 0, %s46
    %s61 = sphi 0, %s47
    %s65 = sphi 0, %s65
    %s67 = sphi 0, %s65
    %s68 = sphi 0, %s67
    %s82 = sphi 0, %s68
    %s86 = sphi 0, %s86
    %s88 = sphi 0, %s86
    %s89 = sphi 0, %s88
    %s103 = sphi 0, %s89
    %s109 = sphi 0, %s111
    %s112 = sphi 0, %s109
    %s113 = sphi 0, %s112
    %s129 = sphi 0, %s113
  $region4: #{unet_seq_forward.12} parent=0 // loop_header_branch
    %13 = sbr.rel (%p11) target = $region8
  $region5: #{unet_seq_forward.12} parent=0 // loop_body
    %s15 = ssub.s32 %s10, 1
    %s16 = ssub.s32 %s10, 2
    %s17 = sadd.s32 %s10, 1
    %s18 = ssub.s32 %s10, %s17
    %p19 = scmp.eq.s32.totalorder %s18, 0
    %s21 = sadd.s32 %s20, 1
    %s22 = scalar_select %p19, %s20, %s21
    %p25 = pneg %p19
    %p26 = scmp.eq.s32.totalorder %s10, 1
    %p27 = por %p25, %p26
    %p28 = scmp.ne.s32.totalorder %s20, %s23
    %p29 = scmp.eq.s32.totalorder %s10, 0
    %p30 = por %p28, %p29
    %p31 = scmp.ne.s32.totalorder %s20, %s23
    %p32 = scmp.eq.s32.totalorder %s15, 1
    %p33 = por %p31, %p32
    %p34 = scmp.ne.s32.totalorder %s23, %s24
    %p35 = scmp.eq.s32.totalorder %s15, 0
    %p36 = por %p34, %p35
    %p37 = scmp.ne.s32.totalorder %s23, %s24
    %p38 = scmp.eq.s32.totalorder %s16, 1
    %p39 = por %p37, %p38
    %p41 = scmp.ne.s32.totalorder %s24, %s40
    %p42 = scmp.eq.s32.totalorder %s16, 0
    %p43 = por %p41, %p42
    %s45 = sadd.s32 %s44, 1
    %p48 = scmp.eq.s32.totalorder %s10, 1
    %p49 = scmp.ne.s32.totalorder %s44, %s46
    %p50 = scmp.eq.s32.totalorder %s10, 0
    %p51 = por %p49, %p50
    %p52 = scmp.ne.s32.totalorder %s44, %s46
    %p53 = scmp.eq.s32.totalorder %s15, 1
    %p54 = por %p52, %p53
    %p55 = scmp.ne.s32.totalorder %s46, %s47
    %p56 = scmp.eq.s32.totalorder %s15, 0
    %p57 = por %p55, %p56
    %p58 = scmp.ne.s32.totalorder %s46, %s47
    %p59 = scmp.eq.s32.totalorder %s16, 1
    %p60 = por %p58, %p59
    %p62 = scmp.ne.s32.totalorder %s47, %s61
    %p63 = scmp.eq.s32.totalorder %s16, 0
    %p64 = por %p62, %p63
    %s66 = sadd.s32 %s65, 1
    %p69 = scmp.eq.s32.totalorder %s10, 1
    %p70 = scmp.ne.s32.totalorder %s65, %s67
    %p71 = scmp.eq.s32.totalorder %s10, 0
    %p72 = por %p70, %p71
    %p73 = scmp.ne.s32.totalorder %s65, %s67
    %p74 = scmp.eq.s32.totalorder %s15, 1
    %p75 = por %p73, %p74
    %p76 = scmp.ne.s32.totalorder %s67, %s68
    %p77 = scmp.eq.s32.totalorder %s15, 0
    %p78 = por %p76, %p77
    %p79 = scmp.ne.s32.totalorder %s67, %s68
    %p80 = scmp.eq.s32.totalorder %s16, 1
    %p81 = por %p79, %p80
    %p83 = scmp.ne.s32.totalorder %s68, %s82
    %p84 = scmp.eq.s32.totalorder %s16, 0
    %p85 = por %p83, %p84
    %s87 = sadd.s32 %s86, 1
    %p90 = scmp.eq.s32.totalorder %s10, 1
    %p91 = scmp.ne.s32.totalorder %s86, %s88
    %p92 = scmp.eq.s32.totalorder %s10, 0
    %p93 = por %p91, %p92
    %p94 = scmp.ne.s32.totalorder %s86, %s88
    %p95 = scmp.eq.s32.totalorder %s15, 1
    %p96 = por %p94, %p95
    %p97 = scmp.ne.s32.totalorder %s88, %s89
    %p98 = scmp.eq.s32.totalorder %s15, 0
    %p99 = por %p97, %p98
    %p100 = scmp.ne.s32.totalorder %s88, %s89
    %p101 = scmp.eq.s32.totalorder %s16, 1
    %p102 = por %p100, %p101
    %p104 = scmp.ne.s32.totalorder %s89, %s103
    %p105 = scmp.eq.s32.totalorder %s16, 0
    %p106 = por %p104, %p105
    %s107 = ssub.s32 %s10, %s17
    %p108 = scmp.eq.s32.totalorder %s107, 0
    %s110 = sadd.s32 %s109, 1
    %s111 = scalar_select %p108, %s109, %s110
    %p114 = pneg %p108
    %p115 = scmp.eq.s32.totalorder %s10, 1
    %p116 = por %p114, %p115
    %p117 = scmp.ne.s32.totalorder %s109, %s112
    %p118 = scmp.eq.s32.totalorder %s10, 0
    %p119 = por %p117, %p118
    %p120 = scmp.ne.s32.totalorder %s109, %s112
    %p121 = scmp.eq.s32.totalorder %s15, 1
    %p122 = por %p120, %p121
    %p123 = scmp.ne.s32.totalorder %s112, %s113
    %p124 = scmp.eq.s32.totalorder %s15, 0
    %p125 = por %p123, %p124
    %p126 = scmp.ne.s32.totalorder %s112, %s113
    %p127 = scmp.eq.s32.totalorder %s16, 1
    %p128 = por %p126, %p127
    %p130 = scmp.ne.s32.totalorder %s113, %s129
    %p131 = scmp.eq.s32.totalorder %s16, 0
    %p132 = por %p130, %p131
    %p133 = scmp.le.s32.totalorder 1, %s10
    %p134 = scmp.lt.s32.totalorder %s10, 3
    %p135 = pnand %p133, %p134
    %p136 = pneg %p135
    // Predicated region
    $region9: #{unet_seq_forward.12} parent=5 // pred_check
      _
    $region10: #{unet_seq_forward.12} parent=5 // pred_check_branch
      %138 = sbr.rel (%p135) target = $region12
    $region11: #{unet_seq_forward.12} parent=5 // pred_region
      %s139 = ssub.s32 %s10, 1
      // Predicated region
      $region13: #{unet_seq_forward.12} parent=11 // pred_check
        %p140 = pneg %p57
      $region14: #{unet_seq_forward.12} parent=11 // pred_check_branch
        %142 = sbr.rel (%p140) target = $region16
      $region15: #{unet_seq_forward.12} parent=11 // pred_region
        _
      $region16: #{unet_seq_forward.12} parent=11 // pred_fallthru
        _
      // Predicated region
      $region17: #{unet_seq_forward.12} parent=11 // pred_check
        %p143 = pneg %p78
      $region18: #{unet_seq_forward.12} parent=11 // pred_check_branch
        %145 = sbr.rel (%p143) target = $region20
      $region19: #{unet_seq_forward.12} parent=11 // pred_region
        _
      $region20: #{unet_seq_forward.12} parent=11 // pred_fallthru
        _
      // Predicated region
      $region21: #{unet_seq_forward.12} parent=11 // pred_check
        %p146 = pneg %p99
      $region22: #{unet_seq_forward.12} parent=11 // pred_check_branch
        %148 = sbr.rel (%p146) target = $region24
      $region23: #{unet_seq_forward.12} parent=11 // pred_region
        _
      $region24: #{unet_seq_forward.12} parent=11 // pred_fallthru
        _
    $region12: #{unet_seq_forward.12} parent=5 // pred_fallthru
      _
    %p149 = scmp.lt.s32.totalorder %s10, 2
    // Predicated region
    $region25: #{unet_seq_forward.12} parent=5 // pred_check
      %p150 = pneg %p149
    $region26: #{unet_seq_forward.12} parent=5 // pred_check_branch
      %152 = sbr.rel (%p150) target = $region28
    $region27: #{unet_seq_forward.12} parent=5 // pred_region
      // Predicated region
      $region29: #{unet_seq_forward.12} parent=27 // pred_check
        %p153 = pneg %p30
      $region30: #{unet_seq_forward.12} parent=27 // pred_check_branch
        %155 = sbr.rel (%p153) target = $region32
      $region31: #{unet_seq_forward.12} parent=27 // pred_region
        %s156 = smul.u32 32, %s10
        %p157 = scmp.lt.s32.totalorder %s156, 63
        %s158 = scalar_select %p157, %s156, 63
        %s159 = smul.addr %s158, 4
        %s160 = scalar_lea.vmem %s0, %s159
        %s161 = smul.u32 32, %s10
      $region32: #{unet_seq_forward.12} parent=27 // pred_fallthru
        _
    $region28: #{unet_seq_forward.12} parent=5 // pred_fallthru
      _
    %p162 = scmp.le.s32.totalorder 1, %s10
    %p163 = scmp.lt.s32.totalorder %s10, 3
    %p164 = pnand %p162, %p163
    %p165 = pneg %p164
    // Predicated region
    $region33: #{unet_seq_forward.12} parent=5 // pred_check
      _
    $region34: #{unet_seq_forward.12} parent=5 // pred_check_branch
      %167 = sbr.rel (%p164) target = $region36
    $region35: #{unet_seq_forward.12} parent=5 // pred_region
      %s168 = ssub.s32 %s10, 1
      %s169 = smul.u32 32, %s15
      %p170 = scmp.lt.s32.totalorder %s169, 63
      %s171 = scalar_select %p170, %s169, 63
      %s172 = smul.addr %s171, 4
      %s173 = scalar_lea.vmem %s0, %s172
      %p174 = pneg %p36
      %p175 = pneg %p33
      %p176 = pneg %p57
      %p177 = pneg %p54
      %p178 = pneg %p78
      %p179 = pneg %p75
      %p180 = pneg %p99
      %p181 = pneg %p96
      %p182 = pneg %p125
      %p183 = pneg %p122
      %s184 = smul.u32 32, %s15
      %p185 = scmp.lt.s32.totalorder %s184, 63
      %s186 = scalar_select %p185, %s184, 63
      %s187 = smul.addr %s186, 4
      %s188 = scalar_lea.vmem %s4, %s187
      %s189 = smul.u32 32, %s15
      %p190 = scmp.lt.s32.totalorder %s189, 63
      %s191 = scalar_select %p190, %s189, 63
      %s192 = smul.addr %s191, 4
      %s193 = scalar_lea.vmem %s0, %s192
      %s194 = smul.u32 32, %s15
      %s195 = smul.u32 32, %s15
      %p196 = scmp.lt.s32.totalorder %s195, 63
      %s197 = scalar_select %p196, %s195, 63
      %s198 = smul.addr %s197, 4
      %s199 = scalar_lea.vmem %s4, %s198
      %s200 = smul.u32 32, %s15
      %v202 = vld [vmem:[%s193] sm:$0xf]
      %v203 = vld [vmem:[%s193 + $0x4] sm:$0xf]
      %v204 = vld [vmem:[%s193 + $0x8] sm:$0xf]
      %v205 = vld [vmem:[%s193 + $0xc] sm:$0xf]
      %v206 = vld [vmem:[%s193 + $0x10] sm:$0xf]
      %v207 = vld [vmem:[%s193 + $0x14] sm:$0xf]
      %v208 = vld [vmem:[%s193 + $0x18] sm:$0xf]
      %v209 = vld [vmem:[%s193 + $0x1c] sm:$0xf]
      %v210 = vld [vmem:[%s193 + $0x20] sm:$0xf]
      %v211 = vld [vmem:[%s193 + $0x24] sm:$0xf]
      %v212 = vld [vmem:[%s193 + $0x28] sm:$0xf]
      %v213 = vld [vmem:[%s193 + $0x2c] sm:$0xf]
      %v214 = vld [vmem:[%s193 + $0x30] sm:$0xf]
      %v215 = vld [vmem:[%s193 + $0x34] sm:$0xf]
      %v216 = vld [vmem:[%s193 + $0x38] sm:$0xf]
      %v217 = vld [vmem:[%s193 + $0x3c] sm:$0xf]
      %v218 = vld [vmem:[%s193 + $0x40] sm:$0xf]
      %v219 = vld [vmem:[%s193 + $0x44] sm:$0xf]
      %v220 = vld [vmem:[%s193 + $0x48] sm:$0xf]
      %v221 = vld [vmem:[%s193 + $0x4c] sm:$0xf]
      %v222 = vld [vmem:[%s193 + $0x50] sm:$0xf]
      %v223 = vld [vmem:[%s193 + $0x54] sm:$0xf]
      %v224 = vld [vmem:[%s193 + $0x58] sm:$0xf]
      %v225 = vld [vmem:[%s193 + $0x5c] sm:$0xf]
      %v226 = vld [vmem:[%s193 + $0x60] sm:$0xf]
      %v227 = vld [vmem:[%s193 + $0x64] sm:$0xf]
      %v228 = vld [vmem:[%s193 + $0x68] sm:$0xf]
      %v229 = vld [vmem:[%s193 + $0x6c] sm:$0xf]
      %v230 = vld [vmem:[%s193 + $0x70] sm:$0xf]
      %v231 = vld [vmem:[%s193 + $0x74] sm:$0xf]
      %v232 = vld [vmem:[%s193 + $0x78] sm:$0xf]
      %v233 = vld [vmem:[%s193 + $0x7c] sm:$0xf]
      %v234 = vld [vmem:[%s1] sm:$0xf]
      %v235 = vld [vmem:[%s1 + $0x4] sm:$0xf]
      %v236 = vld [vmem:[%s1 + $0x8] sm:$0xf]
      %v237 = vld [vmem:[%s1 + $0xc] sm:$0xf]
      %v238 = vld [vmem:[%s1 + $0x10] sm:$0xf]
      %v239 = vld [vmem:[%s1 + $0x14] sm:$0xf]
      %v240 = vld [vmem:[%s1 + $0x18] sm:$0xf]
      %v241 = vld [vmem:[%s1 + $0x1c] sm:$0xf]
      %v242 = vld [vmem:[%s1 + $0x20] sm:$0xf]
      %v243 = vld [vmem:[%s1 + $0x24] sm:$0xf]
      %v276 = vunpack.c.l.b16 %v202
      %v277 = vunpack.c.l.b16 %v203
      %v278 = vunpack.c.l.b16 %v204
      %v279 = vunpack.c.l.b16 %v205
      %v280 = vunpack.c.l.b16 %v206
      %v281 = vunpack.c.l.b16 %v207
      %v282 = vunpack.c.l.b16 %v208
      %v283 = vunpack.c.l.b16 %v209
      %v284 = vunpack.c.l.b16 %v210
      %v285 = vunpack.c.l.b16 %v211
      %v286 = vunpack.c.l.b16 %v212
      %v287 = vunpack.c.l.b16 %v213
      %v288 = vunpack.c.l.b16 %v214
      %v289 = vunpack.c.l.b16 %v215
      %v290 = vunpack.c.l.b16 %v216
      %v291 = vunpack.c.l.b16 %v217
      %v292 = vunpack.c.l.b16 %v218
      %v293 = vunpack.c.l.b16 %v219
      %v294 = vunpack.c.l.b16 %v220
      %v295 = vunpack.c.l.b16 %v221
      %v296 = vunpack.c.l.b16 %v222
      %v297 = vunpack.c.l.b16 %v223
      %v298 = vunpack.c.l.b16 %v224
      %v299 = vunpack.c.l.b16 %v225
      %v300 = vunpack.c.l.b16 %v226
      %v301 = vunpack.c.l.b16 %v227
      %v302 = vunpack.c.l.b16 %v228
      %v303 = vunpack.c.l.b16 %v229
      %v304 = vunpack.c.l.b16 %v230
      %v305 = vunpack.c.l.b16 %v231
      %v306 = vunpack.c.l.b16 %v232
      %v307 = vunpack.c.l.b16 %v233
      %v308 = vpack.c.b16 %v277, %v276
      %v309 = vpack.c.b16 %v279, %v278
      %v310 = vpack.c.b16 %v281, %v280
      %v311 = vpack.c.b16 %v283, %v282
      %v312 = vpack.c.b16 %v285, %v284
      %v313 = vpack.c.b16 %v287, %v286
      %v314 = vpack.c.b16 %v289, %v288
      %v315 = vpack.c.b16 %v291, %v290
      %v316 = vpack.c.b16 %v293, %v292
      %v317 = vpack.c.b16 %v295, %v294
      %v318 = vpack.c.b16 %v297, %v296
      %v319 = vpack.c.b16 %v299, %v298
      %v320 = vpack.c.b16 %v301, %v300
      %v321 = vpack.c.b16 %v303, %v302
      %v322 = vpack.c.b16 %v305, %v304
      %v323 = vpack.c.b16 %v307, %v306
      %v334 = vunpack.c.l.b16 %v234
      %v335 = vunpack.c.l.b16 %v235
      %v336 = vunpack.c.l.b16 %v236
      %v337 = vunpack.c.l.b16 %v237
      %v338 = vunpack.c.l.b16 %v238
      %v339 = vunpack.c.l.b16 %v239
      %v340 = vunpack.c.l.b16 %v240
      %v341 = vunpack.c.l.b16 %v241
      %v342 = vunpack.c.l.b16 %v242
      %v343 = vunpack.c.l.b16 %v243
      %v344 = vpack.c.b16 %v335, %v334
      %v345 = vpack.c.b16 %v337, %v336
      %v346 = vpack.c.b16 %v339, %v338
      %v347 = vpack.c.b16 %v341, %v340
      %v348 = vpack.c.b16 %v343, %v342
      %vm354 = vcmask 654336
      %v356 = vsel %vm354, %v308, 0
      %v359 = vsel %vm354, %v309, 0
      %v362 = vsel %vm354, %v310, 0
      %v365 = vsel %vm354, %v311, 0
      %v368 = vsel %vm354, %v312, 0
      %v371 = vsel %vm354, %v313, 0
      %v374 = vsel %vm354, %v314, 0
      %v377 = vsel %vm354, %v315, 0
      %v380 = vsel %vm354, %v316, 0
      %v383 = vsel %vm354, %v317, 0
      %v386 = vsel %vm354, %v318, 0
      %v389 = vsel %vm354, %v319, 0
      %v392 = vsel %vm354, %v320, 0
      %v395 = vsel %vm354, %v321, 0
      %v398 = vsel %vm354, %v322, 0
      %v401 = vsel %vm354, %v323, 0
      %403 = vmatprep.subr.bf16.mxu0 0
      %404 = vmatpush1.bf16.msra.mxu0 0
      %405 = vmatprep.subr.bf16.mxu0 0
      %406 = vmatpush1.bf16.msra.mxu0 0
      %407 = vmatprep.subr.bf16.mxu0 0
      %408 = vmatpush1.bf16.msra.mxu0 0
      %409 = vmatprep.subr.bf16.mxu0 0
      %410 = vmatpush1.bf16.msra.mxu0 %v348
      %411 = vmatprep.subr.bf16.mxu0 0
      %412 = vmatpush1.bf16.msra.mxu0 %v347
      %413 = vmatprep.subr.bf16.mxu0 0
      %414 = vmatpush1.bf16.msra.mxu0 %v346
      %415 = vmatprep.subr.bf16.mxu0 0
      %416 = vmatpush1.bf16.msra.mxu0 %v345
      %417 = vmatprep.subr.bf16.mxu0 0
      %418 = vmatpush1.bf16.msra.mxu0 %v344
      %419 = vmatprep.subr.bf16.mxu0 0
      %420 = vmatpush2.bf16.msra.mxu0 0
      %421 = vmatprep.subr.bf16.mxu0 0
      %422 = vmatpush2.bf16.msra.mxu0 0
      %423 = vmatprep.subr.bf16.mxu0 0
      %424 = vmatpush2.bf16.msra.mxu0 0
      %425 = vmatprep.subr.bf16.mxu0 0
      %426 = vmatpush2.bf16.msra.mxu0 0
      %427 = vmatprep.subr.bf16.mxu0 0
      %428 = vmatpush2.bf16.msra.mxu0 0
      %429 = vmatprep.subr.bf16.mxu0 0
      %430 = vmatpush2.bf16.msra.mxu0 0
      %431 = vmatprep.subr.bf16.mxu0 0
      %432 = vmatpush2.bf16.msra.mxu0 0
      %433 = vmatprep.subr.bf16.mxu0 0
      %434 = vmatpush2.bf16.msra.mxu0 0
      %435 = vmatprep.mubr.bf16.mxu0 0
      %436 = vmatmul.mubr.bf16.gmra.mxu0 %v356
      %v437 = vpop.f32.mrf.mxu0
      %v438 = vadd.f32 0.0, %v437
      %v439 = vpop.f32.mrf.mxu0
      %v440 = vpop.f32.mrf.mxu0
      %v441 = vadd.f32 0.0, %v440
      %v442 = vpop.f32.mrf.mxu0
      %443 = vmatprep.mubr.bf16.mxu0 0
      %444 = vmatmul.mubr.bf16.gmra.mxu0 %v359
      %v445 = vpop.f32.mrf.mxu0
      %v446 = vadd.f32 0.0, %v445
      %v447 = vpop.f32.mrf.mxu0
      %v448 = vpop.f32.mrf.mxu0
      %v449 = vadd.f32 0.0, %v448
      %v450 = vpop.f32.mrf.mxu0
      %451 = vmatprep.mubr.bf16.mxu0 0
      %452 = vmatmul.mubr.bf16.gmra.mxu0 %v362
      %v453 = vpop.f32.mrf.mxu0
      %v454 = vadd.f32 0.0, %v453
      %v455 = vpop.f32.mrf.mxu0
      %v456 = vpop.f32.mrf.mxu0
      %v457 = vadd.f32 0.0, %v456
      %v458 = vpop.f32.mrf.mxu0
      %459 = vmatprep.mubr.bf16.mxu0 0
      %460 = vmatmul.mubr.bf16.gmra.mxu0 %v365
      %v461 = vpop.f32.mrf.mxu0
      %v462 = vadd.f32 0.0, %v461
      %v463 = vpop.f32.mrf.mxu0
      %v464 = vpop.f32.mrf.mxu0
      %v465 = vadd.f32 0.0, %v464
      %v466 = vpop.f32.mrf.mxu0
      %467 = vmatprep.mubr.bf16.mxu0 0
      %468 = vmatmul.mubr.bf16.gmra.mxu0 %v368
      %v469 = vpop.f32.mrf.mxu0
      %v470 = vadd.f32 0.0, %v469
      %v471 = vpop.f32.mrf.mxu0
      %v472 = vpop.f32.mrf.mxu0
      %v473 = vadd.f32 0.0, %v472
      %v474 = vpop.f32.mrf.mxu0
      %475 = vmatprep.mubr.bf16.mxu0 0
      %476 = vmatmul.mubr.bf16.gmra.mxu0 %v371
      %v477 = vpop.f32.mrf.mxu0
      %v478 = vadd.f32 0.0, %v477
      %v479 = vpop.f32.mrf.mxu0
      %v480 = vpop.f32.mrf.mxu0
      %v481 = vadd.f32 0.0, %v480
      %v482 = vpop.f32.mrf.mxu0
      %483 = vmatprep.mubr.bf16.mxu0 0
      %484 = vmatmul.mubr.bf16.gmra.mxu0 %v374
      %v485 = vpop.f32.mrf.mxu0
      %v486 = vadd.f32 0.0, %v485
      %v487 = vpop.f32.mrf.mxu0
      %v488 = vpop.f32.mrf.mxu0
      %v489 = vadd.f32 0.0, %v488
      %v490 = vpop.f32.mrf.mxu0
      %491 = vmatprep.mubr.bf16.mxu0 0
      %492 = vmatmul.mubr.bf16.gmra.mxu0 %v377
      %v493 = vpop.f32.mrf.mxu0
      %v494 = vadd.f32 0.0, %v493
      %v495 = vpop.f32.mrf.mxu0
      %v496 = vpop.f32.mrf.mxu0
      %v497 = vadd.f32 0.0, %v496
      %v498 = vpop.f32.mrf.mxu0
      %499 = vmatprep.mubr.bf16.mxu0 0
      %500 = vmatmul.mubr.bf16.gmra.mxu0 %v380
      %v501 = vpop.f32.mrf.mxu0
      %v502 = vadd.f32 0.0, %v501
      %v503 = vpop.f32.mrf.mxu0
      %v504 = vpop.f32.mrf.mxu0
      %v505 = vadd.f32 0.0, %v504
      %v506 = vpop.f32.mrf.mxu0
      %507 = vmatprep.mubr.bf16.mxu0 0
      %508 = vmatmul.mubr.bf16.gmra.mxu0 %v383
      %v509 = vpop.f32.mrf.mxu0
      %v510 = vadd.f32 0.0, %v509
      %v511 = vpop.f32.mrf.mxu0
      %v512 = vpop.f32.mrf.mxu0
      %v513 = vadd.f32 0.0, %v512
      %v514 = vpop.f32.mrf.mxu0
      %515 = vmatprep.mubr.bf16.mxu0 0
      %516 = vmatmul.mubr.bf16.gmra.mxu0 %v386
      %v517 = vpop.f32.mrf.mxu0
      %v518 = vadd.f32 0.0, %v517
      %v519 = vpop.f32.mrf.mxu0
      %v520 = vpop.f32.mrf.mxu0
      %v521 = vadd.f32 0.0, %v520
      %v522 = vpop.f32.mrf.mxu0
      %523 = vmatprep.mubr.bf16.mxu0 0
      %524 = vmatmul.mubr.bf16.gmra.mxu0 %v389
      %v525 = vpop.f32.mrf.mxu0
      %v526 = vadd.f32 0.0, %v525
      %v527 = vpop.f32.mrf.mxu0
      %v528 = vpop.f32.mrf.mxu0
      %v529 = vadd.f32 0.0, %v528
      %v530 = vpop.f32.mrf.mxu0
      %531 = vmatprep.mubr.bf16.mxu0 0
      %532 = vmatmul.mubr.bf16.gmra.mxu0 %v392
      %v533 = vpop.f32.mrf.mxu0
      %v534 = vadd.f32 0.0, %v533
      %v535 = vpop.f32.mrf.mxu0
      %v536 = vpop.f32.mrf.mxu0
      %v537 = vadd.f32 0.0, %v536
      %v538 = vpop.f32.mrf.mxu0
      %539 = vmatprep.mubr.bf16.mxu0 0
      %540 = vmatmul.mubr.bf16.gmra.mxu0 %v395
      %v541 = vpop.f32.mrf.mxu0
      %v542 = vadd.f32 0.0, %v541
      %v543 = vpop.f32.mrf.mxu0
      %v544 = vpop.f32.mrf.mxu0
      %v545 = vadd.f32 0.0, %v544
      %v546 = vpop.f32.mrf.mxu0
      %547 = vmatprep.mubr.bf16.mxu0 0
      %548 = vmatmul.mubr.bf16.gmra.mxu0 %v398
      %v549 = vpop.f32.mrf.mxu0
      %v550 = vadd.f32 0.0, %v549
      %v551 = vpop.f32.mrf.mxu0
      %v552 = vpop.f32.mrf.mxu0
      %v553 = vadd.f32 0.0, %v552
      %v554 = vpop.f32.mrf.mxu0
      %555 = vmatprep.mubr.bf16.mxu0 0
      %556 = vmatmul.mubr.bf16.gmra.mxu0 %v401
      %v557 = vpop.f32.mrf.mxu0
      %v558 = vadd.f32 0.0, %v557
      %v559 = vpop.f32.mrf.mxu0
      %v560 = vpop.f32.mrf.mxu0
      %v561 = vadd.f32 0.0, %v560
      %v562 = vpop.f32.mrf.mxu0
      %563 = vdwg.mxu0
      %v564 = vld [vmem:[%s2] sm:$0x1]
      %v566 = vlaneseq
      %v567 = vshrl.u32 %v566, 7
      %v568 = vsub.s32 0, %v567
      %v569 = vrot.slane %v564, %v568
      %v571 = vmul.f32 %v438, %v569
      %v572 = vmul.f32 %v441, %v569
      %v573 = vmul.f32 %v446, %v569
      %v574 = vmul.f32 %v449, %v569
      %v575 = vmul.f32 %v454, %v569
      %v576 = vmul.f32 %v457, %v569
      %v577 = vmul.f32 %v462, %v569
      %v578 = vmul.f32 %v465, %v569
      %v579 = vmul.f32 %v470, %v569
      %v580 = vmul.f32 %v473, %v569
      %v581 = vmul.f32 %v478, %v569
      %v582 = vmul.f32 %v481, %v569
      %v583 = vmul.f32 %v486, %v569
      %v584 = vmul.f32 %v489, %v569
      %v585 = vmul.f32 %v494, %v569
      %v586 = vmul.f32 %v497, %v569
      %v587 = vmul.f32 %v502, %v569
      %v588 = vmul.f32 %v505, %v569
      %v589 = vmul.f32 %v510, %v569
      %v590 = vmul.f32 %v513, %v569
      %v591 = vmul.f32 %v518, %v569
      %v592 = vmul.f32 %v521, %v569
      %v593 = vmul.f32 %v526, %v569
      %v594 = vmul.f32 %v529, %v569
      %v595 = vmul.f32 %v534, %v569
      %v596 = vmul.f32 %v537, %v569
      %v597 = vmul.f32 %v542, %v569
      %v598 = vmul.f32 %v545, %v569
      %v599 = vmul.f32 %v550, %v569
      %v600 = vmul.f32 %v553, %v569
      %v601 = vmul.f32 %v558, %v569
      %v602 = vmul.f32 %v561, %v569
      %v603 = vld [vmem:[%s3] sm:$0x1]
      %v605 = vlaneseq
      %v606 = vshrl.u32 %v605, 7
      %v607 = vsub.s32 0, %v606
      %v608 = vrot.slane %v603, %v607
      %v610 = vadd.f32 %v571, %v608
      %v611 = vadd.f32 %v572, %v608
      %v612 = vadd.f32 %v573, %v608
      %v613 = vadd.f32 %v574, %v608
      %v614 = vadd.f32 %v575, %v608
      %v615 = vadd.f32 %v576, %v608
      %v616 = vadd.f32 %v577, %v608
      %v617 = vadd.f32 %v578, %v608
      %v618 = vadd.f32 %v579, %v608
      %v619 = vadd.f32 %v580, %v608
      %v620 = vadd.f32 %v581, %v608
      %v621 = vadd.f32 %v582, %v608
      %v622 = vadd.f32 %v583, %v608
      %v623 = vadd.f32 %v584, %v608
      %v624 = vadd.f32 %v585, %v608
      %v625 = vadd.f32 %v586, %v608
      %v626 = vadd.f32 %v587, %v608
      %v627 = vadd.f32 %v588, %v608
      %v628 = vadd.f32 %v589, %v608
      %v629 = vadd.f32 %v590, %v608
      %v630 = vadd.f32 %v591, %v608
      %v631 = vadd.f32 %v592, %v608
      %v632 = vadd.f32 %v593, %v608
      %v633 = vadd.f32 %v594, %v608
      %v634 = vadd.f32 %v595, %v608
      %v635 = vadd.f32 %v596, %v608
      %v636 = vadd.f32 %v597, %v608
      %v637 = vadd.f32 %v598, %v608
      %v638 = vadd.f32 %v599, %v608
      %v639 = vadd.f32 %v600, %v608
      %v640 = vadd.f32 %v601, %v608
      %v641 = vadd.f32 %v602, %v608
      %v642 = vmax.f32 %v610, 0.0
      %v643 = vmax.f32 %v611, 0.0
      %v644 = vmax.f32 %v612, 0.0
      %v645 = vmax.f32 %v613, 0.0
      %v646 = vmax.f32 %v614, 0.0
      %v647 = vmax.f32 %v615, 0.0
      %v648 = vmax.f32 %v616, 0.0
      %v649 = vmax.f32 %v617, 0.0
      %v650 = vmax.f32 %v618, 0.0
      %v651 = vmax.f32 %v619, 0.0
      %v652 = vmax.f32 %v620, 0.0
      %v653 = vmax.f32 %v621, 0.0
      %v654 = vmax.f32 %v622, 0.0
      %v655 = vmax.f32 %v623, 0.0
      %v656 = vmax.f32 %v624, 0.0
      %v657 = vmax.f32 %v625, 0.0
      %v658 = vmax.f32 %v626, 0.0
      %v659 = vmax.f32 %v627, 0.0
      %v660 = vmax.f32 %v628, 0.0
      %v661 = vmax.f32 %v629, 0.0
      %v662 = vmax.f32 %v630, 0.0
      %v663 = vmax.f32 %v631, 0.0
      %v664 = vmax.f32 %v632, 0.0
      %v665 = vmax.f32 %v633, 0.0
      %v666 = vmax.f32 %v634, 0.0
      %v667 = vmax.f32 %v635, 0.0
      %v668 = vmax.f32 %v636, 0.0
      %v669 = vmax.f32 %v637, 0.0
      %v670 = vmax.f32 %v638, 0.0
      %v671 = vmax.f32 %v639, 0.0
      %v672 = vmax.f32 %v640, 0.0
      %v673 = vmax.f32 %v641, 0.0
      %v674 = vpack.c.bf16 %v643, %v642
      %v675 = vpack.c.bf16 %v645, %v644
      %v676 = vpack.c.bf16 %v647, %v646
      %v677 = vpack.c.bf16 %v649, %v648
      %v678 = vpack.c.bf16 %v651, %v650
      %v679 = vpack.c.bf16 %v653, %v652
      %v680 = vpack.c.bf16 %v655, %v654
      %v681 = vpack.c.bf16 %v657, %v656
      %v682 = vpack.c.bf16 %v659, %v658
      %v683 = vpack.c.bf16 %v661, %v660
      %v684 = vpack.c.bf16 %v663, %v662
      %v685 = vpack.c.bf16 %v665, %v664
      %v686 = vpack.c.bf16 %v667, %v666
      %v687 = vpack.c.bf16 %v669, %v668
      %v688 = vpack.c.bf16 %v671, %v670
      %v689 = vpack.c.bf16 %v673, %v672
      %v706 = vunpack.c.l.b16 %v674
      %v707 = vunpack.c.h.b16 %v674
      %v708 = vunpack.c.l.b16 %v675
      %v709 = vunpack.c.h.b16 %v675
      %v710 = vunpack.c.l.b16 %v676
      %v711 = vunpack.c.h.b16 %v676
      %v712 = vunpack.c.l.b16 %v677
      %v713 = vunpack.c.h.b16 %v677
      %v714 = vunpack.c.l.b16 %v678
      %v715 = vunpack.c.h.b16 %v678
      %v716 = vunpack.c.l.b16 %v679
      %v717 = vunpack.c.h.b16 %v679
      %v718 = vunpack.c.l.b16 %v680
      %v719 = vunpack.c.h.b16 %v680
      %v720 = vunpack.c.l.b16 %v681
      %v721 = vunpack.c.h.b16 %v681
      %v722 = vunpack.c.l.b16 %v682
      %v723 = vunpack.c.h.b16 %v682
      %v724 = vunpack.c.l.b16 %v683
      %v725 = vunpack.c.h.b16 %v683
      %v726 = vunpack.c.l.b16 %v684
      %v727 = vunpack.c.h.b16 %v684
      %v728 = vunpack.c.l.b16 %v685
      %v729 = vunpack.c.h.b16 %v685
      %v730 = vunpack.c.l.b16 %v686
      %v731 = vunpack.c.h.b16 %v686
      %v732 = vunpack.c.l.b16 %v687
      %v733 = vunpack.c.h.b16 %v687
      %v734 = vunpack.c.l.b16 %v688
      %v735 = vunpack.c.h.b16 %v688
      %v736 = vunpack.c.l.b16 %v689
      %v737 = vunpack.c.h.b16 %v689
      %v738 = vpack.c.b16 %v706, %v706
      %v739 = vpack.c.b16 %v707, %v707
      %v740 = vpack.c.b16 %v708, %v708
      %v741 = vpack.c.b16 %v709, %v709
      %v742 = vpack.c.b16 %v710, %v710
      %v743 = vpack.c.b16 %v711, %v711
      %v744 = vpack.c.b16 %v712, %v712
      %v745 = vpack.c.b16 %v713, %v713
      %v746 = vpack.c.b16 %v714, %v714
      %v747 = vpack.c.b16 %v715, %v715
      %v748 = vpack.c.b16 %v716, %v716
      %v749 = vpack.c.b16 %v717, %v717
      %v750 = vpack.c.b16 %v718, %v718
      %v751 = vpack.c.b16 %v719, %v719
      %v752 = vpack.c.b16 %v720, %v720
      %v753 = vpack.c.b16 %v721, %v721
      %v754 = vpack.c.b16 %v722, %v722
      %v755 = vpack.c.b16 %v723, %v723
      %v756 = vpack.c.b16 %v724, %v724
      %v757 = vpack.c.b16 %v725, %v725
      %v758 = vpack.c.b16 %v726, %v726
      %v759 = vpack.c.b16 %v727, %v727
      %v760 = vpack.c.b16 %v728, %v728
      %v761 = vpack.c.b16 %v729, %v729
      %v762 = vpack.c.b16 %v730, %v730
      %v763 = vpack.c.b16 %v731, %v731
      %v764 = vpack.c.b16 %v732, %v732
      %v765 = vpack.c.b16 %v733, %v733
      %v766 = vpack.c.b16 %v734, %v734
      %v767 = vpack.c.b16 %v735, %v735
      %v768 = vpack.c.b16 %v736, %v736
      %v769 = vpack.c.b16 %v737, %v737
      %802 = vst [vmem:[%s199] sm:$0xf] %v738
      %803 = vst [vmem:[%s199 + $0x4] sm:$0xf] %v739
      %804 = vst [vmem:[%s199 + $0x8] sm:$0xf] %v740
      %805 = vst [vmem:[%s199 + $0xc] sm:$0xf] %v741
      %806 = vst [vmem:[%s199 + $0x10] sm:$0xf] %v742
      %807 = vst [vmem:[%s199 + $0x14] sm:$0xf] %v743
      %808 = vst [vmem:[%s199 + $0x18] sm:$0xf] %v744
      %809 = vst [vmem:[%s199 + $0x1c] sm:$0xf] %v745
      %810 = vst [vmem:[%s199 + $0x20] sm:$0xf] %v746
      %811 = vst [vmem:[%s199 + $0x24] sm:$0xf] %v747
      %812 = vst [vmem:[%s199 + $0x28] sm:$0xf] %v748
      %813 = vst [vmem:[%s199 + $0x2c] sm:$0xf] %v749
      %814 = vst [vmem:[%s199 + $0x30] sm:$0xf] %v750
      %815 = vst [vmem:[%s199 + $0x34] sm:$0xf] %v751
      %816 = vst [vmem:[%s199 + $0x38] sm:$0xf] %v752
      %817 = vst [vmem:[%s199 + $0x3c] sm:$0xf] %v753
      %818 = vst [vmem:[%s199 + $0x40] sm:$0xf] %v754
      %819 = vst [vmem:[%s199 + $0x44] sm:$0xf] %v755
      %820 = vst [vmem:[%s199 + $0x48] sm:$0xf] %v756
      %821 = vst [vmem:[%s199 + $0x4c] sm:$0xf] %v757
      %822 = vst [vmem:[%s199 + $0x50] sm:$0xf] %v758
      %823 = vst [vmem:[%s199 + $0x54] sm:$0xf] %v759
      %824 = vst [vmem:[%s199 + $0x58] sm:$0xf] %v760
      %825 = vst [vmem:[%s199 + $0x5c] sm:$0xf] %v761
      %826 = vst [vmem:[%s199 + $0x60] sm:$0xf] %v762
      %827 = vst [vmem:[%s199 + $0x64] sm:$0xf] %v763
      %828 = vst [vmem:[%s199 + $0x68] sm:$0xf] %v764
      %829 = vst [vmem:[%s199 + $0x6c] sm:$0xf] %v765
      %830 = vst [vmem:[%s199 + $0x70] sm:$0xf] %v766
      %831 = vst [vmem:[%s199 + $0x74] sm:$0xf] %v767
      %832 = vst [vmem:[%s199 + $0x78] sm:$0xf] %v768
      %833 = vst [vmem:[%s199 + $0x7c] sm:$0xf] %v769
      %s834 = smul.u32 32, %s15
      %p835 = scmp.lt.s32.totalorder %s834, 63
      %s836 = scalar_select %p835, %s834, 63
      %s837 = smul.addr %s836, 4
      %s838 = scalar_lea.vmem %s4, %s837
      // Predicated region
      $region37: #{unet_seq_forward.12} parent=35 // pred_check
        %p839 = pneg %p122
      $region38: #{unet_seq_forward.12} parent=35 // pred_check_branch
        %841 = sbr.rel (%p839) target = $region40
      $region39: #{unet_seq_forward.12} parent=35 // pred_region
        %s842 = smul.u32 32, %s15
      $region40: #{unet_seq_forward.12} parent=35 // pred_fallthru
        _
    $region36: #{unet_seq_forward.12} parent=5 // pred_fallthru
      _
    %p843 = scmp.le.s32.totalorder 2, %s10
    // Predicated region
    $region41: #{unet_seq_forward.12} parent=5 // pred_check
      %p844 = pneg %p843
    $region42: #{unet_seq_forward.12} parent=5 // pred_check_branch
      %846 = sbr.rel (%p844) target = $region44
    $region43: #{unet_seq_forward.12} parent=5 // pred_region
      %s847 = ssub.s32 %s10, 2
      // Predicated region
      $region45: #{unet_seq_forward.12} parent=43 // pred_check
        %p848 = pneg %p128
      $region46: #{unet_seq_forward.12} parent=43 // pred_check_branch
        %850 = sbr.rel (%p848) target = $region48
      $region47: #{unet_seq_forward.12} parent=43 // pred_region
        %s851 = smul.u32 32, %s16
        %p852 = scmp.lt.s32.totalorder %s851, 63
        %s853 = scalar_select %p852, %s851, 63
        %s854 = smul.addr %s853, 4
        %s855 = scalar_lea.vmem %s4, %s854
      $region48: #{unet_seq_forward.12} parent=43 // pred_fallthru
        _
    $region44: #{unet_seq_forward.12} parent=5 // pred_fallthru
      _
  $region6: #{unet_seq_forward.12} parent=0 // loop_footer
    %s14 = sadd.s32 1, %s10
  $region7: #{unet_seq_forward.12} parent=0 // loop_footer_branch
    %9 = sbr.rel target = $region3
  $region8: #{unet_seq_forward.12} parent=0 // loop_exit
    _

// kernel: unet_seq_forward.13
$region0: #{unet_seq_forward.13}
  #allocation0 [shape = 'u32[]', space=smem, size = 0x4, offset = 0x4, fixed_abs, tag = 'smem constant byte address 0x4 - core index']
  #allocation1 [shape = 'u32[144,128]{1,0:T(1,128)}', space=vmem, size = 0x12000, scoped, tag = 'internal scratch']
  %s0 = inlined_call_operand.vmem [shape: bf16[128,144], index: 0, kind: input, shape index: {}]
  %s1 = inlined_call_operand.vmem [shape: bf16[144,128], index: 1, kind: input, shape index: {}]
  %s2 = inlined_call_operand.vmem [shape: f32[1,128], index: 2, kind: input, shape index: {}]
  %s3 = inlined_call_operand.vmem [shape: f32[1,128], index: 3, kind: input, shape index: {}]
  %s4 = inlined_call_operand.vmem [shape: bf16[128,128], index: 4, kind: output, shape index: {}]
  %s5 = sld [smem:[#allocation0]]
  $region49: #{unet_seq_forward.13} parent=0
    _
  %s7 = ssub.s32 1, %s5
  %s8 = scalar_select 0, %s7, %s5
  loop: start=0, step=1, limit=4
  $region2: #{unet_seq_forward.13} parent=0 // loop_pre_header
    _
  $region3: #{unet_seq_forward.13} parent=0 // loop_header
    %s10 = sphi 0, %s14
    %p11 = scmp.ge.s32.totalorder %s10, 4
    %s20 = sphi 0, %s22
    %s23 = sphi 0, %s20
    %s24 = sphi 0, %s23
    %s40 = sphi 0, %s24
    %s44 = sphi 0, %s44
    %s46 = sphi 0, %s44
    %s47 = sphi 0, %s46
    %s61 = sphi 0, %s47
    %s65 = sphi 0, %s65
    %s67 = sphi 0, %s65
    %s68 = sphi 0, %s67
    %s82 = sphi 0, %s68
    %s86 = sphi 0, %s86
    %s88 = sphi 0, %s86
    %s89 = sphi 0, %s88
    %s103 = sphi 0, %s89
    %s109 = sphi 0, %s111
    %s112 = sphi 0, %s109
    %s113 = sphi 0, %s112
    %s129 = sphi 0, %s113
  $region4: #{unet_seq_forward.13} parent=0 // loop_header_branch
    %13 = sbr.rel (%p11) target = $region8
  $region5: #{unet_seq_forward.13} parent=0 // loop_body
    %s15 = ssub.s32 %s10, 1
    %s16 = ssub.s32 %s10, 2
    %s17 = sadd.s32 %s10, 1
    %s18 = ssub.s32 %s10, %s17
    %p19 = scmp.eq.s32.totalorder %s18, 0
    %s21 = sadd.s32 %s20, 1
    %s22 = scalar_select %p19, %s20, %s21
    %p25 = pneg %p19
    %p26 = scmp.eq.s32.totalorder %s10, 1
    %p27 = por %p25, %p26
    %p28 = scmp.ne.s32.totalorder %s20, %s23
    %p29 = scmp.eq.s32.totalorder %s10, 0
    %p30 = por %p28, %p29
    %p31 = scmp.ne.s32.totalorder %s20, %s23
    %p32 = scmp.eq.s32.totalorder %s15, 1
    %p33 = por %p31, %p32
    %p34 = scmp.ne.s32.totalorder %s23, %s24
    %p35 = scmp.eq.s32.totalorder %s15, 0
    %p36 = por %p34, %p35
    %p37 = scmp.ne.s32.totalorder %s23, %s24
    %p38 = scmp.eq.s32.totalorder %s16, 1
    %p39 = por %p37, %p38
    %p41 = scmp.ne.s32.totalorder %s24, %s40
    %p42 = scmp.eq.s32.totalorder %s16, 0
    %p43 = por %p41, %p42
    %s45 = sadd.s32 %s44, 1
    %p48 = scmp.eq.s32.totalorder %s10, 1
    %p49 = scmp.ne.s32.totalorder %s44, %s46
    %p50 = scmp.eq.s32.totalorder %s10, 0
    %p51 = por %p49, %p50
    %p52 = scmp.ne.s32.totalorder %s44, %s46
    %p53 = scmp.eq.s32.totalorder %s15, 1
    %p54 = por %p52, %p53
    %p55 = scmp.ne.s32.totalorder %s46, %s47
    %p56 = scmp.eq.s32.totalorder %s15, 0
    %p57 = por %p55, %p56
    %p58 = scmp.ne.s32.totalorder %s46, %s47
    %p59 = scmp.eq.s32.totalorder %s16, 1
    %p60 = por %p58, %p59
    %p62 = scmp.ne.s32.totalorder %s47, %s61
    %p63 = scmp.eq.s32.totalorder %s16, 0
    %p64 = por %p62, %p63
    %s66 = sadd.s32 %s65, 1
    %p69 = scmp.eq.s32.totalorder %s10, 1
    %p70 = scmp.ne.s32.totalorder %s65, %s67
    %p71 = scmp.eq.s32.totalorder %s10, 0
    %p72 = por %p70, %p71
    %p73 = scmp.ne.s32.totalorder %s65, %s67
    %p74 = scmp.eq.s32.totalorder %s15, 1
    %p75 = por %p73, %p74
    %p76 = scmp.ne.s32.totalorder %s67, %s68
    %p77 = scmp.eq.s32.totalorder %s15, 0
    %p78 = por %p76, %p77
    %p79 = scmp.ne.s32.totalorder %s67, %s68
    %p80 = scmp.eq.s32.totalorder %s16, 1
    %p81 = por %p79, %p80
    %p83 = scmp.ne.s32.totalorder %s68, %s82
    %p84 = scmp.eq.s32.totalorder %s16, 0
    %p85 = por %p83, %p84
    %s87 = sadd.s32 %s86, 1
    %p90 = scmp.eq.s32.totalorder %s10, 1
    %p91 = scmp.ne.s32.totalorder %s86, %s88
    %p92 = scmp.eq.s32.totalorder %s10, 0
    %p93 = por %p91, %p92
    %p94 = scmp.ne.s32.totalorder %s86, %s88
    %p95 = scmp.eq.s32.totalorder %s15, 1
    %p96 = por %p94, %p95
    %p97 = scmp.ne.s32.totalorder %s88, %s89
    %p98 = scmp.eq.s32.totalorder %s15, 0
    %p99 = por %p97, %p98
    %p100 = scmp.ne.s32.totalorder %s88, %s89
    %p101 = scmp.eq.s32.totalorder %s16, 1
    %p102 = por %p100, %p101
    %p104 = scmp.ne.s32.totalorder %s89, %s103
    %p105 = scmp.eq.s32.totalorder %s16, 0
    %p106 = por %p104, %p105
    %s107 = ssub.s32 %s10, %s17
    %p108 = scmp.eq.s32.totalorder %s107, 0
    %s110 = sadd.s32 %s109, 1
    %s111 = scalar_select %p108, %s109, %s110
    %p114 = pneg %p108
    %p115 = scmp.eq.s32.totalorder %s10, 1
    %p116 = por %p114, %p115
    %p117 = scmp.ne.s32.totalorder %s109, %s112
    %p118 = scmp.eq.s32.totalorder %s10, 0
    %p119 = por %p117, %p118
    %p120 = scmp.ne.s32.totalorder %s109, %s112
    %p121 = scmp.eq.s32.totalorder %s15, 1
    %p122 = por %p120, %p121
    %p123 = scmp.ne.s32.totalorder %s112, %s113
    %p124 = scmp.eq.s32.totalorder %s15, 0
    %p125 = por %p123, %p124
    %p126 = scmp.ne.s32.totalorder %s112, %s113
    %p127 = scmp.eq.s32.totalorder %s16, 1
    %p128 = por %p126, %p127
    %p130 = scmp.ne.s32.totalorder %s113, %s129
    %p131 = scmp.eq.s32.totalorder %s16, 0
    %p132 = por %p130, %p131
    %p133 = scmp.le.s32.totalorder 1, %s10
    %p134 = scmp.lt.s32.totalorder %s10, 3
    %p135 = pnand %p133, %p134
    %p136 = pneg %p135
    // Predicated region
    $region9: #{unet_seq_forward.13} parent=5 // pred_check
      _
    $region10: #{unet_seq_forward.13} parent=5 // pred_check_branch
      %138 = sbr.rel (%p135) target = $region12
    $region11: #{unet_seq_forward.13} parent=5 // pred_region
      %s139 = ssub.s32 %s10, 1
      // Predicated region
      $region13: #{unet_seq_forward.13} parent=11 // pred_check
        %p140 = pneg %p57
      $region14: #{unet_seq_forward.13} parent=11 // pred_check_branch
        %142 = sbr.rel (%p140) target = $region16
      $region15: #{unet_seq_forward.13} parent=11 // pred_region
        _
      $region16: #{unet_seq_forward.13} parent=11 // pred_fallthru
        _
      // Predicated region
      $region17: #{unet_seq_forward.13} parent=11 // pred_check
        %p143 = pneg %p78
      $region18: #{unet_seq_forward.13} parent=11 // pred_check_branch
        %145 = sbr.rel (%p143) target = $region20
      $region19: #{unet_seq_forward.13} parent=11 // pred_region
        _
      $region20: #{unet_seq_forward.13} parent=11 // pred_fallthru
        _
      // Predicated region
      $region21: #{unet_seq_forward.13} parent=11 // pred_check
        %p146 = pneg %p99
      $region22: #{unet_seq_forward.13} parent=11 // pred_check_branch
        %148 = sbr.rel (%p146) target = $region24
      $region23: #{unet_seq_forward.13} parent=11 // pred_region
        _
      $region24: #{unet_seq_forward.13} parent=11 // pred_fallthru
        _
    $region12: #{unet_seq_forward.13} parent=5 // pred_fallthru
      _
    %p149 = scmp.lt.s32.totalorder %s10, 2
    // Predicated region
    $region25: #{unet_seq_forward.13} parent=5 // pred_check
      %p150 = pneg %p149
    $region26: #{unet_seq_forward.13} parent=5 // pred_check_branch
      %152 = sbr.rel (%p150) target = $region28
    $region27: #{unet_seq_forward.13} parent=5 // pred_region
      // Predicated region
      $region29: #{unet_seq_forward.13} parent=27 // pred_check
        %p153 = pneg %p30
      $region30: #{unet_seq_forward.13} parent=27 // pred_check_branch
        %155 = sbr.rel (%p153) target = $region32
      $region31: #{unet_seq_forward.13} parent=27 // pred_region
        %s156 = smul.u32 8, %s10
        %p157 = scmp.lt.s32.totalorder %s156, 15
        %s158 = scalar_select %p157, %s156, 15
        %s159 = smul.addr %s158, 2
        %s160 = smul.addr %s159, 4
        %s161 = scalar_lea.vmem %s0, %s160
        %s162 = smul.u32 8, %s10
      $region32: #{unet_seq_forward.13} parent=27 // pred_fallthru
        _
    $region28: #{unet_seq_forward.13} parent=5 // pred_fallthru
      _
    %p163 = scmp.le.s32.totalorder 1, %s10
    %p164 = scmp.lt.s32.totalorder %s10, 3
    %p165 = pnand %p163, %p164
    %p166 = pneg %p165
    // Predicated region
    $region33: #{unet_seq_forward.13} parent=5 // pred_check
      _
    $region34: #{unet_seq_forward.13} parent=5 // pred_check_branch
      %168 = sbr.rel (%p165) target = $region36
    $region35: #{unet_seq_forward.13} parent=5 // pred_region
      %s169 = ssub.s32 %s10, 1
      %s170 = smul.u32 8, %s15
      %p171 = scmp.lt.s32.totalorder %s170, 15
      %s172 = scalar_select %p171, %s170, 15
      %s173 = smul.addr %s172, 2
      %s174 = smul.addr %s173, 4
      %s175 = scalar_lea.vmem %s0, %s174
      %p176 = pneg %p36
      %p177 = pneg %p33
      %p178 = pneg %p57
      %p179 = pneg %p54
      %p180 = pneg %p78
      %p181 = pneg %p75
      %p182 = pneg %p99
      %p183 = pneg %p96
      %p184 = pneg %p125
      %p185 = pneg %p122
      %s186 = smul.u32 8, %s15
      %p187 = scmp.lt.s32.totalorder %s186, 15
      %s188 = scalar_select %p187, %s186, 15
      %s189 = smul.addr %s188, 4
      %s190 = scalar_lea.vmem %s4, %s189
      %s191 = smul.u32 8, %s15
      %p192 = scmp.lt.s32.totalorder %s191, 15
      %s193 = scalar_select %p192, %s191, 15
      %s194 = smul.addr %s193, 2
      %s195 = smul.addr %s194, 4
      %s196 = scalar_lea.vmem %s0, %s195
      %s197 = smul.u32 8, %s15
      %s198 = smul.u32 8, %s15
      %p199 = scmp.lt.s32.totalorder %s198, 15
      %s200 = scalar_select %p199, %s198, 15
      %s201 = smul.addr %s200, 4
      %s202 = scalar_lea.vmem %s4, %s201
      %s203 = smul.u32 8, %s15
      %v205 = vld [vmem:[%s196] sm:$0xff]
      %v206 = vld [vmem:[%s196 + $0x8] sm:$0xff]
      %v207 = vld [vmem:[%s196 + $0x10] sm:$0xff]
      %v208 = vld [vmem:[%s196 + $0x18] sm:$0xff]
      %v209 = vld [vmem:[%s196 + $0x20] sm:$0xff]
      %v210 = vld [vmem:[%s196 + $0x28] sm:$0xff]
      %v211 = vld [vmem:[%s196 + $0x30] sm:$0xff]
      %v212 = vld [vmem:[%s196 + $0x38] sm:$0xff]
      %v213 = vld [vmem:[%s1] sm:$0xf]
      %v214 = vld [vmem:[%s1 + $0x4] sm:$0xf]
      %v215 = vld [vmem:[%s1 + $0x8] sm:$0xf]
      %v216 = vld [vmem:[%s1 + $0xc] sm:$0xf]
      %v217 = vld [vmem:[%s1 + $0x10] sm:$0xf]
      %v218 = vld [vmem:[%s1 + $0x14] sm:$0xf]
      %v219 = vld [vmem:[%s1 + $0x18] sm:$0xf]
      %v220 = vld [vmem:[%s1 + $0x1c] sm:$0xf]
      %v221 = vld [vmem:[%s1 + $0x20] sm:$0xf]
      %v222 = vld [vmem:[%s1 + $0x24] sm:$0xf]
      %v223 = vld [vmem:[%s1 + $0x28] sm:$0xf]
      %v224 = vld [vmem:[%s1 + $0x2c] sm:$0xf]
      %v225 = vld [vmem:[%s1 + $0x30] sm:$0xf]
      %v226 = vld [vmem:[%s1 + $0x34] sm:$0xf]
      %v227 = vld [vmem:[%s1 + $0x38] sm:$0xf]
      %v228 = vld [vmem:[%s1 + $0x3c] sm:$0xf]
      %v229 = vld [vmem:[%s1 + $0x40] sm:$0xf]
      %v230 = vld [vmem:[%s1 + $0x44] sm:$0xf]
      %v239 = vunpack.c.l.b16 %v205
      %v240 = vunpack.c.h.b16 %v205
      %v241 = vunpack.c.l.b16 %v206
      %v242 = vunpack.c.h.b16 %v206
      %v243 = vunpack.c.l.b16 %v207
      %v244 = vunpack.c.h.b16 %v207
      %v245 = vunpack.c.l.b16 %v208
      %v246 = vunpack.c.h.b16 %v208
      %v247 = vunpack.c.l.b16 %v209
      %v248 = vunpack.c.h.b16 %v209
      %v249 = vunpack.c.l.b16 %v210
      %v250 = vunpack.c.h.b16 %v210
      %v251 = vunpack.c.l.b16 %v211
      %v252 = vunpack.c.h.b16 %v211
      %v253 = vunpack.c.l.b16 %v212
      %v254 = vunpack.c.h.b16 %v212
      %v255 = vpack.c.b16 %v241, %v239
      %v256 = vpack.c.b16 %v242, %v240
      %v257 = vpack.c.b16 %v245, %v243
      %v258 = vpack.c.b16 %v246, %v244
      %v259 = vpack.c.b16 %v249, %v247
      %v260 = vpack.c.b16 %v250, %v248
      %v261 = vpack.c.b16 %v253, %v251
      %v262 = vpack.c.b16 %v254, %v252
      %v285 = vunpack.c.l.b16 %v213
      %v286 = vunpack.c.l.b16 %v214
      %v287 = vunpack.c.l.b16 %v215
      %v288 = vunpack.c.l.b16 %v216
      %v289 = vunpack.c.l.b16 %v217
      %v290 = vunpack.c.l.b16 %v218
      %v291 = vunpack.c.l.b16 %v219
      %v292 = vunpack.c.l.b16 %v220
      %v293 = vunpack.c.l.b16 %v221
      %v294 = vunpack.c.l.b16 %v222
      %v295 = vunpack.c.l.b16 %v223
      %v296 = vunpack.c.l.b16 %v224
      %v297 = vunpack.c.l.b16 %v225
      %v298 = vunpack.c.l.b16 %v226
      %v299 = vunpack.c.l.b16 %v227
      %v300 = vunpack.c.l.b16 %v228
      %v301 = vunpack.c.l.b16 %v229
      %v302 = vunpack.c.l.b16 %v230
      %v303 = vpack.c.b16 %v286, %v285
      %v304 = vpack.c.b16 %v288, %v287
      %v305 = vpack.c.b16 %v290, %v289
      %v306 = vpack.c.b16 %v292, %v291
      %v307 = vpack.c.b16 %v294, %v293
      %v308 = vpack.c.b16 %v296, %v295
      %v309 = vpack.c.b16 %v298, %v297
      %v310 = vpack.c.b16 %v300, %v299
      %v311 = vpack.c.b16 %v302, %v301
      %vm321 = vcmask 130048
      %v323 = vsel %vm321, %v256, 0
      %v326 = vsel %vm321, %v258, 0
      %v329 = vsel %vm321, %v260, 0
      %v332 = vsel %vm321, %v262, 0
      %334 = vmatprep.subr.bf16.mxu0 0
      %335 = vmatpush1.bf16.msra.mxu0 %v310
      %336 = vmatprep.subr.bf16.mxu0 0
      %337 = vmatpush1.bf16.msra.mxu0 %v309
      %338 = vmatprep.subr.bf16.mxu0 0
      %339 = vmatpush1.bf16.msra.mxu0 %v308
      %340 = vmatprep.subr.bf16.mxu0 0
      %341 = vmatpush1.bf16.msra.mxu0 %v307
      %342 = vmatprep.subr.bf16.mxu0 0
      %343 = vmatpush1.bf16.msra.mxu0 %v306
      %344 = vmatprep.subr.bf16.mxu0 0
      %345 = vmatpush1.bf16.msra.mxu0 %v305
      %346 = vmatprep.subr.bf16.mxu0 0
      %347 = vmatpush1.bf16.msra.mxu0 %v304
      %348 = vmatprep.subr.bf16.mxu0 0
      %349 = vmatpush1.bf16.msra.mxu0 %v303
      %350 = vmatprep.subr.bf16.mxu0 0
      %351 = vmatpush2.bf16.msra.mxu0 0
      %352 = vmatprep.subr.bf16.mxu0 0
      %353 = vmatpush2.bf16.msra.mxu0 0
      %354 = vmatprep.subr.bf16.mxu0 0
      %355 = vmatpush2.bf16.msra.mxu0 0
      %356 = vmatprep.subr.bf16.mxu0 0
      %357 = vmatpush2.bf16.msra.mxu0 0
      %358 = vmatprep.subr.bf16.mxu0 0
      %359 = vmatpush2.bf16.msra.mxu0 0
      %360 = vmatprep.subr.bf16.mxu0 0
      %361 = vmatpush2.bf16.msra.mxu0 0
      %362 = vmatprep.subr.bf16.mxu0 0
      %363 = vmatpush2.bf16.msra.mxu0 0
      %364 = vmatprep.subr.bf16.mxu0 0
      %365 = vmatpush2.bf16.msra.mxu0 %v311
      %366 = vmatprep.mubr.bf16.mxu0 %v323
      %367 = vmatmul.mubr.bf16.gmra.mxu0 %v255
      %v368 = vpop.f32.mrf.mxu0
      %v369 = vadd.f32 0.0, %v368
      %v370 = vpop.f32.mrf.mxu0
      %v371 = vpop.f32.mrf.mxu0
      %v372 = vadd.f32 0.0, %v371
      %v373 = vpop.f32.mrf.mxu0
      %374 = vmatprep.mubr.bf16.mxu0 %v326
      %375 = vmatmul.mubr.bf16.gmra.mxu0 %v257
      %v376 = vpop.f32.mrf.mxu0
      %v377 = vadd.f32 0.0, %v376
      %v378 = vpop.f32.mrf.mxu0
      %v379 = vpop.f32.mrf.mxu0
      %v380 = vadd.f32 0.0, %v379
      %v381 = vpop.f32.mrf.mxu0
      %382 = vmatprep.mubr.bf16.mxu0 %v329
      %383 = vmatmul.mubr.bf16.gmra.mxu0 %v259
      %v384 = vpop.f32.mrf.mxu0
      %v385 = vadd.f32 0.0, %v384
      %v386 = vpop.f32.mrf.mxu0
      %v387 = vpop.f32.mrf.mxu0
      %v388 = vadd.f32 0.0, %v387
      %v389 = vpop.f32.mrf.mxu0
      %390 = vmatprep.mubr.bf16.mxu0 %v332
      %391 = vmatmul.mubr.bf16.gmra.mxu0 %v261
      %v392 = vpop.f32.mrf.mxu0
      %v393 = vadd.f32 0.0, %v392
      %v394 = vpop.f32.mrf.mxu0
      %v395 = vpop.f32.mrf.mxu0
      %v396 = vadd.f32 0.0, %v395
      %v397 = vpop.f32.mrf.mxu0
      %398 = vdwg.mxu0
      %v399 = vld [vmem:[%s2] sm:$0x1]
      %v401 = vlaneseq
      %v402 = vshrl.u32 %v401, 7
      %v403 = vsub.s32 0, %v402
      %v404 = vrot.slane %v399, %v403
      %v406 = vmul.f32 %v369, %v404
      %v407 = vmul.f32 %v372, %v404
      %v408 = vmul.f32 %v377, %v404
      %v409 = vmul.f32 %v380, %v404
      %v410 = vmul.f32 %v385, %v404
      %v411 = vmul.f32 %v388, %v404
      %v412 = vmul.f32 %v393, %v404
      %v413 = vmul.f32 %v396, %v404
      %v414 = vld [vmem:[%s3] sm:$0x1]
      %v416 = vlaneseq
      %v417 = vshrl.u32 %v416, 7
      %v418 = vsub.s32 0, %v417
      %v419 = vrot.slane %v414, %v418
      %v421 = vadd.f32 %v406, %v419
      %v422 = vadd.f32 %v407, %v419
      %v423 = vadd.f32 %v408, %v419
      %v424 = vadd.f32 %v409, %v419
      %v425 = vadd.f32 %v410, %v419
      %v426 = vadd.f32 %v411, %v419
      %v427 = vadd.f32 %v412, %v419
      %v428 = vadd.f32 %v413, %v419
      %v429 = vmax.f32 %v421, 0.0
      %v430 = vmax.f32 %v422, 0.0
      %v431 = vmax.f32 %v423, 0.0
      %v432 = vmax.f32 %v424, 0.0
      %v433 = vmax.f32 %v425, 0.0
      %v434 = vmax.f32 %v426, 0.0
      %v435 = vmax.f32 %v427, 0.0
      %v436 = vmax.f32 %v428, 0.0
      %v437 = vpack.c.bf16 %v430, %v429
      %v438 = vpack.c.bf16 %v432, %v431
      %v439 = vpack.c.bf16 %v434, %v433
      %v440 = vpack.c.bf16 %v436, %v435
      %v445 = vunpack.c.l.b16 %v437
      %v446 = vunpack.c.h.b16 %v437
      %v447 = vunpack.c.l.b16 %v438
      %v448 = vunpack.c.h.b16 %v438
      %v449 = vunpack.c.l.b16 %v439
      %v450 = vunpack.c.h.b16 %v439
      %v451 = vunpack.c.l.b16 %v440
      %v452 = vunpack.c.h.b16 %v440
      %v453 = vpack.c.b16 %v445, %v445
      %v454 = vpack.c.b16 %v446, %v446
      %v455 = vpack.c.b16 %v447, %v447
      %v456 = vpack.c.b16 %v448, %v448
      %v457 = vpack.c.b16 %v449, %v449
      %v458 = vpack.c.b16 %v450, %v450
      %v459 = vpack.c.b16 %v451, %v451
      %v460 = vpack.c.b16 %v452, %v452
      %469 = vst [vmem:[%s202] sm:$0xf] %v453
      %470 = vst [vmem:[%s202 + $0x4] sm:$0xf] %v454
      %471 = vst [vmem:[%s202 + $0x8] sm:$0xf] %v455
      %472 = vst [vmem:[%s202 + $0xc] sm:$0xf] %v456
      %473 = vst [vmem:[%s202 + $0x10] sm:$0xf] %v457
      %474 = vst [vmem:[%s202 + $0x14] sm:$0xf] %v458
      %475 = vst [vmem:[%s202 + $0x18] sm:$0xf] %v459
      %476 = vst [vmem:[%s202 + $0x1c] sm:$0xf] %v460
      %s477 = smul.u32 8, %s15
      %p478 = scmp.lt.s32.totalorder %s477, 15
      %s479 = scalar_select %p478, %s477, 15
      %s480 = smul.addr %s479, 4
      %s481 = scalar_lea.vmem %s4, %s480
      // Predicated region
      $region37: #{unet_seq_forward.13} parent=35 // pred_check
        %p482 = pneg %p122
      $region38: #{unet_seq_forward.13} parent=35 // pred_check_branch
        %484 = sbr.rel (%p482) target = $region40
      $region39: #{unet_seq_forward.13} parent=35 // pred_region
        %s485 = smul.u32 8, %s15
      $region40: #{unet_seq_forward.13} parent=35 // pred_fallthru
        _
    $region36: #{unet_seq_forward.13} parent=5 // pred_fallthru
      _
    %p486 = scmp.le.s32.totalorder 2, %s10
    // Predicated region
    $region41: #{unet_seq_forward.13} parent=5 // pred_check
      %p487 = pneg %p486
    $region42: #{unet_seq_forward.13} parent=5 // pred_check_branch
      %489 = sbr.rel (%p487) target = $region44
    $region43: #{unet_seq_forward.13} parent=5 // pred_region
      %s490 = ssub.s32 %s10, 2
      // Predicated region
      $region45: #{unet_seq_forward.13} parent=43 // pred_check
        %p491 = pneg %p128
      $region46: #{unet_seq_forward.13} parent=43 // pred_check_branch
        %493 = sbr.rel (%p491) target = $region48
      $region47: #{unet_seq_forward.13} parent=43 // pred_region
        %s494 = smul.u32 8, %s16
        %p495 = scmp.lt.s32.totalorder %s494, 15
        %s496 = scalar_select %p495, %s494, 15
        %s497 = smul.addr %s496, 4
        %s498 = scalar_lea.vmem %s4, %s497
      $region48: #{unet_seq_forward.13} parent=43 // pred_fallthru
        _
    $region44: #{unet_seq_forward.13} parent=5 // pred_fallthru
      _
  $region6: #{unet_seq_forward.13} parent=0 // loop_footer
    %s14 = sadd.s32 1, %s10
  $region7: #{unet_seq_forward.13} parent=0 // loop_footer_branch
    %9 = sbr.rel target = $region3
  $region8: #{unet_seq_forward.13} parent=0 // loop_exit
    _

// kernel: unet_seq_forward.21
$region0: #{unet_seq_forward.21}
  #allocation0 [shape = 'u32[]', space=smem, size = 0x4, offset = 0x4, fixed_abs, tag = 'smem constant byte address 0x4 - core index']
  #allocation1 [shape = 'u32[144,128]{1,0:T(1,128)}', space=vmem, size = 0x12000, scoped, tag = 'internal scratch']
  %s0 = inlined_call_operand.vmem [shape: bf16[8,4,32], index: 0, kind: input, shape index: {}]
  %s1 = inlined_call_operand.vmem [shape: bf16[32,3], index: 1, kind: input, shape index: {}]
  %s2 = inlined_call_operand.vmem [shape: f32[1,3], index: 2, kind: input, shape index: {}]
  %s3 = inlined_call_operand.vmem [shape: bf16[32,4], index: 3, kind: input, shape index: {}]
  %s4 = inlined_call_operand.vmem [shape: f32[1,4], index: 4, kind: input, shape index: {}]
  %s5 = inlined_call_operand.vmem [shape: bf16[2,8], index: 5, kind: input, shape index: {}]
  %s6 = inlined_call_operand.vmem [shape: f32[2,1], index: 6, kind: input, shape index: {}]
  %s7 = inlined_call_operand.vmem [shape: bf16[2,8], index: 7, kind: input, shape index: {}]
  %s8 = inlined_call_operand.vmem [shape: f32[2,1], index: 8, kind: input, shape index: {}]
  %s9 = inlined_call_operand.hbm [shape: f32[2,3], index: 9, kind: output, shape index: {0}]
  %s10 = inlined_call_operand.hbm [shape: f32[2,4], index: 10, kind: output, shape index: {1}]
  %11 = xla_tuple %s9, %s10
  %s12 = sld [smem:[#allocation0]]
  $region54: #{unet_seq_forward.21} parent=0
    _
  %s14 = ssub.s32 1, %s12
  %s15 = scalar_select 0, %s14, %s12
  $region1: #{unet_seq_forward.21} parent=0
    #allocation2 [shape = 'u8[1024]{0}', space=vmem, size = 0x400, scoped, tag = 'output window, operand 0, single buffered']
    #allocation3 [shape = 's32[1]{0}', space=sflag, size = 0x4, scoped, tag = 'scoped memory for unet_seq_forward.21']
    #allocation4 [shape = 'u8[1024]{0}', space=vmem, size = 0x400, scoped, tag = 'output window, operand 1, single buffered']
    #allocation5 [shape = 's32[1]{0}', space=sflag, size = 0x4, scoped, tag = 'scoped memory for unet_seq_forward.21']
    %16 = vsyncpa [#allocation3], 0
    %17 = vsyncpa [#allocation5], 0
    // Predicated region
    $region2: #{unet_seq_forward.21} parent=1 // pred_check
      _
    $region3: #{unet_seq_forward.21} parent=1 // pred_check_branch
      %19 = sbr.rel (0) target = $region5
    $region4: #{unet_seq_forward.21} parent=1 // pred_region
      _
    $region5: #{unet_seq_forward.21} parent=1 // pred_fallthru
      _
    // Predicated region
    $region6: #{unet_seq_forward.21} parent=1 // pred_check
      _
    $region7: #{unet_seq_forward.21} parent=1 // pred_check_branch
      %21 = sbr.rel (0) target = $region9
    $region8: #{unet_seq_forward.21} parent=1 // pred_region
      _
    $region9: #{unet_seq_forward.21} parent=1 // pred_fallthru
      _
    // Predicated region
    $region10: #{unet_seq_forward.21} parent=1 // pred_check
      _
    $region11: #{unet_seq_forward.21} parent=1 // pred_check_branch
      %23 = sbr.rel (0) target = $region13
    $region12: #{unet_seq_forward.21} parent=1 // pred_region
      _
    $region13: #{unet_seq_forward.21} parent=1 // pred_fallthru
      _
    // Predicated region
    $region14: #{unet_seq_forward.21} parent=1 // pred_check
      _
    $region15: #{unet_seq_forward.21} parent=1 // pred_check_branch
      %25 = sbr.rel (0) target = $region17
    $region16: #{unet_seq_forward.21} parent=1 // pred_region
      _
    $region17: #{unet_seq_forward.21} parent=1 // pred_fallthru
      _
    // Predicated region
    $region18: #{unet_seq_forward.21} parent=1 // pred_check
      _
    $region19: #{unet_seq_forward.21} parent=1 // pred_check_branch
      %27 = sbr.rel (0) target = $region21
    $region20: #{unet_seq_forward.21} parent=1 // pred_region
      _
    $region21: #{unet_seq_forward.21} parent=1 // pred_fallthru
      _
    // Predicated region
    $region22: #{unet_seq_forward.21} parent=1 // pred_check
      _
    $region23: #{unet_seq_forward.21} parent=1 // pred_check_branch
      %29 = sbr.rel (0) target = $region25
    $region24: #{unet_seq_forward.21} parent=1 // pred_region
      _
    $region25: #{unet_seq_forward.21} parent=1 // pred_fallthru
      _
    // Predicated region
    $region26: #{unet_seq_forward.21} parent=1 // pred_check
      _
    $region27: #{unet_seq_forward.21} parent=1 // pred_check_branch
      %31 = sbr.rel (0) target = $region29
    $region28: #{unet_seq_forward.21} parent=1 // pred_region
      _
    $region29: #{unet_seq_forward.21} parent=1 // pred_fallthru
      _
    // Predicated region
    $region30: #{unet_seq_forward.21} parent=1 // pred_check
      _
    $region31: #{unet_seq_forward.21} parent=1 // pred_check_branch
      %33 = sbr.rel (0) target = $region33
    $region32: #{unet_seq_forward.21} parent=1 // pred_region
      _
    $region33: #{unet_seq_forward.21} parent=1 // pred_fallthru
      _
    // Predicated region
    $region34: #{unet_seq_forward.21} parent=1 // pred_check
      _
    $region35: #{unet_seq_forward.21} parent=1 // pred_check_branch
      %35 = sbr.rel (0) target = $region37
    $region36: #{unet_seq_forward.21} parent=1 // pred_region
      _
    $region37: #{unet_seq_forward.21} parent=1 // pred_fallthru
      _
    %v37 = vld [vmem:[%s0] sm:$0x3]
    %v38 = vld [vmem:[%s0 + $0x2] sm:$0x3]
    %v39 = vld [vmem:[%s0 + $0x4] sm:$0x3]
    %v40 = vld [vmem:[%s0 + $0x6] sm:$0x3]
    %v41 = vld [vmem:[%s0 + $0x8] sm:$0x3]
    %v42 = vld [vmem:[%s0 + $0xa] sm:$0x3]
    %v43 = vld [vmem:[%s0 + $0xc] sm:$0x3]
    %v44 = vld [vmem:[%s0 + $0xe] sm:$0x3]
    %v45 = vunpack.c.l.bf16 %v37
    %v46 = vunpack.c.l.bf16 %v38
    %v47 = vunpack.c.l.bf16 %v39
    %v48 = vunpack.c.l.bf16 %v40
    %v49 = vunpack.c.l.bf16 %v41
    %v50 = vunpack.c.l.bf16 %v42
    %v51 = vunpack.c.l.bf16 %v43
    %v52 = vunpack.c.l.bf16 %v44
    %vm53 = vcmask 257024
    %v54 = vsel %vm53, %v45, 0.0
    %v55 = vrot.slane %v54, 4
    %v56 = vadd.f32 %v54, %v55
    %v57 = vrot.slane %v56, 2
    %v58 = vadd.f32 %v56, %v57
    %v59 = vrot.slane %v58, 1
    %v60 = vadd.f32 %v58, %v59
    %v61 = vsel %vm53, %v46, 0.0
    %v62 = vrot.slane %v61, 4
    %v63 = vadd.f32 %v61, %v62
    %v64 = vrot.slane %v63, 2
    %v65 = vadd.f32 %v63, %v64
    %v66 = vrot.slane %v65, 1
    %v67 = vadd.f32 %v65, %v66
    %v68 = vsel %vm53, %v47, 0.0
    %v69 = vrot.slane %v68, 4
    %v70 = vadd.f32 %v68, %v69
    %v71 = vrot.slane %v70, 2
    %v72 = vadd.f32 %v70, %v71
    %v73 = vrot.slane %v72, 1
    %v74 = vadd.f32 %v72, %v73
    %v75 = vsel %vm53, %v48, 0.0
    %v76 = vrot.slane %v75, 4
    %v77 = vadd.f32 %v75, %v76
    %v78 = vrot.slane %v77, 2
    %v79 = vadd.f32 %v77, %v78
    %v80 = vrot.slane %v79, 1
    %v81 = vadd.f32 %v79, %v80
    %v82 = vsel %vm53, %v49, 0.0
    %v83 = vrot.slane %v82, 4
    %v84 = vadd.f32 %v82, %v83
    %v85 = vrot.slane %v84, 2
    %v86 = vadd.f32 %v84, %v85
    %v87 = vrot.slane %v86, 1
    %v88 = vadd.f32 %v86, %v87
    %v89 = vsel %vm53, %v50, 0.0
    %v90 = vrot.slane %v89, 4
    %v91 = vadd.f32 %v89, %v90
    %v92 = vrot.slane %v91, 2
    %v93 = vadd.f32 %v91, %v92
    %v94 = vrot.slane %v93, 1
    %v95 = vadd.f32 %v93, %v94
    %v96 = vsel %vm53, %v51, 0.0
    %v97 = vrot.slane %v96, 4
    %v98 = vadd.f32 %v96, %v97
    %v99 = vrot.slane %v98, 2
    %v100 = vadd.f32 %v98, %v99
    %v101 = vrot.slane %v100, 1
    %v102 = vadd.f32 %v100, %v101
    %v103 = vsel %vm53, %v52, 0.0
    %v104 = vrot.slane %v103, 4
    %v105 = vadd.f32 %v103, %v104
    %v106 = vrot.slane %v105, 2
    %v107 = vadd.f32 %v105, %v106
    %v108 = vrot.slane %v107, 1
    %v109 = vadd.f32 %v107, %v108
    %v110 = vrcp.pop 4.0
    %v111 = vmul.f32 %v60, %v110
    %v112 = vmul.f32 %v67, %v110
    %v113 = vmul.f32 %v74, %v110
    %v114 = vmul.f32 %v81, %v110
    %v115 = vmul.f32 %v88, %v110
    %v116 = vmul.f32 %v95, %v110
    %v117 = vmul.f32 %v102, %v110
    %v118 = vmul.f32 %v109, %v110
    %v119 = vpack.c.bf16 %v111, %v111
    %v120 = vpack.c.bf16 %v112, %v112
    %v121 = vpack.c.bf16 %v113, %v113
    %v122 = vpack.c.bf16 %v114, %v114
    %v123 = vpack.c.bf16 %v115, %v115
    %v124 = vpack.c.bf16 %v116, %v116
    %v125 = vpack.c.bf16 %v117, %v117
    %v126 = vpack.c.bf16 %v118, %v118
    %v127 = vld [vmem:[%s1] sm:$0xf]
    %v128 = vld [vmem:[%s1 + $0x4] sm:$0xf]
    %v129 = vld [vmem:[%s1 + $0x8] sm:$0xf]
    %v130 = vld [vmem:[%s1 + $0xc] sm:$0xf]
    %v131 = vld [vmem:[%s2] sm:$0x1]
    %v133 = vlaneseq
    %v134 = vshrl.u32 %v133, 7
    %v135 = vsub.s32 0, %v134
    %v136 = vrot.slane %v131, %v135
    %v146 = vunpack.c.l.b16 %v119
    %v147 = vunpack.c.l.b16 %v120
    %v148 = vunpack.c.l.b16 %v121
    %v149 = vunpack.c.l.b16 %v122
    %v150 = vunpack.c.l.b16 %v123
    %v151 = vunpack.c.l.b16 %v124
    %v152 = vunpack.c.l.b16 %v125
    %v153 = vunpack.c.l.b16 %v126
    %vm154 = vcmask 1041409
    %v155 = vsel %vm154, %v147, %v146
    %vm156 = vcmask 1042434
    %v157 = vsel %vm156, %v148, %v155
    %vm158 = vcmask 1043459
    %v159 = vsel %vm158, %v149, %v157
    %vm160 = vcmask 1044484
    %v161 = vsel %vm160, %v150, %v159
    %vm162 = vcmask 1045509
    %v163 = vsel %vm162, %v151, %v161
    %vm164 = vcmask 1046534
    %v165 = vsel %vm164, %v152, %v163
    %vm166 = vcmask 1047559
    %v167 = vsel %vm166, %v153, %v165
    %v168 = vpack.c.b16 %v167, %v167
    %v173 = vunpack.c.l.b16 %v127
    %v174 = vunpack.c.l.b16 %v128
    %v175 = vunpack.c.l.b16 %v129
    %v176 = vunpack.c.l.b16 %v130
    %v177 = vpack.c.b16 %v174, %v173
    %v178 = vpack.c.b16 %v176, %v175
    %vm181 = vcmask 261120
    %v183 = vsel %vm181, %v168, 0
    %185 = vmatprep.subr.bf16.mxu0 0
    %186 = vmatpush1.bf16.msra.mxu0 0
    %187 = vmatprep.subr.bf16.mxu0 0
    %188 = vmatpush1.bf16.msra.mxu0 0
    %189 = vmatprep.subr.bf16.mxu0 0
    %190 = vmatpush1.bf16.msra.mxu0 0
    %191 = vmatprep.subr.bf16.mxu0 0
    %192 = vmatpush1.bf16.msra.mxu0 0
    %193 = vmatprep.subr.bf16.mxu0 0
    %194 = vmatpush1.bf16.msra.mxu0 0
    %195 = vmatprep.subr.bf16.mxu0 0
    %196 = vmatpush1.bf16.msra.mxu0 0
    %197 = vmatprep.subr.bf16.mxu0 0
    %198 = vmatpush1.bf16.msra.mxu0 %v178
    %199 = vmatprep.subr.bf16.mxu0 0
    %200 = vmatpush1.bf16.msra.mxu0 %v177
    %201 = vmatprep.subr.bf16.mxu0 0
    %202 = vmatpush2.bf16.msra.mxu0 0
    %203 = vmatprep.subr.bf16.mxu0 0
    %204 = vmatpush2.bf16.msra.mxu0 0
    %205 = vmatprep.subr.bf16.mxu0 0
    %206 = vmatpush2.bf16.msra.mxu0 0
    %207 = vmatprep.subr.bf16.mxu0 0
    %208 = vmatpush2.bf16.msra.mxu0 0
    %209 = vmatprep.subr.bf16.mxu0 0
    %210 = vmatpush2.bf16.msra.mxu0 0
    %211 = vmatprep.subr.bf16.mxu0 0
    %212 = vmatpush2.bf16.msra.mxu0 0
    %213 = vmatprep.subr.bf16.mxu0 0
    %214 = vmatpush2.bf16.msra.mxu0 0
    %215 = vmatprep.subr.bf16.mxu0 0
    %216 = vmatpush2.bf16.msra.mxu0 0
    %217 = vmatprep.mubr.bf16.mxu0 0
    %218 = vmatmul.mubr.bf16.gmra.mxu0 %v183
    %v219 = vpop.f32.mrf.mxu0
    %v220 = vadd.f32 %v136, %v219
    %v221 = vpop.f32.mrf.mxu0
    %v222 = vpop.f32.mrf.mxu0
    %v223 = vpop.f32.mrf.mxu0
    %224 = vdwg.mxu0
    %v225 = vld [vmem:[%s3] sm:$0xf]
    %v226 = vld [vmem:[%s3 + $0x4] sm:$0xf]
    %v227 = vld [vmem:[%s3 + $0x8] sm:$0xf]
    %v228 = vld [vmem:[%s3 + $0xc] sm:$0xf]
    %v229 = vld [vmem:[%s4] sm:$0x1]
    %v231 = vlaneseq
    %v232 = vshrl.u32 %v231, 7
    %v233 = vsub.s32 0, %v232
    %v234 = vrot.slane %v229, %v233
    %v240 = vunpack.c.l.b16 %v225
    %v241 = vunpack.c.l.b16 %v226
    %v242 = vunpack.c.l.b16 %v227
    %v243 = vunpack.c.l.b16 %v228
    %v244 = vpack.c.b16 %v241, %v240
    %v245 = vpack.c.b16 %v243, %v242
    %248 = vmatprep.subr.bf16.mxu0 0
    %249 = vmatpush1.bf16.msra.mxu0 0
    %250 = vmatprep.subr.bf16.mxu0 0
    %251 = vmatpush1.bf16.msra.mxu0 0
    %252 = vmatprep.subr.bf16.mxu0 0
    %253 = vmatpush1.bf16.msra.mxu0 0
    %254 = vmatprep.subr.bf16.mxu0 0
    %255 = vmatpush1.bf16.msra.mxu0 0
    %256 = vmatprep.subr.bf16.mxu0 0
    %257 = vmatpush1.bf16.msra.mxu0 0
    %258 = vmatprep.subr.bf16.mxu0 0
    %259 = vmatpush1.bf16.msra.mxu0 0
    %260 = vmatprep.subr.bf16.mxu0 0
    %261 = vmatpush1.bf16.msra.mxu0 %v245
    %262 = vmatprep.subr.bf16.mxu0 0
    %263 = vmatpush1.bf16.msra.mxu0 %v244
    %264 = vmatprep.subr.bf16.mxu0 0
    %265 = vmatpush2.bf16.msra.mxu0 0
    %266 = vmatprep.subr.bf16.mxu0 0
    %267 = vmatpush2.bf16.msra.mxu0 0
    %268 = vmatprep.subr.bf16.mxu0 0
    %269 = vmatpush2.bf16.msra.mxu0 0
    %270 = vmatprep.subr.bf16.mxu0 0
    %271 = vmatpush2.bf16.msra.mxu0 0
    %272 = vmatprep.subr.bf16.mxu0 0
    %273 = vmatpush2.bf16.msra.mxu0 0
    %274 = vmatprep.subr.bf16.mxu0 0
    %275 = vmatpush2.bf16.msra.mxu0 0
    %276 = vmatprep.subr.bf16.mxu0 0
    %277 = vmatpush2.bf16.msra.mxu0 0
    %278 = vmatprep.subr.bf16.mxu0 0
    %279 = vmatpush2.bf16.msra.mxu0 0
    %280 = vmatprep.mubr.bf16.mxu0 0
    %281 = vmatmul.mubr.bf16.gmra.mxu0 %v183
    %v282 = vpop.f32.mrf.mxu0
    %v283 = vadd.f32 %v234, %v282
    %v284 = vpop.f32.mrf.mxu0
    %v285 = vpop.f32.mrf.mxu0
    %v286 = vpop.f32.mrf.mxu0
    %287 = vdwg.mxu0
    %v288 = vld [vmem:[%s5] sm:$0x1]
    %v289 = vpack.c.bf16 %v220, %v220
    %v290 = vld [vmem:[%s6] sm:$0x3]
    %292 = vset.pattern.permute.xlu0 0
    %293 = vperm.xlu0 %292, %v290
    %v294 = vpop.permute.xlu0 %293
    %vm296 = vcmask 64512
    %v298 = vsel %vm296, %v288, 0
    %vm300 = vcmask 1043456
    %v302 = vsel %vm300, %v289, 0
    %304 = vmatprep.subr.bf16.mxu0 0
    %305 = vmatpush1.bf16.msra.mxu0 0
    %306 = vmatprep.subr.bf16.mxu0 0
    %307 = vmatpush1.bf16.msra.mxu0 0
    %308 = vmatprep.subr.bf16.mxu0 0
    %309 = vmatpush1.bf16.msra.mxu0 0
    %310 = vmatprep.subr.bf16.mxu0 0
    %311 = vmatpush1.bf16.msra.mxu0 0
    %312 = vmatprep.subr.bf16.mxu0 0
    %313 = vmatpush1.bf16.msra.mxu0 0
    %314 = vmatprep.subr.bf16.mxu0 0
    %315 = vmatpush1.bf16.msra.mxu0 0
    %316 = vmatprep.subr.bf16.mxu0 0
    %317 = vmatpush1.bf16.msra.mxu0 0
    %318 = vmatprep.subr.bf16.mxu0 0
    %319 = vmatpush1.bf16.msra.mxu0 %v302
    %320 = vmatprep.subr.bf16.mxu0 0
    %321 = vmatpush2.bf16.msra.mxu0 0
    %322 = vmatprep.subr.bf16.mxu0 0
    %323 = vmatpush2.bf16.msra.mxu0 0
    %324 = vmatprep.subr.bf16.mxu0 0
    %325 = vmatpush2.bf16.msra.mxu0 0
    %326 = vmatprep.subr.bf16.mxu0 0
    %327 = vmatpush2.bf16.msra.mxu0 0
    %328 = vmatprep.subr.bf16.mxu0 0
    %329 = vmatpush2.bf16.msra.mxu0 0
    %330 = vmatprep.subr.bf16.mxu0 0
    %331 = vmatpush2.bf16.msra.mxu0 0
    %332 = vmatprep.subr.bf16.mxu0 0
    %333 = vmatpush2.bf16.msra.mxu0 0
    %334 = vmatprep.subr.bf16.mxu0 0
    %335 = vmatpush2.bf16.msra.mxu0 0
    %336 = vmatprep.mubr.bf16.mxu0 0
    %337 = vmatmul.mubr.bf16.gmra.mxu0 %v298
    %v338 = vpop.f32.mrf.mxu0
    %v339 = vadd.f32 %v294, %v338
    %v340 = vpop.f32.mrf.mxu0
    %v341 = vpop.f32.mrf.mxu0
    %v342 = vpop.f32.mrf.mxu0
    %343 = vdwg.mxu0
    %vm344 = vcmask 17408
    %345 = vst.msk [vmem:[#allocation2] sm:$0x3] %vm344, %v339
    %v346 = vld [vmem:[%s7] sm:$0x1]
    %v347 = vpack.c.bf16 %v283, %v283
    %v348 = vld [vmem:[%s8] sm:$0x3]
    %350 = vset.pattern.permute.xlu0 0
    %351 = vperm.xlu0 %350, %v348
    %v352 = vpop.permute.xlu0 %351
    %v355 = vsel %vm296, %v346, 0
    %v358 = vsel %vm300, %v347, 0
    %360 = vmatprep.subr.bf16.mxu0 0
    %361 = vmatpush1.bf16.msra.mxu0 0
    %362 = vmatprep.subr.bf16.mxu0 0
    %363 = vmatpush1.bf16.msra.mxu0 0
    %364 = vmatprep.subr.bf16.mxu0 0
    %365 = vmatpush1.bf16.msra.mxu0 0
    %366 = vmatprep.subr.bf16.mxu0 0
    %367 = vmatpush1.bf16.msra.mxu0 0
    %368 = vmatprep.subr.bf16.mxu0 0
    %369 = vmatpush1.bf16.msra.mxu0 0
    %370 = vmatprep.subr.bf16.mxu0 0
    %371 = vmatpush1.bf16.msra.mxu0 0
    %372 = vmatprep.subr.bf16.mxu0 0
    %373 = vmatpush1.bf16.msra.mxu0 0
    %374 = vmatprep.subr.bf16.mxu0 0
    %375 = vmatpush1.bf16.msra.mxu0 %v358
    %376 = vmatprep.subr.bf16.mxu0 0
    %377 = vmatpush2.bf16.msra.mxu0 0
    %378 = vmatprep.subr.bf16.mxu0 0
    %379 = vmatpush2.bf16.msra.mxu0 0
    %380 = vmatprep.subr.bf16.mxu0 0
    %381 = vmatpush2.bf16.msra.mxu0 0
    %382 = vmatprep.subr.bf16.mxu0 0
    %383 = vmatpush2.bf16.msra.mxu0 0
    %384 = vmatprep.subr.bf16.mxu0 0
    %385 = vmatpush2.bf16.msra.mxu0 0
    %386 = vmatprep.subr.bf16.mxu0 0
    %387 = vmatpush2.bf16.msra.mxu0 0
    %388 = vmatprep.subr.bf16.mxu0 0
    %389 = vmatpush2.bf16.msra.mxu0 0
    %390 = vmatprep.subr.bf16.mxu0 0
    %391 = vmatpush2.bf16.msra.mxu0 0
    %392 = vmatprep.mubr.bf16.mxu0 0
    %393 = vmatmul.mubr.bf16.gmra.mxu0 %v355
    %v394 = vpop.f32.mrf.mxu0
    %v395 = vadd.f32 %v352, %v394
    %v396 = vpop.f32.mrf.mxu0
    %v397 = vpop.f32.mrf.mxu0
    %v398 = vpop.f32.mrf.mxu0
    %399 = vdwg.mxu0
    %vm400 = vcmask 25600
    %401 = vst.msk [vmem:[#allocation4] sm:$0x3] %vm400, %v395
    // Predicated region
    $region38: #{unet_seq_forward.21} parent=1 // pred_check
      _
    $region39: #{unet_seq_forward.21} parent=1 // pred_check_branch
      %403 = sbr.rel (0) target = $region41
    $region40: #{unet_seq_forward.21} parent=1 // pred_region
      %s405 = ssub.s32 32, 32
      %406 = vsyncadd [#allocation3], %s405
      %s408 = sshll.u32 [#allocation2], 4
      %s409 = int_to_ptr.vmem [resolvable:$true] %s408
      %411 = dma.vmem_to_hbm [thread:$0]  %s409, 32, %s9, [#allocation3]
    $region41: #{unet_seq_forward.21} parent=1 // pred_fallthru
      _
    // Predicated region
    $region42: #{unet_seq_forward.21} parent=1 // pred_check
      _
    $region43: #{unet_seq_forward.21} parent=1 // pred_check_branch
      %413 = sbr.rel (0) target = $region45
    $region44: #{unet_seq_forward.21} parent=1 // pred_region
      %s415 = ssub.s32 32, 32
      %416 = vsyncadd [#allocation5], %s415
      %s418 = sshll.u32 [#allocation4], 4
      %s419 = int_to_ptr.vmem [resolvable:$true] %s418
      %421 = dma.vmem_to_hbm [thread:$0]  %s419, 32, %s10, [#allocation5]
    $region45: #{unet_seq_forward.21} parent=1 // pred_fallthru
      _
    // Predicated region
    $region46: #{unet_seq_forward.21} parent=1 // pred_check
      _
    $region47: #{unet_seq_forward.21} parent=1 // pred_check_branch
      %423 = sbr.rel (0) target = $region49
    $region48: #{unet_seq_forward.21} parent=1 // pred_region
      %424 = dma.done [#allocation3], 32
    $region49: #{unet_seq_forward.21} parent=1 // pred_fallthru
      _
    // Predicated region
    $region50: #{unet_seq_forward.21} parent=1 // pred_check
      _
    $region51: #{unet_seq_forward.21} parent=1 // pred_check_branch
      %426 = sbr.rel (0) target = $region53
    $region52: #{unet_seq_forward.21} parent=1 // pred_region
      %427 = dma.done [#allocation5], 32
    $region53: #{unet_seq_forward.21} parent=1 // pred_fallthru
      _
    %428 = vsyncpa [#allocation3], 1
    %429 = vsyncpa [#allocation5], 1

// kernel: unet_seq_forward.14
$region0: #{unet_seq_forward.14}
  #allocation0 [shape = 'u32[]', space=smem, size = 0x4, offset = 0x4, fixed_abs, tag = 'smem constant byte address 0x4 - core index']
  #allocation1 [shape = 'u32[144,128]{1,0:T(1,128)}', space=vmem, size = 0x12000, scoped, tag = 'internal scratch']
  %s0 = inlined_call_operand.vmem [shape: bf16[128,432], index: 0, kind: input, shape index: {}]
  %s1 = inlined_call_operand.vmem [shape: bf16[432,128], index: 1, kind: input, shape index: {}]
  %s2 = inlined_call_operand.vmem [shape: f32[1,128], index: 2, kind: input, shape index: {}]
  %s3 = inlined_call_operand.vmem [shape: f32[1,128], index: 3, kind: input, shape index: {}]
  %s4 = inlined_call_operand.vmem [shape: bf16[128,128], index: 4, kind: output, shape index: {}]
  %s5 = sld [smem:[#allocation0]]
  $region49: #{unet_seq_forward.14} parent=0
    _
  %s7 = ssub.s32 1, %s5
  %s8 = scalar_select 0, %s7, %s5
  loop: start=0, step=1, limit=4
  $region2: #{unet_seq_forward.14} parent=0 // loop_pre_header
    _
  $region3: #{unet_seq_forward.14} parent=0 // loop_header
    %s10 = sphi 0, %s14
    %p11 = scmp.ge.s32.totalorder %s10, 4
    %s20 = sphi 0, %s22
    %s23 = sphi 0, %s20
    %s24 = sphi 0, %s23
    %s40 = sphi 0, %s24
    %s44 = sphi 0, %s44
    %s46 = sphi 0, %s44
    %s47 = sphi 0, %s46
    %s61 = sphi 0, %s47
    %s65 = sphi 0, %s65
    %s67 = sphi 0, %s65
    %s68 = sphi 0, %s67
    %s82 = sphi 0, %s68
    %s86 = sphi 0, %s86
    %s88 = sphi 0, %s86
    %s89 = sphi 0, %s88
    %s103 = sphi 0, %s89
    %s109 = sphi 0, %s111
    %s112 = sphi 0, %s109
    %s113 = sphi 0, %s112
    %s129 = sphi 0, %s113
  $region4: #{unet_seq_forward.14} parent=0 // loop_header_branch
    %13 = sbr.rel (%p11) target = $region8
  $region5: #{unet_seq_forward.14} parent=0 // loop_body
    %s15 = ssub.s32 %s10, 1
    %s16 = ssub.s32 %s10, 2
    %s17 = sadd.s32 %s10, 1
    %s18 = ssub.s32 %s10, %s17
    %p19 = scmp.eq.s32.totalorder %s18, 0
    %s21 = sadd.s32 %s20, 1
    %s22 = scalar_select %p19, %s20, %s21
    %p25 = pneg %p19
    %p26 = scmp.eq.s32.totalorder %s10, 1
    %p27 = por %p25, %p26
    %p28 = scmp.ne.s32.totalorder %s20, %s23
    %p29 = scmp.eq.s32.totalorder %s10, 0
    %p30 = por %p28, %p29
    %p31 = scmp.ne.s32.totalorder %s20, %s23
    %p32 = scmp.eq.s32.totalorder %s15, 1
    %p33 = por %p31, %p32
    %p34 = scmp.ne.s32.totalorder %s23, %s24
    %p35 = scmp.eq.s32.totalorder %s15, 0
    %p36 = por %p34, %p35
    %p37 = scmp.ne.s32.totalorder %s23, %s24
    %p38 = scmp.eq.s32.totalorder %s16, 1
    %p39 = por %p37, %p38
    %p41 = scmp.ne.s32.totalorder %s24, %s40
    %p42 = scmp.eq.s32.totalorder %s16, 0
    %p43 = por %p41, %p42
    %s45 = sadd.s32 %s44, 1
    %p48 = scmp.eq.s32.totalorder %s10, 1
    %p49 = scmp.ne.s32.totalorder %s44, %s46
    %p50 = scmp.eq.s32.totalorder %s10, 0
    %p51 = por %p49, %p50
    %p52 = scmp.ne.s32.totalorder %s44, %s46
    %p53 = scmp.eq.s32.totalorder %s15, 1
    %p54 = por %p52, %p53
    %p55 = scmp.ne.s32.totalorder %s46, %s47
    %p56 = scmp.eq.s32.totalorder %s15, 0
    %p57 = por %p55, %p56
    %p58 = scmp.ne.s32.totalorder %s46, %s47
    %p59 = scmp.eq.s32.totalorder %s16, 1
    %p60 = por %p58, %p59
    %p62 = scmp.ne.s32.totalorder %s47, %s61
    %p63 = scmp.eq.s32.totalorder %s16, 0
    %p64 = por %p62, %p63
    %s66 = sadd.s32 %s65, 1
    %p69 = scmp.eq.s32.totalorder %s10, 1
    %p70 = scmp.ne.s32.totalorder %s65, %s67
    %p71 = scmp.eq.s32.totalorder %s10, 0
    %p72 = por %p70, %p71
    %p73 = scmp.ne.s32.totalorder %s65, %s67
    %p74 = scmp.eq.s32.totalorder %s15, 1
    %p75 = por %p73, %p74
    %p76 = scmp.ne.s32.totalorder %s67, %s68
    %p77 = scmp.eq.s32.totalorder %s15, 0
    %p78 = por %p76, %p77
    %p79 = scmp.ne.s32.totalorder %s67, %s68
    %p80 = scmp.eq.s32.totalorder %s16, 1
    %p81 = por %p79, %p80
    %p83 = scmp.ne.s32.totalorder %s68, %s82
    %p84 = scmp.eq.s32.totalorder %s16, 0
    %p85 = por %p83, %p84
    %s87 = sadd.s32 %s86, 1
    %p90 = scmp.eq.s32.totalorder %s10, 1
    %p91 = scmp.ne.s32.totalorder %s86, %s88
    %p92 = scmp.eq.s32.totalorder %s10, 0
    %p93 = por %p91, %p92
    %p94 = scmp.ne.s32.totalorder %s86, %s88
    %p95 = scmp.eq.s32.totalorder %s15, 1
    %p96 = por %p94, %p95
    %p97 = scmp.ne.s32.totalorder %s88, %s89
    %p98 = scmp.eq.s32.totalorder %s15, 0
    %p99 = por %p97, %p98
    %p100 = scmp.ne.s32.totalorder %s88, %s89
    %p101 = scmp.eq.s32.totalorder %s16, 1
    %p102 = por %p100, %p101
    %p104 = scmp.ne.s32.totalorder %s89, %s103
    %p105 = scmp.eq.s32.totalorder %s16, 0
    %p106 = por %p104, %p105
    %s107 = ssub.s32 %s10, %s17
    %p108 = scmp.eq.s32.totalorder %s107, 0
    %s110 = sadd.s32 %s109, 1
    %s111 = scalar_select %p108, %s109, %s110
    %p114 = pneg %p108
    %p115 = scmp.eq.s32.totalorder %s10, 1
    %p116 = por %p114, %p115
    %p117 = scmp.ne.s32.totalorder %s109, %s112
    %p118 = scmp.eq.s32.totalorder %s10, 0
    %p119 = por %p117, %p118
    %p120 = scmp.ne.s32.totalorder %s109, %s112
    %p121 = scmp.eq.s32.totalorder %s15, 1
    %p122 = por %p120, %p121
    %p123 = scmp.ne.s32.totalorder %s112, %s113
    %p124 = scmp.eq.s32.totalorder %s15, 0
    %p125 = por %p123, %p124
    %p126 = scmp.ne.s32.totalorder %s112, %s113
    %p127 = scmp.eq.s32.totalorder %s16, 1
    %p128 = por %p126, %p127
    %p130 = scmp.ne.s32.totalorder %s113, %s129
    %p131 = scmp.eq.s32.totalorder %s16, 0
    %p132 = por %p130, %p131
    %p133 = scmp.le.s32.totalorder 1, %s10
    %p134 = scmp.lt.s32.totalorder %s10, 3
    %p135 = pnand %p133, %p134
    %p136 = pneg %p135
    // Predicated region
    $region9: #{unet_seq_forward.14} parent=5 // pred_check
      _
    $region10: #{unet_seq_forward.14} parent=5 // pred_check_branch
      %138 = sbr.rel (%p135) target = $region12
    $region11: #{unet_seq_forward.14} parent=5 // pred_region
      %s139 = ssub.s32 %s10, 1
      // Predicated region
      $region13: #{unet_seq_forward.14} parent=11 // pred_check
        %p140 = pneg %p57
      $region14: #{unet_seq_forward.14} parent=11 // pred_check_branch
        %142 = sbr.rel (%p140) target = $region16
      $region15: #{unet_seq_forward.14} parent=11 // pred_region
        _
      $region16: #{unet_seq_forward.14} parent=11 // pred_fallthru
        _
      // Predicated region
      $region17: #{unet_seq_forward.14} parent=11 // pred_check
        %p143 = pneg %p78
      $region18: #{unet_seq_forward.14} parent=11 // pred_check_branch
        %145 = sbr.rel (%p143) target = $region20
      $region19: #{unet_seq_forward.14} parent=11 // pred_region
        _
      $region20: #{unet_seq_forward.14} parent=11 // pred_fallthru
        _
      // Predicated region
      $region21: #{unet_seq_forward.14} parent=11 // pred_check
        %p146 = pneg %p99
      $region22: #{unet_seq_forward.14} parent=11 // pred_check_branch
        %148 = sbr.rel (%p146) target = $region24
      $region23: #{unet_seq_forward.14} parent=11 // pred_region
        _
      $region24: #{unet_seq_forward.14} parent=11 // pred_fallthru
        _
    $region12: #{unet_seq_forward.14} parent=5 // pred_fallthru
      _
    %p149 = scmp.lt.s32.totalorder %s10, 2
    // Predicated region
    $region25: #{unet_seq_forward.14} parent=5 // pred_check
      %p150 = pneg %p149
    $region26: #{unet_seq_forward.14} parent=5 // pred_check_branch
      %152 = sbr.rel (%p150) target = $region28
    $region27: #{unet_seq_forward.14} parent=5 // pred_region
      // Predicated region
      $region29: #{unet_seq_forward.14} parent=27 // pred_check
        %p153 = pneg %p30
      $region30: #{unet_seq_forward.14} parent=27 // pred_check_branch
        %155 = sbr.rel (%p153) target = $region32
      $region31: #{unet_seq_forward.14} parent=27 // pred_region
        %s156 = smul.u32 8, %s10
        %p157 = scmp.lt.s32.totalorder %s156, 15
        %s158 = scalar_select %p157, %s156, 15
        %s159 = smul.addr %s158, 4
        %s160 = smul.addr %s159, 4
        %s161 = scalar_lea.vmem %s0, %s160
        %s162 = smul.u32 8, %s10
      $region32: #{unet_seq_forward.14} parent=27 // pred_fallthru
        _
    $region28: #{unet_seq_forward.14} parent=5 // pred_fallthru
      _
    %p163 = scmp.le.s32.totalorder 1, %s10
    %p164 = scmp.lt.s32.totalorder %s10, 3
    %p165 = pnand %p163, %p164
    %p166 = pneg %p165
    // Predicated region
    $region33: #{unet_seq_forward.14} parent=5 // pred_check
      _
    $region34: #{unet_seq_forward.14} parent=5 // pred_check_branch
      %168 = sbr.rel (%p165) target = $region36
    $region35: #{unet_seq_forward.14} parent=5 // pred_region
      %s169 = ssub.s32 %s10, 1
      %s170 = smul.u32 8, %s15
      %p171 = scmp.lt.s32.totalorder %s170, 15
      %s172 = scalar_select %p171, %s170, 15
      %s173 = smul.addr %s172, 4
      %s174 = smul.addr %s173, 4
      %s175 = scalar_lea.vmem %s0, %s174
      %p176 = pneg %p36
      %p177 = pneg %p33
      %p178 = pneg %p57
      %p179 = pneg %p54
      %p180 = pneg %p78
      %p181 = pneg %p75
      %p182 = pneg %p99
      %p183 = pneg %p96
      %p184 = pneg %p125
      %p185 = pneg %p122
      %s186 = smul.u32 8, %s15
      %p187 = scmp.lt.s32.totalorder %s186, 15
      %s188 = scalar_select %p187, %s186, 15
      %s189 = smul.addr %s188, 4
      %s190 = scalar_lea.vmem %s4, %s189
      %s191 = smul.u32 8, %s15
      %p192 = scmp.lt.s32.totalorder %s191, 15
      %s193 = scalar_select %p192, %s191, 15
      %s194 = smul.addr %s193, 4
      %s195 = smul.addr %s194, 4
      %s196 = scalar_lea.vmem %s0, %s195
      %s197 = smul.u32 8, %s15
      %s198 = smul.u32 8, %s15
      %p199 = scmp.lt.s32.totalorder %s198, 15
      %s200 = scalar_select %p199, %s198, 15
      %s201 = smul.addr %s200, 4
      %s202 = scalar_lea.vmem %s4, %s201
      %s203 = smul.u32 8, %s15
      %v205 = vld [vmem:[%s196] sm:$0xff]
      %v206 = vld [vmem:[%s196 + $0x8] sm:$0xff]
      %v207 = vld [vmem:[%s196 + $0x10] sm:$0xff]
      %v208 = vld [vmem:[%s196 + $0x18] sm:$0xff]
      %v209 = vld [vmem:[%s196 + $0x20] sm:$0xff]
      %v210 = vld [vmem:[%s196 + $0x28] sm:$0xff]
      %v211 = vld [vmem:[%s196 + $0x30] sm:$0xff]
      %v212 = vld [vmem:[%s196 + $0x38] sm:$0xff]
      %v213 = vld [vmem:[%s196 + $0x40] sm:$0xff]
      %v214 = vld [vmem:[%s196 + $0x48] sm:$0xff]
      %v215 = vld [vmem:[%s196 + $0x50] sm:$0xff]
      %v216 = vld [vmem:[%s196 + $0x58] sm:$0xff]
      %v217 = vld [vmem:[%s196 + $0x60] sm:$0xff]
      %v218 = vld [vmem:[%s196 + $0x68] sm:$0xff]
      %v219 = vld [vmem:[%s196 + $0x70] sm:$0xff]
      %v220 = vld [vmem:[%s196 + $0x78] sm:$0xff]
      %v221 = vld [vmem:[%s1] sm:$0xf]
      %v222 = vld [vmem:[%s1 + $0x4] sm:$0xf]
      %v223 = vld [vmem:[%s1 + $0x8] sm:$0xf]
      %v224 = vld [vmem:[%s1 + $0xc] sm:$0xf]
      %v225 = vld [vmem:[%s1 + $0x10] sm:$0xf]
      %v226 = vld [vmem:[%s1 + $0x14] sm:$0xf]
      %v227 = vld [vmem:[%s1 + $0x18] sm:$0xf]
      %v228 = vld [vmem:[%s1 + $0x1c] sm:$0xf]
      %v229 = vld [vmem:[%s1 + $0x20] sm:$0xf]
      %v230 = vld [vmem:[%s1 + $0x24] sm:$0xf]
      %v231 = vld [vmem:[%s1 + $0x28] sm:$0xf]
      %v232 = vld [vmem:[%s1 + $0x2c] sm:$0xf]
      %v233 = vld [vmem:[%s1 + $0x30] sm:$0xf]
      %v234 = vld [vmem:[%s1 + $0x34] sm:$0xf]
      %v235 = vld [vmem:[%s1 + $0x38] sm:$0xf]
      %v236 = vld [vmem:[%s1 + $0x3c] sm:$0xf]
      %v237 = vld [vmem:[%s1 + $0x40] sm:$0xf]
      %v238 = vld [vmem:[%s1 + $0x44] sm:$0xf]
      %v239 = vld [vmem:[%s1 + $0x48] sm:$0xf]
      %v240 = vld [vmem:[%s1 + $0x4c] sm:$0xf]
      %v241 = vld [vmem:[%s1 + $0x50] sm:$0xf]
      %v242 = vld [vmem:[%s1 + $0x54] sm:$0xf]
      %v243 = vld [vmem:[%s1 + $0x58] sm:$0xf]
      %v244 = vld [vmem:[%s1 + $0x5c] sm:$0xf]
      %v245 = vld [vmem:[%s1 + $0x60] sm:$0xf]
      %v246 = vld [vmem:[%s1 + $0x64] sm:$0xf]
      %v247 = vld [vmem:[%s1 + $0x68] sm:$0xf]
      %v248 = vld [vmem:[%s1 + $0x6c] sm:$0xf]
      %v249 = vld [vmem:[%s1 + $0x70] sm:$0xf]
      %v250 = vld [vmem:[%s1 + $0x74] sm:$0xf]
      %v251 = vld [vmem:[%s1 + $0x78] sm:$0xf]
      %v252 = vld [vmem:[%s1 + $0x7c] sm:$0xf]
      %v253 = vld [vmem:[%s1 + $0x80] sm:$0xf]
      %v254 = vld [vmem:[%s1 + $0x84] sm:$0xf]
      %v255 = vld [vmem:[%s1 + $0x88] sm:$0xf]
      %v256 = vld [vmem:[%s1 + $0x8c] sm:$0xf]
      %v257 = vld [vmem:[%s1 + $0x90] sm:$0xf]
      %v258 = vld [vmem:[%s1 + $0x94] sm:$0xf]
      %v259 = vld [vmem:[%s1 + $0x98] sm:$0xf]
      %v260 = vld [vmem:[%s1 + $0x9c] sm:$0xf]
      %v261 = vld [vmem:[%s1 + $0xa0] sm:$0xf]
      %v262 = vld [vmem:[%s1 + $0xa4] sm:$0xf]
      %v263 = vld [vmem:[%s1 + $0xa8] sm:$0xf]
      %v264 = vld [vmem:[%s1 + $0xac] sm:$0xf]
      %v265 = vld [vmem:[%s1 + $0xb0] sm:$0xf]
      %v266 = vld [vmem:[%s1 + $0xb4] sm:$0xf]
      %v267 = vld [vmem:[%s1 + $0xb8] sm:$0xf]
      %v268 = vld [vmem:[%s1 + $0xbc] sm:$0xf]
      %v269 = vld [vmem:[%s1 + $0xc0] sm:$0xf]
      %v270 = vld [vmem:[%s1 + $0xc4] sm:$0xf]
      %v271 = vld [vmem:[%s1 + $0xc8] sm:$0xf]
      %v272 = vld [vmem:[%s1 + $0xcc] sm:$0xf]
      %v273 = vld [vmem:[%s1 + $0xd0] sm:$0xf]
      %v274 = vld [vmem:[%s1 + $0xd4] sm:$0xf]
      %v291 = vunpack.c.l.b16 %v205
      %v292 = vunpack.c.h.b16 %v205
      %v293 = vunpack.c.l.b16 %v206
      %v294 = vunpack.c.h.b16 %v206
      %v295 = vunpack.c.l.b16 %v207
      %v296 = vunpack.c.h.b16 %v207
      %v297 = vunpack.c.l.b16 %v208
      %v298 = vunpack.c.h.b16 %v208
      %v299 = vunpack.c.l.b16 %v209
      %v300 = vunpack.c.h.b16 %v209
      %v301 = vunpack.c.l.b16 %v210
      %v302 = vunpack.c.h.b16 %v210
      %v303 = vunpack.c.l.b16 %v211
      %v304 = vunpack.c.h.b16 %v211
      %v305 = vunpack.c.l.b16 %v212
      %v306 = vunpack.c.h.b16 %v212
      %v307 = vunpack.c.l.b16 %v213
      %v308 = vunpack.c.h.b16 %v213
      %v309 = vunpack.c.l.b16 %v214
      %v310 = vunpack.c.h.b16 %v214
      %v311 = vunpack.c.l.b16 %v215
      %v312 = vunpack.c.h.b16 %v215
      %v313 = vunpack.c.l.b16 %v216
      %v314 = vunpack.c.h.b16 %v216
      %v315 = vunpack.c.l.b16 %v217
      %v316 = vunpack.c.h.b16 %v217
      %v317 = vunpack.c.l.b16 %v218
      %v318 = vunpack.c.h.b16 %v218
      %v319 = vunpack.c.l.b16 %v219
      %v320 = vunpack.c.h.b16 %v219
      %v321 = vunpack.c.l.b16 %v220
      %v322 = vunpack.c.h.b16 %v220
      %v323 = vpack.c.b16 %v295, %v291
      %v324 = vpack.c.b16 %v296, %v292
      %v325 = vpack.c.b16 %v297, %v293
      %v326 = vpack.c.b16 %v298, %v294
      %v327 = vpack.c.b16 %v303, %v299
      %v328 = vpack.c.b16 %v304, %v300
      %v329 = vpack.c.b16 %v305, %v301
      %v330 = vpack.c.b16 %v306, %v302
      %v331 = vpack.c.b16 %v311, %v307
      %v332 = vpack.c.b16 %v312, %v308
      %v333 = vpack.c.b16 %v313, %v309
      %v334 = vpack.c.b16 %v314, %v310
      %v335 = vpack.c.b16 %v319, %v315
      %v336 = vpack.c.b16 %v320, %v316
      %v337 = vpack.c.b16 %v321, %v317
      %v338 = vpack.c.b16 %v322, %v318
      %v405 = vunpack.c.l.b16 %v221
      %v406 = vunpack.c.l.b16 %v222
      %v407 = vunpack.c.l.b16 %v223
      %v408 = vunpack.c.l.b16 %v224
      %v409 = vunpack.c.l.b16 %v225
      %v410 = vunpack.c.l.b16 %v226
      %v411 = vunpack.c.l.b16 %v227
      %v412 = vunpack.c.l.b16 %v228
      %v413 = vunpack.c.l.b16 %v229
      %v414 = vunpack.c.l.b16 %v230
      %v415 = vunpack.c.l.b16 %v231
      %v416 = vunpack.c.l.b16 %v232
      %v417 = vunpack.c.l.b16 %v233
      %v418 = vunpack.c.l.b16 %v234
      %v419 = vunpack.c.l.b16 %v235
      %v420 = vunpack.c.l.b16 %v236
      %v421 = vunpack.c.l.b16 %v237
      %v422 = vunpack.c.l.b16 %v238
      %v423 = vunpack.c.l.b16 %v239
      %v424 = vunpack.c.l.b16 %v240
      %v425 = vunpack.c.l.b16 %v241
      %v426 = vunpack.c.l.b16 %v242
      %v427 = vunpack.c.l.b16 %v243
      %v428 = vunpack.c.l.b16 %v244
      %v429 = vunpack.c.l.b16 %v245
      %v430 = vunpack.c.l.b16 %v246
      %v431 = vunpack.c.l.b16 %v247
      %v432 = vunpack.c.l.b16 %v248
      %v433 = vunpack.c.l.b16 %v249
      %v434 = vunpack.c.l.b16 %v250
      %v435 = vunpack.c.l.b16 %v251
      %v436 = vunpack.c.l.b16 %v252
      %v437 = vunpack.c.l.b16 %v253
      %v438 = vunpack.c.l.b16 %v254
      %v439 = vunpack.c.l.b16 %v255
      %v440 = vunpack.c.l.b16 %v256
      %v441 = vunpack.c.l.b16 %v257
      %v442 = vunpack.c.l.b16 %v258
      %v443 = vunpack.c.l.b16 %v259
      %v444 = vunpack.c.l.b16 %v260
      %v445 = vunpack.c.l.b16 %v261
      %v446 = vunpack.c.l.b16 %v262
      %v447 = vunpack.c.l.b16 %v263
      %v448 = vunpack.c.l.b16 %v264
      %v449 = vunpack.c.l.b16 %v265
      %v450 = vunpack.c.l.b16 %v266
      %v451 = vunpack.c.l.b16 %v267
      %v452 = vunpack.c.l.b16 %v268
      %v453 = vunpack.c.l.b16 %v269
      %v454 = vunpack.c.l.b16 %v270
      %v455 = vunpack.c.l.b16 %v271
      %v456 = vunpack.c.l.b16 %v272
      %v457 = vunpack.c.l.b16 %v273
      %v458 = vunpack.c.l.b16 %v274
      %v459 = vpack.c.b16 %v406, %v405
      %v460 = vpack.c.b16 %v408, %v407
      %v461 = vpack.c.b16 %v410, %v409
      %v462 = vpack.c.b16 %v412, %v411
      %v463 = vpack.c.b16 %v414, %v413
      %v464 = vpack.c.b16 %v416, %v415
      %v465 = vpack.c.b16 %v418, %v417
      %v466 = vpack.c.b16 %v420, %v419
      %v467 = vpack.c.b16 %v422, %v421
      %v468 = vpack.c.b16 %v424, %v423
      %v469 = vpack.c.b16 %v426, %v425
      %v470 = vpack.c.b16 %v428, %v427
      %v471 = vpack.c.b16 %v430, %v429
      %v472 = vpack.c.b16 %v432, %v431
      %v473 = vpack.c.b16 %v434, %v433
      %v474 = vpack.c.b16 %v436, %v435
      %v475 = vpack.c.b16 %v438, %v437
      %v476 = vpack.c.b16 %v440, %v439
      %v477 = vpack.c.b16 %v442, %v441
      %v478 = vpack.c.b16 %v444, %v443
      %v479 = vpack.c.b16 %v446, %v445
      %v480 = vpack.c.b16 %v448, %v447
      %v481 = vpack.c.b16 %v450, %v449
      %v482 = vpack.c.b16 %v452, %v451
      %v483 = vpack.c.b16 %v454, %v453
      %v484 = vpack.c.b16 %v456, %v455
      %v485 = vpack.c.b16 %v458, %v457
      %vm513 = vcmask 392192
      %v515 = vsel %vm513, %v326, 0
      %v518 = vsel %vm513, %v330, 0
      %v521 = vsel %vm513, %v334, 0
      %v524 = vsel %vm513, %v338, 0
      %526 = vmatprep.subr.bf16.mxu0 0
      %527 = vmatpush1.bf16.msra.mxu0 %v466
      %528 = vmatprep.subr.bf16.mxu0 0
      %529 = vmatpush1.bf16.msra.mxu0 %v465
      %530 = vmatprep.subr.bf16.mxu0 0
      %531 = vmatpush1.bf16.msra.mxu0 %v464
      %532 = vmatprep.subr.bf16.mxu0 0
      %533 = vmatpush1.bf16.msra.mxu0 %v463
      %534 = vmatprep.subr.bf16.mxu0 0
      %535 = vmatpush1.bf16.msra.mxu0 %v462
      %536 = vmatprep.subr.bf16.mxu0 0
      %537 = vmatpush1.bf16.msra.mxu0 %v461
      %538 = vmatprep.subr.bf16.mxu0 0
      %539 = vmatpush1.bf16.msra.mxu0 %v460
      %540 = vmatprep.subr.bf16.mxu0 0
      %541 = vmatpush1.bf16.msra.mxu0 %v459
      %542 = vmatprep.subr.bf16.mxu0 0
      %543 = vmatpush2.bf16.msra.mxu0 %v474
      %544 = vmatprep.subr.bf16.mxu0 0
      %545 = vmatpush2.bf16.msra.mxu0 %v473
      %546 = vmatprep.subr.bf16.mxu0 0
      %547 = vmatpush2.bf16.msra.mxu0 %v472
      %548 = vmatprep.subr.bf16.mxu0 0
      %549 = vmatpush2.bf16.msra.mxu0 %v471
      %550 = vmatprep.subr.bf16.mxu0 0
      %551 = vmatpush2.bf16.msra.mxu0 %v470
      %552 = vmatprep.subr.bf16.mxu0 0
      %553 = vmatpush2.bf16.msra.mxu0 %v469
      %554 = vmatprep.subr.bf16.mxu0 0
      %555 = vmatpush2.bf16.msra.mxu0 %v468
      %556 = vmatprep.subr.bf16.mxu0 0
      %557 = vmatpush2.bf16.msra.mxu0 %v467
      %558 = vmatprep.mubr.bf16.mxu0 %v324
      %559 = vmatmul.mubr.bf16.gmra.mxu0 %v323
      %v560 = vpop.f32.mrf.mxu0
      %v561 = vadd.f32 0.0, %v560
      %v562 = vpop.f32.mrf.mxu0
      %v563 = vpop.f32.mrf.mxu0
      %v564 = vadd.f32 0.0, %v563
      %v565 = vpop.f32.mrf.mxu0
      %566 = vmatprep.mubr.bf16.mxu0 %v328
      %567 = vmatmul.mubr.bf16.gmra.mxu0 %v327
      %v568 = vpop.f32.mrf.mxu0
      %v569 = vadd.f32 0.0, %v568
      %v570 = vpop.f32.mrf.mxu0
      %v571 = vpop.f32.mrf.mxu0
      %v572 = vadd.f32 0.0, %v571
      %v573 = vpop.f32.mrf.mxu0
      %574 = vmatprep.mubr.bf16.mxu0 %v332
      %575 = vmatmul.mubr.bf16.gmra.mxu0 %v331
      %v576 = vpop.f32.mrf.mxu0
      %v577 = vadd.f32 0.0, %v576
      %v578 = vpop.f32.mrf.mxu0
      %v579 = vpop.f32.mrf.mxu0
      %v580 = vadd.f32 0.0, %v579
      %v581 = vpop.f32.mrf.mxu0
      %582 = vmatprep.mubr.bf16.mxu0 %v336
      %583 = vmatmul.mubr.bf16.gmra.mxu0 %v335
      %v584 = vpop.f32.mrf.mxu0
      %v585 = vadd.f32 0.0, %v584
      %v586 = vpop.f32.mrf.mxu0
      %v587 = vpop.f32.mrf.mxu0
      %v588 = vadd.f32 0.0, %v587
      %v589 = vpop.f32.mrf.mxu0
      %590 = vdwg.mxu0
      %591 = vmatprep.subr.bf16.mxu0 0
      %592 = vmatpush1.bf16.msra.mxu0 %v482
      %593 = vmatprep.subr.bf16.mxu0 0
      %594 = vmatpush1.bf16.msra.mxu0 %v481
      %595 = vmatprep.subr.bf16.mxu0 0
      %596 = vmatpush1.bf16.msra.mxu0 %v480
      %597 = vmatprep.subr.bf16.mxu0 0
      %598 = vmatpush1.bf16.msra.mxu0 %v479
      %599 = vmatprep.subr.bf16.mxu0 0
      %600 = vmatpush1.bf16.msra.mxu0 %v478
      %601 = vmatprep.subr.bf16.mxu0 0
      %602 = vmatpush1.bf16.msra.mxu0 %v477
      %603 = vmatprep.subr.bf16.mxu0 0
      %604 = vmatpush1.bf16.msra.mxu0 %v476
      %605 = vmatprep.subr.bf16.mxu0 0
      %606 = vmatpush1.bf16.msra.mxu0 %v475
      %607 = vmatprep.subr.bf16.mxu0 0
      %608 = vmatpush2.bf16.msra.mxu0 0
      %609 = vmatprep.subr.bf16.mxu0 0
      %610 = vmatpush2.bf16.msra.mxu0 0
      %611 = vmatprep.subr.bf16.mxu0 0
      %612 = vmatpush2.bf16.msra.mxu0 0
      %613 = vmatprep.subr.bf16.mxu0 0
      %614 = vmatpush2.bf16.msra.mxu0 0
      %615 = vmatprep.subr.bf16.mxu0 0
      %616 = vmatpush2.bf16.msra.mxu0 0
      %617 = vmatprep.subr.bf16.mxu0 0
      %618 = vmatpush2.bf16.msra.mxu0 %v485
      %619 = vmatprep.subr.bf16.mxu0 0
      %620 = vmatpush2.bf16.msra.mxu0 %v484
      %621 = vmatprep.subr.bf16.mxu0 0
      %622 = vmatpush2.bf16.msra.mxu0 %v483
      %623 = vmatprep.mubr.bf16.mxu0 %v515
      %624 = vmatmul.mubr.bf16.gmra.mxu0 %v325
      %v625 = vpop.f32.mrf.mxu0
      %v626 = vadd.f32 %v561, %v625
      %v627 = vpop.f32.mrf.mxu0
      %v628 = vpop.f32.mrf.mxu0
      %v629 = vadd.f32 %v564, %v628
      %v630 = vpop.f32.mrf.mxu0
      %631 = vmatprep.mubr.bf16.mxu0 %v518
      %632 = vmatmul.mubr.bf16.gmra.mxu0 %v329
      %v633 = vpop.f32.mrf.mxu0
      %v634 = vadd.f32 %v569, %v633
      %v635 = vpop.f32.mrf.mxu0
      %v636 = vpop.f32.mrf.mxu0
      %v637 = vadd.f32 %v572, %v636
      %v638 = vpop.f32.mrf.mxu0
      %639 = vmatprep.mubr.bf16.mxu0 %v521
      %640 = vmatmul.mubr.bf16.gmra.mxu0 %v333
      %v641 = vpop.f32.mrf.mxu0
      %v642 = vadd.f32 %v577, %v641
      %v643 = vpop.f32.mrf.mxu0
      %v644 = vpop.f32.mrf.mxu0
      %v645 = vadd.f32 %v580, %v644
      %v646 = vpop.f32.mrf.mxu0
      %647 = vmatprep.mubr.bf16.mxu0 %v524
      %648 = vmatmul.mubr.bf16.gmra.mxu0 %v337
      %v649 = vpop.f32.mrf.mxu0
      %v650 = vadd.f32 %v585, %v649
      %v651 = vpop.f32.mrf.mxu0
      %v652 = vpop.f32.mrf.mxu0
      %v653 = vadd.f32 %v588, %v652
      %v654 = vpop.f32.mrf.mxu0
      %655 = vdwg.mxu0
      %v656 = vld [vmem:[%s2] sm:$0x1]
      %v658 = vlaneseq
      %v659 = vshrl.u32 %v658, 7
      %v660 = vsub.s32 0, %v659
      %v661 = vrot.slane %v656, %v660
      %v663 = vmul.f32 %v626, %v661
      %v664 = vmul.f32 %v629, %v661
      %v665 = vmul.f32 %v634, %v661
      %v666 = vmul.f32 %v637, %v661
      %v667 = vmul.f32 %v642, %v661
      %v668 = vmul.f32 %v645, %v661
      %v669 = vmul.f32 %v650, %v661
      %v670 = vmul.f32 %v653, %v661
      %v671 = vld [vmem:[%s3] sm:$0x1]
      %v673 = vlaneseq
      %v674 = vshrl.u32 %v673, 7
      %v675 = vsub.s32 0, %v674
      %v676 = vrot.slane %v671, %v675
      %v678 = vadd.f32 %v663, %v676
      %v679 = vadd.f32 %v664, %v676
      %v680 = vadd.f32 %v665, %v676
      %v681 = vadd.f32 %v666, %v676
      %v682 = vadd.f32 %v667, %v676
      %v683 = vadd.f32 %v668, %v676
      %v684 = vadd.f32 %v669, %v676
      %v685 = vadd.f32 %v670, %v676
      %v686 = vmax.f32 %v678, 0.0
      %v687 = vmax.f32 %v679, 0.0
      %v688 = vmax.f32 %v680, 0.0
      %v689 = vmax.f32 %v681, 0.0
      %v690 = vmax.f32 %v682, 0.0
      %v691 = vmax.f32 %v683, 0.0
      %v692 = vmax.f32 %v684, 0.0
      %v693 = vmax.f32 %v685, 0.0
      %v694 = vpack.c.bf16 %v687, %v686
      %v695 = vpack.c.bf16 %v689, %v688
      %v696 = vpack.c.bf16 %v691, %v690
      %v697 = vpack.c.bf16 %v693, %v692
      %v702 = vunpack.c.l.b16 %v694
      %v703 = vunpack.c.h.b16 %v694
      %v704 = vunpack.c.l.b16 %v695
      %v705 = vunpack.c.h.b16 %v695
      %v706 = vunpack.c.l.b16 %v696
      %v707 = vunpack.c.h.b16 %v696
      %v708 = vunpack.c.l.b16 %v697
      %v709 = vunpack.c.h.b16 %v697
      %v710 = vpack.c.b16 %v702, %v702
      %v711 = vpack.c.b16 %v703, %v703
      %v712 = vpack.c.b16 %v704, %v704
      %v713 = vpack.c.b16 %v705, %v705
      %v714 = vpack.c.b16 %v706, %v706
      %v715 = vpack.c.b16 %v707, %v707
      %v716 = vpack.c.b16 %v708, %v708
      %v717 = vpack.c.b16 %v709, %v709
      %726 = vst [vmem:[%s202] sm:$0xf] %v710
      %727 = vst [vmem:[%s202 + $0x4] sm:$0xf] %v711
      %728 = vst [vmem:[%s202 + $0x8] sm:$0xf] %v712
      %729 = vst [vmem:[%s202 + $0xc] sm:$0xf] %v713
      %730 = vst [vmem:[%s202 + $0x10] sm:$0xf] %v714
      %731 = vst [vmem:[%s202 + $0x14] sm:$0xf] %v715
      %732 = vst [vmem:[%s202 + $0x18] sm:$0xf] %v716
      %733 = vst [vmem:[%s202 + $0x1c] sm:$0xf] %v717
      %s734 = smul.u32 8, %s15
      %p735 = scmp.lt.s32.totalorder %s734, 15
      %s736 = scalar_select %p735, %s734, 15
      %s737 = smul.addr %s736, 4
      %s738 = scalar_lea.vmem %s4, %s737
      // Predicated region
      $region37: #{unet_seq_forward.14} parent=35 // pred_check
        %p739 = pneg %p122
      $region38: #{unet_seq_forward.14} parent=35 // pred_check_branch
        %741 = sbr.rel (%p739) target = $region40
      $region39: #{unet_seq_forward.14} parent=35 // pred_region
        %s742 = smul.u32 8, %s15
      $region40: #{unet_seq_forward.14} parent=35 // pred_fallthru
        _
    $region36: #{unet_seq_forward.14} parent=5 // pred_fallthru
      _
    %p743 = scmp.le.s32.totalorder 2, %s10
    // Predicated region
    $region41: #{unet_seq_forward.14} parent=5 // pred_check
      %p744 = pneg %p743
    $region42: #{unet_seq_forward.14} parent=5 // pred_check_branch
      %746 = sbr.rel (%p744) target = $region44
    $region43: #{unet_seq_forward.14} parent=5 // pred_region
      %s747 = ssub.s32 %s10, 2
      // Predicated region
      $region45: #{unet_seq_forward.14} parent=43 // pred_check
        %p748 = pneg %p128
      $region46: #{unet_seq_forward.14} parent=43 // pred_check_branch
        %750 = sbr.rel (%p748) target = $region48
      $region47: #{unet_seq_forward.14} parent=43 // pred_region
        %s751 = smul.u32 8, %s16
        %p752 = scmp.lt.s32.totalorder %s751, 15
        %s753 = scalar_select %p752, %s751, 15
        %s754 = smul.addr %s753, 4
        %s755 = scalar_lea.vmem %s4, %s754
      $region48: #{unet_seq_forward.14} parent=43 // pred_fallthru
        _
    $region44: #{unet_seq_forward.14} parent=5 // pred_fallthru
      _
  $region6: #{unet_seq_forward.14} parent=0 // loop_footer
    %s14 = sadd.s32 1, %s10
  $region7: #{unet_seq_forward.14} parent=0 // loop_footer_branch
    %9 = sbr.rel target = $region3
  $region8: #{unet_seq_forward.14} parent=0 // loop_exit
    _

// kernel: unet_seq_forward.15
$region0: #{unet_seq_forward.15}
  #allocation0 [shape = 'u32[]', space=smem, size = 0x4, offset = 0x4, fixed_abs, tag = 'smem constant byte address 0x4 - core index']
  #allocation1 [shape = 'u32[144,128]{1,0:T(1,128)}', space=vmem, size = 0x12000, scoped, tag = 'internal scratch']
  %s0 = inlined_call_operand.vmem [shape: bf16[128,288], index: 0, kind: input, shape index: {}]
  %s1 = inlined_call_operand.vmem [shape: bf16[288,128], index: 1, kind: input, shape index: {}]
  %s2 = inlined_call_operand.vmem [shape: f32[1,128], index: 2, kind: input, shape index: {}]
  %s3 = inlined_call_operand.vmem [shape: f32[1,128], index: 3, kind: input, shape index: {}]
  %s4 = inlined_call_operand.vmem [shape: bf16[128,128], index: 4, kind: output, shape index: {}]
  %s5 = sld [smem:[#allocation0]]
  $region49: #{unet_seq_forward.15} parent=0
    _
  %s7 = ssub.s32 1, %s5
  %s8 = scalar_select 0, %s7, %s5
  loop: start=0, step=1, limit=4
  $region2: #{unet_seq_forward.15} parent=0 // loop_pre_header
    _
  $region3: #{unet_seq_forward.15} parent=0 // loop_header
    %s10 = sphi 0, %s14
    %p11 = scmp.ge.s32.totalorder %s10, 4
    %s20 = sphi 0, %s22
    %s23 = sphi 0, %s20
    %s24 = sphi 0, %s23
    %s40 = sphi 0, %s24
    %s44 = sphi 0, %s44
    %s46 = sphi 0, %s44
    %s47 = sphi 0, %s46
    %s61 = sphi 0, %s47
    %s65 = sphi 0, %s65
    %s67 = sphi 0, %s65
    %s68 = sphi 0, %s67
    %s82 = sphi 0, %s68
    %s86 = sphi 0, %s86
    %s88 = sphi 0, %s86
    %s89 = sphi 0, %s88
    %s103 = sphi 0, %s89
    %s109 = sphi 0, %s111
    %s112 = sphi 0, %s109
    %s113 = sphi 0, %s112
    %s129 = sphi 0, %s113
  $region4: #{unet_seq_forward.15} parent=0 // loop_header_branch
    %13 = sbr.rel (%p11) target = $region8
  $region5: #{unet_seq_forward.15} parent=0 // loop_body
    %s15 = ssub.s32 %s10, 1
    %s16 = ssub.s32 %s10, 2
    %s17 = sadd.s32 %s10, 1
    %s18 = ssub.s32 %s10, %s17
    %p19 = scmp.eq.s32.totalorder %s18, 0
    %s21 = sadd.s32 %s20, 1
    %s22 = scalar_select %p19, %s20, %s21
    %p25 = pneg %p19
    %p26 = scmp.eq.s32.totalorder %s10, 1
    %p27 = por %p25, %p26
    %p28 = scmp.ne.s32.totalorder %s20, %s23
    %p29 = scmp.eq.s32.totalorder %s10, 0
    %p30 = por %p28, %p29
    %p31 = scmp.ne.s32.totalorder %s20, %s23
    %p32 = scmp.eq.s32.totalorder %s15, 1
    %p33 = por %p31, %p32
    %p34 = scmp.ne.s32.totalorder %s23, %s24
    %p35 = scmp.eq.s32.totalorder %s15, 0
    %p36 = por %p34, %p35
    %p37 = scmp.ne.s32.totalorder %s23, %s24
    %p38 = scmp.eq.s32.totalorder %s16, 1
    %p39 = por %p37, %p38
    %p41 = scmp.ne.s32.totalorder %s24, %s40
    %p42 = scmp.eq.s32.totalorder %s16, 0
    %p43 = por %p41, %p42
    %s45 = sadd.s32 %s44, 1
    %p48 = scmp.eq.s32.totalorder %s10, 1
    %p49 = scmp.ne.s32.totalorder %s44, %s46
    %p50 = scmp.eq.s32.totalorder %s10, 0
    %p51 = por %p49, %p50
    %p52 = scmp.ne.s32.totalorder %s44, %s46
    %p53 = scmp.eq.s32.totalorder %s15, 1
    %p54 = por %p52, %p53
    %p55 = scmp.ne.s32.totalorder %s46, %s47
    %p56 = scmp.eq.s32.totalorder %s15, 0
    %p57 = por %p55, %p56
    %p58 = scmp.ne.s32.totalorder %s46, %s47
    %p59 = scmp.eq.s32.totalorder %s16, 1
    %p60 = por %p58, %p59
    %p62 = scmp.ne.s32.totalorder %s47, %s61
    %p63 = scmp.eq.s32.totalorder %s16, 0
    %p64 = por %p62, %p63
    %s66 = sadd.s32 %s65, 1
    %p69 = scmp.eq.s32.totalorder %s10, 1
    %p70 = scmp.ne.s32.totalorder %s65, %s67
    %p71 = scmp.eq.s32.totalorder %s10, 0
    %p72 = por %p70, %p71
    %p73 = scmp.ne.s32.totalorder %s65, %s67
    %p74 = scmp.eq.s32.totalorder %s15, 1
    %p75 = por %p73, %p74
    %p76 = scmp.ne.s32.totalorder %s67, %s68
    %p77 = scmp.eq.s32.totalorder %s15, 0
    %p78 = por %p76, %p77
    %p79 = scmp.ne.s32.totalorder %s67, %s68
    %p80 = scmp.eq.s32.totalorder %s16, 1
    %p81 = por %p79, %p80
    %p83 = scmp.ne.s32.totalorder %s68, %s82
    %p84 = scmp.eq.s32.totalorder %s16, 0
    %p85 = por %p83, %p84
    %s87 = sadd.s32 %s86, 1
    %p90 = scmp.eq.s32.totalorder %s10, 1
    %p91 = scmp.ne.s32.totalorder %s86, %s88
    %p92 = scmp.eq.s32.totalorder %s10, 0
    %p93 = por %p91, %p92
    %p94 = scmp.ne.s32.totalorder %s86, %s88
    %p95 = scmp.eq.s32.totalorder %s15, 1
    %p96 = por %p94, %p95
    %p97 = scmp.ne.s32.totalorder %s88, %s89
    %p98 = scmp.eq.s32.totalorder %s15, 0
    %p99 = por %p97, %p98
    %p100 = scmp.ne.s32.totalorder %s88, %s89
    %p101 = scmp.eq.s32.totalorder %s16, 1
    %p102 = por %p100, %p101
    %p104 = scmp.ne.s32.totalorder %s89, %s103
    %p105 = scmp.eq.s32.totalorder %s16, 0
    %p106 = por %p104, %p105
    %s107 = ssub.s32 %s10, %s17
    %p108 = scmp.eq.s32.totalorder %s107, 0
    %s110 = sadd.s32 %s109, 1
    %s111 = scalar_select %p108, %s109, %s110
    %p114 = pneg %p108
    %p115 = scmp.eq.s32.totalorder %s10, 1
    %p116 = por %p114, %p115
    %p117 = scmp.ne.s32.totalorder %s109, %s112
    %p118 = scmp.eq.s32.totalorder %s10, 0
    %p119 = por %p117, %p118
    %p120 = scmp.ne.s32.totalorder %s109, %s112
    %p121 = scmp.eq.s32.totalorder %s15, 1
    %p122 = por %p120, %p121
    %p123 = scmp.ne.s32.totalorder %s112, %s113
    %p124 = scmp.eq.s32.totalorder %s15, 0
    %p125 = por %p123, %p124
    %p126 = scmp.ne.s32.totalorder %s112, %s113
    %p127 = scmp.eq.s32.totalorder %s16, 1
    %p128 = por %p126, %p127
    %p130 = scmp.ne.s32.totalorder %s113, %s129
    %p131 = scmp.eq.s32.totalorder %s16, 0
    %p132 = por %p130, %p131
    %p133 = scmp.le.s32.totalorder 1, %s10
    %p134 = scmp.lt.s32.totalorder %s10, 3
    %p135 = pnand %p133, %p134
    %p136 = pneg %p135
    // Predicated region
    $region9: #{unet_seq_forward.15} parent=5 // pred_check
      _
    $region10: #{unet_seq_forward.15} parent=5 // pred_check_branch
      %138 = sbr.rel (%p135) target = $region12
    $region11: #{unet_seq_forward.15} parent=5 // pred_region
      %s139 = ssub.s32 %s10, 1
      // Predicated region
      $region13: #{unet_seq_forward.15} parent=11 // pred_check
        %p140 = pneg %p57
      $region14: #{unet_seq_forward.15} parent=11 // pred_check_branch
        %142 = sbr.rel (%p140) target = $region16
      $region15: #{unet_seq_forward.15} parent=11 // pred_region
        _
      $region16: #{unet_seq_forward.15} parent=11 // pred_fallthru
        _
      // Predicated region
      $region17: #{unet_seq_forward.15} parent=11 // pred_check
        %p143 = pneg %p78
      $region18: #{unet_seq_forward.15} parent=11 // pred_check_branch
        %145 = sbr.rel (%p143) target = $region20
      $region19: #{unet_seq_forward.15} parent=11 // pred_region
        _
      $region20: #{unet_seq_forward.15} parent=11 // pred_fallthru
        _
      // Predicated region
      $region21: #{unet_seq_forward.15} parent=11 // pred_check
        %p146 = pneg %p99
      $region22: #{unet_seq_forward.15} parent=11 // pred_check_branch
        %148 = sbr.rel (%p146) target = $region24
      $region23: #{unet_seq_forward.15} parent=11 // pred_region
        _
      $region24: #{unet_seq_forward.15} parent=11 // pred_fallthru
        _
    $region12: #{unet_seq_forward.15} parent=5 // pred_fallthru
      _
    %p149 = scmp.lt.s32.totalorder %s10, 2
    // Predicated region
    $region25: #{unet_seq_forward.15} parent=5 // pred_check
      %p150 = pneg %p149
    $region26: #{unet_seq_forward.15} parent=5 // pred_check_branch
      %152 = sbr.rel (%p150) target = $region28
    $region27: #{unet_seq_forward.15} parent=5 // pred_region
      // Predicated region
      $region29: #{unet_seq_forward.15} parent=27 // pred_check
        %p153 = pneg %p30
      $region30: #{unet_seq_forward.15} parent=27 // pred_check_branch
        %155 = sbr.rel (%p153) target = $region32
      $region31: #{unet_seq_forward.15} parent=27 // pred_region
        %s156 = smul.u32 8, %s10
        %p157 = scmp.lt.s32.totalorder %s156, 15
        %s158 = scalar_select %p157, %s156, 15
        %s159 = smul.addr %s158, 3
        %s160 = smul.addr %s159, 4
        %s161 = scalar_lea.vmem %s0, %s160
        %s162 = smul.u32 8, %s10
      $region32: #{unet_seq_forward.15} parent=27 // pred_fallthru
        _
    $region28: #{unet_seq_forward.15} parent=5 // pred_fallthru
      _
    %p163 = scmp.le.s32.totalorder 1, %s10
    %p164 = scmp.lt.s32.totalorder %s10, 3
    %p165 = pnand %p163, %p164
    %p166 = pneg %p165
    // Predicated region
    $region33: #{unet_seq_forward.15} parent=5 // pred_check
      _
    $region34: #{unet_seq_forward.15} parent=5 // pred_check_branch
      %168 = sbr.rel (%p165) target = $region36
    $region35: #{unet_seq_forward.15} parent=5 // pred_region
      %s169 = ssub.s32 %s10, 1
      %s170 = smul.u32 8, %s15
      %p171 = scmp.lt.s32.totalorder %s170, 15
      %s172 = scalar_select %p171, %s170, 15
      %s173 = smul.addr %s172, 3
      %s174 = smul.addr %s173, 4
      %s175 = scalar_lea.vmem %s0, %s174
      %p176 = pneg %p36
      %p177 = pneg %p33
      %p178 = pneg %p57
      %p179 = pneg %p54
      %p180 = pneg %p78
      %p181 = pneg %p75
      %p182 = pneg %p99
      %p183 = pneg %p96
      %p184 = pneg %p125
      %p185 = pneg %p122
      %s186 = smul.u32 8, %s15
      %p187 = scmp.lt.s32.totalorder %s186, 15
      %s188 = scalar_select %p187, %s186, 15
      %s189 = smul.addr %s188, 4
      %s190 = scalar_lea.vmem %s4, %s189
      %s191 = smul.u32 8, %s15
      %p192 = scmp.lt.s32.totalorder %s191, 15
      %s193 = scalar_select %p192, %s191, 15
      %s194 = smul.addr %s193, 3
      %s195 = smul.addr %s194, 4
      %s196 = scalar_lea.vmem %s0, %s195
      %s197 = smul.u32 8, %s15
      %s198 = smul.u32 8, %s15
      %p199 = scmp.lt.s32.totalorder %s198, 15
      %s200 = scalar_select %p199, %s198, 15
      %s201 = smul.addr %s200, 4
      %s202 = scalar_lea.vmem %s4, %s201
      %s203 = smul.u32 8, %s15
      %v205 = vld [vmem:[%s196] sm:$0xff]
      %v206 = vld [vmem:[%s196 + $0x8] sm:$0xf]
      %v207 = vld [vmem:[%s196 + $0xc] sm:$0xff]
      %v208 = vld [vmem:[%s196 + $0x14] sm:$0xf]
      %v209 = vld [vmem:[%s196 + $0x18] sm:$0xff]
      %v210 = vld [vmem:[%s196 + $0x20] sm:$0xf]
      %v211 = vld [vmem:[%s196 + $0x24] sm:$0xff]
      %v212 = vld [vmem:[%s196 + $0x2c] sm:$0xf]
      %v213 = vld [vmem:[%s196 + $0x30] sm:$0xff]
      %v214 = vld [vmem:[%s196 + $0x38] sm:$0xf]
      %v215 = vld [vmem:[%s196 + $0x3c] sm:$0xff]
      %v216 = vld [vmem:[%s196 + $0x44] sm:$0xf]
      %v217 = vld [vmem:[%s196 + $0x48] sm:$0xff]
      %v218 = vld [vmem:[%s196 + $0x50] sm:$0xf]
      %v219 = vld [vmem:[%s196 + $0x54] sm:$0xff]
      %v220 = vld [vmem:[%s196 + $0x5c] sm:$0xf]
      %v221 = vld [vmem:[%s1] sm:$0xf]
      %v222 = vld [vmem:[%s1 + $0x4] sm:$0xf]
      %v223 = vld [vmem:[%s1 + $0x8] sm:$0xf]
      %v224 = vld [vmem:[%s1 + $0xc] sm:$0xf]
      %v225 = vld [vmem:[%s1 + $0x10] sm:$0xf]
      %v226 = vld [vmem:[%s1 + $0x14] sm:$0xf]
      %v227 = vld [vmem:[%s1 + $0x18] sm:$0xf]
      %v228 = vld [vmem:[%s1 + $0x1c] sm:$0xf]
      %v229 = vld [vmem:[%s1 + $0x20] sm:$0xf]
      %v230 = vld [vmem:[%s1 + $0x24] sm:$0xf]
      %v231 = vld [vmem:[%s1 + $0x28] sm:$0xf]
      %v232 = vld [vmem:[%s1 + $0x2c] sm:$0xf]
      %v233 = vld [vmem:[%s1 + $0x30] sm:$0xf]
      %v234 = vld [vmem:[%s1 + $0x34] sm:$0xf]
      %v235 = vld [vmem:[%s1 + $0x38] sm:$0xf]
      %v236 = vld [vmem:[%s1 + $0x3c] sm:$0xf]
      %v237 = vld [vmem:[%s1 + $0x40] sm:$0xf]
      %v238 = vld [vmem:[%s1 + $0x44] sm:$0xf]
      %v239 = vld [vmem:[%s1 + $0x48] sm:$0xf]
      %v240 = vld [vmem:[%s1 + $0x4c] sm:$0xf]
      %v241 = vld [vmem:[%s1 + $0x50] sm:$0xf]
      %v242 = vld [vmem:[%s1 + $0x54] sm:$0xf]
      %v243 = vld [vmem:[%s1 + $0x58] sm:$0xf]
      %v244 = vld [vmem:[%s1 + $0x5c] sm:$0xf]
      %v245 = vld [vmem:[%s1 + $0x60] sm:$0xf]
      %v246 = vld [vmem:[%s1 + $0x64] sm:$0xf]
      %v247 = vld [vmem:[%s1 + $0x68] sm:$0xf]
      %v248 = vld [vmem:[%s1 + $0x6c] sm:$0xf]
      %v249 = vld [vmem:[%s1 + $0x70] sm:$0xf]
      %v250 = vld [vmem:[%s1 + $0x74] sm:$0xf]
      %v251 = vld [vmem:[%s1 + $0x78] sm:$0xf]
      %v252 = vld [vmem:[%s1 + $0x7c] sm:$0xf]
      %v253 = vld [vmem:[%s1 + $0x80] sm:$0xf]
      %v254 = vld [vmem:[%s1 + $0x84] sm:$0xf]
      %v255 = vld [vmem:[%s1 + $0x88] sm:$0xf]
      %v256 = vld [vmem:[%s1 + $0x8c] sm:$0xf]
      %v273 = vunpack.c.l.b16 %v205
      %v274 = vunpack.c.h.b16 %v205
      %v275 = vunpack.c.l.b16 %v206
      %v276 = vunpack.c.l.b16 %v207
      %v277 = vunpack.c.h.b16 %v207
      %v278 = vunpack.c.l.b16 %v208
      %v279 = vunpack.c.l.b16 %v209
      %v280 = vunpack.c.h.b16 %v209
      %v281 = vunpack.c.l.b16 %v210
      %v282 = vunpack.c.l.b16 %v211
      %v283 = vunpack.c.h.b16 %v211
      %v284 = vunpack.c.l.b16 %v212
      %v285 = vunpack.c.l.b16 %v213
      %v286 = vunpack.c.h.b16 %v213
      %v287 = vunpack.c.l.b16 %v214
      %v288 = vunpack.c.l.b16 %v215
      %v289 = vunpack.c.h.b16 %v215
      %v290 = vunpack.c.l.b16 %v216
      %v291 = vunpack.c.l.b16 %v217
      %v292 = vunpack.c.h.b16 %v217
      %v293 = vunpack.c.l.b16 %v218
      %v294 = vunpack.c.l.b16 %v219
      %v295 = vunpack.c.h.b16 %v219
      %v296 = vunpack.c.l.b16 %v220
      %v297 = vpack.c.b16 %v276, %v273
      %v298 = vpack.c.b16 %v277, %v274
      %v299 = vpack.c.b16 %v278, %v275
      %v300 = vpack.c.b16 %v282, %v279
      %v301 = vpack.c.b16 %v283, %v280
      %v302 = vpack.c.b16 %v284, %v281
      %v303 = vpack.c.b16 %v288, %v285
      %v304 = vpack.c.b16 %v289, %v286
      %v305 = vpack.c.b16 %v290, %v287
      %v306 = vpack.c.b16 %v294, %v291
      %v307 = vpack.c.b16 %v295, %v292
      %v308 = vpack.c.b16 %v296, %v293
      %v353 = vunpack.c.l.b16 %v221
      %v354 = vunpack.c.l.b16 %v222
      %v355 = vunpack.c.l.b16 %v223
      %v356 = vunpack.c.l.b16 %v224
      %v357 = vunpack.c.l.b16 %v225
      %v358 = vunpack.c.l.b16 %v226
      %v359 = vunpack.c.l.b16 %v227
      %v360 = vunpack.c.l.b16 %v228
      %v361 = vunpack.c.l.b16 %v229
      %v362 = vunpack.c.l.b16 %v230
      %v363 = vunpack.c.l.b16 %v231
      %v364 = vunpack.c.l.b16 %v232
      %v365 = vunpack.c.l.b16 %v233
      %v366 = vunpack.c.l.b16 %v234
      %v367 = vunpack.c.l.b16 %v235
      %v368 = vunpack.c.l.b16 %v236
      %v369 = vunpack.c.l.b16 %v237
      %v370 = vunpack.c.l.b16 %v238
      %v371 = vunpack.c.l.b16 %v239
      %v372 = vunpack.c.l.b16 %v240
      %v373 = vunpack.c.l.b16 %v241
      %v374 = vunpack.c.l.b16 %v242
      %v375 = vunpack.c.l.b16 %v243
      %v376 = vunpack.c.l.b16 %v244
      %v377 = vunpack.c.l.b16 %v245
      %v378 = vunpack.c.l.b16 %v246
      %v379 = vunpack.c.l.b16 %v247
      %v380 = vunpack.c.l.b16 %v248
      %v381 = vunpack.c.l.b16 %v249
      %v382 = vunpack.c.l.b16 %v250
      %v383 = vunpack.c.l.b16 %v251
      %v384 = vunpack.c.l.b16 %v252
      %v385 = vunpack.c.l.b16 %v253
      %v386 = vunpack.c.l.b16 %v254
      %v387 = vunpack.c.l.b16 %v255
      %v388 = vunpack.c.l.b16 %v256
      %v389 = vpack.c.b16 %v354, %v353
      %v390 = vpack.c.b16 %v356, %v355
      %v391 = vpack.c.b16 %v358, %v357
      %v392 = vpack.c.b16 %v360, %v359
      %v393 = vpack.c.b16 %v362, %v361
      %v394 = vpack.c.b16 %v364, %v363
      %v395 = vpack.c.b16 %v366, %v365
      %v396 = vpack.c.b16 %v368, %v367
      %v397 = vpack.c.b16 %v370, %v369
      %v398 = vpack.c.b16 %v372, %v371
      %v399 = vpack.c.b16 %v374, %v373
      %v400 = vpack.c.b16 %v376, %v375
      %v401 = vpack.c.b16 %v378, %v377
      %v402 = vpack.c.b16 %v380, %v379
      %v403 = vpack.c.b16 %v382, %v381
      %v404 = vpack.c.b16 %v384, %v383
      %v405 = vpack.c.b16 %v386, %v385
      %v406 = vpack.c.b16 %v388, %v387
      %vm425 = vcmask 261120
      %v427 = vsel %vm425, %v299, 0
      %v430 = vsel %vm425, %v302, 0
      %v433 = vsel %vm425, %v305, 0
      %v436 = vsel %vm425, %v308, 0
      %438 = vmatprep.subr.bf16.mxu0 0
      %439 = vmatpush1.bf16.msra.mxu0 %v396
      %440 = vmatprep.subr.bf16.mxu0 0
      %441 = vmatpush1.bf16.msra.mxu0 %v395
      %442 = vmatprep.subr.bf16.mxu0 0
      %443 = vmatpush1.bf16.msra.mxu0 %v394
      %444 = vmatprep.subr.bf16.mxu0 0
      %445 = vmatpush1.bf16.msra.mxu0 %v393
      %446 = vmatprep.subr.bf16.mxu0 0
      %447 = vmatpush1.bf16.msra.mxu0 %v392
      %448 = vmatprep.subr.bf16.mxu0 0
      %449 = vmatpush1.bf16.msra.mxu0 %v391
      %450 = vmatprep.subr.bf16.mxu0 0
      %451 = vmatpush1.bf16.msra.mxu0 %v390
      %452 = vmatprep.subr.bf16.mxu0 0
      %453 = vmatpush1.bf16.msra.mxu0 %v389
      %454 = vmatprep.subr.bf16.mxu0 0
      %455 = vmatpush2.bf16.msra.mxu0 %v404
      %456 = vmatprep.subr.bf16.mxu0 0
      %457 = vmatpush2.bf16.msra.mxu0 %v403
      %458 = vmatprep.subr.bf16.mxu0 0
      %459 = vmatpush2.bf16.msra.mxu0 %v402
      %460 = vmatprep.subr.bf16.mxu0 0
      %461 = vmatpush2.bf16.msra.mxu0 %v401
      %462 = vmatprep.subr.bf16.mxu0 0
      %463 = vmatpush2.bf16.msra.mxu0 %v400
      %464 = vmatprep.subr.bf16.mxu0 0
      %465 = vmatpush2.bf16.msra.mxu0 %v399
      %466 = vmatprep.subr.bf16.mxu0 0
      %467 = vmatpush2.bf16.msra.mxu0 %v398
      %468 = vmatprep.subr.bf16.mxu0 0
      %469 = vmatpush2.bf16.msra.mxu0 %v397
      %470 = vmatprep.mubr.bf16.mxu0 %v298
      %471 = vmatmul.mubr.bf16.gmra.mxu0 %v297
      %v472 = vpop.f32.mrf.mxu0
      %v473 = vadd.f32 0.0, %v472
      %v474 = vpop.f32.mrf.mxu0
      %v475 = vpop.f32.mrf.mxu0
      %v476 = vadd.f32 0.0, %v475
      %v477 = vpop.f32.mrf.mxu0
      %478 = vmatprep.mubr.bf16.mxu0 %v301
      %479 = vmatmul.mubr.bf16.gmra.mxu0 %v300
      %v480 = vpop.f32.mrf.mxu0
      %v481 = vadd.f32 0.0, %v480
      %v482 = vpop.f32.mrf.mxu0
      %v483 = vpop.f32.mrf.mxu0
      %v484 = vadd.f32 0.0, %v483
      %v485 = vpop.f32.mrf.mxu0
      %486 = vmatprep.mubr.bf16.mxu0 %v304
      %487 = vmatmul.mubr.bf16.gmra.mxu0 %v303
      %v488 = vpop.f32.mrf.mxu0
      %v489 = vadd.f32 0.0, %v488
      %v490 = vpop.f32.mrf.mxu0
      %v491 = vpop.f32.mrf.mxu0
      %v492 = vadd.f32 0.0, %v491
      %v493 = vpop.f32.mrf.mxu0
      %494 = vmatprep.mubr.bf16.mxu0 %v307
      %495 = vmatmul.mubr.bf16.gmra.mxu0 %v306
      %v496 = vpop.f32.mrf.mxu0
      %v497 = vadd.f32 0.0, %v496
      %v498 = vpop.f32.mrf.mxu0
      %v499 = vpop.f32.mrf.mxu0
      %v500 = vadd.f32 0.0, %v499
      %v501 = vpop.f32.mrf.mxu0
      %502 = vdwg.mxu0
      %503 = vmatprep.subr.bf16.mxu0 0
      %504 = vmatpush1.bf16.msra.mxu0 0
      %505 = vmatprep.subr.bf16.mxu0 0
      %506 = vmatpush1.bf16.msra.mxu0 0
      %507 = vmatprep.subr.bf16.mxu0 0
      %508 = vmatpush1.bf16.msra.mxu0 0
      %509 = vmatprep.subr.bf16.mxu0 0
      %510 = vmatpush1.bf16.msra.mxu0 0
      %511 = vmatprep.subr.bf16.mxu0 0
      %512 = vmatpush1.bf16.msra.mxu0 0
      %513 = vmatprep.subr.bf16.mxu0 0
      %514 = vmatpush1.bf16.msra.mxu0 0
      %515 = vmatprep.subr.bf16.mxu0 0
      %516 = vmatpush1.bf16.msra.mxu0 %v406
      %517 = vmatprep.subr.bf16.mxu0 0
      %518 = vmatpush1.bf16.msra.mxu0 %v405
      %519 = vmatprep.subr.bf16.mxu0 0
      %520 = vmatpush2.bf16.msra.mxu0 0
      %521 = vmatprep.subr.bf16.mxu0 0
      %522 = vmatpush2.bf16.msra.mxu0 0
      %523 = vmatprep.subr.bf16.mxu0 0
      %524 = vmatpush2.bf16.msra.mxu0 0
      %525 = vmatprep.subr.bf16.mxu0 0
      %526 = vmatpush2.bf16.msra.mxu0 0
      %527 = vmatprep.subr.bf16.mxu0 0
      %528 = vmatpush2.bf16.msra.mxu0 0
      %529 = vmatprep.subr.bf16.mxu0 0
      %530 = vmatpush2.bf16.msra.mxu0 0
      %531 = vmatprep.subr.bf16.mxu0 0
      %532 = vmatpush2.bf16.msra.mxu0 0
      %533 = vmatprep.subr.bf16.mxu0 0
      %534 = vmatpush2.bf16.msra.mxu0 0
      %535 = vmatprep.mubr.bf16.mxu0 0
      %536 = vmatmul.mubr.bf16.gmra.mxu0 %v427
      %v537 = vpop.f32.mrf.mxu0
      %v538 = vadd.f32 %v473, %v537
      %v539 = vpop.f32.mrf.mxu0
      %v540 = vpop.f32.mrf.mxu0
      %v541 = vadd.f32 %v476, %v540
      %v542 = vpop.f32.mrf.mxu0
      %543 = vmatprep.mubr.bf16.mxu0 0
      %544 = vmatmul.mubr.bf16.gmra.mxu0 %v430
      %v545 = vpop.f32.mrf.mxu0
      %v546 = vadd.f32 %v481, %v545
      %v547 = vpop.f32.mrf.mxu0
      %v548 = vpop.f32.mrf.mxu0
      %v549 = vadd.f32 %v484, %v548
      %v550 = vpop.f32.mrf.mxu0
      %551 = vmatprep.mubr.bf16.mxu0 0
      %552 = vmatmul.mubr.bf16.gmra.mxu0 %v433
      %v553 = vpop.f32.mrf.mxu0
      %v554 = vadd.f32 %v489, %v553
      %v555 = vpop.f32.mrf.mxu0
      %v556 = vpop.f32.mrf.mxu0
      %v557 = vadd.f32 %v492, %v556
      %v558 = vpop.f32.mrf.mxu0
      %559 = vmatprep.mubr.bf16.mxu0 0
      %560 = vmatmul.mubr.bf16.gmra.mxu0 %v436
      %v561 = vpop.f32.mrf.mxu0
      %v562 = vadd.f32 %v497, %v561
      %v563 = vpop.f32.mrf.mxu0
      %v564 = vpop.f32.mrf.mxu0
      %v565 = vadd.f32 %v500, %v564
      %v566 = vpop.f32.mrf.mxu0
      %567 = vdwg.mxu0
      %v568 = vld [vmem:[%s2] sm:$0x1]
      %v570 = vlaneseq
      %v571 = vshrl.u32 %v570, 7
      %v572 = vsub.s32 0, %v571
      %v573 = vrot.slane %v568, %v572
      %v575 = vmul.f32 %v538, %v573
      %v576 = vmul.f32 %v541, %v573
      %v577 = vmul.f32 %v546, %v573
      %v578 = vmul.f32 %v549, %v573
      %v579 = vmul.f32 %v554, %v573
      %v580 = vmul.f32 %v557, %v573
      %v581 = vmul.f32 %v562, %v573
      %v582 = vmul.f32 %v565, %v573
      %v583 = vld [vmem:[%s3] sm:$0x1]
      %v585 = vlaneseq
      %v586 = vshrl.u32 %v585, 7
      %v587 = vsub.s32 0, %v586
      %v588 = vrot.slane %v583, %v587
      %v590 = vadd.f32 %v575, %v588
      %v591 = vadd.f32 %v576, %v588
      %v592 = vadd.f32 %v577, %v588
      %v593 = vadd.f32 %v578, %v588
      %v594 = vadd.f32 %v579, %v588
      %v595 = vadd.f32 %v580, %v588
      %v596 = vadd.f32 %v581, %v588
      %v597 = vadd.f32 %v582, %v588
      %v598 = vmax.f32 %v590, 0.0
      %v599 = vmax.f32 %v591, 0.0
      %v600 = vmax.f32 %v592, 0.0
      %v601 = vmax.f32 %v593, 0.0
      %v602 = vmax.f32 %v594, 0.0
      %v603 = vmax.f32 %v595, 0.0
      %v604 = vmax.f32 %v596, 0.0
      %v605 = vmax.f32 %v597, 0.0
      %v606 = vpack.c.bf16 %v599, %v598
      %v607 = vpack.c.bf16 %v601, %v600
      %v608 = vpack.c.bf16 %v603, %v602
      %v609 = vpack.c.bf16 %v605, %v604
      %v614 = vunpack.c.l.b16 %v606
      %v615 = vunpack.c.h.b16 %v606
      %v616 = vunpack.c.l.b16 %v607
      %v617 = vunpack.c.h.b16 %v607
      %v618 = vunpack.c.l.b16 %v608
      %v619 = vunpack.c.h.b16 %v608
      %v620 = vunpack.c.l.b16 %v609
      %v621 = vunpack.c.h.b16 %v609
      %v622 = vpack.c.b16 %v614, %v614
      %v623 = vpack.c.b16 %v615, %v615
      %v624 = vpack.c.b16 %v616, %v616
      %v625 = vpack.c.b16 %v617, %v617
      %v626 = vpack.c.b16 %v618, %v618
      %v627 = vpack.c.b16 %v619, %v619
      %v628 = vpack.c.b16 %v620, %v620
      %v629 = vpack.c.b16 %v621, %v621
      %638 = vst [vmem:[%s202] sm:$0xf] %v622
      %639 = vst [vmem:[%s202 + $0x4] sm:$0xf] %v623
      %640 = vst [vmem:[%s202 + $0x8] sm:$0xf] %v624
      %641 = vst [vmem:[%s202 + $0xc] sm:$0xf] %v625
      %642 = vst [vmem:[%s202 + $0x10] sm:$0xf] %v626
      %643 = vst [vmem:[%s202 + $0x14] sm:$0xf] %v627
      %644 = vst [vmem:[%s202 + $0x18] sm:$0xf] %v628
      %645 = vst [vmem:[%s202 + $0x1c] sm:$0xf] %v629
      %s646 = smul.u32 8, %s15
      %p647 = scmp.lt.s32.totalorder %s646, 15
      %s648 = scalar_select %p647, %s646, 15
      %s649 = smul.addr %s648, 4
      %s650 = scalar_lea.vmem %s4, %s649
      // Predicated region
      $region37: #{unet_seq_forward.15} parent=35 // pred_check
        %p651 = pneg %p122
      $region38: #{unet_seq_forward.15} parent=35 // pred_check_branch
        %653 = sbr.rel (%p651) target = $region40
      $region39: #{unet_seq_forward.15} parent=35 // pred_region
        %s654 = smul.u32 8, %s15
      $region40: #{unet_seq_forward.15} parent=35 // pred_fallthru
        _
    $region36: #{unet_seq_forward.15} parent=5 // pred_fallthru
      _
    %p655 = scmp.le.s32.totalorder 2, %s10
    // Predicated region
    $region41: #{unet_seq_forward.15} parent=5 // pred_check
      %p656 = pneg %p655
    $region42: #{unet_seq_forward.15} parent=5 // pred_check_branch
      %658 = sbr.rel (%p656) target = $region44
    $region43: #{unet_seq_forward.15} parent=5 // pred_region
      %s659 = ssub.s32 %s10, 2
      // Predicated region
      $region45: #{unet_seq_forward.15} parent=43 // pred_check
        %p660 = pneg %p128
      $region46: #{unet_seq_forward.15} parent=43 // pred_check_branch
        %662 = sbr.rel (%p660) target = $region48
      $region47: #{unet_seq_forward.15} parent=43 // pred_region
        %s663 = smul.u32 8, %s16
        %p664 = scmp.lt.s32.totalorder %s663, 15
        %s665 = scalar_select %p664, %s663, 15
        %s666 = smul.addr %s665, 4
        %s667 = scalar_lea.vmem %s4, %s666
      $region48: #{unet_seq_forward.15} parent=43 // pred_fallthru
        _
    $region44: #{unet_seq_forward.15} parent=5 // pred_fallthru
      _
  $region6: #{unet_seq_forward.15} parent=0 // loop_footer
    %s14 = sadd.s32 1, %s10
  $region7: #{unet_seq_forward.15} parent=0 // loop_footer_branch
    %9 = sbr.rel target = $region3
  $region8: #{unet_seq_forward.15} parent=0 // loop_exit
    _

// kernel: unet_seq_forward.16
$region0: #{unet_seq_forward.16}
  #allocation0 [shape = 'u32[]', space=smem, size = 0x4, offset = 0x4, fixed_abs, tag = 'smem constant byte address 0x4 - core index']
  #allocation1 [shape = 'u32[144,128]{1,0:T(1,128)}', space=vmem, size = 0x12000, scoped, tag = 'internal scratch']
  %s0 = inlined_call_operand.vmem [shape: bf16[512,368], index: 0, kind: input, shape index: {}]
  %s1 = inlined_call_operand.vmem [shape: bf16[368,128], index: 1, kind: input, shape index: {}]
  %s2 = inlined_call_operand.vmem [shape: f32[1,128], index: 2, kind: input, shape index: {}]
  %s3 = inlined_call_operand.vmem [shape: f32[1,128], index: 3, kind: input, shape index: {}]
  %s4 = inlined_call_operand.vmem [shape: bf16[512,128], index: 4, kind: output, shape index: {}]
  %s5 = sld [smem:[#allocation0]]
  $region49: #{unet_seq_forward.16} parent=0
    _
  %s7 = ssub.s32 1, %s5
  %s8 = scalar_select 0, %s7, %s5
  loop: start=0, step=1, limit=4
  $region2: #{unet_seq_forward.16} parent=0 // loop_pre_header
    _
  $region3: #{unet_seq_forward.16} parent=0 // loop_header
    %s10 = sphi 0, %s14
    %p11 = scmp.ge.s32.totalorder %s10, 4
    %s20 = sphi 0, %s22
    %s23 = sphi 0, %s20
    %s24 = sphi 0, %s23
    %s40 = sphi 0, %s24
    %s44 = sphi 0, %s44
    %s46 = sphi 0, %s44
    %s47 = sphi 0, %s46
    %s61 = sphi 0, %s47
    %s65 = sphi 0, %s65
    %s67 = sphi 0, %s65
    %s68 = sphi 0, %s67
    %s82 = sphi 0, %s68
    %s86 = sphi 0, %s86
    %s88 = sphi 0, %s86
    %s89 = sphi 0, %s88
    %s103 = sphi 0, %s89
    %s109 = sphi 0, %s111
    %s112 = sphi 0, %s109
    %s113 = sphi 0, %s112
    %s129 = sphi 0, %s113
  $region4: #{unet_seq_forward.16} parent=0 // loop_header_branch
    %13 = sbr.rel (%p11) target = $region8
  $region5: #{unet_seq_forward.16} parent=0 // loop_body
    %s15 = ssub.s32 %s10, 1
    %s16 = ssub.s32 %s10, 2
    %s17 = sadd.s32 %s10, 1
    %s18 = ssub.s32 %s10, %s17
    %p19 = scmp.eq.s32.totalorder %s18, 0
    %s21 = sadd.s32 %s20, 1
    %s22 = scalar_select %p19, %s20, %s21
    %p25 = pneg %p19
    %p26 = scmp.eq.s32.totalorder %s10, 1
    %p27 = por %p25, %p26
    %p28 = scmp.ne.s32.totalorder %s20, %s23
    %p29 = scmp.eq.s32.totalorder %s10, 0
    %p30 = por %p28, %p29
    %p31 = scmp.ne.s32.totalorder %s20, %s23
    %p32 = scmp.eq.s32.totalorder %s15, 1
    %p33 = por %p31, %p32
    %p34 = scmp.ne.s32.totalorder %s23, %s24
    %p35 = scmp.eq.s32.totalorder %s15, 0
    %p36 = por %p34, %p35
    %p37 = scmp.ne.s32.totalorder %s23, %s24
    %p38 = scmp.eq.s32.totalorder %s16, 1
    %p39 = por %p37, %p38
    %p41 = scmp.ne.s32.totalorder %s24, %s40
    %p42 = scmp.eq.s32.totalorder %s16, 0
    %p43 = por %p41, %p42
    %s45 = sadd.s32 %s44, 1
    %p48 = scmp.eq.s32.totalorder %s10, 1
    %p49 = scmp.ne.s32.totalorder %s44, %s46
    %p50 = scmp.eq.s32.totalorder %s10, 0
    %p51 = por %p49, %p50
    %p52 = scmp.ne.s32.totalorder %s44, %s46
    %p53 = scmp.eq.s32.totalorder %s15, 1
    %p54 = por %p52, %p53
    %p55 = scmp.ne.s32.totalorder %s46, %s47
    %p56 = scmp.eq.s32.totalorder %s15, 0
    %p57 = por %p55, %p56
    %p58 = scmp.ne.s32.totalorder %s46, %s47
    %p59 = scmp.eq.s32.totalorder %s16, 1
    %p60 = por %p58, %p59
    %p62 = scmp.ne.s32.totalorder %s47, %s61
    %p63 = scmp.eq.s32.totalorder %s16, 0
    %p64 = por %p62, %p63
    %s66 = sadd.s32 %s65, 1
    %p69 = scmp.eq.s32.totalorder %s10, 1
    %p70 = scmp.ne.s32.totalorder %s65, %s67
    %p71 = scmp.eq.s32.totalorder %s10, 0
    %p72 = por %p70, %p71
    %p73 = scmp.ne.s32.totalorder %s65, %s67
    %p74 = scmp.eq.s32.totalorder %s15, 1
    %p75 = por %p73, %p74
    %p76 = scmp.ne.s32.totalorder %s67, %s68
    %p77 = scmp.eq.s32.totalorder %s15, 0
    %p78 = por %p76, %p77
    %p79 = scmp.ne.s32.totalorder %s67, %s68
    %p80 = scmp.eq.s32.totalorder %s16, 1
    %p81 = por %p79, %p80
    %p83 = scmp.ne.s32.totalorder %s68, %s82
    %p84 = scmp.eq.s32.totalorder %s16, 0
    %p85 = por %p83, %p84
    %s87 = sadd.s32 %s86, 1
    %p90 = scmp.eq.s32.totalorder %s10, 1
    %p91 = scmp.ne.s32.totalorder %s86, %s88
    %p92 = scmp.eq.s32.totalorder %s10, 0
    %p93 = por %p91, %p92
    %p94 = scmp.ne.s32.totalorder %s86, %s88
    %p95 = scmp.eq.s32.totalorder %s15, 1
    %p96 = por %p94, %p95
    %p97 = scmp.ne.s32.totalorder %s88, %s89
    %p98 = scmp.eq.s32.totalorder %s15, 0
    %p99 = por %p97, %p98
    %p100 = scmp.ne.s32.totalorder %s88, %s89
    %p101 = scmp.eq.s32.totalorder %s16, 1
    %p102 = por %p100, %p101
    %p104 = scmp.ne.s32.totalorder %s89, %s103
    %p105 = scmp.eq.s32.totalorder %s16, 0
    %p106 = por %p104, %p105
    %s107 = ssub.s32 %s10, %s17
    %p108 = scmp.eq.s32.totalorder %s107, 0
    %s110 = sadd.s32 %s109, 1
    %s111 = scalar_select %p108, %s109, %s110
    %p114 = pneg %p108
    %p115 = scmp.eq.s32.totalorder %s10, 1
    %p116 = por %p114, %p115
    %p117 = scmp.ne.s32.totalorder %s109, %s112
    %p118 = scmp.eq.s32.totalorder %s10, 0
    %p119 = por %p117, %p118
    %p120 = scmp.ne.s32.totalorder %s109, %s112
    %p121 = scmp.eq.s32.totalorder %s15, 1
    %p122 = por %p120, %p121
    %p123 = scmp.ne.s32.totalorder %s112, %s113
    %p124 = scmp.eq.s32.totalorder %s15, 0
    %p125 = por %p123, %p124
    %p126 = scmp.ne.s32.totalorder %s112, %s113
    %p127 = scmp.eq.s32.totalorder %s16, 1
    %p128 = por %p126, %p127
    %p130 = scmp.ne.s32.totalorder %s113, %s129
    %p131 = scmp.eq.s32.totalorder %s16, 0
    %p132 = por %p130, %p131
    %p133 = scmp.le.s32.totalorder 1, %s10
    %p134 = scmp.lt.s32.totalorder %s10, 3
    %p135 = pnand %p133, %p134
    %p136 = pneg %p135
    // Predicated region
    $region9: #{unet_seq_forward.16} parent=5 // pred_check
      _
    $region10: #{unet_seq_forward.16} parent=5 // pred_check_branch
      %138 = sbr.rel (%p135) target = $region12
    $region11: #{unet_seq_forward.16} parent=5 // pred_region
      %s139 = ssub.s32 %s10, 1
      // Predicated region
      $region13: #{unet_seq_forward.16} parent=11 // pred_check
        %p140 = pneg %p57
      $region14: #{unet_seq_forward.16} parent=11 // pred_check_branch
        %142 = sbr.rel (%p140) target = $region16
      $region15: #{unet_seq_forward.16} parent=11 // pred_region
        _
      $region16: #{unet_seq_forward.16} parent=11 // pred_fallthru
        _
      // Predicated region
      $region17: #{unet_seq_forward.16} parent=11 // pred_check
        %p143 = pneg %p78
      $region18: #{unet_seq_forward.16} parent=11 // pred_check_branch
        %145 = sbr.rel (%p143) target = $region20
      $region19: #{unet_seq_forward.16} parent=11 // pred_region
        _
      $region20: #{unet_seq_forward.16} parent=11 // pred_fallthru
        _
      // Predicated region
      $region21: #{unet_seq_forward.16} parent=11 // pred_check
        %p146 = pneg %p99
      $region22: #{unet_seq_forward.16} parent=11 // pred_check_branch
        %148 = sbr.rel (%p146) target = $region24
      $region23: #{unet_seq_forward.16} parent=11 // pred_region
        _
      $region24: #{unet_seq_forward.16} parent=11 // pred_fallthru
        _
    $region12: #{unet_seq_forward.16} parent=5 // pred_fallthru
      _
    %p149 = scmp.lt.s32.totalorder %s10, 2
    // Predicated region
    $region25: #{unet_seq_forward.16} parent=5 // pred_check
      %p150 = pneg %p149
    $region26: #{unet_seq_forward.16} parent=5 // pred_check_branch
      %152 = sbr.rel (%p150) target = $region28
    $region27: #{unet_seq_forward.16} parent=5 // pred_region
      // Predicated region
      $region29: #{unet_seq_forward.16} parent=27 // pred_check
        %p153 = pneg %p30
      $region30: #{unet_seq_forward.16} parent=27 // pred_check_branch
        %155 = sbr.rel (%p153) target = $region32
      $region31: #{unet_seq_forward.16} parent=27 // pred_region
        %s156 = smul.u32 32, %s10
        %p157 = scmp.lt.s32.totalorder %s156, 63
        %s158 = scalar_select %p157, %s156, 63
        %s159 = smul.addr %s158, 3
        %s160 = smul.addr %s159, 4
        %s161 = scalar_lea.vmem %s0, %s160
        %s162 = smul.u32 32, %s10
      $region32: #{unet_seq_forward.16} parent=27 // pred_fallthru
        _
    $region28: #{unet_seq_forward.16} parent=5 // pred_fallthru
      _
    %p163 = scmp.le.s32.totalorder 1, %s10
    %p164 = scmp.lt.s32.totalorder %s10, 3
    %p165 = pnand %p163, %p164
    %p166 = pneg %p165
    // Predicated region
    $region33: #{unet_seq_forward.16} parent=5 // pred_check
      _
    $region34: #{unet_seq_forward.16} parent=5 // pred_check_branch
      %168 = sbr.rel (%p165) target = $region36
    $region35: #{unet_seq_forward.16} parent=5 // pred_region
      %s169 = ssub.s32 %s10, 1
      %s170 = smul.u32 32, %s15
      %p171 = scmp.lt.s32.totalorder %s170, 63
      %s172 = scalar_select %p171, %s170, 63
      %s173 = smul.addr %s172, 3
      %s174 = smul.addr %s173, 4
      %s175 = scalar_lea.vmem %s0, %s174
      %p176 = pneg %p36
      %p177 = pneg %p33
      %p178 = pneg %p57
      %p179 = pneg %p54
      %p180 = pneg %p78
      %p181 = pneg %p75
      %p182 = pneg %p99
      %p183 = pneg %p96
      %p184 = pneg %p125
      %p185 = pneg %p122
      %s186 = smul.u32 32, %s15
      %p187 = scmp.lt.s32.totalorder %s186, 63
      %s188 = scalar_select %p187, %s186, 63
      %s189 = smul.addr %s188, 4
      %s190 = scalar_lea.vmem %s4, %s189
      %s191 = smul.u32 32, %s15
      %p192 = scmp.lt.s32.totalorder %s191, 63
      %s193 = scalar_select %p192, %s191, 63
      %s194 = smul.addr %s193, 3
      %s195 = smul.addr %s194, 4
      %s196 = scalar_lea.vmem %s0, %s195
      %s197 = smul.u32 32, %s15
      %s198 = smul.u32 32, %s15
      %p199 = scmp.lt.s32.totalorder %s198, 63
      %s200 = scalar_select %p199, %s198, 63
      %s201 = smul.addr %s200, 4
      %s202 = scalar_lea.vmem %s4, %s201
      %s203 = smul.u32 32, %s15
      %v205 = vld [vmem:[%s196] sm:$0xff]
      %v206 = vld [vmem:[%s196 + $0x8] sm:$0xf]
      %v207 = vld [vmem:[%s196 + $0xc] sm:$0xff]
      %v208 = vld [vmem:[%s196 + $0x14] sm:$0xf]
      %v209 = vld [vmem:[%s196 + $0x18] sm:$0xff]
      %v210 = vld [vmem:[%s196 + $0x20] sm:$0xf]
      %v211 = vld [vmem:[%s196 + $0x24] sm:$0xff]
      %v212 = vld [vmem:[%s196 + $0x2c] sm:$0xf]
      %v213 = vld [vmem:[%s196 + $0x30] sm:$0xff]
      %v214 = vld [vmem:[%s196 + $0x38] sm:$0xf]
      %v215 = vld [vmem:[%s196 + $0x3c] sm:$0xff]
      %v216 = vld [vmem:[%s196 + $0x44] sm:$0xf]
      %v217 = vld [vmem:[%s196 + $0x48] sm:$0xff]
      %v218 = vld [vmem:[%s196 + $0x50] sm:$0xf]
      %v219 = vld [vmem:[%s196 + $0x54] sm:$0xff]
      %v220 = vld [vmem:[%s196 + $0x5c] sm:$0xf]
      %v221 = vld [vmem:[%s196 + $0x60] sm:$0xff]
      %v222 = vld [vmem:[%s196 + $0x68] sm:$0xf]
      %v223 = vld [vmem:[%s196 + $0x6c] sm:$0xff]
      %v224 = vld [vmem:[%s196 + $0x74] sm:$0xf]
      %v225 = vld [vmem:[%s196 + $0x78] sm:$0xff]
      %v226 = vld [vmem:[%s196 + $0x80] sm:$0xf]
      %v227 = vld [vmem:[%s196 + $0x84] sm:$0xff]
      %v228 = vld [vmem:[%s196 + $0x8c] sm:$0xf]
      %v229 = vld [vmem:[%s196 + $0x90] sm:$0xff]
      %v230 = vld [vmem:[%s196 + $0x98] sm:$0xf]
      %v231 = vld [vmem:[%s196 + $0x9c] sm:$0xff]
      %v232 = vld [vmem:[%s196 + $0xa4] sm:$0xf]
      %v233 = vld [vmem:[%s196 + $0xa8] sm:$0xff]
      %v234 = vld [vmem:[%s196 + $0xb0] sm:$0xf]
      %v235 = vld [vmem:[%s196 + $0xb4] sm:$0xff]
      %v236 = vld [vmem:[%s196 + $0xbc] sm:$0xf]
      %v237 = vld [vmem:[%s196 + $0xc0] sm:$0xff]
      %v238 = vld [vmem:[%s196 + $0xc8] sm:$0xf]
      %v239 = vld [vmem:[%s196 + $0xcc] sm:$0xff]
      %v240 = vld [vmem:[%s196 + $0xd4] sm:$0xf]
      %v241 = vld [vmem:[%s196 + $0xd8] sm:$0xff]
      %v242 = vld [vmem:[%s196 + $0xe0] sm:$0xf]
      %v243 = vld [vmem:[%s196 + $0xe4] sm:$0xff]
      %v244 = vld [vmem:[%s196 + $0xec] sm:$0xf]
      %v245 = vld [vmem:[%s196 + $0xf0] sm:$0xff]
      %v246 = vld [vmem:[%s196 + $0xf8] sm:$0xf]
      %v247 = vld [vmem:[%s196 + $0xfc] sm:$0xff]
      %v248 = vld [vmem:[%s196 + $0x104] sm:$0xf]
      %v249 = vld [vmem:[%s196 + $0x108] sm:$0xff]
      %v250 = vld [vmem:[%s196 + $0x110] sm:$0xf]
      %v251 = vld [vmem:[%s196 + $0x114] sm:$0xff]
      %v252 = vld [vmem:[%s196 + $0x11c] sm:$0xf]
      %v253 = vld [vmem:[%s196 + $0x120] sm:$0xff]
      %v254 = vld [vmem:[%s196 + $0x128] sm:$0xf]
      %v255 = vld [vmem:[%s196 + $0x12c] sm:$0xff]
      %v256 = vld [vmem:[%s196 + $0x134] sm:$0xf]
      %v257 = vld [vmem:[%s196 + $0x138] sm:$0xff]
      %v258 = vld [vmem:[%s196 + $0x140] sm:$0xf]
      %v259 = vld [vmem:[%s196 + $0x144] sm:$0xff]
      %v260 = vld [vmem:[%s196 + $0x14c] sm:$0xf]
      %v261 = vld [vmem:[%s196 + $0x150] sm:$0xff]
      %v262 = vld [vmem:[%s196 + $0x158] sm:$0xf]
      %v263 = vld [vmem:[%s196 + $0x15c] sm:$0xff]
      %v264 = vld [vmem:[%s196 + $0x164] sm:$0xf]
      %v265 = vld [vmem:[%s196 + $0x168] sm:$0xff]
      %v266 = vld [vmem:[%s196 + $0x170] sm:$0xf]
      %v267 = vld [vmem:[%s196 + $0x174] sm:$0xff]
      %v268 = vld [vmem:[%s196 + $0x17c] sm:$0xf]
      %v269 = vld [vmem:[%s1] sm:$0xf]
      %v270 = vld [vmem:[%s1 + $0x4] sm:$0xf]
      %v271 = vld [vmem:[%s1 + $0x8] sm:$0xf]
      %v272 = vld [vmem:[%s1 + $0xc] sm:$0xf]
      %v273 = vld [vmem:[%s1 + $0x10] sm:$0xf]
      %v274 = vld [vmem:[%s1 + $0x14] sm:$0xf]
      %v275 = vld [vmem:[%s1 + $0x18] sm:$0xf]
      %v276 = vld [vmem:[%s1 + $0x1c] sm:$0xf]
      %v277 = vld [vmem:[%s1 + $0x20] sm:$0xf]
      %v278 = vld [vmem:[%s1 + $0x24] sm:$0xf]
      %v279 = vld [vmem:[%s1 + $0x28] sm:$0xf]
      %v280 = vld [vmem:[%s1 + $0x2c] sm:$0xf]
      %v281 = vld [vmem:[%s1 + $0x30] sm:$0xf]
      %v282 = vld [vmem:[%s1 + $0x34] sm:$0xf]
      %v283 = vld [vmem:[%s1 + $0x38] sm:$0xf]
      %v284 = vld [vmem:[%s1 + $0x3c] sm:$0xf]
      %v285 = vld [vmem:[%s1 + $0x40] sm:$0xf]
      %v286 = vld [vmem:[%s1 + $0x44] sm:$0xf]
      %v287 = vld [vmem:[%s1 + $0x48] sm:$0xf]
      %v288 = vld [vmem:[%s1 + $0x4c] sm:$0xf]
      %v289 = vld [vmem:[%s1 + $0x50] sm:$0xf]
      %v290 = vld [vmem:[%s1 + $0x54] sm:$0xf]
      %v291 = vld [vmem:[%s1 + $0x58] sm:$0xf]
      %v292 = vld [vmem:[%s1 + $0x5c] sm:$0xf]
      %v293 = vld [vmem:[%s1 + $0x60] sm:$0xf]
      %v294 = vld [vmem:[%s1 + $0x64] sm:$0xf]
      %v295 = vld [vmem:[%s1 + $0x68] sm:$0xf]
      %v296 = vld [vmem:[%s1 + $0x6c] sm:$0xf]
      %v297 = vld [vmem:[%s1 + $0x70] sm:$0xf]
      %v298 = vld [vmem:[%s1 + $0x74] sm:$0xf]
      %v299 = vld [vmem:[%s1 + $0x78] sm:$0xf]
      %v300 = vld [vmem:[%s1 + $0x7c] sm:$0xf]
      %v301 = vld [vmem:[%s1 + $0x80] sm:$0xf]
      %v302 = vld [vmem:[%s1 + $0x84] sm:$0xf]
      %v303 = vld [vmem:[%s1 + $0x88] sm:$0xf]
      %v304 = vld [vmem:[%s1 + $0x8c] sm:$0xf]
      %v305 = vld [vmem:[%s1 + $0x90] sm:$0xf]
      %v306 = vld [vmem:[%s1 + $0x94] sm:$0xf]
      %v307 = vld [vmem:[%s1 + $0x98] sm:$0xf]
      %v308 = vld [vmem:[%s1 + $0x9c] sm:$0xf]
      %v309 = vld [vmem:[%s1 + $0xa0] sm:$0xf]
      %v310 = vld [vmem:[%s1 + $0xa4] sm:$0xf]
      %v311 = vld [vmem:[%s1 + $0xa8] sm:$0xf]
      %v312 = vld [vmem:[%s1 + $0xac] sm:$0xf]
      %v313 = vld [vmem:[%s1 + $0xb0] sm:$0xf]
      %v314 = vld [vmem:[%s1 + $0xb4] sm:$0xf]
      %v379 = vunpack.c.l.b16 %v205
      %v380 = vunpack.c.h.b16 %v205
      %v381 = vunpack.c.l.b16 %v206
      %v382 = vunpack.c.l.b16 %v207
      %v383 = vunpack.c.h.b16 %v207
      %v384 = vunpack.c.l.b16 %v208
      %v385 = vunpack.c.l.b16 %v209
      %v386 = vunpack.c.h.b16 %v209
      %v387 = vunpack.c.l.b16 %v210
      %v388 = vunpack.c.l.b16 %v211
      %v389 = vunpack.c.h.b16 %v211
      %v390 = vunpack.c.l.b16 %v212
      %v391 = vunpack.c.l.b16 %v213
      %v392 = vunpack.c.h.b16 %v213
      %v393 = vunpack.c.l.b16 %v214
      %v394 = vunpack.c.l.b16 %v215
      %v395 = vunpack.c.h.b16 %v215
      %v396 = vunpack.c.l.b16 %v216
      %v397 = vunpack.c.l.b16 %v217
      %v398 = vunpack.c.h.b16 %v217
      %v399 = vunpack.c.l.b16 %v218
      %v400 = vunpack.c.l.b16 %v219
      %v401 = vunpack.c.h.b16 %v219
      %v402 = vunpack.c.l.b16 %v220
      %v403 = vunpack.c.l.b16 %v221
      %v404 = vunpack.c.h.b16 %v221
      %v405 = vunpack.c.l.b16 %v222
      %v406 = vunpack.c.l.b16 %v223
      %v407 = vunpack.c.h.b16 %v223
      %v408 = vunpack.c.l.b16 %v224
      %v409 = vunpack.c.l.b16 %v225
      %v410 = vunpack.c.h.b16 %v225
      %v411 = vunpack.c.l.b16 %v226
      %v412 = vunpack.c.l.b16 %v227
      %v413 = vunpack.c.h.b16 %v227
      %v414 = vunpack.c.l.b16 %v228
      %v415 = vunpack.c.l.b16 %v229
      %v416 = vunpack.c.h.b16 %v229
      %v417 = vunpack.c.l.b16 %v230
      %v418 = vunpack.c.l.b16 %v231
      %v419 = vunpack.c.h.b16 %v231
      %v420 = vunpack.c.l.b16 %v232
      %v421 = vunpack.c.l.b16 %v233
      %v422 = vunpack.c.h.b16 %v233
      %v423 = vunpack.c.l.b16 %v234
      %v424 = vunpack.c.l.b16 %v235
      %v425 = vunpack.c.h.b16 %v235
      %v426 = vunpack.c.l.b16 %v236
      %v427 = vunpack.c.l.b16 %v237
      %v428 = vunpack.c.h.b16 %v237
      %v429 = vunpack.c.l.b16 %v238
      %v430 = vunpack.c.l.b16 %v239
      %v431 = vunpack.c.h.b16 %v239
      %v432 = vunpack.c.l.b16 %v240
      %v433 = vunpack.c.l.b16 %v241
      %v434 = vunpack.c.h.b16 %v241
      %v435 = vunpack.c.l.b16 %v242
      %v436 = vunpack.c.l.b16 %v243
      %v437 = vunpack.c.h.b16 %v243
      %v438 = vunpack.c.l.b16 %v244
      %v439 = vunpack.c.l.b16 %v245
      %v440 = vunpack.c.h.b16 %v245
      %v441 = vunpack.c.l.b16 %v246
      %v442 = vunpack.c.l.b16 %v247
      %v443 = vunpack.c.h.b16 %v247
      %v444 = vunpack.c.l.b16 %v248
      %v445 = vunpack.c.l.b16 %v249
      %v446 = vunpack.c.h.b16 %v249
      %v447 = vunpack.c.l.b16 %v250
      %v448 = vunpack.c.l.b16 %v251
      %v449 = vunpack.c.h.b16 %v251
      %v450 = vunpack.c.l.b16 %v252
      %v451 = vunpack.c.l.b16 %v253
      %v452 = vunpack.c.h.b16 %v253
      %v453 = vunpack.c.l.b16 %v254
      %v454 = vunpack.c.l.b16 %v255
      %v455 = vunpack.c.h.b16 %v255
      %v456 = vunpack.c.l.b16 %v256
      %v457 = vunpack.c.l.b16 %v257
      %v458 = vunpack.c.h.b16 %v257
      %v459 = vunpack.c.l.b16 %v258
      %v460 = vunpack.c.l.b16 %v259
      %v461 = vunpack.c.h.b16 %v259
      %v462 = vunpack.c.l.b16 %v260
      %v463 = vunpack.c.l.b16 %v261
      %v464 = vunpack.c.h.b16 %v261
      %v465 = vunpack.c.l.b16 %v262
      %v466 = vunpack.c.l.b16 %v263
      %v467 = vunpack.c.h.b16 %v263
      %v468 = vunpack.c.l.b16 %v264
      %v469 = vunpack.c.l.b16 %v265
      %v470 = vunpack.c.h.b16 %v265
      %v471 = vunpack.c.l.b16 %v266
      %v472 = vunpack.c.l.b16 %v267
      %v473 = vunpack.c.h.b16 %v267
      %v474 = vunpack.c.l.b16 %v268
      %v475 = vpack.c.b16 %v382, %v379
      %v476 = vpack.c.b16 %v383, %v380
      %v477 = vpack.c.b16 %v384, %v381
      %v478 = vpack.c.b16 %v388, %v385
      %v479 = vpack.c.b16 %v389, %v386
      %v480 = vpack.c.b16 %v390, %v387
      %v481 = vpack.c.b16 %v394, %v391
      %v482 = vpack.c.b16 %v395, %v392
      %v483 = vpack.c.b16 %v396, %v393
      %v484 = vpack.c.b16 %v400, %v397
      %v485 = vpack.c.b16 %v401, %v398
      %v486 = vpack.c.b16 %v402, %v399
      %v487 = vpack.c.b16 %v406, %v403
      %v488 = vpack.c.b16 %v407, %v404
      %v489 = vpack.c.b16 %v408, %v405
      %v490 = vpack.c.b16 %v412, %v409
      %v491 = vpack.c.b16 %v413, %v410
      %v492 = vpack.c.b16 %v414, %v411
      %v493 = vpack.c.b16 %v418, %v415
      %v494 = vpack.c.b16 %v419, %v416
      %v495 = vpack.c.b16 %v420, %v417
      %v496 = vpack.c.b16 %v424, %v421
      %v497 = vpack.c.b16 %v425, %v422
      %v498 = vpack.c.b16 %v426, %v423
      %v499 = vpack.c.b16 %v430, %v427
      %v500 = vpack.c.b16 %v431, %v428
      %v501 = vpack.c.b16 %v432, %v429
      %v502 = vpack.c.b16 %v436, %v433
      %v503 = vpack.c.b16 %v437, %v434
      %v504 = vpack.c.b16 %v438, %v435
      %v505 = vpack.c.b16 %v442, %v439
      %v506 = vpack.c.b16 %v443, %v440
      %v507 = vpack.c.b16 %v444, %v441
      %v508 = vpack.c.b16 %v448, %v445
      %v509 = vpack.c.b16 %v449, %v446
      %v510 = vpack.c.b16 %v450, %v447
      %v511 = vpack.c.b16 %v454, %v451
      %v512 = vpack.c.b16 %v455, %v452
      %v513 = vpack.c.b16 %v456, %v453
      %v514 = vpack.c.b16 %v460, %v457
      %v515 = vpack.c.b16 %v461, %v458
      %v516 = vpack.c.b16 %v462, %v459
      %v517 = vpack.c.b16 %v466, %v463
      %v518 = vpack.c.b16 %v467, %v464
      %v519 = vpack.c.b16 %v468, %v465
      %v520 = vpack.c.b16 %v472, %v469
      %v521 = vpack.c.b16 %v473, %v470
      %v522 = vpack.c.b16 %v474, %v471
      %v601 = vunpack.c.l.b16 %v269
      %v602 = vunpack.c.l.b16 %v270
      %v603 = vunpack.c.l.b16 %v271
      %v604 = vunpack.c.l.b16 %v272
      %v605 = vunpack.c.l.b16 %v273
      %v606 = vunpack.c.l.b16 %v274
      %v607 = vunpack.c.l.b16 %v275
      %v608 = vunpack.c.l.b16 %v276
      %v609 = vunpack.c.l.b16 %v277
      %v610 = vunpack.c.l.b16 %v278
      %v611 = vunpack.c.l.b16 %v279
      %v612 = vunpack.c.l.b16 %v280
      %v613 = vunpack.c.l.b16 %v281
      %v614 = vunpack.c.l.b16 %v282
      %v615 = vunpack.c.l.b16 %v283
      %v616 = vunpack.c.l.b16 %v284
      %v617 = vunpack.c.l.b16 %v285
      %v618 = vunpack.c.l.b16 %v286
      %v619 = vunpack.c.l.b16 %v287
      %v620 = vunpack.c.l.b16 %v288
      %v621 = vunpack.c.l.b16 %v289
      %v622 = vunpack.c.l.b16 %v290
      %v623 = vunpack.c.l.b16 %v291
      %v624 = vunpack.c.l.b16 %v292
      %v625 = vunpack.c.l.b16 %v293
      %v626 = vunpack.c.l.b16 %v294
      %v627 = vunpack.c.l.b16 %v295
      %v628 = vunpack.c.l.b16 %v296
      %v629 = vunpack.c.l.b16 %v297
      %v630 = vunpack.c.l.b16 %v298
      %v631 = vunpack.c.l.b16 %v299
      %v632 = vunpack.c.l.b16 %v300
      %v633 = vunpack.c.l.b16 %v301
      %v634 = vunpack.c.l.b16 %v302
      %v635 = vunpack.c.l.b16 %v303
      %v636 = vunpack.c.l.b16 %v304
      %v637 = vunpack.c.l.b16 %v305
      %v638 = vunpack.c.l.b16 %v306
      %v639 = vunpack.c.l.b16 %v307
      %v640 = vunpack.c.l.b16 %v308
      %v641 = vunpack.c.l.b16 %v309
      %v642 = vunpack.c.l.b16 %v310
      %v643 = vunpack.c.l.b16 %v311
      %v644 = vunpack.c.l.b16 %v312
      %v645 = vunpack.c.l.b16 %v313
      %v646 = vunpack.c.l.b16 %v314
      %v647 = vpack.c.b16 %v602, %v601
      %v648 = vpack.c.b16 %v604, %v603
      %v649 = vpack.c.b16 %v606, %v605
      %v650 = vpack.c.b16 %v608, %v607
      %v651 = vpack.c.b16 %v610, %v609
      %v652 = vpack.c.b16 %v612, %v611
      %v653 = vpack.c.b16 %v614, %v613
      %v654 = vpack.c.b16 %v616, %v615
      %v655 = vpack.c.b16 %v618, %v617
      %v656 = vpack.c.b16 %v620, %v619
      %v657 = vpack.c.b16 %v622, %v621
      %v658 = vpack.c.b16 %v624, %v623
      %v659 = vpack.c.b16 %v626, %v625
      %v660 = vpack.c.b16 %v628, %v627
      %v661 = vpack.c.b16 %v630, %v629
      %v662 = vpack.c.b16 %v632, %v631
      %v663 = vpack.c.b16 %v634, %v633
      %v664 = vpack.c.b16 %v636, %v635
      %v665 = vpack.c.b16 %v638, %v637
      %v666 = vpack.c.b16 %v640, %v639
      %v667 = vpack.c.b16 %v642, %v641
      %v668 = vpack.c.b16 %v644, %v643
      %v669 = vpack.c.b16 %v646, %v645
      %vm693 = vcmask 916480
      %v695 = vsel %vm693, %v477, 0
      %v698 = vsel %vm693, %v480, 0
      %v701 = vsel %vm693, %v483, 0
      %v704 = vsel %vm693, %v486, 0
      %v707 = vsel %vm693, %v489, 0
      %v710 = vsel %vm693, %v492, 0
      %v713 = vsel %vm693, %v495, 0
      %v716 = vsel %vm693, %v498, 0
      %v719 = vsel %vm693, %v501, 0
      %v722 = vsel %vm693, %v504, 0
      %v725 = vsel %vm693, %v507, 0
      %v728 = vsel %vm693, %v510, 0
      %v731 = vsel %vm693, %v513, 0
      %v734 = vsel %vm693, %v516, 0
      %v737 = vsel %vm693, %v519, 0
      %v740 = vsel %vm693, %v522, 0
      %742 = vmatprep.subr.bf16.mxu0 0
      %743 = vmatpush1.bf16.msra.mxu0 %v654
      %744 = vmatprep.subr.bf16.mxu0 0
      %745 = vmatpush1.bf16.msra.mxu0 %v653
      %746 = vmatprep.subr.bf16.mxu0 0
      %747 = vmatpush1.bf16.msra.mxu0 %v652
      %748 = vmatprep.subr.bf16.mxu0 0
      %749 = vmatpush1.bf16.msra.mxu0 %v651
      %750 = vmatprep.subr.bf16.mxu0 0
      %751 = vmatpush1.bf16.msra.mxu0 %v650
      %752 = vmatprep.subr.bf16.mxu0 0
      %753 = vmatpush1.bf16.msra.mxu0 %v649
      %754 = vmatprep.subr.bf16.mxu0 0
      %755 = vmatpush1.bf16.msra.mxu0 %v648
      %756 = vmatprep.subr.bf16.mxu0 0
      %757 = vmatpush1.bf16.msra.mxu0 %v647
      %758 = vmatprep.subr.bf16.mxu0 0
      %759 = vmatpush2.bf16.msra.mxu0 %v662
      %760 = vmatprep.subr.bf16.mxu0 0
      %761 = vmatpush2.bf16.msra.mxu0 %v661
      %762 = vmatprep.subr.bf16.mxu0 0
      %763 = vmatpush2.bf16.msra.mxu0 %v660
      %764 = vmatprep.subr.bf16.mxu0 0
      %765 = vmatpush2.bf16.msra.mxu0 %v659
      %766 = vmatprep.subr.bf16.mxu0 0
      %767 = vmatpush2.bf16.msra.mxu0 %v658
      %768 = vmatprep.subr.bf16.mxu0 0
      %769 = vmatpush2.bf16.msra.mxu0 %v657
      %770 = vmatprep.subr.bf16.mxu0 0
      %771 = vmatpush2.bf16.msra.mxu0 %v656
      %772 = vmatprep.subr.bf16.mxu0 0
      %773 = vmatpush2.bf16.msra.mxu0 %v655
      %774 = vmatprep.mubr.bf16.mxu0 %v476
      %775 = vmatmul.mubr.bf16.gmra.mxu0 %v475
      %v776 = vpop.f32.mrf.mxu0
      %v777 = vadd.f32 0.0, %v776
      %v778 = vpop.f32.mrf.mxu0
      %v779 = vpop.f32.mrf.mxu0
      %v780 = vadd.f32 0.0, %v779
      %v781 = vpop.f32.mrf.mxu0
      %782 = vmatprep.mubr.bf16.mxu0 %v479
      %783 = vmatmul.mubr.bf16.gmra.mxu0 %v478
      %v784 = vpop.f32.mrf.mxu0
      %v785 = vadd.f32 0.0, %v784
      %v786 = vpop.f32.mrf.mxu0
      %v787 = vpop.f32.mrf.mxu0
      %v788 = vadd.f32 0.0, %v787
      %v789 = vpop.f32.mrf.mxu0
      %790 = vmatprep.mubr.bf16.mxu0 %v482
      %791 = vmatmul.mubr.bf16.gmra.mxu0 %v481
      %v792 = vpop.f32.mrf.mxu0
      %v793 = vadd.f32 0.0, %v792
      %v794 = vpop.f32.mrf.mxu0
      %v795 = vpop.f32.mrf.mxu0
      %v796 = vadd.f32 0.0, %v795
      %v797 = vpop.f32.mrf.mxu0
      %798 = vmatprep.mubr.bf16.mxu0 %v485
      %799 = vmatmul.mubr.bf16.gmra.mxu0 %v484
      %v800 = vpop.f32.mrf.mxu0
      %v801 = vadd.f32 0.0, %v800
      %v802 = vpop.f32.mrf.mxu0
      %v803 = vpop.f32.mrf.mxu0
      %v804 = vadd.f32 0.0, %v803
      %v805 = vpop.f32.mrf.mxu0
      %806 = vmatprep.mubr.bf16.mxu0 %v488
      %807 = vmatmul.mubr.bf16.gmra.mxu0 %v487
      %v808 = vpop.f32.mrf.mxu0
      %v809 = vadd.f32 0.0, %v808
      %v810 = vpop.f32.mrf.mxu0
      %v811 = vpop.f32.mrf.mxu0
      %v812 = vadd.f32 0.0, %v811
      %v813 = vpop.f32.mrf.mxu0
      %814 = vmatprep.mubr.bf16.mxu0 %v491
      %815 = vmatmul.mubr.bf16.gmra.mxu0 %v490
      %v816 = vpop.f32.mrf.mxu0
      %v817 = vadd.f32 0.0, %v816
      %v818 = vpop.f32.mrf.mxu0
      %v819 = vpop.f32.mrf.mxu0
      %v820 = vadd.f32 0.0, %v819
      %v821 = vpop.f32.mrf.mxu0
      %822 = vmatprep.mubr.bf16.mxu0 %v494
      %823 = vmatmul.mubr.bf16.gmra.mxu0 %v493
      %v824 = vpop.f32.mrf.mxu0
      %v825 = vadd.f32 0.0, %v824
      %v826 = vpop.f32.mrf.mxu0
      %v827 = vpop.f32.mrf.mxu0
      %v828 = vadd.f32 0.0, %v827
      %v829 = vpop.f32.mrf.mxu0
      %830 = vmatprep.mubr.bf16.mxu0 %v497
      %831 = vmatmul.mubr.bf16.gmra.mxu0 %v496
      %v832 = vpop.f32.mrf.mxu0
      %v833 = vadd.f32 0.0, %v832
      %v834 = vpop.f32.mrf.mxu0
      %v835 = vpop.f32.mrf.mxu0
      %v836 = vadd.f32 0.0, %v835
      %v837 = vpop.f32.mrf.mxu0
      %838 = vmatprep.mubr.bf16.mxu0 %v500
      %839 = vmatmul.mubr.bf16.gmra.mxu0 %v499
      %v840 = vpop.f32.mrf.mxu0
      %v841 = vadd.f32 0.0, %v840
      %v842 = vpop.f32.mrf.mxu0
      %v843 = vpop.f32.mrf.mxu0
      %v844 = vadd.f32 0.0, %v843
      %v845 = vpop.f32.mrf.mxu0
      %846 = vmatprep.mubr.bf16.mxu0 %v503
      %847 = vmatmul.mubr.bf16.gmra.mxu0 %v502
      %v848 = vpop.f32.mrf.mxu0
      %v849 = vadd.f32 0.0, %v848
      %v850 = vpop.f32.mrf.mxu0
      %v851 = vpop.f32.mrf.mxu0
      %v852 = vadd.f32 0.0, %v851
      %v853 = vpop.f32.mrf.mxu0
      %854 = vmatprep.mubr.bf16.mxu0 %v506
      %855 = vmatmul.mubr.bf16.gmra.mxu0 %v505
      %v856 = vpop.f32.mrf.mxu0
      %v857 = vadd.f32 0.0, %v856
      %v858 = vpop.f32.mrf.mxu0
      %v859 = vpop.f32.mrf.mxu0
      %v860 = vadd.f32 0.0, %v859
      %v861 = vpop.f32.mrf.mxu0
      %862 = vmatprep.mubr.bf16.mxu0 %v509
      %863 = vmatmul.mubr.bf16.gmra.mxu0 %v508
      %v864 = vpop.f32.mrf.mxu0
      %v865 = vadd.f32 0.0, %v864
      %v866 = vpop.f32.mrf.mxu0
      %v867 = vpop.f32.mrf.mxu0
      %v868 = vadd.f32 0.0, %v867
      %v869 = vpop.f32.mrf.mxu0
      %870 = vmatprep.mubr.bf16.mxu0 %v512
      %871 = vmatmul.mubr.bf16.gmra.mxu0 %v511
      %v872 = vpop.f32.mrf.mxu0
      %v873 = vadd.f32 0.0, %v872
      %v874 = vpop.f32.mrf.mxu0
      %v875 = vpop.f32.mrf.mxu0
      %v876 = vadd.f32 0.0, %v875
      %v877 = vpop.f32.mrf.mxu0
      %878 = vmatprep.mubr.bf16.mxu0 %v515
      %879 = vmatmul.mubr.bf16.gmra.mxu0 %v514
      %v880 = vpop.f32.mrf.mxu0
      %v881 = vadd.f32 0.0, %v880
      %v882 = vpop.f32.mrf.mxu0
      %v883 = vpop.f32.mrf.mxu0
      %v884 = vadd.f32 0.0, %v883
      %v885 = vpop.f32.mrf.mxu0
      %886 = vmatprep.mubr.bf16.mxu0 %v518
      %887 = vmatmul.mubr.bf16.gmra.mxu0 %v517
      %v888 = vpop.f32.mrf.mxu0
      %v889 = vadd.f32 0.0, %v888
      %v890 = vpop.f32.mrf.mxu0
      %v891 = vpop.f32.mrf.mxu0
      %v892 = vadd.f32 0.0, %v891
      %v893 = vpop.f32.mrf.mxu0
      %894 = vmatprep.mubr.bf16.mxu0 %v521
      %895 = vmatmul.mubr.bf16.gmra.mxu0 %v520
      %v896 = vpop.f32.mrf.mxu0
      %v897 = vadd.f32 0.0, %v896
      %v898 = vpop.f32.mrf.mxu0
      %v899 = vpop.f32.mrf.mxu0
      %v900 = vadd.f32 0.0, %v899
      %v901 = vpop.f32.mrf.mxu0
      %902 = vdwg.mxu0
      %903 = vmatprep.subr.bf16.mxu0 0
      %904 = vmatpush1.bf16.msra.mxu0 0
      %905 = vmatprep.subr.bf16.mxu0 0
      %906 = vmatpush1.bf16.msra.mxu0 %v669
      %907 = vmatprep.subr.bf16.mxu0 0
      %908 = vmatpush1.bf16.msra.mxu0 %v668
      %909 = vmatprep.subr.bf16.mxu0 0
      %910 = vmatpush1.bf16.msra.mxu0 %v667
      %911 = vmatprep.subr.bf16.mxu0 0
      %912 = vmatpush1.bf16.msra.mxu0 %v666
      %913 = vmatprep.subr.bf16.mxu0 0
      %914 = vmatpush1.bf16.msra.mxu0 %v665
      %915 = vmatprep.subr.bf16.mxu0 0
      %916 = vmatpush1.bf16.msra.mxu0 %v664
      %917 = vmatprep.subr.bf16.mxu0 0
      %918 = vmatpush1.bf16.msra.mxu0 %v663
      %919 = vmatprep.subr.bf16.mxu0 0
      %920 = vmatpush2.bf16.msra.mxu0 0
      %921 = vmatprep.subr.bf16.mxu0 0
      %922 = vmatpush2.bf16.msra.mxu0 0
      %923 = vmatprep.subr.bf16.mxu0 0
      %924 = vmatpush2.bf16.msra.mxu0 0
      %925 = vmatprep.subr.bf16.mxu0 0
      %926 = vmatpush2.bf16.msra.mxu0 0
      %927 = vmatprep.subr.bf16.mxu0 0
      %928 = vmatpush2.bf16.msra.mxu0 0
      %929 = vmatprep.subr.bf16.mxu0 0
      %930 = vmatpush2.bf16.msra.mxu0 0
      %931 = vmatprep.subr.bf16.mxu0 0
      %932 = vmatpush2.bf16.msra.mxu0 0
      %933 = vmatprep.subr.bf16.mxu0 0
      %934 = vmatpush2.bf16.msra.mxu0 0
      %935 = vmatprep.mubr.bf16.mxu0 0
      %936 = vmatmul.mubr.bf16.gmra.mxu0 %v695
      %v937 = vpop.f32.mrf.mxu0
      %v938 = vadd.f32 %v777, %v937
      %v939 = vpop.f32.mrf.mxu0
      %v940 = vpop.f32.mrf.mxu0
      %v941 = vadd.f32 %v780, %v940
      %v942 = vpop.f32.mrf.mxu0
      %943 = vmatprep.mubr.bf16.mxu0 0
      %944 = vmatmul.mubr.bf16.gmra.mxu0 %v698
      %v945 = vpop.f32.mrf.mxu0
      %v946 = vadd.f32 %v785, %v945
      %v947 = vpop.f32.mrf.mxu0
      %v948 = vpop.f32.mrf.mxu0
      %v949 = vadd.f32 %v788, %v948
      %v950 = vpop.f32.mrf.mxu0
      %951 = vmatprep.mubr.bf16.mxu0 0
      %952 = vmatmul.mubr.bf16.gmra.mxu0 %v701
      %v953 = vpop.f32.mrf.mxu0
      %v954 = vadd.f32 %v793, %v953
      %v955 = vpop.f32.mrf.mxu0
      %v956 = vpop.f32.mrf.mxu0
      %v957 = vadd.f32 %v796, %v956
      %v958 = vpop.f32.mrf.mxu0
      %959 = vmatprep.mubr.bf16.mxu0 0
      %960 = vmatmul.mubr.bf16.gmra.mxu0 %v704
      %v961 = vpop.f32.mrf.mxu0
      %v962 = vadd.f32 %v801, %v961
      %v963 = vpop.f32.mrf.mxu0
      %v964 = vpop.f32.mrf.mxu0
      %v965 = vadd.f32 %v804, %v964
      %v966 = vpop.f32.mrf.mxu0
      %967 = vmatprep.mubr.bf16.mxu0 0
      %968 = vmatmul.mubr.bf16.gmra.mxu0 %v707
      %v969 = vpop.f32.mrf.mxu0
      %v970 = vadd.f32 %v809, %v969
      %v971 = vpop.f32.mrf.mxu0
      %v972 = vpop.f32.mrf.mxu0
      %v973 = vadd.f32 %v812, %v972
      %v974 = vpop.f32.mrf.mxu0
      %975 = vmatprep.mubr.bf16.mxu0 0
      %976 = vmatmul.mubr.bf16.gmra.mxu0 %v710
      %v977 = vpop.f32.mrf.mxu0
      %v978 = vadd.f32 %v817, %v977
      %v979 = vpop.f32.mrf.mxu0
      %v980 = vpop.f32.mrf.mxu0
      %v981 = vadd.f32 %v820, %v980
      %v982 = vpop.f32.mrf.mxu0
      %983 = vmatprep.mubr.bf16.mxu0 0
      %984 = vmatmul.mubr.bf16.gmra.mxu0 %v713
      %v985 = vpop.f32.mrf.mxu0
      %v986 = vadd.f32 %v825, %v985
      %v987 = vpop.f32.mrf.mxu0
      %v988 = vpop.f32.mrf.mxu0
      %v989 = vadd.f32 %v828, %v988
      %v990 = vpop.f32.mrf.mxu0
      %991 = vmatprep.mubr.bf16.mxu0 0
      %992 = vmatmul.mubr.bf16.gmra.mxu0 %v716
      %v993 = vpop.f32.mrf.mxu0
      %v994 = vadd.f32 %v833, %v993
      %v995 = vpop.f32.mrf.mxu0
      %v996 = vpop.f32.mrf.mxu0
      %v997 = vadd.f32 %v836, %v996
      %v998 = vpop.f32.mrf.mxu0
      %999 = vmatprep.mubr.bf16.mxu0 0
      %1000 = vmatmul.mubr.bf16.gmra.mxu0 %v719
      %v1001 = vpop.f32.mrf.mxu0
      %v1002 = vadd.f32 %v841, %v1001
      %v1003 = vpop.f32.mrf.mxu0
      %v1004 = vpop.f32.mrf.mxu0
      %v1005 = vadd.f32 %v844, %v1004
      %v1006 = vpop.f32.mrf.mxu0
      %1007 = vmatprep.mubr.bf16.mxu0 0
      %1008 = vmatmul.mubr.bf16.gmra.mxu0 %v722
      %v1009 = vpop.f32.mrf.mxu0
      %v1010 = vadd.f32 %v849, %v1009
      %v1011 = vpop.f32.mrf.mxu0
      %v1012 = vpop.f32.mrf.mxu0
      %v1013 = vadd.f32 %v852, %v1012
      %v1014 = vpop.f32.mrf.mxu0
      %1015 = vmatprep.mubr.bf16.mxu0 0
      %1016 = vmatmul.mubr.bf16.gmra.mxu0 %v725
      %v1017 = vpop.f32.mrf.mxu0
      %v1018 = vadd.f32 %v857, %v1017
      %v1019 = vpop.f32.mrf.mxu0
      %v1020 = vpop.f32.mrf.mxu0
      %v1021 = vadd.f32 %v860, %v1020
      %v1022 = vpop.f32.mrf.mxu0
      %1023 = vmatprep.mubr.bf16.mxu0 0
      %1024 = vmatmul.mubr.bf16.gmra.mxu0 %v728
      %v1025 = vpop.f32.mrf.mxu0
      %v1026 = vadd.f32 %v865, %v1025
      %v1027 = vpop.f32.mrf.mxu0
      %v1028 = vpop.f32.mrf.mxu0
      %v1029 = vadd.f32 %v868, %v1028
      %v1030 = vpop.f32.mrf.mxu0
      %1031 = vmatprep.mubr.bf16.mxu0 0
      %1032 = vmatmul.mubr.bf16.gmra.mxu0 %v731
      %v1033 = vpop.f32.mrf.mxu0
      %v1034 = vadd.f32 %v873, %v1033
      %v1035 = vpop.f32.mrf.mxu0
      %v1036 = vpop.f32.mrf.mxu0
      %v1037 = vadd.f32 %v876, %v1036
      %v1038 = vpop.f32.mrf.mxu0
      %1039 = vmatprep.mubr.bf16.mxu0 0
      %1040 = vmatmul.mubr.bf16.gmra.mxu0 %v734
      %v1041 = vpop.f32.mrf.mxu0
      %v1042 = vadd.f32 %v881, %v1041
      %v1043 = vpop.f32.mrf.mxu0
      %v1044 = vpop.f32.mrf.mxu0
      %v1045 = vadd.f32 %v884, %v1044
      %v1046 = vpop.f32.mrf.mxu0
      %1047 = vmatprep.mubr.bf16.mxu0 0
      %1048 = vmatmul.mubr.bf16.gmra.mxu0 %v737
      %v1049 = vpop.f32.mrf.mxu0
      %v1050 = vadd.f32 %v889, %v1049
      %v1051 = vpop.f32.mrf.mxu0
      %v1052 = vpop.f32.mrf.mxu0
      %v1053 = vadd.f32 %v892, %v1052
      %v1054 = vpop.f32.mrf.mxu0
      %1055 = vmatprep.mubr.bf16.mxu0 0
      %1056 = vmatmul.mubr.bf16.gmra.mxu0 %v740
      %v1057 = vpop.f32.mrf.mxu0
      %v1058 = vadd.f32 %v897, %v1057
      %v1059 = vpop.f32.mrf.mxu0
      %v1060 = vpop.f32.mrf.mxu0
      %v1061 = vadd.f32 %v900, %v1060
      %v1062 = vpop.f32.mrf.mxu0
      %1063 = vdwg.mxu0
      %v1064 = vld [vmem:[%s2] sm:$0x1]
      %v1066 = vlaneseq
      %v1067 = vshrl.u32 %v1066, 7
      %v1068 = vsub.s32 0, %v1067
      %v1069 = vrot.slane %v1064, %v1068
      %v1071 = vmul.f32 %v938, %v1069
      %v1072 = vmul.f32 %v941, %v1069
      %v1073 = vmul.f32 %v946, %v1069
      %v1074 = vmul.f32 %v949, %v1069
      %v1075 = vmul.f32 %v954, %v1069
      %v1076 = vmul.f32 %v957, %v1069
      %v1077 = vmul.f32 %v962, %v1069
      %v1078 = vmul.f32 %v965, %v1069
      %v1079 = vmul.f32 %v970, %v1069
      %v1080 = vmul.f32 %v973, %v1069
      %v1081 = vmul.f32 %v978, %v1069
      %v1082 = vmul.f32 %v981, %v1069
      %v1083 = vmul.f32 %v986, %v1069
      %v1084 = vmul.f32 %v989, %v1069
      %v1085 = vmul.f32 %v994, %v1069
      %v1086 = vmul.f32 %v997, %v1069
      %v1087 = vmul.f32 %v1002, %v1069
      %v1088 = vmul.f32 %v1005, %v1069
      %v1089 = vmul.f32 %v1010, %v1069
      %v1090 = vmul.f32 %v1013, %v1069
      %v1091 = vmul.f32 %v1018, %v1069
      %v1092 = vmul.f32 %v1021, %v1069
      %v1093 = vmul.f32 %v1026, %v1069
      %v1094 = vmul.f32 %v1029, %v1069
      %v1095 = vmul.f32 %v1034, %v1069
      %v1096 = vmul.f32 %v1037, %v1069
      %v1097 = vmul.f32 %v1042, %v1069
      %v1098 = vmul.f32 %v1045, %v1069
      %v1099 = vmul.f32 %v1050, %v1069
      %v1100 = vmul.f32 %v1053, %v1069
      %v1101 = vmul.f32 %v1058, %v1069
      %v1102 = vmul.f32 %v1061, %v1069
      %v1103 = vld [vmem:[%s3] sm:$0x1]
      %v1105 = vlaneseq
      %v1106 = vshrl.u32 %v1105, 7
      %v1107 = vsub.s32 0, %v1106
      %v1108 = vrot.slane %v1103, %v1107
      %v1110 = vadd.f32 %v1071, %v1108
      %v1111 = vadd.f32 %v1072, %v1108
      %v1112 = vadd.f32 %v1073, %v1108
      %v1113 = vadd.f32 %v1074, %v1108
      %v1114 = vadd.f32 %v1075, %v1108
      %v1115 = vadd.f32 %v1076, %v1108
      %v1116 = vadd.f32 %v1077, %v1108
      %v1117 = vadd.f32 %v1078, %v1108
      %v1118 = vadd.f32 %v1079, %v1108
      %v1119 = vadd.f32 %v1080, %v1108
      %v1120 = vadd.f32 %v1081, %v1108
      %v1121 = vadd.f32 %v1082, %v1108
      %v1122 = vadd.f32 %v1083, %v1108
      %v1123 = vadd.f32 %v1084, %v1108
      %v1124 = vadd.f32 %v1085, %v1108
      %v1125 = vadd.f32 %v1086, %v1108
      %v1126 = vadd.f32 %v1087, %v1108
      %v1127 = vadd.f32 %v1088, %v1108
      %v1128 = vadd.f32 %v1089, %v1108
      %v1129 = vadd.f32 %v1090, %v1108
      %v1130 = vadd.f32 %v1091, %v1108
      %v1131 = vadd.f32 %v1092, %v1108
      %v1132 = vadd.f32 %v1093, %v1108
      %v1133 = vadd.f32 %v1094, %v1108
      %v1134 = vadd.f32 %v1095, %v1108
      %v1135 = vadd.f32 %v1096, %v1108
      %v1136 = vadd.f32 %v1097, %v1108
      %v1137 = vadd.f32 %v1098, %v1108
      %v1138 = vadd.f32 %v1099, %v1108
      %v1139 = vadd.f32 %v1100, %v1108
      %v1140 = vadd.f32 %v1101, %v1108
      %v1141 = vadd.f32 %v1102, %v1108
      %v1142 = vmax.f32 %v1110, 0.0
      %v1143 = vmax.f32 %v1111, 0.0
      %v1144 = vmax.f32 %v1112, 0.0
      %v1145 = vmax.f32 %v1113, 0.0
      %v1146 = vmax.f32 %v1114, 0.0
      %v1147 = vmax.f32 %v1115, 0.0
      %v1148 = vmax.f32 %v1116, 0.0
      %v1149 = vmax.f32 %v1117, 0.0
      %v1150 = vmax.f32 %v1118, 0.0
      %v1151 = vmax.f32 %v1119, 0.0
      %v1152 = vmax.f32 %v1120, 0.0
      %v1153 = vmax.f32 %v1121, 0.0
      %v1154 = vmax.f32 %v1122, 0.0
      %v1155 = vmax.f32 %v1123, 0.0
      %v1156 = vmax.f32 %v1124, 0.0
      %v1157 = vmax.f32 %v1125, 0.0
      %v1158 = vmax.f32 %v1126, 0.0
      %v1159 = vmax.f32 %v1127, 0.0
      %v1160 = vmax.f32 %v1128, 0.0
      %v1161 = vmax.f32 %v1129, 0.0
      %v1162 = vmax.f32 %v1130, 0.0
      %v1163 = vmax.f32 %v1131, 0.0
      %v1164 = vmax.f32 %v1132, 0.0
      %v1165 = vmax.f32 %v1133, 0.0
      %v1166 = vmax.f32 %v1134, 0.0
      %v1167 = vmax.f32 %v1135, 0.0
      %v1168 = vmax.f32 %v1136, 0.0
      %v1169 = vmax.f32 %v1137, 0.0
      %v1170 = vmax.f32 %v1138, 0.0
      %v1171 = vmax.f32 %v1139, 0.0
      %v1172 = vmax.f32 %v1140, 0.0
      %v1173 = vmax.f32 %v1141, 0.0
      %v1174 = vpack.c.bf16 %v1143, %v1142
      %v1175 = vpack.c.bf16 %v1145, %v1144
      %v1176 = vpack.c.bf16 %v1147, %v1146
      %v1177 = vpack.c.bf16 %v1149, %v1148
      %v1178 = vpack.c.bf16 %v1151, %v1150
      %v1179 = vpack.c.bf16 %v1153, %v1152
      %v1180 = vpack.c.bf16 %v1155, %v1154
      %v1181 = vpack.c.bf16 %v1157, %v1156
      %v1182 = vpack.c.bf16 %v1159, %v1158
      %v1183 = vpack.c.bf16 %v1161, %v1160
      %v1184 = vpack.c.bf16 %v1163, %v1162
      %v1185 = vpack.c.bf16 %v1165, %v1164
      %v1186 = vpack.c.bf16 %v1167, %v1166
      %v1187 = vpack.c.bf16 %v1169, %v1168
      %v1188 = vpack.c.bf16 %v1171, %v1170
      %v1189 = vpack.c.bf16 %v1173, %v1172
      %v1206 = vunpack.c.l.b16 %v1174
      %v1207 = vunpack.c.h.b16 %v1174
      %v1208 = vunpack.c.l.b16 %v1175
      %v1209 = vunpack.c.h.b16 %v1175
      %v1210 = vunpack.c.l.b16 %v1176
      %v1211 = vunpack.c.h.b16 %v1176
      %v1212 = vunpack.c.l.b16 %v1177
      %v1213 = vunpack.c.h.b16 %v1177
      %v1214 = vunpack.c.l.b16 %v1178
      %v1215 = vunpack.c.h.b16 %v1178
      %v1216 = vunpack.c.l.b16 %v1179
      %v1217 = vunpack.c.h.b16 %v1179
      %v1218 = vunpack.c.l.b16 %v1180
      %v1219 = vunpack.c.h.b16 %v1180
      %v1220 = vunpack.c.l.b16 %v1181
      %v1221 = vunpack.c.h.b16 %v1181
      %v1222 = vunpack.c.l.b16 %v1182
      %v1223 = vunpack.c.h.b16 %v1182
      %v1224 = vunpack.c.l.b16 %v1183
      %v1225 = vunpack.c.h.b16 %v1183
      %v1226 = vunpack.c.l.b16 %v1184
      %v1227 = vunpack.c.h.b16 %v1184
      %v1228 = vunpack.c.l.b16 %v1185
      %v1229 = vunpack.c.h.b16 %v1185
      %v1230 = vunpack.c.l.b16 %v1186
      %v1231 = vunpack.c.h.b16 %v1186
      %v1232 = vunpack.c.l.b16 %v1187
      %v1233 = vunpack.c.h.b16 %v1187
      %v1234 = vunpack.c.l.b16 %v1188
      %v1235 = vunpack.c.h.b16 %v1188
      %v1236 = vunpack.c.l.b16 %v1189
      %v1237 = vunpack.c.h.b16 %v1189
      %v1238 = vpack.c.b16 %v1206, %v1206
      %v1239 = vpack.c.b16 %v1207, %v1207
      %v1240 = vpack.c.b16 %v1208, %v1208
      %v1241 = vpack.c.b16 %v1209, %v1209
      %v1242 = vpack.c.b16 %v1210, %v1210
      %v1243 = vpack.c.b16 %v1211, %v1211
      %v1244 = vpack.c.b16 %v1212, %v1212
      %v1245 = vpack.c.b16 %v1213, %v1213
      %v1246 = vpack.c.b16 %v1214, %v1214
      %v1247 = vpack.c.b16 %v1215, %v1215
      %v1248 = vpack.c.b16 %v1216, %v1216
      %v1249 = vpack.c.b16 %v1217, %v1217
      %v1250 = vpack.c.b16 %v1218, %v1218
      %v1251 = vpack.c.b16 %v1219, %v1219
      %v1252 = vpack.c.b16 %v1220, %v1220
      %v1253 = vpack.c.b16 %v1221, %v1221
      %v1254 = vpack.c.b16 %v1222, %v1222
      %v1255 = vpack.c.b16 %v1223, %v1223
      %v1256 = vpack.c.b16 %v1224, %v1224
      %v1257 = vpack.c.b16 %v1225, %v1225
      %v1258 = vpack.c.b16 %v1226, %v1226
      %v1259 = vpack.c.b16 %v1227, %v1227
      %v1260 = vpack.c.b16 %v1228, %v1228
      %v1261 = vpack.c.b16 %v1229, %v1229
      %v1262 = vpack.c.b16 %v1230, %v1230
      %v1263 = vpack.c.b16 %v1231, %v1231
      %v1264 = vpack.c.b16 %v1232, %v1232
      %v1265 = vpack.c.b16 %v1233, %v1233
      %v1266 = vpack.c.b16 %v1234, %v1234
      %v1267 = vpack.c.b16 %v1235, %v1235
      %v1268 = vpack.c.b16 %v1236, %v1236
      %v1269 = vpack.c.b16 %v1237, %v1237
      %1302 = vst [vmem:[%s202] sm:$0xf] %v1238
      %1303 = vst [vmem:[%s202 + $0x4] sm:$0xf] %v1239
      %1304 = vst [vmem:[%s202 + $0x8] sm:$0xf] %v1240
      %1305 = vst [vmem:[%s202 + $0xc] sm:$0xf] %v1241
      %1306 = vst [vmem:[%s202 + $0x10] sm:$0xf] %v1242
      %1307 = vst [vmem:[%s202 + $0x14] sm:$0xf] %v1243
      %1308 = vst [vmem:[%s202 + $0x18] sm:$0xf] %v1244
      %1309 = vst [vmem:[%s202 + $0x1c] sm:$0xf] %v1245
      %1310 = vst [vmem:[%s202 + $0x20] sm:$0xf] %v1246
      %1311 = vst [vmem:[%s202 + $0x24] sm:$0xf] %v1247
      %1312 = vst [vmem:[%s202 + $0x28] sm:$0xf] %v1248
      %1313 = vst [vmem:[%s202 + $0x2c] sm:$0xf] %v1249
      %1314 = vst [vmem:[%s202 + $0x30] sm:$0xf] %v1250
      %1315 = vst [vmem:[%s202 + $0x34] sm:$0xf] %v1251
      %1316 = vst [vmem:[%s202 + $0x38] sm:$0xf] %v1252
      %1317 = vst [vmem:[%s202 + $0x3c] sm:$0xf] %v1253
      %1318 = vst [vmem:[%s202 + $0x40] sm:$0xf] %v1254
      %1319 = vst [vmem:[%s202 + $0x44] sm:$0xf] %v1255
      %1320 = vst [vmem:[%s202 + $0x48] sm:$0xf] %v1256
      %1321 = vst [vmem:[%s202 + $0x4c] sm:$0xf] %v1257
      %1322 = vst [vmem:[%s202 + $0x50] sm:$0xf] %v1258
      %1323 = vst [vmem:[%s202 + $0x54] sm:$0xf] %v1259
      %1324 = vst [vmem:[%s202 + $0x58] sm:$0xf] %v1260
      %1325 = vst [vmem:[%s202 + $0x5c] sm:$0xf] %v1261
      %1326 = vst [vmem:[%s202 + $0x60] sm:$0xf] %v1262
      %1327 = vst [vmem:[%s202 + $0x64] sm:$0xf] %v1263
      %1328 = vst [vmem:[%s202 + $0x68] sm:$0xf] %v1264
      %1329 = vst [vmem:[%s202 + $0x6c] sm:$0xf] %v1265
      %1330 = vst [vmem:[%s202 + $0x70] sm:$0xf] %v1266
      %1331 = vst [vmem:[%s202 + $0x74] sm:$0xf] %v1267
      %1332 = vst [vmem:[%s202 + $0x78] sm:$0xf] %v1268
      %1333 = vst [vmem:[%s202 + $0x7c] sm:$0xf] %v1269
      %s1334 = smul.u32 32, %s15
      %p1335 = scmp.lt.s32.totalorder %s1334, 63
      %s1336 = scalar_select %p1335, %s1334, 63
      %s1337 = smul.addr %s1336, 4
      %s1338 = scalar_lea.vmem %s4, %s1337
      // Predicated region
      $region37: #{unet_seq_forward.16} parent=35 // pred_check
        %p1339 = pneg %p122
      $region38: #{unet_seq_forward.16} parent=35 // pred_check_branch
        %1341 = sbr.rel (%p1339) target = $region40
      $region39: #{unet_seq_forward.16} parent=35 // pred_region
        %s1342 = smul.u32 32, %s15
      $region40: #{unet_seq_forward.16} parent=35 // pred_fallthru
        _
    $region36: #{unet_seq_forward.16} parent=5 // pred_fallthru
      _
    %p1343 = scmp.le.s32.totalorder 2, %s10
    // Predicated region
    $region41: #{unet_seq_forward.16} parent=5 // pred_check
      %p1344 = pneg %p1343
    $region42: #{unet_seq_forward.16} parent=5 // pred_check_branch
      %1346 = sbr.rel (%p1344) target = $region44
    $region43: #{unet_seq_forward.16} parent=5 // pred_region
      %s1347 = ssub.s32 %s10, 2
      // Predicated region
      $region45: #{unet_seq_forward.16} parent=43 // pred_check
        %p1348 = pneg %p128
      $region46: #{unet_seq_forward.16} parent=43 // pred_check_branch
        %1350 = sbr.rel (%p1348) target = $region48
      $region47: #{unet_seq_forward.16} parent=43 // pred_region
        %s1351 = smul.u32 32, %s16
        %p1352 = scmp.lt.s32.totalorder %s1351, 63
        %s1353 = scalar_select %p1352, %s1351, 63
        %s1354 = smul.addr %s1353, 4
        %s1355 = scalar_lea.vmem %s4, %s1354
      $region48: #{unet_seq_forward.16} parent=43 // pred_fallthru
        _
    $region44: #{unet_seq_forward.16} parent=5 // pred_fallthru
      _
  $region6: #{unet_seq_forward.16} parent=0 // loop_footer
    %s14 = sadd.s32 1, %s10
  $region7: #{unet_seq_forward.16} parent=0 // loop_footer_branch
    %9 = sbr.rel target = $region3
  $region8: #{unet_seq_forward.16} parent=0 // loop_exit
    _

// kernel: unet_seq_forward.17
$region0: #{unet_seq_forward.17}
  #allocation0 [shape = 'u32[]', space=smem, size = 0x4, offset = 0x4, fixed_abs, tag = 'smem constant byte address 0x4 - core index']
  #allocation1 [shape = 'u32[144,128]{1,0:T(1,128)}', space=vmem, size = 0x12000, scoped, tag = 'internal scratch']
  %s0 = inlined_call_operand.vmem [shape: bf16[512,144], index: 0, kind: input, shape index: {}]
  %s1 = inlined_call_operand.vmem [shape: bf16[144,128], index: 1, kind: input, shape index: {}]
  %s2 = inlined_call_operand.vmem [shape: f32[1,128], index: 2, kind: input, shape index: {}]
  %s3 = inlined_call_operand.vmem [shape: f32[1,128], index: 3, kind: input, shape index: {}]
  %s4 = inlined_call_operand.vmem [shape: bf16[512,128], index: 4, kind: output, shape index: {}]
  %s5 = sld [smem:[#allocation0]]
  $region49: #{unet_seq_forward.17} parent=0
    _
  %s7 = ssub.s32 1, %s5
  %s8 = scalar_select 0, %s7, %s5
  loop: start=0, step=1, limit=4
  $region2: #{unet_seq_forward.17} parent=0 // loop_pre_header
    _
  $region3: #{unet_seq_forward.17} parent=0 // loop_header
    %s10 = sphi 0, %s14
    %p11 = scmp.ge.s32.totalorder %s10, 4
    %s20 = sphi 0, %s22
    %s23 = sphi 0, %s20
    %s24 = sphi 0, %s23
    %s40 = sphi 0, %s24
    %s44 = sphi 0, %s44
    %s46 = sphi 0, %s44
    %s47 = sphi 0, %s46
    %s61 = sphi 0, %s47
    %s65 = sphi 0, %s65
    %s67 = sphi 0, %s65
    %s68 = sphi 0, %s67
    %s82 = sphi 0, %s68
    %s86 = sphi 0, %s86
    %s88 = sphi 0, %s86
    %s89 = sphi 0, %s88
    %s103 = sphi 0, %s89
    %s109 = sphi 0, %s111
    %s112 = sphi 0, %s109
    %s113 = sphi 0, %s112
    %s129 = sphi 0, %s113
  $region4: #{unet_seq_forward.17} parent=0 // loop_header_branch
    %13 = sbr.rel (%p11) target = $region8
  $region5: #{unet_seq_forward.17} parent=0 // loop_body
    %s15 = ssub.s32 %s10, 1
    %s16 = ssub.s32 %s10, 2
    %s17 = sadd.s32 %s10, 1
    %s18 = ssub.s32 %s10, %s17
    %p19 = scmp.eq.s32.totalorder %s18, 0
    %s21 = sadd.s32 %s20, 1
    %s22 = scalar_select %p19, %s20, %s21
    %p25 = pneg %p19
    %p26 = scmp.eq.s32.totalorder %s10, 1
    %p27 = por %p25, %p26
    %p28 = scmp.ne.s32.totalorder %s20, %s23
    %p29 = scmp.eq.s32.totalorder %s10, 0
    %p30 = por %p28, %p29
    %p31 = scmp.ne.s32.totalorder %s20, %s23
    %p32 = scmp.eq.s32.totalorder %s15, 1
    %p33 = por %p31, %p32
    %p34 = scmp.ne.s32.totalorder %s23, %s24
    %p35 = scmp.eq.s32.totalorder %s15, 0
    %p36 = por %p34, %p35
    %p37 = scmp.ne.s32.totalorder %s23, %s24
    %p38 = scmp.eq.s32.totalorder %s16, 1
    %p39 = por %p37, %p38
    %p41 = scmp.ne.s32.totalorder %s24, %s40
    %p42 = scmp.eq.s32.totalorder %s16, 0
    %p43 = por %p41, %p42
    %s45 = sadd.s32 %s44, 1
    %p48 = scmp.eq.s32.totalorder %s10, 1
    %p49 = scmp.ne.s32.totalorder %s44, %s46
    %p50 = scmp.eq.s32.totalorder %s10, 0
    %p51 = por %p49, %p50
    %p52 = scmp.ne.s32.totalorder %s44, %s46
    %p53 = scmp.eq.s32.totalorder %s15, 1
    %p54 = por %p52, %p53
    %p55 = scmp.ne.s32.totalorder %s46, %s47
    %p56 = scmp.eq.s32.totalorder %s15, 0
    %p57 = por %p55, %p56
    %p58 = scmp.ne.s32.totalorder %s46, %s47
    %p59 = scmp.eq.s32.totalorder %s16, 1
    %p60 = por %p58, %p59
    %p62 = scmp.ne.s32.totalorder %s47, %s61
    %p63 = scmp.eq.s32.totalorder %s16, 0
    %p64 = por %p62, %p63
    %s66 = sadd.s32 %s65, 1
    %p69 = scmp.eq.s32.totalorder %s10, 1
    %p70 = scmp.ne.s32.totalorder %s65, %s67
    %p71 = scmp.eq.s32.totalorder %s10, 0
    %p72 = por %p70, %p71
    %p73 = scmp.ne.s32.totalorder %s65, %s67
    %p74 = scmp.eq.s32.totalorder %s15, 1
    %p75 = por %p73, %p74
    %p76 = scmp.ne.s32.totalorder %s67, %s68
    %p77 = scmp.eq.s32.totalorder %s15, 0
    %p78 = por %p76, %p77
    %p79 = scmp.ne.s32.totalorder %s67, %s68
    %p80 = scmp.eq.s32.totalorder %s16, 1
    %p81 = por %p79, %p80
    %p83 = scmp.ne.s32.totalorder %s68, %s82
    %p84 = scmp.eq.s32.totalorder %s16, 0
    %p85 = por %p83, %p84
    %s87 = sadd.s32 %s86, 1
    %p90 = scmp.eq.s32.totalorder %s10, 1
    %p91 = scmp.ne.s32.totalorder %s86, %s88
    %p92 = scmp.eq.s32.totalorder %s10, 0
    %p93 = por %p91, %p92
    %p94 = scmp.ne.s32.totalorder %s86, %s88
    %p95 = scmp.eq.s32.totalorder %s15, 1
    %p96 = por %p94, %p95
    %p97 = scmp.ne.s32.totalorder %s88, %s89
    %p98 = scmp.eq.s32.totalorder %s15, 0
    %p99 = por %p97, %p98
    %p100 = scmp.ne.s32.totalorder %s88, %s89
    %p101 = scmp.eq.s32.totalorder %s16, 1
    %p102 = por %p100, %p101
    %p104 = scmp.ne.s32.totalorder %s89, %s103
    %p105 = scmp.eq.s32.totalorder %s16, 0
    %p106 = por %p104, %p105
    %s107 = ssub.s32 %s10, %s17
    %p108 = scmp.eq.s32.totalorder %s107, 0
    %s110 = sadd.s32 %s109, 1
    %s111 = scalar_select %p108, %s109, %s110
    %p114 = pneg %p108
    %p115 = scmp.eq.s32.totalorder %s10, 1
    %p116 = por %p114, %p115
    %p117 = scmp.ne.s32.totalorder %s109, %s112
    %p118 = scmp.eq.s32.totalorder %s10, 0
    %p119 = por %p117, %p118
    %p120 = scmp.ne.s32.totalorder %s109, %s112
    %p121 = scmp.eq.s32.totalorder %s15, 1
    %p122 = por %p120, %p121
    %p123 = scmp.ne.s32.totalorder %s112, %s113
    %p124 = scmp.eq.s32.totalorder %s15, 0
    %p125 = por %p123, %p124
    %p126 = scmp.ne.s32.totalorder %s112, %s113
    %p127 = scmp.eq.s32.totalorder %s16, 1
    %p128 = por %p126, %p127
    %p130 = scmp.ne.s32.totalorder %s113, %s129
    %p131 = scmp.eq.s32.totalorder %s16, 0
    %p132 = por %p130, %p131
    %p133 = scmp.le.s32.totalorder 1, %s10
    %p134 = scmp.lt.s32.totalorder %s10, 3
    %p135 = pnand %p133, %p134
    %p136 = pneg %p135
    // Predicated region
    $region9: #{unet_seq_forward.17} parent=5 // pred_check
      _
    $region10: #{unet_seq_forward.17} parent=5 // pred_check_branch
      %138 = sbr.rel (%p135) target = $region12
    $region11: #{unet_seq_forward.17} parent=5 // pred_region
      %s139 = ssub.s32 %s10, 1
      // Predicated region
      $region13: #{unet_seq_forward.17} parent=11 // pred_check
        %p140 = pneg %p57
      $region14: #{unet_seq_forward.17} parent=11 // pred_check_branch
        %142 = sbr.rel (%p140) target = $region16
      $region15: #{unet_seq_forward.17} parent=11 // pred_region
        _
      $region16: #{unet_seq_forward.17} parent=11 // pred_fallthru
        _
      // Predicated region
      $region17: #{unet_seq_forward.17} parent=11 // pred_check
        %p143 = pneg %p78
      $region18: #{unet_seq_forward.17} parent=11 // pred_check_branch
        %145 = sbr.rel (%p143) target = $region20
      $region19: #{unet_seq_forward.17} parent=11 // pred_region
        _
      $region20: #{unet_seq_forward.17} parent=11 // pred_fallthru
        _
      // Predicated region
      $region21: #{unet_seq_forward.17} parent=11 // pred_check
        %p146 = pneg %p99
      $region22: #{unet_seq_forward.17} parent=11 // pred_check_branch
        %148 = sbr.rel (%p146) target = $region24
      $region23: #{unet_seq_forward.17} parent=11 // pred_region
        _
      $region24: #{unet_seq_forward.17} parent=11 // pred_fallthru
        _
    $region12: #{unet_seq_forward.17} parent=5 // pred_fallthru
      _
    %p149 = scmp.lt.s32.totalorder %s10, 2
    // Predicated region
    $region25: #{unet_seq_forward.17} parent=5 // pred_check
      %p150 = pneg %p149
    $region26: #{unet_seq_forward.17} parent=5 // pred_check_branch
      %152 = sbr.rel (%p150) target = $region28
    $region27: #{unet_seq_forward.17} parent=5 // pred_region
      // Predicated region
      $region29: #{unet_seq_forward.17} parent=27 // pred_check
        %p153 = pneg %p30
      $region30: #{unet_seq_forward.17} parent=27 // pred_check_branch
        %155 = sbr.rel (%p153) target = $region32
      $region31: #{unet_seq_forward.17} parent=27 // pred_region
        %s156 = smul.u32 32, %s10
        %p157 = scmp.lt.s32.totalorder %s156, 63
        %s158 = scalar_select %p157, %s156, 63
        %s159 = smul.addr %s158, 2
        %s160 = smul.addr %s159, 4
        %s161 = scalar_lea.vmem %s0, %s160
        %s162 = smul.u32 32, %s10
      $region32: #{unet_seq_forward.17} parent=27 // pred_fallthru
        _
    $region28: #{unet_seq_forward.17} parent=5 // pred_fallthru
      _
    %p163 = scmp.le.s32.totalorder 1, %s10
    %p164 = scmp.lt.s32.totalorder %s10, 3
    %p165 = pnand %p163, %p164
    %p166 = pneg %p165
    // Predicated region
    $region33: #{unet_seq_forward.17} parent=5 // pred_check
      _
    $region34: #{unet_seq_forward.17} parent=5 // pred_check_branch
      %168 = sbr.rel (%p165) target = $region36
    $region35: #{unet_seq_forward.17} parent=5 // pred_region
      %s169 = ssub.s32 %s10, 1
      %s170 = smul.u32 32, %s15
      %p171 = scmp.lt.s32.totalorder %s170, 63
      %s172 = scalar_select %p171, %s170, 63
      %s173 = smul.addr %s172, 2
      %s174 = smul.addr %s173, 4
      %s175 = scalar_lea.vmem %s0, %s174
      %p176 = pneg %p36
      %p177 = pneg %p33
      %p178 = pneg %p57
      %p179 = pneg %p54
      %p180 = pneg %p78
      %p181 = pneg %p75
      %p182 = pneg %p99
      %p183 = pneg %p96
      %p184 = pneg %p125
      %p185 = pneg %p122
      %s186 = smul.u32 32, %s15
      %p187 = scmp.lt.s32.totalorder %s186, 63
      %s188 = scalar_select %p187, %s186, 63
      %s189 = smul.addr %s188, 4
      %s190 = scalar_lea.vmem %s4, %s189
      %s191 = smul.u32 32, %s15
      %p192 = scmp.lt.s32.totalorder %s191, 63
      %s193 = scalar_select %p192, %s191, 63
      %s194 = smul.addr %s193, 2
      %s195 = smul.addr %s194, 4
      %s196 = scalar_lea.vmem %s0, %s195
      %s197 = smul.u32 32, %s15
      %s198 = smul.u32 32, %s15
      %p199 = scmp.lt.s32.totalorder %s198, 63
      %s200 = scalar_select %p199, %s198, 63
      %s201 = smul.addr %s200, 4
      %s202 = scalar_lea.vmem %s4, %s201
      %s203 = smul.u32 32, %s15
      %v205 = vld [vmem:[%s196] sm:$0xff]
      %v206 = vld [vmem:[%s196 + $0x8] sm:$0xff]
      %v207 = vld [vmem:[%s196 + $0x10] sm:$0xff]
      %v208 = vld [vmem:[%s196 + $0x18] sm:$0xff]
      %v209 = vld [vmem:[%s196 + $0x20] sm:$0xff]
      %v210 = vld [vmem:[%s196 + $0x28] sm:$0xff]
      %v211 = vld [vmem:[%s196 + $0x30] sm:$0xff]
      %v212 = vld [vmem:[%s196 + $0x38] sm:$0xff]
      %v213 = vld [vmem:[%s196 + $0x40] sm:$0xff]
      %v214 = vld [vmem:[%s196 + $0x48] sm:$0xff]
      %v215 = vld [vmem:[%s196 + $0x50] sm:$0xff]
      %v216 = vld [vmem:[%s196 + $0x58] sm:$0xff]
      %v217 = vld [vmem:[%s196 + $0x60] sm:$0xff]
      %v218 = vld [vmem:[%s196 + $0x68] sm:$0xff]
      %v219 = vld [vmem:[%s196 + $0x70] sm:$0xff]
      %v220 = vld [vmem:[%s196 + $0x78] sm:$0xff]
      %v221 = vld [vmem:[%s196 + $0x80] sm:$0xff]
      %v222 = vld [vmem:[%s196 + $0x88] sm:$0xff]
      %v223 = vld [vmem:[%s196 + $0x90] sm:$0xff]
      %v224 = vld [vmem:[%s196 + $0x98] sm:$0xff]
      %v225 = vld [vmem:[%s196 + $0xa0] sm:$0xff]
      %v226 = vld [vmem:[%s196 + $0xa8] sm:$0xff]
      %v227 = vld [vmem:[%s196 + $0xb0] sm:$0xff]
      %v228 = vld [vmem:[%s196 + $0xb8] sm:$0xff]
      %v229 = vld [vmem:[%s196 + $0xc0] sm:$0xff]
      %v230 = vld [vmem:[%s196 + $0xc8] sm:$0xff]
      %v231 = vld [vmem:[%s196 + $0xd0] sm:$0xff]
      %v232 = vld [vmem:[%s196 + $0xd8] sm:$0xff]
      %v233 = vld [vmem:[%s196 + $0xe0] sm:$0xff]
      %v234 = vld [vmem:[%s196 + $0xe8] sm:$0xff]
      %v235 = vld [vmem:[%s196 + $0xf0] sm:$0xff]
      %v236 = vld [vmem:[%s196 + $0xf8] sm:$0xff]
      %v237 = vld [vmem:[%s1] sm:$0xf]
      %v238 = vld [vmem:[%s1 + $0x4] sm:$0xf]
      %v239 = vld [vmem:[%s1 + $0x8] sm:$0xf]
      %v240 = vld [vmem:[%s1 + $0xc] sm:$0xf]
      %v241 = vld [vmem:[%s1 + $0x10] sm:$0xf]
      %v242 = vld [vmem:[%s1 + $0x14] sm:$0xf]
      %v243 = vld [vmem:[%s1 + $0x18] sm:$0xf]
      %v244 = vld [vmem:[%s1 + $0x1c] sm:$0xf]
      %v245 = vld [vmem:[%s1 + $0x20] sm:$0xf]
      %v246 = vld [vmem:[%s1 + $0x24] sm:$0xf]
      %v247 = vld [vmem:[%s1 + $0x28] sm:$0xf]
      %v248 = vld [vmem:[%s1 + $0x2c] sm:$0xf]
      %v249 = vld [vmem:[%s1 + $0x30] sm:$0xf]
      %v250 = vld [vmem:[%s1 + $0x34] sm:$0xf]
      %v251 = vld [vmem:[%s1 + $0x38] sm:$0xf]
      %v252 = vld [vmem:[%s1 + $0x3c] sm:$0xf]
      %v253 = vld [vmem:[%s1 + $0x40] sm:$0xf]
      %v254 = vld [vmem:[%s1 + $0x44] sm:$0xf]
      %v287 = vunpack.c.l.b16 %v205
      %v288 = vunpack.c.h.b16 %v205
      %v289 = vunpack.c.l.b16 %v206
      %v290 = vunpack.c.h.b16 %v206
      %v291 = vunpack.c.l.b16 %v207
      %v292 = vunpack.c.h.b16 %v207
      %v293 = vunpack.c.l.b16 %v208
      %v294 = vunpack.c.h.b16 %v208
      %v295 = vunpack.c.l.b16 %v209
      %v296 = vunpack.c.h.b16 %v209
      %v297 = vunpack.c.l.b16 %v210
      %v298 = vunpack.c.h.b16 %v210
      %v299 = vunpack.c.l.b16 %v211
      %v300 = vunpack.c.h.b16 %v211
      %v301 = vunpack.c.l.b16 %v212
      %v302 = vunpack.c.h.b16 %v212
      %v303 = vunpack.c.l.b16 %v213
      %v304 = vunpack.c.h.b16 %v213
      %v305 = vunpack.c.l.b16 %v214
      %v306 = vunpack.c.h.b16 %v214
      %v307 = vunpack.c.l.b16 %v215
      %v308 = vunpack.c.h.b16 %v215
      %v309 = vunpack.c.l.b16 %v216
      %v310 = vunpack.c.h.b16 %v216
      %v311 = vunpack.c.l.b16 %v217
      %v312 = vunpack.c.h.b16 %v217
      %v313 = vunpack.c.l.b16 %v218
      %v314 = vunpack.c.h.b16 %v218
      %v315 = vunpack.c.l.b16 %v219
      %v316 = vunpack.c.h.b16 %v219
      %v317 = vunpack.c.l.b16 %v220
      %v318 = vunpack.c.h.b16 %v220
      %v319 = vunpack.c.l.b16 %v221
      %v320 = vunpack.c.h.b16 %v221
      %v321 = vunpack.c.l.b16 %v222
      %v322 = vunpack.c.h.b16 %v222
      %v323 = vunpack.c.l.b16 %v223
      %v324 = vunpack.c.h.b16 %v223
      %v325 = vunpack.c.l.b16 %v224
      %v326 = vunpack.c.h.b16 %v224
      %v327 = vunpack.c.l.b16 %v225
      %v328 = vunpack.c.h.b16 %v225
      %v329 = vunpack.c.l.b16 %v226
      %v330 = vunpack.c.h.b16 %v226
      %v331 = vunpack.c.l.b16 %v227
      %v332 = vunpack.c.h.b16 %v227
      %v333 = vunpack.c.l.b16 %v228
      %v334 = vunpack.c.h.b16 %v228
      %v335 = vunpack.c.l.b16 %v229
      %v336 = vunpack.c.h.b16 %v229
      %v337 = vunpack.c.l.b16 %v230
      %v338 = vunpack.c.h.b16 %v230
      %v339 = vunpack.c.l.b16 %v231
      %v340 = vunpack.c.h.b16 %v231
      %v341 = vunpack.c.l.b16 %v232
      %v342 = vunpack.c.h.b16 %v232
      %v343 = vunpack.c.l.b16 %v233
      %v344 = vunpack.c.h.b16 %v233
      %v345 = vunpack.c.l.b16 %v234
      %v346 = vunpack.c.h.b16 %v234
      %v347 = vunpack.c.l.b16 %v235
      %v348 = vunpack.c.h.b16 %v235
      %v349 = vunpack.c.l.b16 %v236
      %v350 = vunpack.c.h.b16 %v236
      %v351 = vpack.c.b16 %v289, %v287
      %v352 = vpack.c.b16 %v290, %v288
      %v353 = vpack.c.b16 %v293, %v291
      %v354 = vpack.c.b16 %v294, %v292
      %v355 = vpack.c.b16 %v297, %v295
      %v356 = vpack.c.b16 %v298, %v296
      %v357 = vpack.c.b16 %v301, %v299
      %v358 = vpack.c.b16 %v302, %v300
      %v359 = vpack.c.b16 %v305, %v303
      %v360 = vpack.c.b16 %v306, %v304
      %v361 = vpack.c.b16 %v309, %v307
      %v362 = vpack.c.b16 %v310, %v308
      %v363 = vpack.c.b16 %v313, %v311
      %v364 = vpack.c.b16 %v314, %v312
      %v365 = vpack.c.b16 %v317, %v315
      %v366 = vpack.c.b16 %v318, %v316
      %v367 = vpack.c.b16 %v321, %v319
      %v368 = vpack.c.b16 %v322, %v320
      %v369 = vpack.c.b16 %v325, %v323
      %v370 = vpack.c.b16 %v326, %v324
      %v371 = vpack.c.b16 %v329, %v327
      %v372 = vpack.c.b16 %v330, %v328
      %v373 = vpack.c.b16 %v333, %v331
      %v374 = vpack.c.b16 %v334, %v332
      %v375 = vpack.c.b16 %v337, %v335
      %v376 = vpack.c.b16 %v338, %v336
      %v377 = vpack.c.b16 %v341, %v339
      %v378 = vpack.c.b16 %v342, %v340
      %v379 = vpack.c.b16 %v345, %v343
      %v380 = vpack.c.b16 %v346, %v344
      %v381 = vpack.c.b16 %v349, %v347
      %v382 = vpack.c.b16 %v350, %v348
      %v417 = vunpack.c.l.b16 %v237
      %v418 = vunpack.c.l.b16 %v238
      %v419 = vunpack.c.l.b16 %v239
      %v420 = vunpack.c.l.b16 %v240
      %v421 = vunpack.c.l.b16 %v241
      %v422 = vunpack.c.l.b16 %v242
      %v423 = vunpack.c.l.b16 %v243
      %v424 = vunpack.c.l.b16 %v244
      %v425 = vunpack.c.l.b16 %v245
      %v426 = vunpack.c.l.b16 %v246
      %v427 = vunpack.c.l.b16 %v247
      %v428 = vunpack.c.l.b16 %v248
      %v429 = vunpack.c.l.b16 %v249
      %v430 = vunpack.c.l.b16 %v250
      %v431 = vunpack.c.l.b16 %v251
      %v432 = vunpack.c.l.b16 %v252
      %v433 = vunpack.c.l.b16 %v253
      %v434 = vunpack.c.l.b16 %v254
      %v435 = vpack.c.b16 %v418, %v417
      %v436 = vpack.c.b16 %v420, %v419
      %v437 = vpack.c.b16 %v422, %v421
      %v438 = vpack.c.b16 %v424, %v423
      %v439 = vpack.c.b16 %v426, %v425
      %v440 = vpack.c.b16 %v428, %v427
      %v441 = vpack.c.b16 %v430, %v429
      %v442 = vpack.c.b16 %v432, %v431
      %v443 = vpack.c.b16 %v434, %v433
      %vm453 = vcmask 130048
      %v455 = vsel %vm453, %v352, 0
      %v458 = vsel %vm453, %v354, 0
      %v461 = vsel %vm453, %v356, 0
      %v464 = vsel %vm453, %v358, 0
      %v467 = vsel %vm453, %v360, 0
      %v470 = vsel %vm453, %v362, 0
      %v473 = vsel %vm453, %v364, 0
      %v476 = vsel %vm453, %v366, 0
      %v479 = vsel %vm453, %v368, 0
      %v482 = vsel %vm453, %v370, 0
      %v485 = vsel %vm453, %v372, 0
      %v488 = vsel %vm453, %v374, 0
      %v491 = vsel %vm453, %v376, 0
      %v494 = vsel %vm453, %v378, 0
      %v497 = vsel %vm453, %v380, 0
      %v500 = vsel %vm453, %v382, 0
      %502 = vmatprep.subr.bf16.mxu0 0
      %503 = vmatpush1.bf16.msra.mxu0 %v442
      %504 = vmatprep.subr.bf16.mxu0 0
      %505 = vmatpush1.bf16.msra.mxu0 %v441
      %506 = vmatprep.subr.bf16.mxu0 0
      %507 = vmatpush1.bf16.msra.mxu0 %v440
      %508 = vmatprep.subr.bf16.mxu0 0
      %509 = vmatpush1.bf16.msra.mxu0 %v439
      %510 = vmatprep.subr.bf16.mxu0 0
      %511 = vmatpush1.bf16.msra.mxu0 %v438
      %512 = vmatprep.subr.bf16.mxu0 0
      %513 = vmatpush1.bf16.msra.mxu0 %v437
      %514 = vmatprep.subr.bf16.mxu0 0
      %515 = vmatpush1.bf16.msra.mxu0 %v436
      %516 = vmatprep.subr.bf16.mxu0 0
      %517 = vmatpush1.bf16.msra.mxu0 %v435
      %518 = vmatprep.subr.bf16.mxu0 0
      %519 = vmatpush2.bf16.msra.mxu0 0
      %520 = vmatprep.subr.bf16.mxu0 0
      %521 = vmatpush2.bf16.msra.mxu0 0
      %522 = vmatprep.subr.bf16.mxu0 0
      %523 = vmatpush2.bf16.msra.mxu0 0
      %524 = vmatprep.subr.bf16.mxu0 0
      %525 = vmatpush2.bf16.msra.mxu0 0
      %526 = vmatprep.subr.bf16.mxu0 0
      %527 = vmatpush2.bf16.msra.mxu0 0
      %528 = vmatprep.subr.bf16.mxu0 0
      %529 = vmatpush2.bf16.msra.mxu0 0
      %530 = vmatprep.subr.bf16.mxu0 0
      %531 = vmatpush2.bf16.msra.mxu0 0
      %532 = vmatprep.subr.bf16.mxu0 0
      %533 = vmatpush2.bf16.msra.mxu0 %v443
      %534 = vmatprep.mubr.bf16.mxu0 %v455
      %535 = vmatmul.mubr.bf16.gmra.mxu0 %v351
      %v536 = vpop.f32.mrf.mxu0
      %v537 = vadd.f32 0.0, %v536
      %v538 = vpop.f32.mrf.mxu0
      %v539 = vpop.f32.mrf.mxu0
      %v540 = vadd.f32 0.0, %v539
      %v541 = vpop.f32.mrf.mxu0
      %542 = vmatprep.mubr.bf16.mxu0 %v458
      %543 = vmatmul.mubr.bf16.gmra.mxu0 %v353
      %v544 = vpop.f32.mrf.mxu0
      %v545 = vadd.f32 0.0, %v544
      %v546 = vpop.f32.mrf.mxu0
      %v547 = vpop.f32.mrf.mxu0
      %v548 = vadd.f32 0.0, %v547
      %v549 = vpop.f32.mrf.mxu0
      %550 = vmatprep.mubr.bf16.mxu0 %v461
      %551 = vmatmul.mubr.bf16.gmra.mxu0 %v355
      %v552 = vpop.f32.mrf.mxu0
      %v553 = vadd.f32 0.0, %v552
      %v554 = vpop.f32.mrf.mxu0
      %v555 = vpop.f32.mrf.mxu0
      %v556 = vadd.f32 0.0, %v555
      %v557 = vpop.f32.mrf.mxu0
      %558 = vmatprep.mubr.bf16.mxu0 %v464
      %559 = vmatmul.mubr.bf16.gmra.mxu0 %v357
      %v560 = vpop.f32.mrf.mxu0
      %v561 = vadd.f32 0.0, %v560
      %v562 = vpop.f32.mrf.mxu0
      %v563 = vpop.f32.mrf.mxu0
      %v564 = vadd.f32 0.0, %v563
      %v565 = vpop.f32.mrf.mxu0
      %566 = vmatprep.mubr.bf16.mxu0 %v467
      %567 = vmatmul.mubr.bf16.gmra.mxu0 %v359
      %v568 = vpop.f32.mrf.mxu0
      %v569 = vadd.f32 0.0, %v568
      %v570 = vpop.f32.mrf.mxu0
      %v571 = vpop.f32.mrf.mxu0
      %v572 = vadd.f32 0.0, %v571
      %v573 = vpop.f32.mrf.mxu0
      %574 = vmatprep.mubr.bf16.mxu0 %v470
      %575 = vmatmul.mubr.bf16.gmra.mxu0 %v361
      %v576 = vpop.f32.mrf.mxu0
      %v577 = vadd.f32 0.0, %v576
      %v578 = vpop.f32.mrf.mxu0
      %v579 = vpop.f32.mrf.mxu0
      %v580 = vadd.f32 0.0, %v579
      %v581 = vpop.f32.mrf.mxu0
      %582 = vmatprep.mubr.bf16.mxu0 %v473
      %583 = vmatmul.mubr.bf16.gmra.mxu0 %v363
      %v584 = vpop.f32.mrf.mxu0
      %v585 = vadd.f32 0.0, %v584
      %v586 = vpop.f32.mrf.mxu0
      %v587 = vpop.f32.mrf.mxu0
      %v588 = vadd.f32 0.0, %v587
      %v589 = vpop.f32.mrf.mxu0
      %590 = vmatprep.mubr.bf16.mxu0 %v476
      %591 = vmatmul.mubr.bf16.gmra.mxu0 %v365
      %v592 = vpop.f32.mrf.mxu0
      %v593 = vadd.f32 0.0, %v592
      %v594 = vpop.f32.mrf.mxu0
      %v595 = vpop.f32.mrf.mxu0
      %v596 = vadd.f32 0.0, %v595
      %v597 = vpop.f32.mrf.mxu0
      %598 = vmatprep.mubr.bf16.mxu0 %v479
      %599 = vmatmul.mubr.bf16.gmra.mxu0 %v367
      %v600 = vpop.f32.mrf.mxu0
      %v601 = vadd.f32 0.0, %v600
      %v602 = vpop.f32.mrf.mxu0
      %v603 = vpop.f32.mrf.mxu0
      %v604 = vadd.f32 0.0, %v603
      %v605 = vpop.f32.mrf.mxu0
      %606 = vmatprep.mubr.bf16.mxu0 %v482
      %607 = vmatmul.mubr.bf16.gmra.mxu0 %v369
      %v608 = vpop.f32.mrf.mxu0
      %v609 = vadd.f32 0.0, %v608
      %v610 = vpop.f32.mrf.mxu0
      %v611 = vpop.f32.mrf.mxu0
      %v612 = vadd.f32 0.0, %v611
      %v613 = vpop.f32.mrf.mxu0
      %614 = vmatprep.mubr.bf16.mxu0 %v485
      %615 = vmatmul.mubr.bf16.gmra.mxu0 %v371
      %v616 = vpop.f32.mrf.mxu0
      %v617 = vadd.f32 0.0, %v616
      %v618 = vpop.f32.mrf.mxu0
      %v619 = vpop.f32.mrf.mxu0
      %v620 = vadd.f32 0.0, %v619
      %v621 = vpop.f32.mrf.mxu0
      %622 = vmatprep.mubr.bf16.mxu0 %v488
      %623 = vmatmul.mubr.bf16.gmra.mxu0 %v373
      %v624 = vpop.f32.mrf.mxu0
      %v625 = vadd.f32 0.0, %v624
      %v626 = vpop.f32.mrf.mxu0
      %v627 = vpop.f32.mrf.mxu0
      %v628 = vadd.f32 0.0, %v627
      %v629 = vpop.f32.mrf.mxu0
      %630 = vmatprep.mubr.bf16.mxu0 %v491
      %631 = vmatmul.mubr.bf16.gmra.mxu0 %v375
      %v632 = vpop.f32.mrf.mxu0
      %v633 = vadd.f32 0.0, %v632
      %v634 = vpop.f32.mrf.mxu0
      %v635 = vpop.f32.mrf.mxu0
      %v636 = vadd.f32 0.0, %v635
      %v637 = vpop.f32.mrf.mxu0
      %638 = vmatprep.mubr.bf16.mxu0 %v494
      %639 = vmatmul.mubr.bf16.gmra.mxu0 %v377
      %v640 = vpop.f32.mrf.mxu0
      %v641 = vadd.f32 0.0, %v640
      %v642 = vpop.f32.mrf.mxu0
      %v643 = vpop.f32.mrf.mxu0
      %v644 = vadd.f32 0.0, %v643
      %v645 = vpop.f32.mrf.mxu0
      %646 = vmatprep.mubr.bf16.mxu0 %v497
      %647 = vmatmul.mubr.bf16.gmra.mxu0 %v379
      %v648 = vpop.f32.mrf.mxu0
      %v649 = vadd.f32 0.0, %v648
      %v650 = vpop.f32.mrf.mxu0
      %v651 = vpop.f32.mrf.mxu0
      %v652 = vadd.f32 0.0, %v651
      %v653 = vpop.f32.mrf.mxu0
      %654 = vmatprep.mubr.bf16.mxu0 %v500
      %655 = vmatmul.mubr.bf16.gmra.mxu0 %v381
      %v656 = vpop.f32.mrf.mxu0
      %v657 = vadd.f32 0.0, %v656
      %v658 = vpop.f32.mrf.mxu0
      %v659 = vpop.f32.mrf.mxu0
      %v660 = vadd.f32 0.0, %v659
      %v661 = vpop.f32.mrf.mxu0
      %662 = vdwg.mxu0
      %v663 = vld [vmem:[%s2] sm:$0x1]
      %v665 = vlaneseq
      %v666 = vshrl.u32 %v665, 7
      %v667 = vsub.s32 0, %v666
      %v668 = vrot.slane %v663, %v667
      %v670 = vmul.f32 %v537, %v668
      %v671 = vmul.f32 %v540, %v668
      %v672 = vmul.f32 %v545, %v668
      %v673 = vmul.f32 %v548, %v668
      %v674 = vmul.f32 %v553, %v668
      %v675 = vmul.f32 %v556, %v668
      %v676 = vmul.f32 %v561, %v668
      %v677 = vmul.f32 %v564, %v668
      %v678 = vmul.f32 %v569, %v668
      %v679 = vmul.f32 %v572, %v668
      %v680 = vmul.f32 %v577, %v668
      %v681 = vmul.f32 %v580, %v668
      %v682 = vmul.f32 %v585, %v668
      %v683 = vmul.f32 %v588, %v668
      %v684 = vmul.f32 %v593, %v668
      %v685 = vmul.f32 %v596, %v668
      %v686 = vmul.f32 %v601, %v668
      %v687 = vmul.f32 %v604, %v668
      %v688 = vmul.f32 %v609, %v668
      %v689 = vmul.f32 %v612, %v668
      %v690 = vmul.f32 %v617, %v668
      %v691 = vmul.f32 %v620, %v668
      %v692 = vmul.f32 %v625, %v668
      %v693 = vmul.f32 %v628, %v668
      %v694 = vmul.f32 %v633, %v668
      %v695 = vmul.f32 %v636, %v668
      %v696 = vmul.f32 %v641, %v668
      %v697 = vmul.f32 %v644, %v668
      %v698 = vmul.f32 %v649, %v668
      %v699 = vmul.f32 %v652, %v668
      %v700 = vmul.f32 %v657, %v668
      %v701 = vmul.f32 %v660, %v668
      %v702 = vld [vmem:[%s3] sm:$0x1]
      %v704 = vlaneseq
      %v705 = vshrl.u32 %v704, 7
      %v706 = vsub.s32 0, %v705
      %v707 = vrot.slane %v702, %v706
      %v709 = vadd.f32 %v670, %v707
      %v710 = vadd.f32 %v671, %v707
      %v711 = vadd.f32 %v672, %v707
      %v712 = vadd.f32 %v673, %v707
      %v713 = vadd.f32 %v674, %v707
      %v714 = vadd.f32 %v675, %v707
      %v715 = vadd.f32 %v676, %v707
      %v716 = vadd.f32 %v677, %v707
      %v717 = vadd.f32 %v678, %v707
      %v718 = vadd.f32 %v679, %v707
      %v719 = vadd.f32 %v680, %v707
      %v720 = vadd.f32 %v681, %v707
      %v721 = vadd.f32 %v682, %v707
      %v722 = vadd.f32 %v683, %v707
      %v723 = vadd.f32 %v684, %v707
      %v724 = vadd.f32 %v685, %v707
      %v725 = vadd.f32 %v686, %v707
      %v726 = vadd.f32 %v687, %v707
      %v727 = vadd.f32 %v688, %v707
      %v728 = vadd.f32 %v689, %v707
      %v729 = vadd.f32 %v690, %v707
      %v730 = vadd.f32 %v691, %v707
      %v731 = vadd.f32 %v692, %v707
      %v732 = vadd.f32 %v693, %v707
      %v733 = vadd.f32 %v694, %v707
      %v734 = vadd.f32 %v695, %v707
      %v735 = vadd.f32 %v696, %v707
      %v736 = vadd.f32 %v697, %v707
      %v737 = vadd.f32 %v698, %v707
      %v738 = vadd.f32 %v699, %v707
      %v739 = vadd.f32 %v700, %v707
      %v740 = vadd.f32 %v701, %v707
      %v741 = vmax.f32 %v709, 0.0
      %v742 = vmax.f32 %v710, 0.0
      %v743 = vmax.f32 %v711, 0.0
      %v744 = vmax.f32 %v712, 0.0
      %v745 = vmax.f32 %v713, 0.0
      %v746 = vmax.f32 %v714, 0.0
      %v747 = vmax.f32 %v715, 0.0
      %v748 = vmax.f32 %v716, 0.0
      %v749 = vmax.f32 %v717, 0.0
      %v750 = vmax.f32 %v718, 0.0
      %v751 = vmax.f32 %v719, 0.0
      %v752 = vmax.f32 %v720, 0.0
      %v753 = vmax.f32 %v721, 0.0
      %v754 = vmax.f32 %v722, 0.0
      %v755 = vmax.f32 %v723, 0.0
      %v756 = vmax.f32 %v724, 0.0
      %v757 = vmax.f32 %v725, 0.0
      %v758 = vmax.f32 %v726, 0.0
      %v759 = vmax.f32 %v727, 0.0
      %v760 = vmax.f32 %v728, 0.0
      %v761 = vmax.f32 %v729, 0.0
      %v762 = vmax.f32 %v730, 0.0
      %v763 = vmax.f32 %v731, 0.0
      %v764 = vmax.f32 %v732, 0.0
      %v765 = vmax.f32 %v733, 0.0
      %v766 = vmax.f32 %v734, 0.0
      %v767 = vmax.f32 %v735, 0.0
      %v768 = vmax.f32 %v736, 0.0
      %v769 = vmax.f32 %v737, 0.0
      %v770 = vmax.f32 %v738, 0.0
      %v771 = vmax.f32 %v739, 0.0
      %v772 = vmax.f32 %v740, 0.0
      %v773 = vpack.c.bf16 %v742, %v741
      %v774 = vpack.c.bf16 %v744, %v743
      %v775 = vpack.c.bf16 %v746, %v745
      %v776 = vpack.c.bf16 %v748, %v747
      %v777 = vpack.c.bf16 %v750, %v749
      %v778 = vpack.c.bf16 %v752, %v751
      %v779 = vpack.c.bf16 %v754, %v753
      %v780 = vpack.c.bf16 %v756, %v755
      %v781 = vpack.c.bf16 %v758, %v757
      %v782 = vpack.c.bf16 %v760, %v759
      %v783 = vpack.c.bf16 %v762, %v761
      %v784 = vpack.c.bf16 %v764, %v763
      %v785 = vpack.c.bf16 %v766, %v765
      %v786 = vpack.c.bf16 %v768, %v767
      %v787 = vpack.c.bf16 %v770, %v769
      %v788 = vpack.c.bf16 %v772, %v771
      %v805 = vunpack.c.l.b16 %v773
      %v806 = vunpack.c.h.b16 %v773
      %v807 = vunpack.c.l.b16 %v774
      %v808 = vunpack.c.h.b16 %v774
      %v809 = vunpack.c.l.b16 %v775
      %v810 = vunpack.c.h.b16 %v775
      %v811 = vunpack.c.l.b16 %v776
      %v812 = vunpack.c.h.b16 %v776
      %v813 = vunpack.c.l.b16 %v777
      %v814 = vunpack.c.h.b16 %v777
      %v815 = vunpack.c.l.b16 %v778
      %v816 = vunpack.c.h.b16 %v778
      %v817 = vunpack.c.l.b16 %v779
      %v818 = vunpack.c.h.b16 %v779
      %v819 = vunpack.c.l.b16 %v780
      %v820 = vunpack.c.h.b16 %v780
      %v821 = vunpack.c.l.b16 %v781
      %v822 = vunpack.c.h.b16 %v781
      %v823 = vunpack.c.l.b16 %v782
      %v824 = vunpack.c.h.b16 %v782
      %v825 = vunpack.c.l.b16 %v783
      %v826 = vunpack.c.h.b16 %v783
      %v827 = vunpack.c.l.b16 %v784
      %v828 = vunpack.c.h.b16 %v784
      %v829 = vunpack.c.l.b16 %v785
      %v830 = vunpack.c.h.b16 %v785
      %v831 = vunpack.c.l.b16 %v786
      %v832 = vunpack.c.h.b16 %v786
      %v833 = vunpack.c.l.b16 %v787
      %v834 = vunpack.c.h.b16 %v787
      %v835 = vunpack.c.l.b16 %v788
      %v836 = vunpack.c.h.b16 %v788
      %v837 = vpack.c.b16 %v805, %v805
      %v838 = vpack.c.b16 %v806, %v806
      %v839 = vpack.c.b16 %v807, %v807
      %v840 = vpack.c.b16 %v808, %v808
      %v841 = vpack.c.b16 %v809, %v809
      %v842 = vpack.c.b16 %v810, %v810
      %v843 = vpack.c.b16 %v811, %v811
      %v844 = vpack.c.b16 %v812, %v812
      %v845 = vpack.c.b16 %v813, %v813
      %v846 = vpack.c.b16 %v814, %v814
      %v847 = vpack.c.b16 %v815, %v815
      %v848 = vpack.c.b16 %v816, %v816
      %v849 = vpack.c.b16 %v817, %v817
      %v850 = vpack.c.b16 %v818, %v818
      %v851 = vpack.c.b16 %v819, %v819
      %v852 = vpack.c.b16 %v820, %v820
      %v853 = vpack.c.b16 %v821, %v821
      %v854 = vpack.c.b16 %v822, %v822
      %v855 = vpack.c.b16 %v823, %v823
      %v856 = vpack.c.b16 %v824, %v824
      %v857 = vpack.c.b16 %v825, %v825
      %v858 = vpack.c.b16 %v826, %v826
      %v859 = vpack.c.b16 %v827, %v827
      %v860 = vpack.c.b16 %v828, %v828
      %v861 = vpack.c.b16 %v829, %v829
      %v862 = vpack.c.b16 %v830, %v830
      %v863 = vpack.c.b16 %v831, %v831
      %v864 = vpack.c.b16 %v832, %v832
      %v865 = vpack.c.b16 %v833, %v833
      %v866 = vpack.c.b16 %v834, %v834
      %v867 = vpack.c.b16 %v835, %v835
      %v868 = vpack.c.b16 %v836, %v836
      %901 = vst [vmem:[%s202] sm:$0xf] %v837
      %902 = vst [vmem:[%s202 + $0x4] sm:$0xf] %v838
      %903 = vst [vmem:[%s202 + $0x8] sm:$0xf] %v839
      %904 = vst [vmem:[%s202 + $0xc] sm:$0xf] %v840
      %905 = vst [vmem:[%s202 + $0x10] sm:$0xf] %v841
      %906 = vst [vmem:[%s202 + $0x14] sm:$0xf] %v842
      %907 = vst [vmem:[%s202 + $0x18] sm:$0xf] %v843
      %908 = vst [vmem:[%s202 + $0x1c] sm:$0xf] %v844
      %909 = vst [vmem:[%s202 + $0x20] sm:$0xf] %v845
      %910 = vst [vmem:[%s202 + $0x24] sm:$0xf] %v846
      %911 = vst [vmem:[%s202 + $0x28] sm:$0xf] %v847
      %912 = vst [vmem:[%s202 + $0x2c] sm:$0xf] %v848
      %913 = vst [vmem:[%s202 + $0x30] sm:$0xf] %v849
      %914 = vst [vmem:[%s202 + $0x34] sm:$0xf] %v850
      %915 = vst [vmem:[%s202 + $0x38] sm:$0xf] %v851
      %916 = vst [vmem:[%s202 + $0x3c] sm:$0xf] %v852
      %917 = vst [vmem:[%s202 + $0x40] sm:$0xf] %v853
      %918 = vst [vmem:[%s202 + $0x44] sm:$0xf] %v854
      %919 = vst [vmem:[%s202 + $0x48] sm:$0xf] %v855
      %920 = vst [vmem:[%s202 + $0x4c] sm:$0xf] %v856
      %921 = vst [vmem:[%s202 + $0x50] sm:$0xf] %v857
      %922 = vst [vmem:[%s202 + $0x54] sm:$0xf] %v858
      %923 = vst [vmem:[%s202 + $0x58] sm:$0xf] %v859
      %924 = vst [vmem:[%s202 + $0x5c] sm:$0xf] %v860
      %925 = vst [vmem:[%s202 + $0x60] sm:$0xf] %v861
      %926 = vst [vmem:[%s202 + $0x64] sm:$0xf] %v862
      %927 = vst [vmem:[%s202 + $0x68] sm:$0xf] %v863
      %928 = vst [vmem:[%s202 + $0x6c] sm:$0xf] %v864
      %929 = vst [vmem:[%s202 + $0x70] sm:$0xf] %v865
      %930 = vst [vmem:[%s202 + $0x74] sm:$0xf] %v866
      %931 = vst [vmem:[%s202 + $0x78] sm:$0xf] %v867
      %932 = vst [vmem:[%s202 + $0x7c] sm:$0xf] %v868
      %s933 = smul.u32 32, %s15
      %p934 = scmp.lt.s32.totalorder %s933, 63
      %s935 = scalar_select %p934, %s933, 63
      %s936 = smul.addr %s935, 4
      %s937 = scalar_lea.vmem %s4, %s936
      // Predicated region
      $region37: #{unet_seq_forward.17} parent=35 // pred_check
        %p938 = pneg %p122
      $region38: #{unet_seq_forward.17} parent=35 // pred_check_branch
        %940 = sbr.rel (%p938) target = $region40
      $region39: #{unet_seq_forward.17} parent=35 // pred_region
        %s941 = smul.u32 32, %s15
      $region40: #{unet_seq_forward.17} parent=35 // pred_fallthru
        _
    $region36: #{unet_seq_forward.17} parent=5 // pred_fallthru
      _
    %p942 = scmp.le.s32.totalorder 2, %s10
    // Predicated region
    $region41: #{unet_seq_forward.17} parent=5 // pred_check
      %p943 = pneg %p942
    $region42: #{unet_seq_forward.17} parent=5 // pred_check_branch
      %945 = sbr.rel (%p943) target = $region44
    $region43: #{unet_seq_forward.17} parent=5 // pred_region
      %s946 = ssub.s32 %s10, 2
      // Predicated region
      $region45: #{unet_seq_forward.17} parent=43 // pred_check
        %p947 = pneg %p128
      $region46: #{unet_seq_forward.17} parent=43 // pred_check_branch
        %949 = sbr.rel (%p947) target = $region48
      $region47: #{unet_seq_forward.17} parent=43 // pred_region
        %s950 = smul.u32 32, %s16
        %p951 = scmp.lt.s32.totalorder %s950, 63
        %s952 = scalar_select %p951, %s950, 63
        %s953 = smul.addr %s952, 4
        %s954 = scalar_lea.vmem %s4, %s953
      $region48: #{unet_seq_forward.17} parent=43 // pred_fallthru
        _
    $region44: #{unet_seq_forward.17} parent=5 // pred_fallthru
      _
  $region6: #{unet_seq_forward.17} parent=0 // loop_footer
    %s14 = sadd.s32 1, %s10
  $region7: #{unet_seq_forward.17} parent=0 // loop_footer_branch
    %9 = sbr.rel target = $region3
  $region8: #{unet_seq_forward.17} parent=0 // loop_exit
    _

// kernel: unet_seq_forward.18
$region0: #{unet_seq_forward.18}
  #allocation0 [shape = 'u32[]', space=smem, size = 0x4, offset = 0x4, fixed_abs, tag = 'smem constant byte address 0x4 - core index']
  #allocation1 [shape = 'u32[144,128]{1,0:T(1,128)}', space=vmem, size = 0x12000, scoped, tag = 'internal scratch']
  %s0 = inlined_call_operand.vmem [shape: bf16[2048,144], index: 0, kind: input, shape index: {}]
  %s1 = inlined_call_operand.vmem [shape: bf16[144,128], index: 1, kind: input, shape index: {}]
  %s2 = inlined_call_operand.vmem [shape: f32[1,128], index: 2, kind: input, shape index: {}]
  %s3 = inlined_call_operand.vmem [shape: f32[1,128], index: 3, kind: input, shape index: {}]
  %s4 = inlined_call_operand.vmem [shape: bf16[2048,128], index: 4, kind: output, shape index: {}]
  %s5 = sld [smem:[#allocation0]]
  $region49: #{unet_seq_forward.18} parent=0
    _
  %s7 = ssub.s32 1, %s5
  %s8 = scalar_select 0, %s7, %s5
  loop: start=0, step=1, limit=6
  $region2: #{unet_seq_forward.18} parent=0 // loop_pre_header
    _
  $region3: #{unet_seq_forward.18} parent=0 // loop_header
    %s10 = sphi 0, %s14
    %p11 = scmp.ge.s32.totalorder %s10, 6
    %s20 = sphi 0, %s22
    %s23 = sphi 0, %s20
    %s24 = sphi 0, %s23
    %s40 = sphi 0, %s24
    %s44 = sphi 0, %s44
    %s46 = sphi 0, %s44
    %s47 = sphi 0, %s46
    %s61 = sphi 0, %s47
    %s65 = sphi 0, %s65
    %s67 = sphi 0, %s65
    %s68 = sphi 0, %s67
    %s82 = sphi 0, %s68
    %s86 = sphi 0, %s86
    %s88 = sphi 0, %s86
    %s89 = sphi 0, %s88
    %s103 = sphi 0, %s89
    %s109 = sphi 0, %s111
    %s112 = sphi 0, %s109
    %s113 = sphi 0, %s112
    %s129 = sphi 0, %s113
  $region4: #{unet_seq_forward.18} parent=0 // loop_header_branch
    %13 = sbr.rel (%p11) target = $region8
  $region5: #{unet_seq_forward.18} parent=0 // loop_body
    %s15 = ssub.s32 %s10, 1
    %s16 = ssub.s32 %s10, 2
    %s17 = sadd.s32 %s10, 1
    %s18 = ssub.s32 %s10, %s17
    %p19 = scmp.eq.s32.totalorder %s18, 0
    %s21 = sadd.s32 %s20, 1
    %s22 = scalar_select %p19, %s20, %s21
    %p25 = pneg %p19
    %p26 = scmp.eq.s32.totalorder %s10, 3
    %p27 = por %p25, %p26
    %p28 = scmp.ne.s32.totalorder %s20, %s23
    %p29 = scmp.eq.s32.totalorder %s10, 0
    %p30 = por %p28, %p29
    %p31 = scmp.ne.s32.totalorder %s20, %s23
    %p32 = scmp.eq.s32.totalorder %s15, 3
    %p33 = por %p31, %p32
    %p34 = scmp.ne.s32.totalorder %s23, %s24
    %p35 = scmp.eq.s32.totalorder %s15, 0
    %p36 = por %p34, %p35
    %p37 = scmp.ne.s32.totalorder %s23, %s24
    %p38 = scmp.eq.s32.totalorder %s16, 3
    %p39 = por %p37, %p38
    %p41 = scmp.ne.s32.totalorder %s24, %s40
    %p42 = scmp.eq.s32.totalorder %s16, 0
    %p43 = por %p41, %p42
    %s45 = sadd.s32 %s44, 1
    %p48 = scmp.eq.s32.totalorder %s10, 3
    %p49 = scmp.ne.s32.totalorder %s44, %s46
    %p50 = scmp.eq.s32.totalorder %s10, 0
    %p51 = por %p49, %p50
    %p52 = scmp.ne.s32.totalorder %s44, %s46
    %p53 = scmp.eq.s32.totalorder %s15, 3
    %p54 = por %p52, %p53
    %p55 = scmp.ne.s32.totalorder %s46, %s47
    %p56 = scmp.eq.s32.totalorder %s15, 0
    %p57 = por %p55, %p56
    %p58 = scmp.ne.s32.totalorder %s46, %s47
    %p59 = scmp.eq.s32.totalorder %s16, 3
    %p60 = por %p58, %p59
    %p62 = scmp.ne.s32.totalorder %s47, %s61
    %p63 = scmp.eq.s32.totalorder %s16, 0
    %p64 = por %p62, %p63
    %s66 = sadd.s32 %s65, 1
    %p69 = scmp.eq.s32.totalorder %s10, 3
    %p70 = scmp.ne.s32.totalorder %s65, %s67
    %p71 = scmp.eq.s32.totalorder %s10, 0
    %p72 = por %p70, %p71
    %p73 = scmp.ne.s32.totalorder %s65, %s67
    %p74 = scmp.eq.s32.totalorder %s15, 3
    %p75 = por %p73, %p74
    %p76 = scmp.ne.s32.totalorder %s67, %s68
    %p77 = scmp.eq.s32.totalorder %s15, 0
    %p78 = por %p76, %p77
    %p79 = scmp.ne.s32.totalorder %s67, %s68
    %p80 = scmp.eq.s32.totalorder %s16, 3
    %p81 = por %p79, %p80
    %p83 = scmp.ne.s32.totalorder %s68, %s82
    %p84 = scmp.eq.s32.totalorder %s16, 0
    %p85 = por %p83, %p84
    %s87 = sadd.s32 %s86, 1
    %p90 = scmp.eq.s32.totalorder %s10, 3
    %p91 = scmp.ne.s32.totalorder %s86, %s88
    %p92 = scmp.eq.s32.totalorder %s10, 0
    %p93 = por %p91, %p92
    %p94 = scmp.ne.s32.totalorder %s86, %s88
    %p95 = scmp.eq.s32.totalorder %s15, 3
    %p96 = por %p94, %p95
    %p97 = scmp.ne.s32.totalorder %s88, %s89
    %p98 = scmp.eq.s32.totalorder %s15, 0
    %p99 = por %p97, %p98
    %p100 = scmp.ne.s32.totalorder %s88, %s89
    %p101 = scmp.eq.s32.totalorder %s16, 3
    %p102 = por %p100, %p101
    %p104 = scmp.ne.s32.totalorder %s89, %s103
    %p105 = scmp.eq.s32.totalorder %s16, 0
    %p106 = por %p104, %p105
    %s107 = ssub.s32 %s10, %s17
    %p108 = scmp.eq.s32.totalorder %s107, 0
    %s110 = sadd.s32 %s109, 1
    %s111 = scalar_select %p108, %s109, %s110
    %p114 = pneg %p108
    %p115 = scmp.eq.s32.totalorder %s10, 3
    %p116 = por %p114, %p115
    %p117 = scmp.ne.s32.totalorder %s109, %s112
    %p118 = scmp.eq.s32.totalorder %s10, 0
    %p119 = por %p117, %p118
    %p120 = scmp.ne.s32.totalorder %s109, %s112
    %p121 = scmp.eq.s32.totalorder %s15, 3
    %p122 = por %p120, %p121
    %p123 = scmp.ne.s32.totalorder %s112, %s113
    %p124 = scmp.eq.s32.totalorder %s15, 0
    %p125 = por %p123, %p124
    %p126 = scmp.ne.s32.totalorder %s112, %s113
    %p127 = scmp.eq.s32.totalorder %s16, 3
    %p128 = por %p126, %p127
    %p130 = scmp.ne.s32.totalorder %s113, %s129
    %p131 = scmp.eq.s32.totalorder %s16, 0
    %p132 = por %p130, %p131
    %p133 = scmp.le.s32.totalorder 1, %s10
    %p134 = scmp.lt.s32.totalorder %s10, 5
    %p135 = pnand %p133, %p134
    %p136 = pneg %p135
    // Predicated region
    $region9: #{unet_seq_forward.18} parent=5 // pred_check
      _
    $region10: #{unet_seq_forward.18} parent=5 // pred_check_branch
      %138 = sbr.rel (%p135) target = $region12
    $region11: #{unet_seq_forward.18} parent=5 // pred_region
      %s139 = ssub.s32 %s10, 1
      // Predicated region
      $region13: #{unet_seq_forward.18} parent=11 // pred_check
        %p140 = pneg %p57
      $region14: #{unet_seq_forward.18} parent=11 // pred_check_branch
        %142 = sbr.rel (%p140) target = $region16
      $region15: #{unet_seq_forward.18} parent=11 // pred_region
        _
      $region16: #{unet_seq_forward.18} parent=11 // pred_fallthru
        _
      // Predicated region
      $region17: #{unet_seq_forward.18} parent=11 // pred_check
        %p143 = pneg %p78
      $region18: #{unet_seq_forward.18} parent=11 // pred_check_branch
        %145 = sbr.rel (%p143) target = $region20
      $region19: #{unet_seq_forward.18} parent=11 // pred_region
        _
      $region20: #{unet_seq_forward.18} parent=11 // pred_fallthru
        _
      // Predicated region
      $region21: #{unet_seq_forward.18} parent=11 // pred_check
        %p146 = pneg %p99
      $region22: #{unet_seq_forward.18} parent=11 // pred_check_branch
        %148 = sbr.rel (%p146) target = $region24
      $region23: #{unet_seq_forward.18} parent=11 // pred_region
        _
      $region24: #{unet_seq_forward.18} parent=11 // pred_fallthru
        _
    $region12: #{unet_seq_forward.18} parent=5 // pred_fallthru
      _
    %p149 = scmp.lt.s32.totalorder %s10, 4
    // Predicated region
    $region25: #{unet_seq_forward.18} parent=5 // pred_check
      %p150 = pneg %p149
    $region26: #{unet_seq_forward.18} parent=5 // pred_check_branch
      %152 = sbr.rel (%p150) target = $region28
    $region27: #{unet_seq_forward.18} parent=5 // pred_region
      // Predicated region
      $region29: #{unet_seq_forward.18} parent=27 // pred_check
        %p153 = pneg %p30
      $region30: #{unet_seq_forward.18} parent=27 // pred_check_branch
        %155 = sbr.rel (%p153) target = $region32
      $region31: #{unet_seq_forward.18} parent=27 // pred_region
        %s156 = smul.u32 64, %s10
        %p157 = scmp.lt.s32.totalorder %s156, 255
        %s158 = scalar_select %p157, %s156, 255
        %s159 = smul.addr %s158, 2
        %s160 = smul.addr %s159, 4
        %s161 = scalar_lea.vmem %s0, %s160
        %s162 = smul.u32 64, %s10
      $region32: #{unet_seq_forward.18} parent=27 // pred_fallthru
        _
    $region28: #{unet_seq_forward.18} parent=5 // pred_fallthru
      _
    %p163 = scmp.le.s32.totalorder 1, %s10
    %p164 = scmp.lt.s32.totalorder %s10, 5
    %p165 = pnand %p163, %p164
    %p166 = pneg %p165
    // Predicated region
    $region33: #{unet_seq_forward.18} parent=5 // pred_check
      _
    $region34: #{unet_seq_forward.18} parent=5 // pred_check_branch
      %168 = sbr.rel (%p165) target = $region36
    $region35: #{unet_seq_forward.18} parent=5 // pred_region
      %s169 = ssub.s32 %s10, 1
      %s170 = smul.u32 64, %s15
      %p171 = scmp.lt.s32.totalorder %s170, 255
      %s172 = scalar_select %p171, %s170, 255
      %s173 = smul.addr %s172, 2
      %s174 = smul.addr %s173, 4
      %s175 = scalar_lea.vmem %s0, %s174
      %p176 = pneg %p36
      %p177 = pneg %p33
      %p178 = pneg %p57
      %p179 = pneg %p54
      %p180 = pneg %p78
      %p181 = pneg %p75
      %p182 = pneg %p99
      %p183 = pneg %p96
      %p184 = pneg %p125
      %p185 = pneg %p122
      %s186 = smul.u32 64, %s15
      %p187 = scmp.lt.s32.totalorder %s186, 255
      %s188 = scalar_select %p187, %s186, 255
      %s189 = smul.addr %s188, 4
      %s190 = scalar_lea.vmem %s4, %s189
      %s191 = smul.u32 64, %s15
      %p192 = scmp.lt.s32.totalorder %s191, 255
      %s193 = scalar_select %p192, %s191, 255
      %s194 = smul.addr %s193, 2
      %s195 = smul.addr %s194, 4
      %s196 = scalar_lea.vmem %s0, %s195
      %s197 = smul.u32 64, %s15
      %s198 = smul.u32 64, %s15
      %p199 = scmp.lt.s32.totalorder %s198, 255
      %s200 = scalar_select %p199, %s198, 255
      %s201 = smul.addr %s200, 4
      %s202 = scalar_lea.vmem %s4, %s201
      %s203 = smul.u32 64, %s15
      %v205 = vld [vmem:[%s196] sm:$0xff]
      %v206 = vld [vmem:[%s196 + $0x8] sm:$0xff]
      %v207 = vld [vmem:[%s196 + $0x10] sm:$0xff]
      %v208 = vld [vmem:[%s196 + $0x18] sm:$0xff]
      %v209 = vld [vmem:[%s196 + $0x20] sm:$0xff]
      %v210 = vld [vmem:[%s196 + $0x28] sm:$0xff]
      %v211 = vld [vmem:[%s196 + $0x30] sm:$0xff]
      %v212 = vld [vmem:[%s196 + $0x38] sm:$0xff]
      %v213 = vld [vmem:[%s196 + $0x40] sm:$0xff]
      %v214 = vld [vmem:[%s196 + $0x48] sm:$0xff]
      %v215 = vld [vmem:[%s196 + $0x50] sm:$0xff]
      %v216 = vld [vmem:[%s196 + $0x58] sm:$0xff]
      %v217 = vld [vmem:[%s196 + $0x60] sm:$0xff]
      %v218 = vld [vmem:[%s196 + $0x68] sm:$0xff]
      %v219 = vld [vmem:[%s196 + $0x70] sm:$0xff]
      %v220 = vld [vmem:[%s196 + $0x78] sm:$0xff]
      %v221 = vld [vmem:[%s196 + $0x80] sm:$0xff]
      %v222 = vld [vmem:[%s196 + $0x88] sm:$0xff]
      %v223 = vld [vmem:[%s196 + $0x90] sm:$0xff]
      %v224 = vld [vmem:[%s196 + $0x98] sm:$0xff]
      %v225 = vld [vmem:[%s196 + $0xa0] sm:$0xff]
      %v226 = vld [vmem:[%s196 + $0xa8] sm:$0xff]
      %v227 = vld [vmem:[%s196 + $0xb0] sm:$0xff]
      %v228 = vld [vmem:[%s196 + $0xb8] sm:$0xff]
      %v229 = vld [vmem:[%s196 + $0xc0] sm:$0xff]
      %v230 = vld [vmem:[%s196 + $0xc8] sm:$0xff]
      %v231 = vld [vmem:[%s196 + $0xd0] sm:$0xff]
      %v232 = vld [vmem:[%s196 + $0xd8] sm:$0xff]
      %v233 = vld [vmem:[%s196 + $0xe0] sm:$0xff]
      %v234 = vld [vmem:[%s196 + $0xe8] sm:$0xff]
      %v235 = vld [vmem:[%s196 + $0xf0] sm:$0xff]
      %v236 = vld [vmem:[%s196 + $0xf8] sm:$0xff]
      %v237 = vld [vmem:[%s196 + $0x100] sm:$0xff]
      %v238 = vld [vmem:[%s196 + $0x108] sm:$0xff]
      %v239 = vld [vmem:[%s196 + $0x110] sm:$0xff]
      %v240 = vld [vmem:[%s196 + $0x118] sm:$0xff]
      %v241 = vld [vmem:[%s196 + $0x120] sm:$0xff]
      %v242 = vld [vmem:[%s196 + $0x128] sm:$0xff]
      %v243 = vld [vmem:[%s196 + $0x130] sm:$0xff]
      %v244 = vld [vmem:[%s196 + $0x138] sm:$0xff]
      %v245 = vld [vmem:[%s196 + $0x140] sm:$0xff]
      %v246 = vld [vmem:[%s196 + $0x148] sm:$0xff]
      %v247 = vld [vmem:[%s196 + $0x150] sm:$0xff]
      %v248 = vld [vmem:[%s196 + $0x158] sm:$0xff]
      %v249 = vld [vmem:[%s196 + $0x160] sm:$0xff]
      %v250 = vld [vmem:[%s196 + $0x168] sm:$0xff]
      %v251 = vld [vmem:[%s196 + $0x170] sm:$0xff]
      %v252 = vld [vmem:[%s196 + $0x178] sm:$0xff]
      %v253 = vld [vmem:[%s196 + $0x180] sm:$0xff]
      %v254 = vld [vmem:[%s196 + $0x188] sm:$0xff]
      %v255 = vld [vmem:[%s196 + $0x190] sm:$0xff]
      %v256 = vld [vmem:[%s196 + $0x198] sm:$0xff]
      %v257 = vld [vmem:[%s196 + $0x1a0] sm:$0xff]
      %v258 = vld [vmem:[%s196 + $0x1a8] sm:$0xff]
      %v259 = vld [vmem:[%s196 + $0x1b0] sm:$0xff]
      %v260 = vld [vmem:[%s196 + $0x1b8] sm:$0xff]
      %v261 = vld [vmem:[%s196 + $0x1c0] sm:$0xff]
      %v262 = vld [vmem:[%s196 + $0x1c8] sm:$0xff]
      %v263 = vld [vmem:[%s196 + $0x1d0] sm:$0xff]
      %v264 = vld [vmem:[%s196 + $0x1d8] sm:$0xff]
      %v265 = vld [vmem:[%s196 + $0x1e0] sm:$0xff]
      %v266 = vld [vmem:[%s196 + $0x1e8] sm:$0xff]
      %v267 = vld [vmem:[%s196 + $0x1f0] sm:$0xff]
      %v268 = vld [vmem:[%s196 + $0x1f8] sm:$0xff]
      %v269 = vld [vmem:[%s1] sm:$0xf]
      %v270 = vld [vmem:[%s1 + $0x4] sm:$0xf]
      %v271 = vld [vmem:[%s1 + $0x8] sm:$0xf]
      %v272 = vld [vmem:[%s1 + $0xc] sm:$0xf]
      %v273 = vld [vmem:[%s1 + $0x10] sm:$0xf]
      %v274 = vld [vmem:[%s1 + $0x14] sm:$0xf]
      %v275 = vld [vmem:[%s1 + $0x18] sm:$0xf]
      %v276 = vld [vmem:[%s1 + $0x1c] sm:$0xf]
      %v277 = vld [vmem:[%s1 + $0x20] sm:$0xf]
      %v278 = vld [vmem:[%s1 + $0x24] sm:$0xf]
      %v279 = vld [vmem:[%s1 + $0x28] sm:$0xf]
      %v280 = vld [vmem:[%s1 + $0x2c] sm:$0xf]
      %v281 = vld [vmem:[%s1 + $0x30] sm:$0xf]
      %v282 = vld [vmem:[%s1 + $0x34] sm:$0xf]
      %v283 = vld [vmem:[%s1 + $0x38] sm:$0xf]
      %v284 = vld [vmem:[%s1 + $0x3c] sm:$0xf]
      %v285 = vld [vmem:[%s1 + $0x40] sm:$0xf]
      %v286 = vld [vmem:[%s1 + $0x44] sm:$0xf]
      %v351 = vunpack.c.l.b16 %v205
      %v352 = vunpack.c.h.b16 %v205
      %v353 = vunpack.c.l.b16 %v206
      %v354 = vunpack.c.h.b16 %v206
      %v355 = vunpack.c.l.b16 %v207
      %v356 = vunpack.c.h.b16 %v207
      %v357 = vunpack.c.l.b16 %v208
      %v358 = vunpack.c.h.b16 %v208
      %v359 = vunpack.c.l.b16 %v209
      %v360 = vunpack.c.h.b16 %v209
      %v361 = vunpack.c.l.b16 %v210
      %v362 = vunpack.c.h.b16 %v210
      %v363 = vunpack.c.l.b16 %v211
      %v364 = vunpack.c.h.b16 %v211
      %v365 = vunpack.c.l.b16 %v212
      %v366 = vunpack.c.h.b16 %v212
      %v367 = vunpack.c.l.b16 %v213
      %v368 = vunpack.c.h.b16 %v213
      %v369 = vunpack.c.l.b16 %v214
      %v370 = vunpack.c.h.b16 %v214
      %v371 = vunpack.c.l.b16 %v215
      %v372 = vunpack.c.h.b16 %v215
      %v373 = vunpack.c.l.b16 %v216
      %v374 = vunpack.c.h.b16 %v216
      %v375 = vunpack.c.l.b16 %v217
      %v376 = vunpack.c.h.b16 %v217
      %v377 = vunpack.c.l.b16 %v218
      %v378 = vunpack.c.h.b16 %v218
      %v379 = vunpack.c.l.b16 %v219
      %v380 = vunpack.c.h.b16 %v219
      %v381 = vunpack.c.l.b16 %v220
      %v382 = vunpack.c.h.b16 %v220
      %v383 = vunpack.c.l.b16 %v221
      %v384 = vunpack.c.h.b16 %v221
      %v385 = vunpack.c.l.b16 %v222
      %v386 = vunpack.c.h.b16 %v222
      %v387 = vunpack.c.l.b16 %v223
      %v388 = vunpack.c.h.b16 %v223
      %v389 = vunpack.c.l.b16 %v224
      %v390 = vunpack.c.h.b16 %v224
      %v391 = vunpack.c.l.b16 %v225
      %v392 = vunpack.c.h.b16 %v225
      %v393 = vunpack.c.l.b16 %v226
      %v394 = vunpack.c.h.b16 %v226
      %v395 = vunpack.c.l.b16 %v227
      %v396 = vunpack.c.h.b16 %v227
      %v397 = vunpack.c.l.b16 %v228
      %v398 = vunpack.c.h.b16 %v228
      %v399 = vunpack.c.l.b16 %v229
      %v400 = vunpack.c.h.b16 %v229
      %v401 = vunpack.c.l.b16 %v230
      %v402 = vunpack.c.h.b16 %v230
      %v403 = vunpack.c.l.b16 %v231
      %v404 = vunpack.c.h.b16 %v231
      %v405 = vunpack.c.l.b16 %v232
      %v406 = vunpack.c.h.b16 %v232
      %v407 = vunpack.c.l.b16 %v233
      %v408 = vunpack.c.h.b16 %v233
      %v409 = vunpack.c.l.b16 %v234
      %v410 = vunpack.c.h.b16 %v234
      %v411 = vunpack.c.l.b16 %v235
      %v412 = vunpack.c.h.b16 %v235
      %v413 = vunpack.c.l.b16 %v236
      %v414 = vunpack.c.h.b16 %v236
      %v415 = vunpack.c.l.b16 %v237
      %v416 = vunpack.c.h.b16 %v237
      %v417 = vunpack.c.l.b16 %v238
      %v418 = vunpack.c.h.b16 %v238
      %v419 = vunpack.c.l.b16 %v239
      %v420 = vunpack.c.h.b16 %v239
      %v421 = vunpack.c.l.b16 %v240
      %v422 = vunpack.c.h.b16 %v240
      %v423 = vunpack.c.l.b16 %v241
      %v424 = vunpack.c.h.b16 %v241
      %v425 = vunpack.c.l.b16 %v242
      %v426 = vunpack.c.h.b16 %v242
      %v427 = vunpack.c.l.b16 %v243
      %v428 = vunpack.c.h.b16 %v243
      %v429 = vunpack.c.l.b16 %v244
      %v430 = vunpack.c.h.b16 %v244
      %v431 = vunpack.c.l.b16 %v245
      %v432 = vunpack.c.h.b16 %v245
      %v433 = vunpack.c.l.b16 %v246
      %v434 = vunpack.c.h.b16 %v246
      %v435 = vunpack.c.l.b16 %v247
      %v436 = vunpack.c.h.b16 %v247
      %v437 = vunpack.c.l.b16 %v248
      %v438 = vunpack.c.h.b16 %v248
      %v439 = vunpack.c.l.b16 %v249
      %v440 = vunpack.c.h.b16 %v249
      %v441 = vunpack.c.l.b16 %v250
      %v442 = vunpack.c.h.b16 %v250
      %v443 = vunpack.c.l.b16 %v251
      %v444 = vunpack.c.h.b16 %v251
      %v445 = vunpack.c.l.b16 %v252
      %v446 = vunpack.c.h.b16 %v252
      %v447 = vunpack.c.l.b16 %v253
      %v448 = vunpack.c.h.b16 %v253
      %v449 = vunpack.c.l.b16 %v254
      %v450 = vunpack.c.h.b16 %v254
      %v451 = vunpack.c.l.b16 %v255
      %v452 = vunpack.c.h.b16 %v255
      %v453 = vunpack.c.l.b16 %v256
      %v454 = vunpack.c.h.b16 %v256
      %v455 = vunpack.c.l.b16 %v257
      %v456 = vunpack.c.h.b16 %v257
      %v457 = vunpack.c.l.b16 %v258
      %v458 = vunpack.c.h.b16 %v258
      %v459 = vunpack.c.l.b16 %v259
      %v460 = vunpack.c.h.b16 %v259
      %v461 = vunpack.c.l.b16 %v260
      %v462 = vunpack.c.h.b16 %v260
      %v463 = vunpack.c.l.b16 %v261
      %v464 = vunpack.c.h.b16 %v261
      %v465 = vunpack.c.l.b16 %v262
      %v466 = vunpack.c.h.b16 %v262
      %v467 = vunpack.c.l.b16 %v263
      %v468 = vunpack.c.h.b16 %v263
      %v469 = vunpack.c.l.b16 %v264
      %v470 = vunpack.c.h.b16 %v264
      %v471 = vunpack.c.l.b16 %v265
      %v472 = vunpack.c.h.b16 %v265
      %v473 = vunpack.c.l.b16 %v266
      %v474 = vunpack.c.h.b16 %v266
      %v475 = vunpack.c.l.b16 %v267
      %v476 = vunpack.c.h.b16 %v267
      %v477 = vunpack.c.l.b16 %v268
      %v478 = vunpack.c.h.b16 %v268
      %v479 = vpack.c.b16 %v353, %v351
      %v480 = vpack.c.b16 %v354, %v352
      %v481 = vpack.c.b16 %v357, %v355
      %v482 = vpack.c.b16 %v358, %v356
      %v483 = vpack.c.b16 %v361, %v359
      %v484 = vpack.c.b16 %v362, %v360
      %v485 = vpack.c.b16 %v365, %v363
      %v486 = vpack.c.b16 %v366, %v364
      %v487 = vpack.c.b16 %v369, %v367
      %v488 = vpack.c.b16 %v370, %v368
      %v489 = vpack.c.b16 %v373, %v371
      %v490 = vpack.c.b16 %v374, %v372
      %v491 = vpack.c.b16 %v377, %v375
      %v492 = vpack.c.b16 %v378, %v376
      %v493 = vpack.c.b16 %v381, %v379
      %v494 = vpack.c.b16 %v382, %v380
      %v495 = vpack.c.b16 %v385, %v383
      %v496 = vpack.c.b16 %v386, %v384
      %v497 = vpack.c.b16 %v389, %v387
      %v498 = vpack.c.b16 %v390, %v388
      %v499 = vpack.c.b16 %v393, %v391
      %v500 = vpack.c.b16 %v394, %v392
      %v501 = vpack.c.b16 %v397, %v395
      %v502 = vpack.c.b16 %v398, %v396
      %v503 = vpack.c.b16 %v401, %v399
      %v504 = vpack.c.b16 %v402, %v400
      %v505 = vpack.c.b16 %v405, %v403
      %v506 = vpack.c.b16 %v406, %v404
      %v507 = vpack.c.b16 %v409, %v407
      %v508 = vpack.c.b16 %v410, %v408
      %v509 = vpack.c.b16 %v413, %v411
      %v510 = vpack.c.b16 %v414, %v412
      %v511 = vpack.c.b16 %v417, %v415
      %v512 = vpack.c.b16 %v418, %v416
      %v513 = vpack.c.b16 %v421, %v419
      %v514 = vpack.c.b16 %v422, %v420
      %v515 = vpack.c.b16 %v425, %v423
      %v516 = vpack.c.b16 %v426, %v424
      %v517 = vpack.c.b16 %v429, %v427
      %v518 = vpack.c.b16 %v430, %v428
      %v519 = vpack.c.b16 %v433, %v431
      %v520 = vpack.c.b16 %v434, %v432
      %v521 = vpack.c.b16 %v437, %v435
      %v522 = vpack.c.b16 %v438, %v436
      %v523 = vpack.c.b16 %v441, %v439
      %v524 = vpack.c.b16 %v442, %v440
      %v525 = vpack.c.b16 %v445, %v443
      %v526 = vpack.c.b16 %v446, %v444
      %v527 = vpack.c.b16 %v449, %v447
      %v528 = vpack.c.b16 %v450, %v448
      %v529 = vpack.c.b16 %v453, %v451
      %v530 = vpack.c.b16 %v454, %v452
      %v531 = vpack.c.b16 %v457, %v455
      %v532 = vpack.c.b16 %v458, %v456
      %v533 = vpack.c.b16 %v461, %v459
      %v534 = vpack.c.b16 %v462, %v460
      %v535 = vpack.c.b16 %v465, %v463
      %v536 = vpack.c.b16 %v466, %v464
      %v537 = vpack.c.b16 %v469, %v467
      %v538 = vpack.c.b16 %v470, %v468
      %v539 = vpack.c.b16 %v473, %v471
      %v540 = vpack.c.b16 %v474, %v472
      %v541 = vpack.c.b16 %v477, %v475
      %v542 = vpack.c.b16 %v478, %v476
      %v593 = vunpack.c.l.b16 %v269
      %v594 = vunpack.c.l.b16 %v270
      %v595 = vunpack.c.l.b16 %v271
      %v596 = vunpack.c.l.b16 %v272
      %v597 = vunpack.c.l.b16 %v273
      %v598 = vunpack.c.l.b16 %v274
      %v599 = vunpack.c.l.b16 %v275
      %v600 = vunpack.c.l.b16 %v276
      %v601 = vunpack.c.l.b16 %v277
      %v602 = vunpack.c.l.b16 %v278
      %v603 = vunpack.c.l.b16 %v279
      %v604 = vunpack.c.l.b16 %v280
      %v605 = vunpack.c.l.b16 %v281
      %v606 = vunpack.c.l.b16 %v282
      %v607 = vunpack.c.l.b16 %v283
      %v608 = vunpack.c.l.b16 %v284
      %v609 = vunpack.c.l.b16 %v285
      %v610 = vunpack.c.l.b16 %v286
      %v611 = vpack.c.b16 %v594, %v593
      %v612 = vpack.c.b16 %v596, %v595
      %v613 = vpack.c.b16 %v598, %v597
      %v614 = vpack.c.b16 %v600, %v599
      %v615 = vpack.c.b16 %v602, %v601
      %v616 = vpack.c.b16 %v604, %v603
      %v617 = vpack.c.b16 %v606, %v605
      %v618 = vpack.c.b16 %v608, %v607
      %v619 = vpack.c.b16 %v610, %v609
      %vm629 = vcmask 130048
      %v631 = vsel %vm629, %v480, 0
      %v634 = vsel %vm629, %v482, 0
      %v637 = vsel %vm629, %v484, 0
      %v640 = vsel %vm629, %v486, 0
      %v643 = vsel %vm629, %v488, 0
      %v646 = vsel %vm629, %v490, 0
      %v649 = vsel %vm629, %v492, 0
      %v652 = vsel %vm629, %v494, 0
      %v655 = vsel %vm629, %v496, 0
      %v658 = vsel %vm629, %v498, 0
      %v661 = vsel %vm629, %v500, 0
      %v664 = vsel %vm629, %v502, 0
      %v667 = vsel %vm629, %v504, 0
      %v670 = vsel %vm629, %v506, 0
      %v673 = vsel %vm629, %v508, 0
      %v676 = vsel %vm629, %v510, 0
      %v679 = vsel %vm629, %v512, 0
      %v682 = vsel %vm629, %v514, 0
      %v685 = vsel %vm629, %v516, 0
      %v688 = vsel %vm629, %v518, 0
      %v691 = vsel %vm629, %v520, 0
      %v694 = vsel %vm629, %v522, 0
      %v697 = vsel %vm629, %v524, 0
      %v700 = vsel %vm629, %v526, 0
      %v703 = vsel %vm629, %v528, 0
      %v706 = vsel %vm629, %v530, 0
      %v709 = vsel %vm629, %v532, 0
      %v712 = vsel %vm629, %v534, 0
      %v715 = vsel %vm629, %v536, 0
      %v718 = vsel %vm629, %v538, 0
      %v721 = vsel %vm629, %v540, 0
      %v724 = vsel %vm629, %v542, 0
      %726 = vmatprep.subr.bf16.mxu0 0
      %727 = vmatpush1.bf16.msra.mxu0 %v618
      %728 = vmatprep.subr.bf16.mxu0 0
      %729 = vmatpush1.bf16.msra.mxu0 %v617
      %730 = vmatprep.subr.bf16.mxu0 0
      %731 = vmatpush1.bf16.msra.mxu0 %v616
      %732 = vmatprep.subr.bf16.mxu0 0
      %733 = vmatpush1.bf16.msra.mxu0 %v615
      %734 = vmatprep.subr.bf16.mxu0 0
      %735 = vmatpush1.bf16.msra.mxu0 %v614
      %736 = vmatprep.subr.bf16.mxu0 0
      %737 = vmatpush1.bf16.msra.mxu0 %v613
      %738 = vmatprep.subr.bf16.mxu0 0
      %739 = vmatpush1.bf16.msra.mxu0 %v612
      %740 = vmatprep.subr.bf16.mxu0 0
      %741 = vmatpush1.bf16.msra.mxu0 %v611
      %742 = vmatprep.subr.bf16.mxu0 0
      %743 = vmatpush2.bf16.msra.mxu0 0
      %744 = vmatprep.subr.bf16.mxu0 0
      %745 = vmatpush2.bf16.msra.mxu0 0
      %746 = vmatprep.subr.bf16.mxu0 0
      %747 = vmatpush2.bf16.msra.mxu0 0
      %748 = vmatprep.subr.bf16.mxu0 0
      %749 = vmatpush2.bf16.msra.mxu0 0
      %750 = vmatprep.subr.bf16.mxu0 0
      %751 = vmatpush2.bf16.msra.mxu0 0
      %752 = vmatprep.subr.bf16.mxu0 0
      %753 = vmatpush2.bf16.msra.mxu0 0
      %754 = vmatprep.subr.bf16.mxu0 0
      %755 = vmatpush2.bf16.msra.mxu0 0
      %756 = vmatprep.subr.bf16.mxu0 0
      %757 = vmatpush2.bf16.msra.mxu0 %v619
      %758 = vmatprep.mubr.bf16.mxu0 %v631
      %759 = vmatmul.mubr.bf16.gmra.mxu0 %v479
      %v760 = vpop.f32.mrf.mxu0
      %v761 = vadd.f32 0.0, %v760
      %v762 = vpop.f32.mrf.mxu0
      %v763 = vpop.f32.mrf.mxu0
      %v764 = vadd.f32 0.0, %v763
      %v765 = vpop.f32.mrf.mxu0
      %766 = vmatprep.mubr.bf16.mxu0 %v634
      %767 = vmatmul.mubr.bf16.gmra.mxu0 %v481
      %v768 = vpop.f32.mrf.mxu0
      %v769 = vadd.f32 0.0, %v768
      %v770 = vpop.f32.mrf.mxu0
      %v771 = vpop.f32.mrf.mxu0
      %v772 = vadd.f32 0.0, %v771
      %v773 = vpop.f32.mrf.mxu0
      %774 = vmatprep.mubr.bf16.mxu0 %v637
      %775 = vmatmul.mubr.bf16.gmra.mxu0 %v483
      %v776 = vpop.f32.mrf.mxu0
      %v777 = vadd.f32 0.0, %v776
      %v778 = vpop.f32.mrf.mxu0
      %v779 = vpop.f32.mrf.mxu0
      %v780 = vadd.f32 0.0, %v779
      %v781 = vpop.f32.mrf.mxu0
      %782 = vmatprep.mubr.bf16.mxu0 %v640
      %783 = vmatmul.mubr.bf16.gmra.mxu0 %v485
      %v784 = vpop.f32.mrf.mxu0
      %v785 = vadd.f32 0.0, %v784
      %v786 = vpop.f32.mrf.mxu0
      %v787 = vpop.f32.mrf.mxu0
      %v788 = vadd.f32 0.0, %v787
      %v789 = vpop.f32.mrf.mxu0
      %790 = vmatprep.mubr.bf16.mxu0 %v643
      %791 = vmatmul.mubr.bf16.gmra.mxu0 %v487
      %v792 = vpop.f32.mrf.mxu0
      %v793 = vadd.f32 0.0, %v792
      %v794 = vpop.f32.mrf.mxu0
      %v795 = vpop.f32.mrf.mxu0
      %v796 = vadd.f32 0.0, %v795
      %v797 = vpop.f32.mrf.mxu0
      %798 = vmatprep.mubr.bf16.mxu0 %v646
      %799 = vmatmul.mubr.bf16.gmra.mxu0 %v489
      %v800 = vpop.f32.mrf.mxu0
      %v801 = vadd.f32 0.0, %v800
      %v802 = vpop.f32.mrf.mxu0
      %v803 = vpop.f32.mrf.mxu0
      %v804 = vadd.f32 0.0, %v803
      %v805 = vpop.f32.mrf.mxu0
      %806 = vmatprep.mubr.bf16.mxu0 %v649
      %807 = vmatmul.mubr.bf16.gmra.mxu0 %v491
      %v808 = vpop.f32.mrf.mxu0
      %v809 = vadd.f32 0.0, %v808
      %v810 = vpop.f32.mrf.mxu0
      %v811 = vpop.f32.mrf.mxu0
      %v812 = vadd.f32 0.0, %v811
      %v813 = vpop.f32.mrf.mxu0
      %814 = vmatprep.mubr.bf16.mxu0 %v652
      %815 = vmatmul.mubr.bf16.gmra.mxu0 %v493
      %v816 = vpop.f32.mrf.mxu0
      %v817 = vadd.f32 0.0, %v816
      %v818 = vpop.f32.mrf.mxu0
      %v819 = vpop.f32.mrf.mxu0
      %v820 = vadd.f32 0.0, %v819
      %v821 = vpop.f32.mrf.mxu0
      %822 = vmatprep.mubr.bf16.mxu0 %v655
      %823 = vmatmul.mubr.bf16.gmra.mxu0 %v495
      %v824 = vpop.f32.mrf.mxu0
      %v825 = vadd.f32 0.0, %v824
      %v826 = vpop.f32.mrf.mxu0
      %v827 = vpop.f32.mrf.mxu0
      %v828 = vadd.f32 0.0, %v827
      %v829 = vpop.f32.mrf.mxu0
      %830 = vmatprep.mubr.bf16.mxu0 %v658
      %831 = vmatmul.mubr.bf16.gmra.mxu0 %v497
      %v832 = vpop.f32.mrf.mxu0
      %v833 = vadd.f32 0.0, %v832
      %v834 = vpop.f32.mrf.mxu0
      %v835 = vpop.f32.mrf.mxu0
      %v836 = vadd.f32 0.0, %v835
      %v837 = vpop.f32.mrf.mxu0
      %838 = vmatprep.mubr.bf16.mxu0 %v661
      %839 = vmatmul.mubr.bf16.gmra.mxu0 %v499
      %v840 = vpop.f32.mrf.mxu0
      %v841 = vadd.f32 0.0, %v840
      %v842 = vpop.f32.mrf.mxu0
      %v843 = vpop.f32.mrf.mxu0
      %v844 = vadd.f32 0.0, %v843
      %v845 = vpop.f32.mrf.mxu0
      %846 = vmatprep.mubr.bf16.mxu0 %v664
      %847 = vmatmul.mubr.bf16.gmra.mxu0 %v501
      %v848 = vpop.f32.mrf.mxu0
      %v849 = vadd.f32 0.0, %v848
      %v850 = vpop.f32.mrf.mxu0
      %v851 = vpop.f32.mrf.mxu0
      %v852 = vadd.f32 0.0, %v851
      %v853 = vpop.f32.mrf.mxu0
      %854 = vmatprep.mubr.bf16.mxu0 %v667
      %855 = vmatmul.mubr.bf16.gmra.mxu0 %v503
      %v856 = vpop.f32.mrf.mxu0
      %v857 = vadd.f32 0.0, %v856
      %v858 = vpop.f32.mrf.mxu0
      %v859 = vpop.f32.mrf.mxu0
      %v860 = vadd.f32 0.0, %v859
      %v861 = vpop.f32.mrf.mxu0
      %862 = vmatprep.mubr.bf16.mxu0 %v670
      %863 = vmatmul.mubr.bf16.gmra.mxu0 %v505
      %v864 = vpop.f32.mrf.mxu0
      %v865 = vadd.f32 0.0, %v864
      %v866 = vpop.f32.mrf.mxu0
      %v867 = vpop.f32.mrf.mxu0
      %v868 = vadd.f32 0.0, %v867
      %v869 = vpop.f32.mrf.mxu0
      %870 = vmatprep.mubr.bf16.mxu0 %v673
      %871 = vmatmul.mubr.bf16.gmra.mxu0 %v507
      %v872 = vpop.f32.mrf.mxu0
      %v873 = vadd.f32 0.0, %v872
      %v874 = vpop.f32.mrf.mxu0
      %v875 = vpop.f32.mrf.mxu0
      %v876 = vadd.f32 0.0, %v875
      %v877 = vpop.f32.mrf.mxu0
      %878 = vmatprep.mubr.bf16.mxu0 %v676
      %879 = vmatmul.mubr.bf16.gmra.mxu0 %v509
      %v880 = vpop.f32.mrf.mxu0
      %v881 = vadd.f32 0.0, %v880
      %v882 = vpop.f32.mrf.mxu0
      %v883 = vpop.f32.mrf.mxu0
      %v884 = vadd.f32 0.0, %v883
      %v885 = vpop.f32.mrf.mxu0
      %886 = vmatprep.mubr.bf16.mxu0 %v679
      %887 = vmatmul.mubr.bf16.gmra.mxu0 %v511
      %v888 = vpop.f32.mrf.mxu0
      %v889 = vadd.f32 0.0, %v888
      %v890 = vpop.f32.mrf.mxu0
      %v891 = vpop.f32.mrf.mxu0
      %v892 = vadd.f32 0.0, %v891
      %v893 = vpop.f32.mrf.mxu0
      %894 = vmatprep.mubr.bf16.mxu0 %v682
      %895 = vmatmul.mubr.bf16.gmra.mxu0 %v513
      %v896 = vpop.f32.mrf.mxu0
      %v897 = vadd.f32 0.0, %v896
      %v898 = vpop.f32.mrf.mxu0
      %v899 = vpop.f32.mrf.mxu0
      %v900 = vadd.f32 0.0, %v899
      %v901 = vpop.f32.mrf.mxu0
      %902 = vmatprep.mubr.bf16.mxu0 %v685
      %903 = vmatmul.mubr.bf16.gmra.mxu0 %v515
      %v904 = vpop.f32.mrf.mxu0
      %v905 = vadd.f32 0.0, %v904
      %v906 = vpop.f32.mrf.mxu0
      %v907 = vpop.f32.mrf.mxu0
      %v908 = vadd.f32 0.0, %v907
      %v909 = vpop.f32.mrf.mxu0
      %910 = vmatprep.mubr.bf16.mxu0 %v688
      %911 = vmatmul.mubr.bf16.gmra.mxu0 %v517
      %v912 = vpop.f32.mrf.mxu0
      %v913 = vadd.f32 0.0, %v912
      %v914 = vpop.f32.mrf.mxu0
      %v915 = vpop.f32.mrf.mxu0
      %v916 = vadd.f32 0.0, %v915
      %v917 = vpop.f32.mrf.mxu0
      %918 = vmatprep.mubr.bf16.mxu0 %v691
      %919 = vmatmul.mubr.bf16.gmra.mxu0 %v519
      %v920 = vpop.f32.mrf.mxu0
      %v921 = vadd.f32 0.0, %v920
      %v922 = vpop.f32.mrf.mxu0
      %v923 = vpop.f32.mrf.mxu0
      %v924 = vadd.f32 0.0, %v923
      %v925 = vpop.f32.mrf.mxu0
      %926 = vmatprep.mubr.bf16.mxu0 %v694
      %927 = vmatmul.mubr.bf16.gmra.mxu0 %v521
      %v928 = vpop.f32.mrf.mxu0
      %v929 = vadd.f32 0.0, %v928
      %v930 = vpop.f32.mrf.mxu0
      %v931 = vpop.f32.mrf.mxu0
      %v932 = vadd.f32 0.0, %v931
      %v933 = vpop.f32.mrf.mxu0
      %934 = vmatprep.mubr.bf16.mxu0 %v697
      %935 = vmatmul.mubr.bf16.gmra.mxu0 %v523
      %v936 = vpop.f32.mrf.mxu0
      %v937 = vadd.f32 0.0, %v936
      %v938 = vpop.f32.mrf.mxu0
      %v939 = vpop.f32.mrf.mxu0
      %v940 = vadd.f32 0.0, %v939
      %v941 = vpop.f32.mrf.mxu0
      %942 = vmatprep.mubr.bf16.mxu0 %v700
      %943 = vmatmul.mubr.bf16.gmra.mxu0 %v525
      %v944 = vpop.f32.mrf.mxu0
      %v945 = vadd.f32 0.0, %v944
      %v946 = vpop.f32.mrf.mxu0
      %v947 = vpop.f32.mrf.mxu0
      %v948 = vadd.f32 0.0, %v947
      %v949 = vpop.f32.mrf.mxu0
      %950 = vmatprep.mubr.bf16.mxu0 %v703
      %951 = vmatmul.mubr.bf16.gmra.mxu0 %v527
      %v952 = vpop.f32.mrf.mxu0
      %v953 = vadd.f32 0.0, %v952
      %v954 = vpop.f32.mrf.mxu0
      %v955 = vpop.f32.mrf.mxu0
      %v956 = vadd.f32 0.0, %v955
      %v957 = vpop.f32.mrf.mxu0
      %958 = vmatprep.mubr.bf16.mxu0 %v706
      %959 = vmatmul.mubr.bf16.gmra.mxu0 %v529
      %v960 = vpop.f32.mrf.mxu0
      %v961 = vadd.f32 0.0, %v960
      %v962 = vpop.f32.mrf.mxu0
      %v963 = vpop.f32.mrf.mxu0
      %v964 = vadd.f32 0.0, %v963
      %v965 = vpop.f32.mrf.mxu0
      %966 = vmatprep.mubr.bf16.mxu0 %v709
      %967 = vmatmul.mubr.bf16.gmra.mxu0 %v531
      %v968 = vpop.f32.mrf.mxu0
      %v969 = vadd.f32 0.0, %v968
      %v970 = vpop.f32.mrf.mxu0
      %v971 = vpop.f32.mrf.mxu0
      %v972 = vadd.f32 0.0, %v971
      %v973 = vpop.f32.mrf.mxu0
      %974 = vmatprep.mubr.bf16.mxu0 %v712
      %975 = vmatmul.mubr.bf16.gmra.mxu0 %v533
      %v976 = vpop.f32.mrf.mxu0
      %v977 = vadd.f32 0.0, %v976
      %v978 = vpop.f32.mrf.mxu0
      %v979 = vpop.f32.mrf.mxu0
      %v980 = vadd.f32 0.0, %v979
      %v981 = vpop.f32.mrf.mxu0
      %982 = vmatprep.mubr.bf16.mxu0 %v715
      %983 = vmatmul.mubr.bf16.gmra.mxu0 %v535
      %v984 = vpop.f32.mrf.mxu0
      %v985 = vadd.f32 0.0, %v984
      %v986 = vpop.f32.mrf.mxu0
      %v987 = vpop.f32.mrf.mxu0
      %v988 = vadd.f32 0.0, %v987
      %v989 = vpop.f32.mrf.mxu0
      %990 = vmatprep.mubr.bf16.mxu0 %v718
      %991 = vmatmul.mubr.bf16.gmra.mxu0 %v537
      %v992 = vpop.f32.mrf.mxu0
      %v993 = vadd.f32 0.0, %v992
      %v994 = vpop.f32.mrf.mxu0
      %v995 = vpop.f32.mrf.mxu0
      %v996 = vadd.f32 0.0, %v995
      %v997 = vpop.f32.mrf.mxu0
      %998 = vmatprep.mubr.bf16.mxu0 %v721
      %999 = vmatmul.mubr.bf16.gmra.mxu0 %v539
      %v1000 = vpop.f32.mrf.mxu0
      %v1001 = vadd.f32 0.0, %v1000
      %v1002 = vpop.f32.mrf.mxu0
      %v1003 = vpop.f32.mrf.mxu0
      %v1004 = vadd.f32 0.0, %v1003
      %v1005 = vpop.f32.mrf.mxu0
      %1006 = vmatprep.mubr.bf16.mxu0 %v724
      %1007 = vmatmul.mubr.bf16.gmra.mxu0 %v541
      %v1008 = vpop.f32.mrf.mxu0
      %v1009 = vadd.f32 0.0, %v1008
      %v1010 = vpop.f32.mrf.mxu0
      %v1011 = vpop.f32.mrf.mxu0
      %v1012 = vadd.f32 0.0, %v1011
      %v1013 = vpop.f32.mrf.mxu0
      %1014 = vdwg.mxu0
      %v1015 = vld [vmem:[%s2] sm:$0x1]
      %v1017 = vlaneseq
      %v1018 = vshrl.u32 %v1017, 7
      %v1019 = vsub.s32 0, %v1018
      %v1020 = vrot.slane %v1015, %v1019
      %v1022 = vmul.f32 %v761, %v1020
      %v1023 = vmul.f32 %v764, %v1020
      %v1024 = vmul.f32 %v769, %v1020
      %v1025 = vmul.f32 %v772, %v1020
      %v1026 = vmul.f32 %v777, %v1020
      %v1027 = vmul.f32 %v780, %v1020
      %v1028 = vmul.f32 %v785, %v1020
      %v1029 = vmul.f32 %v788, %v1020
      %v1030 = vmul.f32 %v793, %v1020
      %v1031 = vmul.f32 %v796, %v1020
      %v1032 = vmul.f32 %v801, %v1020
      %v1033 = vmul.f32 %v804, %v1020
      %v1034 = vmul.f32 %v809, %v1020
      %v1035 = vmul.f32 %v812, %v1020
      %v1036 = vmul.f32 %v817, %v1020
      %v1037 = vmul.f32 %v820, %v1020
      %v1038 = vmul.f32 %v825, %v1020
      %v1039 = vmul.f32 %v828, %v1020
      %v1040 = vmul.f32 %v833, %v1020
      %v1041 = vmul.f32 %v836, %v1020
      %v1042 = vmul.f32 %v841, %v1020
      %v1043 = vmul.f32 %v844, %v1020
      %v1044 = vmul.f32 %v849, %v1020
      %v1045 = vmul.f32 %v852, %v1020
      %v1046 = vmul.f32 %v857, %v1020
      %v1047 = vmul.f32 %v860, %v1020
      %v1048 = vmul.f32 %v865, %v1020
      %v1049 = vmul.f32 %v868, %v1020
      %v1050 = vmul.f32 %v873, %v1020
      %v1051 = vmul.f32 %v876, %v1020
      %v1052 = vmul.f32 %v881, %v1020
      %v1053 = vmul.f32 %v884, %v1020
      %v1054 = vmul.f32 %v889, %v1020
      %v1055 = vmul.f32 %v892, %v1020
      %v1056 = vmul.f32 %v897, %v1020
      %v1057 = vmul.f32 %v900, %v1020
      %v1058 = vmul.f32 %v905, %v1020
      %v1059 = vmul.f32 %v908, %v1020
      %v1060 = vmul.f32 %v913, %v1020
      %v1061 = vmul.f32 %v916, %v1020
      %v1062 = vmul.f32 %v921, %v1020
      %v1063 = vmul.f32 %v924, %v1020
      %v1064 = vmul.f32 %v929, %v1020
      %v1065 = vmul.f32 %v932, %v1020
      %v1066 = vmul.f32 %v937, %v1020
      %v1067 = vmul.f32 %v940, %v1020
      %v1068 = vmul.f32 %v945, %v1020
      %v1069 = vmul.f32 %v948, %v1020
      %v1070 = vmul.f32 %v953, %v1020
      %v1071 = vmul.f32 %v956, %v1020
      %v1072 = vmul.f32 %v961, %v1020
      %v1073 = vmul.f32 %v964, %v1020
      %v1074 = vmul.f32 %v969, %v1020
      %v1075 = vmul.f32 %v972, %v1020
      %v1076 = vmul.f32 %v977, %v1020
      %v1077 = vmul.f32 %v980, %v1020
      %v1078 = vmul.f32 %v985, %v1020
      %v1079 = vmul.f32 %v988, %v1020
      %v1080 = vmul.f32 %v993, %v1020
      %v1081 = vmul.f32 %v996, %v1020
      %v1082 = vmul.f32 %v1001, %v1020
      %v1083 = vmul.f32 %v1004, %v1020
      %v1084 = vmul.f32 %v1009, %v1020
      %v1085 = vmul.f32 %v1012, %v1020
      %v1086 = vld [vmem:[%s3] sm:$0x1]
      %v1088 = vlaneseq
      %v1089 = vshrl.u32 %v1088, 7
      %v1090 = vsub.s32 0, %v1089
      %v1091 = vrot.slane %v1086, %v1090
      %v1093 = vadd.f32 %v1022, %v1091
      %v1094 = vadd.f32 %v1023, %v1091
      %v1095 = vadd.f32 %v1024, %v1091
      %v1096 = vadd.f32 %v1025, %v1091
      %v1097 = vadd.f32 %v1026, %v1091
      %v1098 = vadd.f32 %v1027, %v1091
      %v1099 = vadd.f32 %v1028, %v1091
      %v1100 = vadd.f32 %v1029, %v1091
      %v1101 = vadd.f32 %v1030, %v1091
      %v1102 = vadd.f32 %v1031, %v1091
      %v1103 = vadd.f32 %v1032, %v1091
      %v1104 = vadd.f32 %v1033, %v1091
      %v1105 = vadd.f32 %v1034, %v1091
      %v1106 = vadd.f32 %v1035, %v1091
      %v1107 = vadd.f32 %v1036, %v1091
      %v1108 = vadd.f32 %v1037, %v1091
      %v1109 = vadd.f32 %v1038, %v1091
      %v1110 = vadd.f32 %v1039, %v1091
      %v1111 = vadd.f32 %v1040, %v1091
      %v1112 = vadd.f32 %v1041, %v1091
      %v1113 = vadd.f32 %v1042, %v1091
      %v1114 = vadd.f32 %v1043, %v1091
      %v1115 = vadd.f32 %v1044, %v1091
      %v1116 = vadd.f32 %v1045, %v1091
      %v1117 = vadd.f32 %v1046, %v1091
      %v1118 = vadd.f32 %v1047, %v1091
      %v1119 = vadd.f32 %v1048, %v1091
      %v1120 = vadd.f32 %v1049, %v1091
      %v1121 = vadd.f32 %v1050, %v1091
      %v1122 = vadd.f32 %v1051, %v1091
      %v1123 = vadd.f32 %v1052, %v1091
      %v1124 = vadd.f32 %v1053, %v1091
      %v1125 = vadd.f32 %v1054, %v1091
      %v1126 = vadd.f32 %v1055, %v1091
      %v1127 = vadd.f32 %v1056, %v1091
      %v1128 = vadd.f32 %v1057, %v1091
      %v1129 = vadd.f32 %v1058, %v1091
      %v1130 = vadd.f32 %v1059, %v1091
      %v1131 = vadd.f32 %v1060, %v1091
      %v1132 = vadd.f32 %v1061, %v1091
      %v1133 = vadd.f32 %v1062, %v1091
      %v1134 = vadd.f32 %v1063, %v1091
      %v1135 = vadd.f32 %v1064, %v1091
      %v1136 = vadd.f32 %v1065, %v1091
      %v1137 = vadd.f32 %v1066, %v1091
      %v1138 = vadd.f32 %v1067, %v1091
      %v1139 = vadd.f32 %v1068, %v1091
      %v1140 = vadd.f32 %v1069, %v1091
      %v1141 = vadd.f32 %v1070, %v1091
      %v1142 = vadd.f32 %v1071, %v1091
      %v1143 = vadd.f32 %v1072, %v1091
      %v1144 = vadd.f32 %v1073, %v1091
      %v1145 = vadd.f32 %v1074, %v1091
      %v1146 = vadd.f32 %v1075, %v1091
      %v1147 = vadd.f32 %v1076, %v1091
      %v1148 = vadd.f32 %v1077, %v1091
      %v1149 = vadd.f32 %v1078, %v1091
      %v1150 = vadd.f32 %v1079, %v1091
      %v1151 = vadd.f32 %v1080, %v1091
      %v1152 = vadd.f32 %v1081, %v1091
      %v1153 = vadd.f32 %v1082, %v1091
      %v1154 = vadd.f32 %v1083, %v1091
      %v1155 = vadd.f32 %v1084, %v1091
      %v1156 = vadd.f32 %v1085, %v1091
      %v1157 = vmax.f32 %v1093, 0.0
      %v1158 = vmax.f32 %v1094, 0.0
      %v1159 = vmax.f32 %v1095, 0.0
      %v1160 = vmax.f32 %v1096, 0.0
      %v1161 = vmax.f32 %v1097, 0.0
      %v1162 = vmax.f32 %v1098, 0.0
      %v1163 = vmax.f32 %v1099, 0.0
      %v1164 = vmax.f32 %v1100, 0.0
      %v1165 = vmax.f32 %v1101, 0.0
      %v1166 = vmax.f32 %v1102, 0.0
      %v1167 = vmax.f32 %v1103, 0.0
      %v1168 = vmax.f32 %v1104, 0.0
      %v1169 = vmax.f32 %v1105, 0.0
      %v1170 = vmax.f32 %v1106, 0.0
      %v1171 = vmax.f32 %v1107, 0.0
      %v1172 = vmax.f32 %v1108, 0.0
      %v1173 = vmax.f32 %v1109, 0.0
      %v1174 = vmax.f32 %v1110, 0.0
      %v1175 = vmax.f32 %v1111, 0.0
      %v1176 = vmax.f32 %v1112, 0.0
      %v1177 = vmax.f32 %v1113, 0.0
      %v1178 = vmax.f32 %v1114, 0.0
      %v1179 = vmax.f32 %v1115, 0.0
      %v1180 = vmax.f32 %v1116, 0.0
      %v1181 = vmax.f32 %v1117, 0.0
      %v1182 = vmax.f32 %v1118, 0.0
      %v1183 = vmax.f32 %v1119, 0.0
      %v1184 = vmax.f32 %v1120, 0.0
      %v1185 = vmax.f32 %v1121, 0.0
      %v1186 = vmax.f32 %v1122, 0.0
      %v1187 = vmax.f32 %v1123, 0.0
      %v1188 = vmax.f32 %v1124, 0.0
      %v1189 = vmax.f32 %v1125, 0.0
      %v1190 = vmax.f32 %v1126, 0.0
      %v1191 = vmax.f32 %v1127, 0.0
      %v1192 = vmax.f32 %v1128, 0.0
      %v1193 = vmax.f32 %v1129, 0.0
      %v1194 = vmax.f32 %v1130, 0.0
      %v1195 = vmax.f32 %v1131, 0.0
      %v1196 = vmax.f32 %v1132, 0.0
      %v1197 = vmax.f32 %v1133, 0.0
      %v1198 = vmax.f32 %v1134, 0.0
      %v1199 = vmax.f32 %v1135, 0.0
      %v1200 = vmax.f32 %v1136, 0.0
      %v1201 = vmax.f32 %v1137, 0.0
      %v1202 = vmax.f32 %v1138, 0.0
      %v1203 = vmax.f32 %v1139, 0.0
      %v1204 = vmax.f32 %v1140, 0.0
      %v1205 = vmax.f32 %v1141, 0.0
      %v1206 = vmax.f32 %v1142, 0.0
      %v1207 = vmax.f32 %v1143, 0.0
      %v1208 = vmax.f32 %v1144, 0.0
      %v1209 = vmax.f32 %v1145, 0.0
      %v1210 = vmax.f32 %v1146, 0.0
      %v1211 = vmax.f32 %v1147, 0.0
      %v1212 = vmax.f32 %v1148, 0.0
      %v1213 = vmax.f32 %v1149, 0.0
      %v1214 = vmax.f32 %v1150, 0.0
      %v1215 = vmax.f32 %v1151, 0.0
      %v1216 = vmax.f32 %v1152, 0.0
      %v1217 = vmax.f32 %v1153, 0.0
      %v1218 = vmax.f32 %v1154, 0.0
      %v1219 = vmax.f32 %v1155, 0.0
      %v1220 = vmax.f32 %v1156, 0.0
      %v1221 = vpack.c.bf16 %v1158, %v1157
      %v1222 = vpack.c.bf16 %v1160, %v1159
      %v1223 = vpack.c.bf16 %v1162, %v1161
      %v1224 = vpack.c.bf16 %v1164, %v1163
      %v1225 = vpack.c.bf16 %v1166, %v1165
      %v1226 = vpack.c.bf16 %v1168, %v1167
      %v1227 = vpack.c.bf16 %v1170, %v1169
      %v1228 = vpack.c.bf16 %v1172, %v1171
      %v1229 = vpack.c.bf16 %v1174, %v1173
      %v1230 = vpack.c.bf16 %v1176, %v1175
      %v1231 = vpack.c.bf16 %v1178, %v1177
      %v1232 = vpack.c.bf16 %v1180, %v1179
      %v1233 = vpack.c.bf16 %v1182, %v1181
      %v1234 = vpack.c.bf16 %v1184, %v1183
      %v1235 = vpack.c.bf16 %v1186, %v1185
      %v1236 = vpack.c.bf16 %v1188, %v1187
      %v1237 = vpack.c.bf16 %v1190, %v1189
      %v1238 = vpack.c.bf16 %v1192, %v1191
      %v1239 = vpack.c.bf16 %v1194, %v1193
      %v1240 = vpack.c.bf16 %v1196, %v1195
      %v1241 = vpack.c.bf16 %v1198, %v1197
      %v1242 = vpack.c.bf16 %v1200, %v1199
      %v1243 = vpack.c.bf16 %v1202, %v1201
      %v1244 = vpack.c.bf16 %v1204, %v1203
      %v1245 = vpack.c.bf16 %v1206, %v1205
      %v1246 = vpack.c.bf16 %v1208, %v1207
      %v1247 = vpack.c.bf16 %v1210, %v1209
      %v1248 = vpack.c.bf16 %v1212, %v1211
      %v1249 = vpack.c.bf16 %v1214, %v1213
      %v1250 = vpack.c.bf16 %v1216, %v1215
      %v1251 = vpack.c.bf16 %v1218, %v1217
      %v1252 = vpack.c.bf16 %v1220, %v1219
      %v1285 = vunpack.c.l.b16 %v1221
      %v1286 = vunpack.c.h.b16 %v1221
      %v1287 = vunpack.c.l.b16 %v1222
      %v1288 = vunpack.c.h.b16 %v1222
      %v1289 = vunpack.c.l.b16 %v1223
      %v1290 = vunpack.c.h.b16 %v1223
      %v1291 = vunpack.c.l.b16 %v1224
      %v1292 = vunpack.c.h.b16 %v1224
      %v1293 = vunpack.c.l.b16 %v1225
      %v1294 = vunpack.c.h.b16 %v1225
      %v1295 = vunpack.c.l.b16 %v1226
      %v1296 = vunpack.c.h.b16 %v1226
      %v1297 = vunpack.c.l.b16 %v1227
      %v1298 = vunpack.c.h.b16 %v1227
      %v1299 = vunpack.c.l.b16 %v1228
      %v1300 = vunpack.c.h.b16 %v1228
      %v1301 = vunpack.c.l.b16 %v1229
      %v1302 = vunpack.c.h.b16 %v1229
      %v1303 = vunpack.c.l.b16 %v1230
      %v1304 = vunpack.c.h.b16 %v1230
      %v1305 = vunpack.c.l.b16 %v1231
      %v1306 = vunpack.c.h.b16 %v1231
      %v1307 = vunpack.c.l.b16 %v1232
      %v1308 = vunpack.c.h.b16 %v1232
      %v1309 = vunpack.c.l.b16 %v1233
      %v1310 = vunpack.c.h.b16 %v1233
      %v1311 = vunpack.c.l.b16 %v1234
      %v1312 = vunpack.c.h.b16 %v1234
      %v1313 = vunpack.c.l.b16 %v1235
      %v1314 = vunpack.c.h.b16 %v1235
      %v1315 = vunpack.c.l.b16 %v1236
      %v1316 = vunpack.c.h.b16 %v1236
      %v1317 = vunpack.c.l.b16 %v1237
      %v1318 = vunpack.c.h.b16 %v1237
      %v1319 = vunpack.c.l.b16 %v1238
      %v1320 = vunpack.c.h.b16 %v1238
      %v1321 = vunpack.c.l.b16 %v1239
      %v1322 = vunpack.c.h.b16 %v1239
      %v1323 = vunpack.c.l.b16 %v1240
      %v1324 = vunpack.c.h.b16 %v1240
      %v1325 = vunpack.c.l.b16 %v1241
      %v1326 = vunpack.c.h.b16 %v1241
      %v1327 = vunpack.c.l.b16 %v1242
      %v1328 = vunpack.c.h.b16 %v1242
      %v1329 = vunpack.c.l.b16 %v1243
      %v1330 = vunpack.c.h.b16 %v1243
      %v1331 = vunpack.c.l.b16 %v1244
      %v1332 = vunpack.c.h.b16 %v1244
      %v1333 = vunpack.c.l.b16 %v1245
      %v1334 = vunpack.c.h.b16 %v1245
      %v1335 = vunpack.c.l.b16 %v1246
      %v1336 = vunpack.c.h.b16 %v1246
      %v1337 = vunpack.c.l.b16 %v1247
      %v1338 = vunpack.c.h.b16 %v1247
      %v1339 = vunpack.c.l.b16 %v1248
      %v1340 = vunpack.c.h.b16 %v1248
      %v1341 = vunpack.c.l.b16 %v1249
      %v1342 = vunpack.c.h.b16 %v1249
      %v1343 = vunpack.c.l.b16 %v1250
      %v1344 = vunpack.c.h.b16 %v1250
      %v1345 = vunpack.c.l.b16 %v1251
      %v1346 = vunpack.c.h.b16 %v1251
      %v1347 = vunpack.c.l.b16 %v1252
      %v1348 = vunpack.c.h.b16 %v1252
      %v1349 = vpack.c.b16 %v1285, %v1285
      %v1350 = vpack.c.b16 %v1286, %v1286
      %v1351 = vpack.c.b16 %v1287, %v1287
      %v1352 = vpack.c.b16 %v1288, %v1288
      %v1353 = vpack.c.b16 %v1289, %v1289
      %v1354 = vpack.c.b16 %v1290, %v1290
      %v1355 = vpack.c.b16 %v1291, %v1291
      %v1356 = vpack.c.b16 %v1292, %v1292
      %v1357 = vpack.c.b16 %v1293, %v1293
      %v1358 = vpack.c.b16 %v1294, %v1294
      %v1359 = vpack.c.b16 %v1295, %v1295
      %v1360 = vpack.c.b16 %v1296, %v1296
      %v1361 = vpack.c.b16 %v1297, %v1297
      %v1362 = vpack.c.b16 %v1298, %v1298
      %v1363 = vpack.c.b16 %v1299, %v1299
      %v1364 = vpack.c.b16 %v1300, %v1300
      %v1365 = vpack.c.b16 %v1301, %v1301
      %v1366 = vpack.c.b16 %v1302, %v1302
      %v1367 = vpack.c.b16 %v1303, %v1303
      %v1368 = vpack.c.b16 %v1304, %v1304
      %v1369 = vpack.c.b16 %v1305, %v1305
      %v1370 = vpack.c.b16 %v1306, %v1306
      %v1371 = vpack.c.b16 %v1307, %v1307
      %v1372 = vpack.c.b16 %v1308, %v1308
      %v1373 = vpack.c.b16 %v1309, %v1309
      %v1374 = vpack.c.b16 %v1310, %v1310
      %v1375 = vpack.c.b16 %v1311, %v1311
      %v1376 = vpack.c.b16 %v1312, %v1312
      %v1377 = vpack.c.b16 %v1313, %v1313
      %v1378 = vpack.c.b16 %v1314, %v1314
      %v1379 = vpack.c.b16 %v1315, %v1315
      %v1380 = vpack.c.b16 %v1316, %v1316
      %v1381 = vpack.c.b16 %v1317, %v1317
      %v1382 = vpack.c.b16 %v1318, %v1318
      %v1383 = vpack.c.b16 %v1319, %v1319
      %v1384 = vpack.c.b16 %v1320, %v1320
      %v1385 = vpack.c.b16 %v1321, %v1321
      %v1386 = vpack.c.b16 %v1322, %v1322
      %v1387 = vpack.c.b16 %v1323, %v1323
      %v1388 = vpack.c.b16 %v1324, %v1324
      %v1389 = vpack.c.b16 %v1325, %v1325
      %v1390 = vpack.c.b16 %v1326, %v1326
      %v1391 = vpack.c.b16 %v1327, %v1327
      %v1392 = vpack.c.b16 %v1328, %v1328
      %v1393 = vpack.c.b16 %v1329, %v1329
      %v1394 = vpack.c.b16 %v1330, %v1330
      %v1395 = vpack.c.b16 %v1331, %v1331
      %v1396 = vpack.c.b16 %v1332, %v1332
      %v1397 = vpack.c.b16 %v1333, %v1333
      %v1398 = vpack.c.b16 %v1334, %v1334
      %v1399 = vpack.c.b16 %v1335, %v1335
      %v1400 = vpack.c.b16 %v1336, %v1336
      %v1401 = vpack.c.b16 %v1337, %v1337
      %v1402 = vpack.c.b16 %v1338, %v1338
      %v1403 = vpack.c.b16 %v1339, %v1339
      %v1404 = vpack.c.b16 %v1340, %v1340
      %v1405 = vpack.c.b16 %v1341, %v1341
      %v1406 = vpack.c.b16 %v1342, %v1342
      %v1407 = vpack.c.b16 %v1343, %v1343
      %v1408 = vpack.c.b16 %v1344, %v1344
      %v1409 = vpack.c.b16 %v1345, %v1345
      %v1410 = vpack.c.b16 %v1346, %v1346
      %v1411 = vpack.c.b16 %v1347, %v1347
      %v1412 = vpack.c.b16 %v1348, %v1348
      %1477 = vst [vmem:[%s202] sm:$0xf] %v1349
      %1478 = vst [vmem:[%s202 + $0x4] sm:$0xf] %v1350
      %1479 = vst [vmem:[%s202 + $0x8] sm:$0xf] %v1351
      %1480 = vst [vmem:[%s202 + $0xc] sm:$0xf] %v1352
      %1481 = vst [vmem:[%s202 + $0x10] sm:$0xf] %v1353
      %1482 = vst [vmem:[%s202 + $0x14] sm:$0xf] %v1354
      %1483 = vst [vmem:[%s202 + $0x18] sm:$0xf] %v1355
      %1484 = vst [vmem:[%s202 + $0x1c] sm:$0xf] %v1356
      %1485 = vst [vmem:[%s202 + $0x20] sm:$0xf] %v1357
      %1486 = vst [vmem:[%s202 + $0x24] sm:$0xf] %v1358
      %1487 = vst [vmem:[%s202 + $0x28] sm:$0xf] %v1359
      %1488 = vst [vmem:[%s202 + $0x2c] sm:$0xf] %v1360
      %1489 = vst [vmem:[%s202 + $0x30] sm:$0xf] %v1361
      %1490 = vst [vmem:[%s202 + $0x34] sm:$0xf] %v1362
      %1491 = vst [vmem:[%s202 + $0x38] sm:$0xf] %v1363
      %1492 = vst [vmem:[%s202 + $0x3c] sm:$0xf] %v1364
      %1493 = vst [vmem:[%s202 + $0x40] sm:$0xf] %v1365
      %1494 = vst [vmem:[%s202 + $0x44] sm:$0xf] %v1366
      %1495 = vst [vmem:[%s202 + $0x48] sm:$0xf] %v1367
      %1496 = vst [vmem:[%s202 + $0x4c] sm:$0xf] %v1368
      %1497 = vst [vmem:[%s202 + $0x50] sm:$0xf] %v1369
      %1498 = vst [vmem:[%s202 + $0x54] sm:$0xf] %v1370
      %1499 = vst [vmem:[%s202 + $0x58] sm:$0xf] %v1371
      %1500 = vst [vmem:[%s202 + $0x5c] sm:$0xf] %v1372
      %1501 = vst [vmem:[%s202 + $0x60] sm:$0xf] %v1373
      %1502 = vst [vmem:[%s202 + $0x64] sm:$0xf] %v1374
      %1503 = vst [vmem:[%s202 + $0x68] sm:$0xf] %v1375
      %1504 = vst [vmem:[%s202 + $0x6c] sm:$0xf] %v1376
      %1505 = vst [vmem:[%s202 + $0x70] sm:$0xf] %v1377
      %1506 = vst [vmem:[%s202 + $0x74] sm:$0xf] %v1378
      %1507 = vst [vmem:[%s202 + $0x78] sm:$0xf] %v1379
      %1508 = vst [vmem:[%s202 + $0x7c] sm:$0xf] %v1380
      %1509 = vst [vmem:[%s202 + $0x80] sm:$0xf] %v1381
      %1510 = vst [vmem:[%s202 + $0x84] sm:$0xf] %v1382
      %1511 = vst [vmem:[%s202 + $0x88] sm:$0xf] %v1383
      %1512 = vst [vmem:[%s202 + $0x8c] sm:$0xf] %v1384
      %1513 = vst [vmem:[%s202 + $0x90] sm:$0xf] %v1385
      %1514 = vst [vmem:[%s202 + $0x94] sm:$0xf] %v1386
      %1515 = vst [vmem:[%s202 + $0x98] sm:$0xf] %v1387
      %1516 = vst [vmem:[%s202 + $0x9c] sm:$0xf] %v1388
      %1517 = vst [vmem:[%s202 + $0xa0] sm:$0xf] %v1389
      %1518 = vst [vmem:[%s202 + $0xa4] sm:$0xf] %v1390
      %1519 = vst [vmem:[%s202 + $0xa8] sm:$0xf] %v1391
      %1520 = vst [vmem:[%s202 + $0xac] sm:$0xf] %v1392
      %1521 = vst [vmem:[%s202 + $0xb0] sm:$0xf] %v1393
      %1522 = vst [vmem:[%s202 + $0xb4] sm:$0xf] %v1394
      %1523 = vst [vmem:[%s202 + $0xb8] sm:$0xf] %v1395
      %1524 = vst [vmem:[%s202 + $0xbc] sm:$0xf] %v1396
      %1525 = vst [vmem:[%s202 + $0xc0] sm:$0xf] %v1397
      %1526 = vst [vmem:[%s202 + $0xc4] sm:$0xf] %v1398
      %1527 = vst [vmem:[%s202 + $0xc8] sm:$0xf] %v1399
      %1528 = vst [vmem:[%s202 + $0xcc] sm:$0xf] %v1400
      %1529 = vst [vmem:[%s202 + $0xd0] sm:$0xf] %v1401
      %1530 = vst [vmem:[%s202 + $0xd4] sm:$0xf] %v1402
      %1531 = vst [vmem:[%s202 + $0xd8] sm:$0xf] %v1403
      %1532 = vst [vmem:[%s202 + $0xdc] sm:$0xf] %v1404
      %1533 = vst [vmem:[%s202 + $0xe0] sm:$0xf] %v1405
      %1534 = vst [vmem:[%s202 + $0xe4] sm:$0xf] %v1406
      %1535 = vst [vmem:[%s202 + $0xe8] sm:$0xf] %v1407
      %1536 = vst [vmem:[%s202 + $0xec] sm:$0xf] %v1408
      %1537 = vst [vmem:[%s202 + $0xf0] sm:$0xf] %v1409
      %1538 = vst [vmem:[%s202 + $0xf4] sm:$0xf] %v1410
      %1539 = vst [vmem:[%s202 + $0xf8] sm:$0xf] %v1411
      %1540 = vst [vmem:[%s202 + $0xfc] sm:$0xf] %v1412
      %s1541 = smul.u32 64, %s15
      %p1542 = scmp.lt.s32.totalorder %s1541, 255
      %s1543 = scalar_select %p1542, %s1541, 255
      %s1544 = smul.addr %s1543, 4
      %s1545 = scalar_lea.vmem %s4, %s1544
      // Predicated region
      $region37: #{unet_seq_forward.18} parent=35 // pred_check
        %p1546 = pneg %p122
      $region38: #{unet_seq_forward.18} parent=35 // pred_check_branch
        %1548 = sbr.rel (%p1546) target = $region40
      $region39: #{unet_seq_forward.18} parent=35 // pred_region
        %s1549 = smul.u32 64, %s15
      $region40: #{unet_seq_forward.18} parent=35 // pred_fallthru
        _
    $region36: #{unet_seq_forward.18} parent=5 // pred_fallthru
      _
    %p1550 = scmp.le.s32.totalorder 2, %s10
    // Predicated region
    $region41: #{unet_seq_forward.18} parent=5 // pred_check
      %p1551 = pneg %p1550
    $region42: #{unet_seq_forward.18} parent=5 // pred_check_branch
      %1553 = sbr.rel (%p1551) target = $region44
    $region43: #{unet_seq_forward.18} parent=5 // pred_region
      %s1554 = ssub.s32 %s10, 2
      // Predicated region
      $region45: #{unet_seq_forward.18} parent=43 // pred_check
        %p1555 = pneg %p128
      $region46: #{unet_seq_forward.18} parent=43 // pred_check_branch
        %1557 = sbr.rel (%p1555) target = $region48
      $region47: #{unet_seq_forward.18} parent=43 // pred_region
        %s1558 = smul.u32 64, %s16
        %p1559 = scmp.lt.s32.totalorder %s1558, 255
        %s1560 = scalar_select %p1559, %s1558, 255
        %s1561 = smul.addr %s1560, 4
        %s1562 = scalar_lea.vmem %s4, %s1561
      $region48: #{unet_seq_forward.18} parent=43 // pred_fallthru
        _
    $region44: #{unet_seq_forward.18} parent=5 // pred_fallthru
      _
  $region6: #{unet_seq_forward.18} parent=0 // loop_footer
    %s14 = sadd.s32 1, %s10
  $region7: #{unet_seq_forward.18} parent=0 // loop_footer_branch
    %9 = sbr.rel target = $region3
  $region8: #{unet_seq_forward.18} parent=0 // loop_exit
    _

// kernel: unet_seq_forward.19
$region0: #{unet_seq_forward.19}
  #allocation0 [shape = 'u32[]', space=smem, size = 0x4, offset = 0x4, fixed_abs, tag = 'smem constant byte address 0x4 - core index']
  #allocation1 [shape = 'u32[144,128]{1,0:T(1,128)}', space=vmem, size = 0x12000, scoped, tag = 'internal scratch']
  %s0 = inlined_call_operand.vmem [shape: bf16[2048,80], index: 0, kind: input, shape index: {}]
  %s1 = inlined_call_operand.vmem [shape: bf16[80,128], index: 1, kind: input, shape index: {}]
  %s2 = inlined_call_operand.vmem [shape: f32[1,128], index: 2, kind: input, shape index: {}]
  %s3 = inlined_call_operand.vmem [shape: f32[1,128], index: 3, kind: input, shape index: {}]
  %s4 = inlined_call_operand.vmem [shape: bf16[2048,128], index: 4, kind: output, shape index: {}]
  %s5 = sld [smem:[#allocation0]]
  $region49: #{unet_seq_forward.19} parent=0
    _
  %s7 = ssub.s32 1, %s5
  %s8 = scalar_select 0, %s7, %s5
  loop: start=0, step=1, limit=6
  $region2: #{unet_seq_forward.19} parent=0 // loop_pre_header
    _
  $region3: #{unet_seq_forward.19} parent=0 // loop_header
    %s10 = sphi 0, %s14
    %p11 = scmp.ge.s32.totalorder %s10, 6
    %s20 = sphi 0, %s22
    %s23 = sphi 0, %s20
    %s24 = sphi 0, %s23
    %s40 = sphi 0, %s24
    %s44 = sphi 0, %s44
    %s46 = sphi 0, %s44
    %s47 = sphi 0, %s46
    %s61 = sphi 0, %s47
    %s65 = sphi 0, %s65
    %s67 = sphi 0, %s65
    %s68 = sphi 0, %s67
    %s82 = sphi 0, %s68
    %s86 = sphi 0, %s86
    %s88 = sphi 0, %s86
    %s89 = sphi 0, %s88
    %s103 = sphi 0, %s89
    %s109 = sphi 0, %s111
    %s112 = sphi 0, %s109
    %s113 = sphi 0, %s112
    %s129 = sphi 0, %s113
  $region4: #{unet_seq_forward.19} parent=0 // loop_header_branch
    %13 = sbr.rel (%p11) target = $region8
  $region5: #{unet_seq_forward.19} parent=0 // loop_body
    %s15 = ssub.s32 %s10, 1
    %s16 = ssub.s32 %s10, 2
    %s17 = sadd.s32 %s10, 1
    %s18 = ssub.s32 %s10, %s17
    %p19 = scmp.eq.s32.totalorder %s18, 0
    %s21 = sadd.s32 %s20, 1
    %s22 = scalar_select %p19, %s20, %s21
    %p25 = pneg %p19
    %p26 = scmp.eq.s32.totalorder %s10, 3
    %p27 = por %p25, %p26
    %p28 = scmp.ne.s32.totalorder %s20, %s23
    %p29 = scmp.eq.s32.totalorder %s10, 0
    %p30 = por %p28, %p29
    %p31 = scmp.ne.s32.totalorder %s20, %s23
    %p32 = scmp.eq.s32.totalorder %s15, 3
    %p33 = por %p31, %p32
    %p34 = scmp.ne.s32.totalorder %s23, %s24
    %p35 = scmp.eq.s32.totalorder %s15, 0
    %p36 = por %p34, %p35
    %p37 = scmp.ne.s32.totalorder %s23, %s24
    %p38 = scmp.eq.s32.totalorder %s16, 3
    %p39 = por %p37, %p38
    %p41 = scmp.ne.s32.totalorder %s24, %s40
    %p42 = scmp.eq.s32.totalorder %s16, 0
    %p43 = por %p41, %p42
    %s45 = sadd.s32 %s44, 1
    %p48 = scmp.eq.s32.totalorder %s10, 3
    %p49 = scmp.ne.s32.totalorder %s44, %s46
    %p50 = scmp.eq.s32.totalorder %s10, 0
    %p51 = por %p49, %p50
    %p52 = scmp.ne.s32.totalorder %s44, %s46
    %p53 = scmp.eq.s32.totalorder %s15, 3
    %p54 = por %p52, %p53
    %p55 = scmp.ne.s32.totalorder %s46, %s47
    %p56 = scmp.eq.s32.totalorder %s15, 0
    %p57 = por %p55, %p56
    %p58 = scmp.ne.s32.totalorder %s46, %s47
    %p59 = scmp.eq.s32.totalorder %s16, 3
    %p60 = por %p58, %p59
    %p62 = scmp.ne.s32.totalorder %s47, %s61
    %p63 = scmp.eq.s32.totalorder %s16, 0
    %p64 = por %p62, %p63
    %s66 = sadd.s32 %s65, 1
    %p69 = scmp.eq.s32.totalorder %s10, 3
    %p70 = scmp.ne.s32.totalorder %s65, %s67
    %p71 = scmp.eq.s32.totalorder %s10, 0
    %p72 = por %p70, %p71
    %p73 = scmp.ne.s32.totalorder %s65, %s67
    %p74 = scmp.eq.s32.totalorder %s15, 3
    %p75 = por %p73, %p74
    %p76 = scmp.ne.s32.totalorder %s67, %s68
    %p77 = scmp.eq.s32.totalorder %s15, 0
    %p78 = por %p76, %p77
    %p79 = scmp.ne.s32.totalorder %s67, %s68
    %p80 = scmp.eq.s32.totalorder %s16, 3
    %p81 = por %p79, %p80
    %p83 = scmp.ne.s32.totalorder %s68, %s82
    %p84 = scmp.eq.s32.totalorder %s16, 0
    %p85 = por %p83, %p84
    %s87 = sadd.s32 %s86, 1
    %p90 = scmp.eq.s32.totalorder %s10, 3
    %p91 = scmp.ne.s32.totalorder %s86, %s88
    %p92 = scmp.eq.s32.totalorder %s10, 0
    %p93 = por %p91, %p92
    %p94 = scmp.ne.s32.totalorder %s86, %s88
    %p95 = scmp.eq.s32.totalorder %s15, 3
    %p96 = por %p94, %p95
    %p97 = scmp.ne.s32.totalorder %s88, %s89
    %p98 = scmp.eq.s32.totalorder %s15, 0
    %p99 = por %p97, %p98
    %p100 = scmp.ne.s32.totalorder %s88, %s89
    %p101 = scmp.eq.s32.totalorder %s16, 3
    %p102 = por %p100, %p101
    %p104 = scmp.ne.s32.totalorder %s89, %s103
    %p105 = scmp.eq.s32.totalorder %s16, 0
    %p106 = por %p104, %p105
    %s107 = ssub.s32 %s10, %s17
    %p108 = scmp.eq.s32.totalorder %s107, 0
    %s110 = sadd.s32 %s109, 1
    %s111 = scalar_select %p108, %s109, %s110
    %p114 = pneg %p108
    %p115 = scmp.eq.s32.totalorder %s10, 3
    %p116 = por %p114, %p115
    %p117 = scmp.ne.s32.totalorder %s109, %s112
    %p118 = scmp.eq.s32.totalorder %s10, 0
    %p119 = por %p117, %p118
    %p120 = scmp.ne.s32.totalorder %s109, %s112
    %p121 = scmp.eq.s32.totalorder %s15, 3
    %p122 = por %p120, %p121
    %p123 = scmp.ne.s32.totalorder %s112, %s113
    %p124 = scmp.eq.s32.totalorder %s15, 0
    %p125 = por %p123, %p124
    %p126 = scmp.ne.s32.totalorder %s112, %s113
    %p127 = scmp.eq.s32.totalorder %s16, 3
    %p128 = por %p126, %p127
    %p130 = scmp.ne.s32.totalorder %s113, %s129
    %p131 = scmp.eq.s32.totalorder %s16, 0
    %p132 = por %p130, %p131
    %p133 = scmp.le.s32.totalorder 1, %s10
    %p134 = scmp.lt.s32.totalorder %s10, 5
    %p135 = pnand %p133, %p134
    %p136 = pneg %p135
    // Predicated region
    $region9: #{unet_seq_forward.19} parent=5 // pred_check
      _
    $region10: #{unet_seq_forward.19} parent=5 // pred_check_branch
      %138 = sbr.rel (%p135) target = $region12
    $region11: #{unet_seq_forward.19} parent=5 // pred_region
      %s139 = ssub.s32 %s10, 1
      // Predicated region
      $region13: #{unet_seq_forward.19} parent=11 // pred_check
        %p140 = pneg %p57
      $region14: #{unet_seq_forward.19} parent=11 // pred_check_branch
        %142 = sbr.rel (%p140) target = $region16
      $region15: #{unet_seq_forward.19} parent=11 // pred_region
        _
      $region16: #{unet_seq_forward.19} parent=11 // pred_fallthru
        _
      // Predicated region
      $region17: #{unet_seq_forward.19} parent=11 // pred_check
        %p143 = pneg %p78
      $region18: #{unet_seq_forward.19} parent=11 // pred_check_branch
        %145 = sbr.rel (%p143) target = $region20
      $region19: #{unet_seq_forward.19} parent=11 // pred_region
        _
      $region20: #{unet_seq_forward.19} parent=11 // pred_fallthru
        _
      // Predicated region
      $region21: #{unet_seq_forward.19} parent=11 // pred_check
        %p146 = pneg %p99
      $region22: #{unet_seq_forward.19} parent=11 // pred_check_branch
        %148 = sbr.rel (%p146) target = $region24
      $region23: #{unet_seq_forward.19} parent=11 // pred_region
        _
      $region24: #{unet_seq_forward.19} parent=11 // pred_fallthru
        _
    $region12: #{unet_seq_forward.19} parent=5 // pred_fallthru
      _
    %p149 = scmp.lt.s32.totalorder %s10, 4
    // Predicated region
    $region25: #{unet_seq_forward.19} parent=5 // pred_check
      %p150 = pneg %p149
    $region26: #{unet_seq_forward.19} parent=5 // pred_check_branch
      %152 = sbr.rel (%p150) target = $region28
    $region27: #{unet_seq_forward.19} parent=5 // pred_region
      // Predicated region
      $region29: #{unet_seq_forward.19} parent=27 // pred_check
        %p153 = pneg %p30
      $region30: #{unet_seq_forward.19} parent=27 // pred_check_branch
        %155 = sbr.rel (%p153) target = $region32
      $region31: #{unet_seq_forward.19} parent=27 // pred_region
        %s156 = smul.u32 64, %s10
        %p157 = scmp.lt.s32.totalorder %s156, 255
        %s158 = scalar_select %p157, %s156, 255
        %s159 = smul.addr %s158, 4
        %s160 = scalar_lea.vmem %s0, %s159
        %s161 = smul.u32 64, %s10
      $region32: #{unet_seq_forward.19} parent=27 // pred_fallthru
        _
    $region28: #{unet_seq_forward.19} parent=5 // pred_fallthru
      _
    %p162 = scmp.le.s32.totalorder 1, %s10
    %p163 = scmp.lt.s32.totalorder %s10, 5
    %p164 = pnand %p162, %p163
    %p165 = pneg %p164
    // Predicated region
    $region33: #{unet_seq_forward.19} parent=5 // pred_check
      _
    $region34: #{unet_seq_forward.19} parent=5 // pred_check_branch
      %167 = sbr.rel (%p164) target = $region36
    $region35: #{unet_seq_forward.19} parent=5 // pred_region
      %s168 = ssub.s32 %s10, 1
      %s169 = smul.u32 64, %s15
      %p170 = scmp.lt.s32.totalorder %s169, 255
      %s171 = scalar_select %p170, %s169, 255
      %s172 = smul.addr %s171, 4
      %s173 = scalar_lea.vmem %s0, %s172
      %p174 = pneg %p36
      %p175 = pneg %p33
      %p176 = pneg %p57
      %p177 = pneg %p54
      %p178 = pneg %p78
      %p179 = pneg %p75
      %p180 = pneg %p99
      %p181 = pneg %p96
      %p182 = pneg %p125
      %p183 = pneg %p122
      %s184 = smul.u32 64, %s15
      %p185 = scmp.lt.s32.totalorder %s184, 255
      %s186 = scalar_select %p185, %s184, 255
      %s187 = smul.addr %s186, 4
      %s188 = scalar_lea.vmem %s4, %s187
      %s189 = smul.u32 64, %s15
      %p190 = scmp.lt.s32.totalorder %s189, 255
      %s191 = scalar_select %p190, %s189, 255
      %s192 = smul.addr %s191, 4
      %s193 = scalar_lea.vmem %s0, %s192
      %s194 = smul.u32 64, %s15
      %s195 = smul.u32 64, %s15
      %p196 = scmp.lt.s32.totalorder %s195, 255
      %s197 = scalar_select %p196, %s195, 255
      %s198 = smul.addr %s197, 4
      %s199 = scalar_lea.vmem %s4, %s198
      %s200 = smul.u32 64, %s15
      %v202 = vld [vmem:[%s193] sm:$0xf]
      %v203 = vld [vmem:[%s193 + $0x4] sm:$0xf]
      %v204 = vld [vmem:[%s193 + $0x8] sm:$0xf]
      %v205 = vld [vmem:[%s193 + $0xc] sm:$0xf]
      %v206 = vld [vmem:[%s193 + $0x10] sm:$0xf]
      %v207 = vld [vmem:[%s193 + $0x14] sm:$0xf]
      %v208 = vld [vmem:[%s193 + $0x18] sm:$0xf]
      %v209 = vld [vmem:[%s193 + $0x1c] sm:$0xf]
      %v210 = vld [vmem:[%s193 + $0x20] sm:$0xf]
      %v211 = vld [vmem:[%s193 + $0x24] sm:$0xf]
      %v212 = vld [vmem:[%s193 + $0x28] sm:$0xf]
      %v213 = vld [vmem:[%s193 + $0x2c] sm:$0xf]
      %v214 = vld [vmem:[%s193 + $0x30] sm:$0xf]
      %v215 = vld [vmem:[%s193 + $0x34] sm:$0xf]
      %v216 = vld [vmem:[%s193 + $0x38] sm:$0xf]
      %v217 = vld [vmem:[%s193 + $0x3c] sm:$0xf]
      %v218 = vld [vmem:[%s193 + $0x40] sm:$0xf]
      %v219 = vld [vmem:[%s193 + $0x44] sm:$0xf]
      %v220 = vld [vmem:[%s193 + $0x48] sm:$0xf]
      %v221 = vld [vmem:[%s193 + $0x4c] sm:$0xf]
      %v222 = vld [vmem:[%s193 + $0x50] sm:$0xf]
      %v223 = vld [vmem:[%s193 + $0x54] sm:$0xf]
      %v224 = vld [vmem:[%s193 + $0x58] sm:$0xf]
      %v225 = vld [vmem:[%s193 + $0x5c] sm:$0xf]
      %v226 = vld [vmem:[%s193 + $0x60] sm:$0xf]
      %v227 = vld [vmem:[%s193 + $0x64] sm:$0xf]
      %v228 = vld [vmem:[%s193 + $0x68] sm:$0xf]
      %v229 = vld [vmem:[%s193 + $0x6c] sm:$0xf]
      %v230 = vld [vmem:[%s193 + $0x70] sm:$0xf]
      %v231 = vld [vmem:[%s193 + $0x74] sm:$0xf]
      %v232 = vld [vmem:[%s193 + $0x78] sm:$0xf]
      %v233 = vld [vmem:[%s193 + $0x7c] sm:$0xf]
      %v234 = vld [vmem:[%s193 + $0x80] sm:$0xf]
      %v235 = vld [vmem:[%s193 + $0x84] sm:$0xf]
      %v236 = vld [vmem:[%s193 + $0x88] sm:$0xf]
      %v237 = vld [vmem:[%s193 + $0x8c] sm:$0xf]
      %v238 = vld [vmem:[%s193 + $0x90] sm:$0xf]
      %v239 = vld [vmem:[%s193 + $0x94] sm:$0xf]
      %v240 = vld [vmem:[%s193 + $0x98] sm:$0xf]
      %v241 = vld [vmem:[%s193 + $0x9c] sm:$0xf]
      %v242 = vld [vmem:[%s193 + $0xa0] sm:$0xf]
      %v243 = vld [vmem:[%s193 + $0xa4] sm:$0xf]
      %v244 = vld [vmem:[%s193 + $0xa8] sm:$0xf]
      %v245 = vld [vmem:[%s193 + $0xac] sm:$0xf]
      %v246 = vld [vmem:[%s193 + $0xb0] sm:$0xf]
      %v247 = vld [vmem:[%s193 + $0xb4] sm:$0xf]
      %v248 = vld [vmem:[%s193 + $0xb8] sm:$0xf]
      %v249 = vld [vmem:[%s193 + $0xbc] sm:$0xf]
      %v250 = vld [vmem:[%s193 + $0xc0] sm:$0xf]
      %v251 = vld [vmem:[%s193 + $0xc4] sm:$0xf]
      %v252 = vld [vmem:[%s193 + $0xc8] sm:$0xf]
      %v253 = vld [vmem:[%s193 + $0xcc] sm:$0xf]
      %v254 = vld [vmem:[%s193 + $0xd0] sm:$0xf]
      %v255 = vld [vmem:[%s193 + $0xd4] sm:$0xf]
      %v256 = vld [vmem:[%s193 + $0xd8] sm:$0xf]
      %v257 = vld [vmem:[%s193 + $0xdc] sm:$0xf]
      %v258 = vld [vmem:[%s193 + $0xe0] sm:$0xf]
      %v259 = vld [vmem:[%s193 + $0xe4] sm:$0xf]
      %v260 = vld [vmem:[%s193 + $0xe8] sm:$0xf]
      %v261 = vld [vmem:[%s193 + $0xec] sm:$0xf]
      %v262 = vld [vmem:[%s193 + $0xf0] sm:$0xf]
      %v263 = vld [vmem:[%s193 + $0xf4] sm:$0xf]
      %v264 = vld [vmem:[%s193 + $0xf8] sm:$0xf]
      %v265 = vld [vmem:[%s193 + $0xfc] sm:$0xf]
      %v266 = vld [vmem:[%s1] sm:$0xf]
      %v267 = vld [vmem:[%s1 + $0x4] sm:$0xf]
      %v268 = vld [vmem:[%s1 + $0x8] sm:$0xf]
      %v269 = vld [vmem:[%s1 + $0xc] sm:$0xf]
      %v270 = vld [vmem:[%s1 + $0x10] sm:$0xf]
      %v271 = vld [vmem:[%s1 + $0x14] sm:$0xf]
      %v272 = vld [vmem:[%s1 + $0x18] sm:$0xf]
      %v273 = vld [vmem:[%s1 + $0x1c] sm:$0xf]
      %v274 = vld [vmem:[%s1 + $0x20] sm:$0xf]
      %v275 = vld [vmem:[%s1 + $0x24] sm:$0xf]
      %v340 = vunpack.c.l.b16 %v202
      %v341 = vunpack.c.l.b16 %v203
      %v342 = vunpack.c.l.b16 %v204
      %v343 = vunpack.c.l.b16 %v205
      %v344 = vunpack.c.l.b16 %v206
      %v345 = vunpack.c.l.b16 %v207
      %v346 = vunpack.c.l.b16 %v208
      %v347 = vunpack.c.l.b16 %v209
      %v348 = vunpack.c.l.b16 %v210
      %v349 = vunpack.c.l.b16 %v211
      %v350 = vunpack.c.l.b16 %v212
      %v351 = vunpack.c.l.b16 %v213
      %v352 = vunpack.c.l.b16 %v214
      %v353 = vunpack.c.l.b16 %v215
      %v354 = vunpack.c.l.b16 %v216
      %v355 = vunpack.c.l.b16 %v217
      %v356 = vunpack.c.l.b16 %v218
      %v357 = vunpack.c.l.b16 %v219
      %v358 = vunpack.c.l.b16 %v220
      %v359 = vunpack.c.l.b16 %v221
      %v360 = vunpack.c.l.b16 %v222
      %v361 = vunpack.c.l.b16 %v223
      %v362 = vunpack.c.l.b16 %v224
      %v363 = vunpack.c.l.b16 %v225
      %v364 = vunpack.c.l.b16 %v226
      %v365 = vunpack.c.l.b16 %v227
      %v366 = vunpack.c.l.b16 %v228
      %v367 = vunpack.c.l.b16 %v229
      %v368 = vunpack.c.l.b16 %v230
      %v369 = vunpack.c.l.b16 %v231
      %v370 = vunpack.c.l.b16 %v232
      %v371 = vunpack.c.l.b16 %v233
      %v372 = vunpack.c.l.b16 %v234
      %v373 = vunpack.c.l.b16 %v235
      %v374 = vunpack.c.l.b16 %v236
      %v375 = vunpack.c.l.b16 %v237
      %v376 = vunpack.c.l.b16 %v238
      %v377 = vunpack.c.l.b16 %v239
      %v378 = vunpack.c.l.b16 %v240
      %v379 = vunpack.c.l.b16 %v241
      %v380 = vunpack.c.l.b16 %v242
      %v381 = vunpack.c.l.b16 %v243
      %v382 = vunpack.c.l.b16 %v244
      %v383 = vunpack.c.l.b16 %v245
      %v384 = vunpack.c.l.b16 %v246
      %v385 = vunpack.c.l.b16 %v247
      %v386 = vunpack.c.l.b16 %v248
      %v387 = vunpack.c.l.b16 %v249
      %v388 = vunpack.c.l.b16 %v250
      %v389 = vunpack.c.l.b16 %v251
      %v390 = vunpack.c.l.b16 %v252
      %v391 = vunpack.c.l.b16 %v253
      %v392 = vunpack.c.l.b16 %v254
      %v393 = vunpack.c.l.b16 %v255
      %v394 = vunpack.c.l.b16 %v256
      %v395 = vunpack.c.l.b16 %v257
      %v396 = vunpack.c.l.b16 %v258
      %v397 = vunpack.c.l.b16 %v259
      %v398 = vunpack.c.l.b16 %v260
      %v399 = vunpack.c.l.b16 %v261
      %v400 = vunpack.c.l.b16 %v262
      %v401 = vunpack.c.l.b16 %v263
      %v402 = vunpack.c.l.b16 %v264
      %v403 = vunpack.c.l.b16 %v265
      %v404 = vpack.c.b16 %v341, %v340
      %v405 = vpack.c.b16 %v343, %v342
      %v406 = vpack.c.b16 %v345, %v344
      %v407 = vpack.c.b16 %v347, %v346
      %v408 = vpack.c.b16 %v349, %v348
      %v409 = vpack.c.b16 %v351, %v350
      %v410 = vpack.c.b16 %v353, %v352
      %v411 = vpack.c.b16 %v355, %v354
      %v412 = vpack.c.b16 %v357, %v356
      %v413 = vpack.c.b16 %v359, %v358
      %v414 = vpack.c.b16 %v361, %v360
      %v415 = vpack.c.b16 %v363, %v362
      %v416 = vpack.c.b16 %v365, %v364
      %v417 = vpack.c.b16 %v367, %v366
      %v418 = vpack.c.b16 %v369, %v368
      %v419 = vpack.c.b16 %v371, %v370
      %v420 = vpack.c.b16 %v373, %v372
      %v421 = vpack.c.b16 %v375, %v374
      %v422 = vpack.c.b16 %v377, %v376
      %v423 = vpack.c.b16 %v379, %v378
      %v424 = vpack.c.b16 %v381, %v380
      %v425 = vpack.c.b16 %v383, %v382
      %v426 = vpack.c.b16 %v385, %v384
      %v427 = vpack.c.b16 %v387, %v386
      %v428 = vpack.c.b16 %v389, %v388
      %v429 = vpack.c.b16 %v391, %v390
      %v430 = vpack.c.b16 %v393, %v392
      %v431 = vpack.c.b16 %v395, %v394
      %v432 = vpack.c.b16 %v397, %v396
      %v433 = vpack.c.b16 %v399, %v398
      %v434 = vpack.c.b16 %v401, %v400
      %v435 = vpack.c.b16 %v403, %v402
      %v446 = vunpack.c.l.b16 %v266
      %v447 = vunpack.c.l.b16 %v267
      %v448 = vunpack.c.l.b16 %v268
      %v449 = vunpack.c.l.b16 %v269
      %v450 = vunpack.c.l.b16 %v270
      %v451 = vunpack.c.l.b16 %v271
      %v452 = vunpack.c.l.b16 %v272
      %v453 = vunpack.c.l.b16 %v273
      %v454 = vunpack.c.l.b16 %v274
      %v455 = vunpack.c.l.b16 %v275
      %v456 = vpack.c.b16 %v447, %v446
      %v457 = vpack.c.b16 %v449, %v448
      %v458 = vpack.c.b16 %v451, %v450
      %v459 = vpack.c.b16 %v453, %v452
      %v460 = vpack.c.b16 %v455, %v454
      %vm466 = vcmask 654336
      %v468 = vsel %vm466, %v404, 0
      %v471 = vsel %vm466, %v405, 0
      %v474 = vsel %vm466, %v406, 0
      %v477 = vsel %vm466, %v407, 0
      %v480 = vsel %vm466, %v408, 0
      %v483 = vsel %vm466, %v409, 0
      %v486 = vsel %vm466, %v410, 0
      %v489 = vsel %vm466, %v411, 0
      %v492 = vsel %vm466, %v412, 0
      %v495 = vsel %vm466, %v413, 0
      %v498 = vsel %vm466, %v414, 0
      %v501 = vsel %vm466, %v415, 0
      %v504 = vsel %vm466, %v416, 0
      %v507 = vsel %vm466, %v417, 0
      %v510 = vsel %vm466, %v418, 0
      %v513 = vsel %vm466, %v419, 0
      %v516 = vsel %vm466, %v420, 0
      %v519 = vsel %vm466, %v421, 0
      %v522 = vsel %vm466, %v422, 0
      %v525 = vsel %vm466, %v423, 0
      %v528 = vsel %vm466, %v424, 0
      %v531 = vsel %vm466, %v425, 0
      %v534 = vsel %vm466, %v426, 0
      %v537 = vsel %vm466, %v427, 0
      %v540 = vsel %vm466, %v428, 0
      %v543 = vsel %vm466, %v429, 0
      %v546 = vsel %vm466, %v430, 0
      %v549 = vsel %vm466, %v431, 0
      %v552 = vsel %vm466, %v432, 0
      %v555 = vsel %vm466, %v433, 0
      %v558 = vsel %vm466, %v434, 0
      %v561 = vsel %vm466, %v435, 0
      %563 = vmatprep.subr.bf16.mxu0 0
      %564 = vmatpush1.bf16.msra.mxu0 0
      %565 = vmatprep.subr.bf16.mxu0 0
      %566 = vmatpush1.bf16.msra.mxu0 0
      %567 = vmatprep.subr.bf16.mxu0 0
      %568 = vmatpush1.bf16.msra.mxu0 0
      %569 = vmatprep.subr.bf16.mxu0 0
      %570 = vmatpush1.bf16.msra.mxu0 %v460
      %571 = vmatprep.subr.bf16.mxu0 0
      %572 = vmatpush1.bf16.msra.mxu0 %v459
      %573 = vmatprep.subr.bf16.mxu0 0
      %574 = vmatpush1.bf16.msra.mxu0 %v458
      %575 = vmatprep.subr.bf16.mxu0 0
      %576 = vmatpush1.bf16.msra.mxu0 %v457
      %577 = vmatprep.subr.bf16.mxu0 0
      %578 = vmatpush1.bf16.msra.mxu0 %v456
      %579 = vmatprep.subr.bf16.mxu0 0
      %580 = vmatpush2.bf16.msra.mxu0 0
      %581 = vmatprep.subr.bf16.mxu0 0
      %582 = vmatpush2.bf16.msra.mxu0 0
      %583 = vmatprep.subr.bf16.mxu0 0
      %584 = vmatpush2.bf16.msra.mxu0 0
      %585 = vmatprep.subr.bf16.mxu0 0
      %586 = vmatpush2.bf16.msra.mxu0 0
      %587 = vmatprep.subr.bf16.mxu0 0
      %588 = vmatpush2.bf16.msra.mxu0 0
      %589 = vmatprep.subr.bf16.mxu0 0
      %590 = vmatpush2.bf16.msra.mxu0 0
      %591 = vmatprep.subr.bf16.mxu0 0
      %592 = vmatpush2.bf16.msra.mxu0 0
      %593 = vmatprep.subr.bf16.mxu0 0
      %594 = vmatpush2.bf16.msra.mxu0 0
      %595 = vmatprep.mubr.bf16.mxu0 0
      %596 = vmatmul.mubr.bf16.gmra.mxu0 %v468
      %v597 = vpop.f32.mrf.mxu0
      %v598 = vadd.f32 0.0, %v597
      %v599 = vpop.f32.mrf.mxu0
      %v600 = vpop.f32.mrf.mxu0
      %v601 = vadd.f32 0.0, %v600
      %v602 = vpop.f32.mrf.mxu0
      %603 = vmatprep.mubr.bf16.mxu0 0
      %604 = vmatmul.mubr.bf16.gmra.mxu0 %v471
      %v605 = vpop.f32.mrf.mxu0
      %v606 = vadd.f32 0.0, %v605
      %v607 = vpop.f32.mrf.mxu0
      %v608 = vpop.f32.mrf.mxu0
      %v609 = vadd.f32 0.0, %v608
      %v610 = vpop.f32.mrf.mxu0
      %611 = vmatprep.mubr.bf16.mxu0 0
      %612 = vmatmul.mubr.bf16.gmra.mxu0 %v474
      %v613 = vpop.f32.mrf.mxu0
      %v614 = vadd.f32 0.0, %v613
      %v615 = vpop.f32.mrf.mxu0
      %v616 = vpop.f32.mrf.mxu0
      %v617 = vadd.f32 0.0, %v616
      %v618 = vpop.f32.mrf.mxu0
      %619 = vmatprep.mubr.bf16.mxu0 0
      %620 = vmatmul.mubr.bf16.gmra.mxu0 %v477
      %v621 = vpop.f32.mrf.mxu0
      %v622 = vadd.f32 0.0, %v621
      %v623 = vpop.f32.mrf.mxu0
      %v624 = vpop.f32.mrf.mxu0
      %v625 = vadd.f32 0.0, %v624
      %v626 = vpop.f32.mrf.mxu0
      %627 = vmatprep.mubr.bf16.mxu0 0
      %628 = vmatmul.mubr.bf16.gmra.mxu0 %v480
      %v629 = vpop.f32.mrf.mxu0
      %v630 = vadd.f32 0.0, %v629
      %v631 = vpop.f32.mrf.mxu0
      %v632 = vpop.f32.mrf.mxu0
      %v633 = vadd.f32 0.0, %v632
      %v634 = vpop.f32.mrf.mxu0
      %635 = vmatprep.mubr.bf16.mxu0 0
      %636 = vmatmul.mubr.bf16.gmra.mxu0 %v483
      %v637 = vpop.f32.mrf.mxu0
      %v638 = vadd.f32 0.0, %v637
      %v639 = vpop.f32.mrf.mxu0
      %v640 = vpop.f32.mrf.mxu0
      %v641 = vadd.f32 0.0, %v640
      %v642 = vpop.f32.mrf.mxu0
      %643 = vmatprep.mubr.bf16.mxu0 0
      %644 = vmatmul.mubr.bf16.gmra.mxu0 %v486
      %v645 = vpop.f32.mrf.mxu0
      %v646 = vadd.f32 0.0, %v645
      %v647 = vpop.f32.mrf.mxu0
      %v648 = vpop.f32.mrf.mxu0
      %v649 = vadd.f32 0.0, %v648
      %v650 = vpop.f32.mrf.mxu0
      %651 = vmatprep.mubr.bf16.mxu0 0
      %652 = vmatmul.mubr.bf16.gmra.mxu0 %v489
      %v653 = vpop.f32.mrf.mxu0
      %v654 = vadd.f32 0.0, %v653
      %v655 = vpop.f32.mrf.mxu0
      %v656 = vpop.f32.mrf.mxu0
      %v657 = vadd.f32 0.0, %v656
      %v658 = vpop.f32.mrf.mxu0
      %659 = vmatprep.mubr.bf16.mxu0 0
      %660 = vmatmul.mubr.bf16.gmra.mxu0 %v492
      %v661 = vpop.f32.mrf.mxu0
      %v662 = vadd.f32 0.0, %v661
      %v663 = vpop.f32.mrf.mxu0
      %v664 = vpop.f32.mrf.mxu0
      %v665 = vadd.f32 0.0, %v664
      %v666 = vpop.f32.mrf.mxu0
      %667 = vmatprep.mubr.bf16.mxu0 0
      %668 = vmatmul.mubr.bf16.gmra.mxu0 %v495
      %v669 = vpop.f32.mrf.mxu0
      %v670 = vadd.f32 0.0, %v669
      %v671 = vpop.f32.mrf.mxu0
      %v672 = vpop.f32.mrf.mxu0
      %v673 = vadd.f32 0.0, %v672
      %v674 = vpop.f32.mrf.mxu0
      %675 = vmatprep.mubr.bf16.mxu0 0
      %676 = vmatmul.mubr.bf16.gmra.mxu0 %v498
      %v677 = vpop.f32.mrf.mxu0
      %v678 = vadd.f32 0.0, %v677
      %v679 = vpop.f32.mrf.mxu0
      %v680 = vpop.f32.mrf.mxu0
      %v681 = vadd.f32 0.0, %v680
      %v682 = vpop.f32.mrf.mxu0
      %683 = vmatprep.mubr.bf16.mxu0 0
      %684 = vmatmul.mubr.bf16.gmra.mxu0 %v501
      %v685 = vpop.f32.mrf.mxu0
      %v686 = vadd.f32 0.0, %v685
      %v687 = vpop.f32.mrf.mxu0
      %v688 = vpop.f32.mrf.mxu0
      %v689 = vadd.f32 0.0, %v688
      %v690 = vpop.f32.mrf.mxu0
      %691 = vmatprep.mubr.bf16.mxu0 0
      %692 = vmatmul.mubr.bf16.gmra.mxu0 %v504
      %v693 = vpop.f32.mrf.mxu0
      %v694 = vadd.f32 0.0, %v693
      %v695 = vpop.f32.mrf.mxu0
      %v696 = vpop.f32.mrf.mxu0
      %v697 = vadd.f32 0.0, %v696
      %v698 = vpop.f32.mrf.mxu0
      %699 = vmatprep.mubr.bf16.mxu0 0
      %700 = vmatmul.mubr.bf16.gmra.mxu0 %v507
      %v701 = vpop.f32.mrf.mxu0
      %v702 = vadd.f32 0.0, %v701
      %v703 = vpop.f32.mrf.mxu0
      %v704 = vpop.f32.mrf.mxu0
      %v705 = vadd.f32 0.0, %v704
      %v706 = vpop.f32.mrf.mxu0
      %707 = vmatprep.mubr.bf16.mxu0 0
      %708 = vmatmul.mubr.bf16.gmra.mxu0 %v510
      %v709 = vpop.f32.mrf.mxu0
      %v710 = vadd.f32 0.0, %v709
      %v711 = vpop.f32.mrf.mxu0
      %v712 = vpop.f32.mrf.mxu0
      %v713 = vadd.f32 0.0, %v712
      %v714 = vpop.f32.mrf.mxu0
      %715 = vmatprep.mubr.bf16.mxu0 0
      %716 = vmatmul.mubr.bf16.gmra.mxu0 %v513
      %v717 = vpop.f32.mrf.mxu0
      %v718 = vadd.f32 0.0, %v717
      %v719 = vpop.f32.mrf.mxu0
      %v720 = vpop.f32.mrf.mxu0
      %v721 = vadd.f32 0.0, %v720
      %v722 = vpop.f32.mrf.mxu0
      %723 = vmatprep.mubr.bf16.mxu0 0
      %724 = vmatmul.mubr.bf16.gmra.mxu0 %v516
      %v725 = vpop.f32.mrf.mxu0
      %v726 = vadd.f32 0.0, %v725
      %v727 = vpop.f32.mrf.mxu0
      %v728 = vpop.f32.mrf.mxu0
      %v729 = vadd.f32 0.0, %v728
      %v730 = vpop.f32.mrf.mxu0
      %731 = vmatprep.mubr.bf16.mxu0 0
      %732 = vmatmul.mubr.bf16.gmra.mxu0 %v519
      %v733 = vpop.f32.mrf.mxu0
      %v734 = vadd.f32 0.0, %v733
      %v735 = vpop.f32.mrf.mxu0
      %v736 = vpop.f32.mrf.mxu0
      %v737 = vadd.f32 0.0, %v736
      %v738 = vpop.f32.mrf.mxu0
      %739 = vmatprep.mubr.bf16.mxu0 0
      %740 = vmatmul.mubr.bf16.gmra.mxu0 %v522
      %v741 = vpop.f32.mrf.mxu0
      %v742 = vadd.f32 0.0, %v741
      %v743 = vpop.f32.mrf.mxu0
      %v744 = vpop.f32.mrf.mxu0
      %v745 = vadd.f32 0.0, %v744
      %v746 = vpop.f32.mrf.mxu0
      %747 = vmatprep.mubr.bf16.mxu0 0
      %748 = vmatmul.mubr.bf16.gmra.mxu0 %v525
      %v749 = vpop.f32.mrf.mxu0
      %v750 = vadd.f32 0.0, %v749
      %v751 = vpop.f32.mrf.mxu0
      %v752 = vpop.f32.mrf.mxu0
      %v753 = vadd.f32 0.0, %v752
      %v754 = vpop.f32.mrf.mxu0
      %755 = vmatprep.mubr.bf16.mxu0 0
      %756 = vmatmul.mubr.bf16.gmra.mxu0 %v528
      %v757 = vpop.f32.mrf.mxu0
      %v758 = vadd.f32 0.0, %v757
      %v759 = vpop.f32.mrf.mxu0
      %v760 = vpop.f32.mrf.mxu0
      %v761 = vadd.f32 0.0, %v760
      %v762 = vpop.f32.mrf.mxu0
      %763 = vmatprep.mubr.bf16.mxu0 0
      %764 = vmatmul.mubr.bf16.gmra.mxu0 %v531
      %v765 = vpop.f32.mrf.mxu0
      %v766 = vadd.f32 0.0, %v765
      %v767 = vpop.f32.mrf.mxu0
      %v768 = vpop.f32.mrf.mxu0
      %v769 = vadd.f32 0.0, %v768
      %v770 = vpop.f32.mrf.mxu0
      %771 = vmatprep.mubr.bf16.mxu0 0
      %772 = vmatmul.mubr.bf16.gmra.mxu0 %v534
      %v773 = vpop.f32.mrf.mxu0
      %v774 = vadd.f32 0.0, %v773
      %v775 = vpop.f32.mrf.mxu0
      %v776 = vpop.f32.mrf.mxu0
      %v777 = vadd.f32 0.0, %v776
      %v778 = vpop.f32.mrf.mxu0
      %779 = vmatprep.mubr.bf16.mxu0 0
      %780 = vmatmul.mubr.bf16.gmra.mxu0 %v537
      %v781 = vpop.f32.mrf.mxu0
      %v782 = vadd.f32 0.0, %v781
      %v783 = vpop.f32.mrf.mxu0
      %v784 = vpop.f32.mrf.mxu0
      %v785 = vadd.f32 0.0, %v784
      %v786 = vpop.f32.mrf.mxu0
      %787 = vmatprep.mubr.bf16.mxu0 0
      %788 = vmatmul.mubr.bf16.gmra.mxu0 %v540
      %v789 = vpop.f32.mrf.mxu0
      %v790 = vadd.f32 0.0, %v789
      %v791 = vpop.f32.mrf.mxu0
      %v792 = vpop.f32.mrf.mxu0
      %v793 = vadd.f32 0.0, %v792
      %v794 = vpop.f32.mrf.mxu0
      %795 = vmatprep.mubr.bf16.mxu0 0
      %796 = vmatmul.mubr.bf16.gmra.mxu0 %v543
      %v797 = vpop.f32.mrf.mxu0
      %v798 = vadd.f32 0.0, %v797
      %v799 = vpop.f32.mrf.mxu0
      %v800 = vpop.f32.mrf.mxu0
      %v801 = vadd.f32 0.0, %v800
      %v802 = vpop.f32.mrf.mxu0
      %803 = vmatprep.mubr.bf16.mxu0 0
      %804 = vmatmul.mubr.bf16.gmra.mxu0 %v546
      %v805 = vpop.f32.mrf.mxu0
      %v806 = vadd.f32 0.0, %v805
      %v807 = vpop.f32.mrf.mxu0
      %v808 = vpop.f32.mrf.mxu0
      %v809 = vadd.f32 0.0, %v808
      %v810 = vpop.f32.mrf.mxu0
      %811 = vmatprep.mubr.bf16.mxu0 0
      %812 = vmatmul.mubr.bf16.gmra.mxu0 %v549
      %v813 = vpop.f32.mrf.mxu0
      %v814 = vadd.f32 0.0, %v813
      %v815 = vpop.f32.mrf.mxu0
      %v816 = vpop.f32.mrf.mxu0
      %v817 = vadd.f32 0.0, %v816
      %v818 = vpop.f32.mrf.mxu0
      %819 = vmatprep.mubr.bf16.mxu0 0
      %820 = vmatmul.mubr.bf16.gmra.mxu0 %v552
      %v821 = vpop.f32.mrf.mxu0
      %v822 = vadd.f32 0.0, %v821
      %v823 = vpop.f32.mrf.mxu0
      %v824 = vpop.f32.mrf.mxu0
      %v825 = vadd.f32 0.0, %v824
      %v826 = vpop.f32.mrf.mxu0
      %827 = vmatprep.mubr.bf16.mxu0 0
      %828 = vmatmul.mubr.bf16.gmra.mxu0 %v555
      %v829 = vpop.f32.mrf.mxu0
      %v830 = vadd.f32 0.0, %v829
      %v831 = vpop.f32.mrf.mxu0
      %v832 = vpop.f32.mrf.mxu0
      %v833 = vadd.f32 0.0, %v832
      %v834 = vpop.f32.mrf.mxu0
      %835 = vmatprep.mubr.bf16.mxu0 0
      %836 = vmatmul.mubr.bf16.gmra.mxu0 %v558
      %v837 = vpop.f32.mrf.mxu0
      %v838 = vadd.f32 0.0, %v837
      %v839 = vpop.f32.mrf.mxu0
      %v840 = vpop.f32.mrf.mxu0
      %v841 = vadd.f32 0.0, %v840
      %v842 = vpop.f32.mrf.mxu0
      %843 = vmatprep.mubr.bf16.mxu0 0
      %844 = vmatmul.mubr.bf16.gmra.mxu0 %v561
      %v845 = vpop.f32.mrf.mxu0
      %v846 = vadd.f32 0.0, %v845
      %v847 = vpop.f32.mrf.mxu0
      %v848 = vpop.f32.mrf.mxu0
      %v849 = vadd.f32 0.0, %v848
      %v850 = vpop.f32.mrf.mxu0
      %851 = vdwg.mxu0
      %v852 = vld [vmem:[%s2] sm:$0x1]
      %v854 = vlaneseq
      %v855 = vshrl.u32 %v854, 7
      %v856 = vsub.s32 0, %v855
      %v857 = vrot.slane %v852, %v856
      %v859 = vmul.f32 %v598, %v857
      %v860 = vmul.f32 %v601, %v857
      %v861 = vmul.f32 %v606, %v857
      %v862 = vmul.f32 %v609, %v857
      %v863 = vmul.f32 %v614, %v857
      %v864 = vmul.f32 %v617, %v857
      %v865 = vmul.f32 %v622, %v857
      %v866 = vmul.f32 %v625, %v857
      %v867 = vmul.f32 %v630, %v857
      %v868 = vmul.f32 %v633, %v857
      %v869 = vmul.f32 %v638, %v857
      %v870 = vmul.f32 %v641, %v857
      %v871 = vmul.f32 %v646, %v857
      %v872 = vmul.f32 %v649, %v857
      %v873 = vmul.f32 %v654, %v857
      %v874 = vmul.f32 %v657, %v857
      %v875 = vmul.f32 %v662, %v857
      %v876 = vmul.f32 %v665, %v857
      %v877 = vmul.f32 %v670, %v857
      %v878 = vmul.f32 %v673, %v857
      %v879 = vmul.f32 %v678, %v857
      %v880 = vmul.f32 %v681, %v857
      %v881 = vmul.f32 %v686, %v857
      %v882 = vmul.f32 %v689, %v857
      %v883 = vmul.f32 %v694, %v857
      %v884 = vmul.f32 %v697, %v857
      %v885 = vmul.f32 %v702, %v857
      %v886 = vmul.f32 %v705, %v857
      %v887 = vmul.f32 %v710, %v857
      %v888 = vmul.f32 %v713, %v857
      %v889 = vmul.f32 %v718, %v857
      %v890 = vmul.f32 %v721, %v857
      %v891 = vmul.f32 %v726, %v857
      %v892 = vmul.f32 %v729, %v857
      %v893 = vmul.f32 %v734, %v857
      %v894 = vmul.f32 %v737, %v857
      %v895 = vmul.f32 %v742, %v857
      %v896 = vmul.f32 %v745, %v857
      %v897 = vmul.f32 %v750, %v857
      %v898 = vmul.f32 %v753, %v857
      %v899 = vmul.f32 %v758, %v857
      %v900 = vmul.f32 %v761, %v857
      %v901 = vmul.f32 %v766, %v857
      %v902 = vmul.f32 %v769, %v857
      %v903 = vmul.f32 %v774, %v857
      %v904 = vmul.f32 %v777, %v857
      %v905 = vmul.f32 %v782, %v857
      %v906 = vmul.f32 %v785, %v857
      %v907 = vmul.f32 %v790, %v857
      %v908 = vmul.f32 %v793, %v857
      %v909 = vmul.f32 %v798, %v857
      %v910 = vmul.f32 %v801, %v857
      %v911 = vmul.f32 %v806, %v857
      %v912 = vmul.f32 %v809, %v857
      %v913 = vmul.f32 %v814, %v857
      %v914 = vmul.f32 %v817, %v857
      %v915 = vmul.f32 %v822, %v857
      %v916 = vmul.f32 %v825, %v857
      %v917 = vmul.f32 %v830, %v857
      %v918 = vmul.f32 %v833, %v857
      %v919 = vmul.f32 %v838, %v857
      %v920 = vmul.f32 %v841, %v857
      %v921 = vmul.f32 %v846, %v857
      %v922 = vmul.f32 %v849, %v857
      %v923 = vld [vmem:[%s3] sm:$0x1]
      %v925 = vlaneseq
      %v926 = vshrl.u32 %v925, 7
      %v927 = vsub.s32 0, %v926
      %v928 = vrot.slane %v923, %v927
      %v930 = vadd.f32 %v859, %v928
      %v931 = vadd.f32 %v860, %v928
      %v932 = vadd.f32 %v861, %v928
      %v933 = vadd.f32 %v862, %v928
      %v934 = vadd.f32 %v863, %v928
      %v935 = vadd.f32 %v864, %v928
      %v936 = vadd.f32 %v865, %v928
      %v937 = vadd.f32 %v866, %v928
      %v938 = vadd.f32 %v867, %v928
      %v939 = vadd.f32 %v868, %v928
      %v940 = vadd.f32 %v869, %v928
      %v941 = vadd.f32 %v870, %v928
      %v942 = vadd.f32 %v871, %v928
      %v943 = vadd.f32 %v872, %v928
      %v944 = vadd.f32 %v873, %v928
      %v945 = vadd.f32 %v874, %v928
      %v946 = vadd.f32 %v875, %v928
      %v947 = vadd.f32 %v876, %v928
      %v948 = vadd.f32 %v877, %v928
      %v949 = vadd.f32 %v878, %v928
      %v950 = vadd.f32 %v879, %v928
      %v951 = vadd.f32 %v880, %v928
      %v952 = vadd.f32 %v881, %v928
      %v953 = vadd.f32 %v882, %v928
      %v954 = vadd.f32 %v883, %v928
      %v955 = vadd.f32 %v884, %v928
      %v956 = vadd.f32 %v885, %v928
      %v957 = vadd.f32 %v886, %v928
      %v958 = vadd.f32 %v887, %v928
      %v959 = vadd.f32 %v888, %v928
      %v960 = vadd.f32 %v889, %v928
      %v961 = vadd.f32 %v890, %v928
      %v962 = vadd.f32 %v891, %v928
      %v963 = vadd.f32 %v892, %v928
      %v964 = vadd.f32 %v893, %v928
      %v965 = vadd.f32 %v894, %v928
      %v966 = vadd.f32 %v895, %v928
      %v967 = vadd.f32 %v896, %v928
      %v968 = vadd.f32 %v897, %v928
      %v969 = vadd.f32 %v898, %v928
      %v970 = vadd.f32 %v899, %v928
      %v971 = vadd.f32 %v900, %v928
      %v972 = vadd.f32 %v901, %v928
      %v973 = vadd.f32 %v902, %v928
      %v974 = vadd.f32 %v903, %v928
      %v975 = vadd.f32 %v904, %v928
      %v976 = vadd.f32 %v905, %v928
      %v977 = vadd.f32 %v906, %v928
      %v978 = vadd.f32 %v907, %v928
      %v979 = vadd.f32 %v908, %v928
      %v980 = vadd.f32 %v909, %v928
      %v981 = vadd.f32 %v910, %v928
      %v982 = vadd.f32 %v911, %v928
      %v983 = vadd.f32 %v912, %v928
      %v984 = vadd.f32 %v913, %v928
      %v985 = vadd.f32 %v914, %v928
      %v986 = vadd.f32 %v915, %v928
      %v987 = vadd.f32 %v916, %v928
      %v988 = vadd.f32 %v917, %v928
      %v989 = vadd.f32 %v918, %v928
      %v990 = vadd.f32 %v919, %v928
      %v991 = vadd.f32 %v920, %v928
      %v992 = vadd.f32 %v921, %v928
      %v993 = vadd.f32 %v922, %v928
      %v994 = vmax.f32 %v930, 0.0
      %v995 = vmax.f32 %v931, 0.0
      %v996 = vmax.f32 %v932, 0.0
      %v997 = vmax.f32 %v933, 0.0
      %v998 = vmax.f32 %v934, 0.0
      %v999 = vmax.f32 %v935, 0.0
      %v1000 = vmax.f32 %v936, 0.0
      %v1001 = vmax.f32 %v937, 0.0
      %v1002 = vmax.f32 %v938, 0.0
      %v1003 = vmax.f32 %v939, 0.0
      %v1004 = vmax.f32 %v940, 0.0
      %v1005 = vmax.f32 %v941, 0.0
      %v1006 = vmax.f32 %v942, 0.0
      %v1007 = vmax.f32 %v943, 0.0
      %v1008 = vmax.f32 %v944, 0.0
      %v1009 = vmax.f32 %v945, 0.0
      %v1010 = vmax.f32 %v946, 0.0
      %v1011 = vmax.f32 %v947, 0.0
      %v1012 = vmax.f32 %v948, 0.0
      %v1013 = vmax.f32 %v949, 0.0
      %v1014 = vmax.f32 %v950, 0.0
      %v1015 = vmax.f32 %v951, 0.0
      %v1016 = vmax.f32 %v952, 0.0
      %v1017 = vmax.f32 %v953, 0.0
      %v1018 = vmax.f32 %v954, 0.0
      %v1019 = vmax.f32 %v955, 0.0
      %v1020 = vmax.f32 %v956, 0.0
      %v1021 = vmax.f32 %v957, 0.0
      %v1022 = vmax.f32 %v958, 0.0
      %v1023 = vmax.f32 %v959, 0.0
      %v1024 = vmax.f32 %v960, 0.0
      %v1025 = vmax.f32 %v961, 0.0
      %v1026 = vmax.f32 %v962, 0.0
      %v1027 = vmax.f32 %v963, 0.0
      %v1028 = vmax.f32 %v964, 0.0
      %v1029 = vmax.f32 %v965, 0.0
      %v1030 = vmax.f32 %v966, 0.0
      %v1031 = vmax.f32 %v967, 0.0
      %v1032 = vmax.f32 %v968, 0.0
      %v1033 = vmax.f32 %v969, 0.0
      %v1034 = vmax.f32 %v970, 0.0
      %v1035 = vmax.f32 %v971, 0.0
      %v1036 = vmax.f32 %v972, 0.0
      %v1037 = vmax.f32 %v973, 0.0
      %v1038 = vmax.f32 %v974, 0.0
      %v1039 = vmax.f32 %v975, 0.0
      %v1040 = vmax.f32 %v976, 0.0
      %v1041 = vmax.f32 %v977, 0.0
      %v1042 = vmax.f32 %v978, 0.0
      %v1043 = vmax.f32 %v979, 0.0
      %v1044 = vmax.f32 %v980, 0.0
      %v1045 = vmax.f32 %v981, 0.0
      %v1046 = vmax.f32 %v982, 0.0
      %v1047 = vmax.f32 %v983, 0.0
      %v1048 = vmax.f32 %v984, 0.0
      %v1049 = vmax.f32 %v985, 0.0
      %v1050 = vmax.f32 %v986, 0.0
      %v1051 = vmax.f32 %v987, 0.0
      %v1052 = vmax.f32 %v988, 0.0
      %v1053 = vmax.f32 %v989, 0.0
      %v1054 = vmax.f32 %v990, 0.0
      %v1055 = vmax.f32 %v991, 0.0
      %v1056 = vmax.f32 %v992, 0.0
      %v1057 = vmax.f32 %v993, 0.0
      %v1058 = vpack.c.bf16 %v995, %v994
      %v1059 = vpack.c.bf16 %v997, %v996
      %v1060 = vpack.c.bf16 %v999, %v998
      %v1061 = vpack.c.bf16 %v1001, %v1000
      %v1062 = vpack.c.bf16 %v1003, %v1002
      %v1063 = vpack.c.bf16 %v1005, %v1004
      %v1064 = vpack.c.bf16 %v1007, %v1006
      %v1065 = vpack.c.bf16 %v1009, %v1008
      %v1066 = vpack.c.bf16 %v1011, %v1010
      %v1067 = vpack.c.bf16 %v1013, %v1012
      %v1068 = vpack.c.bf16 %v1015, %v1014
      %v1069 = vpack.c.bf16 %v1017, %v1016
      %v1070 = vpack.c.bf16 %v1019, %v1018
      %v1071 = vpack.c.bf16 %v1021, %v1020
      %v1072 = vpack.c.bf16 %v1023, %v1022
      %v1073 = vpack.c.bf16 %v1025, %v1024
      %v1074 = vpack.c.bf16 %v1027, %v1026
      %v1075 = vpack.c.bf16 %v1029, %v1028
      %v1076 = vpack.c.bf16 %v1031, %v1030
      %v1077 = vpack.c.bf16 %v1033, %v1032
      %v1078 = vpack.c.bf16 %v1035, %v1034
      %v1079 = vpack.c.bf16 %v1037, %v1036
      %v1080 = vpack.c.bf16 %v1039, %v1038
      %v1081 = vpack.c.bf16 %v1041, %v1040
      %v1082 = vpack.c.bf16 %v1043, %v1042
      %v1083 = vpack.c.bf16 %v1045, %v1044
      %v1084 = vpack.c.bf16 %v1047, %v1046
      %v1085 = vpack.c.bf16 %v1049, %v1048
      %v1086 = vpack.c.bf16 %v1051, %v1050
      %v1087 = vpack.c.bf16 %v1053, %v1052
      %v1088 = vpack.c.bf16 %v1055, %v1054
      %v1089 = vpack.c.bf16 %v1057, %v1056
      %v1122 = vunpack.c.l.b16 %v1058
      %v1123 = vunpack.c.h.b16 %v1058
      %v1124 = vunpack.c.l.b16 %v1059
      %v1125 = vunpack.c.h.b16 %v1059
      %v1126 = vunpack.c.l.b16 %v1060
      %v1127 = vunpack.c.h.b16 %v1060
      %v1128 = vunpack.c.l.b16 %v1061
      %v1129 = vunpack.c.h.b16 %v1061
      %v1130 = vunpack.c.l.b16 %v1062
      %v1131 = vunpack.c.h.b16 %v1062
      %v1132 = vunpack.c.l.b16 %v1063
      %v1133 = vunpack.c.h.b16 %v1063
      %v1134 = vunpack.c.l.b16 %v1064
      %v1135 = vunpack.c.h.b16 %v1064
      %v1136 = vunpack.c.l.b16 %v1065
      %v1137 = vunpack.c.h.b16 %v1065
      %v1138 = vunpack.c.l.b16 %v1066
      %v1139 = vunpack.c.h.b16 %v1066
      %v1140 = vunpack.c.l.b16 %v1067
      %v1141 = vunpack.c.h.b16 %v1067
      %v1142 = vunpack.c.l.b16 %v1068
      %v1143 = vunpack.c.h.b16 %v1068
      %v1144 = vunpack.c.l.b16 %v1069
      %v1145 = vunpack.c.h.b16 %v1069
      %v1146 = vunpack.c.l.b16 %v1070
      %v1147 = vunpack.c.h.b16 %v1070
      %v1148 = vunpack.c.l.b16 %v1071
      %v1149 = vunpack.c.h.b16 %v1071
      %v1150 = vunpack.c.l.b16 %v1072
      %v1151 = vunpack.c.h.b16 %v1072
      %v1152 = vunpack.c.l.b16 %v1073
      %v1153 = vunpack.c.h.b16 %v1073
      %v1154 = vunpack.c.l.b16 %v1074
      %v1155 = vunpack.c.h.b16 %v1074
      %v1156 = vunpack.c.l.b16 %v1075
      %v1157 = vunpack.c.h.b16 %v1075
      %v1158 = vunpack.c.l.b16 %v1076
      %v1159 = vunpack.c.h.b16 %v1076
      %v1160 = vunpack.c.l.b16 %v1077
      %v1161 = vunpack.c.h.b16 %v1077
      %v1162 = vunpack.c.l.b16 %v1078
      %v1163 = vunpack.c.h.b16 %v1078
      %v1164 = vunpack.c.l.b16 %v1079
      %v1165 = vunpack.c.h.b16 %v1079
      %v1166 = vunpack.c.l.b16 %v1080
      %v1167 = vunpack.c.h.b16 %v1080
      %v1168 = vunpack.c.l.b16 %v1081
      %v1169 = vunpack.c.h.b16 %v1081
      %v1170 = vunpack.c.l.b16 %v1082
      %v1171 = vunpack.c.h.b16 %v1082
      %v1172 = vunpack.c.l.b16 %v1083
      %v1173 = vunpack.c.h.b16 %v1083
      %v1174 = vunpack.c.l.b16 %v1084
      %v1175 = vunpack.c.h.b16 %v1084
      %v1176 = vunpack.c.l.b16 %v1085
      %v1177 = vunpack.c.h.b16 %v1085
      %v1178 = vunpack.c.l.b16 %v1086
      %v1179 = vunpack.c.h.b16 %v1086
      %v1180 = vunpack.c.l.b16 %v1087
      %v1181 = vunpack.c.h.b16 %v1087
      %v1182 = vunpack.c.l.b16 %v1088
      %v1183 = vunpack.c.h.b16 %v1088
      %v1184 = vunpack.c.l.b16 %v1089
      %v1185 = vunpack.c.h.b16 %v1089
      %v1186 = vpack.c.b16 %v1122, %v1122
      %v1187 = vpack.c.b16 %v1123, %v1123
      %v1188 = vpack.c.b16 %v1124, %v1124
      %v1189 = vpack.c.b16 %v1125, %v1125
      %v1190 = vpack.c.b16 %v1126, %v1126
      %v1191 = vpack.c.b16 %v1127, %v1127
      %v1192 = vpack.c.b16 %v1128, %v1128
      %v1193 = vpack.c.b16 %v1129, %v1129
      %v1194 = vpack.c.b16 %v1130, %v1130
      %v1195 = vpack.c.b16 %v1131, %v1131
      %v1196 = vpack.c.b16 %v1132, %v1132
      %v1197 = vpack.c.b16 %v1133, %v1133
      %v1198 = vpack.c.b16 %v1134, %v1134
      %v1199 = vpack.c.b16 %v1135, %v1135
      %v1200 = vpack.c.b16 %v1136, %v1136
      %v1201 = vpack.c.b16 %v1137, %v1137
      %v1202 = vpack.c.b16 %v1138, %v1138
      %v1203 = vpack.c.b16 %v1139, %v1139
      %v1204 = vpack.c.b16 %v1140, %v1140
      %v1205 = vpack.c.b16 %v1141, %v1141
      %v1206 = vpack.c.b16 %v1142, %v1142
      %v1207 = vpack.c.b16 %v1143, %v1143
      %v1208 = vpack.c.b16 %v1144, %v1144
      %v1209 = vpack.c.b16 %v1145, %v1145
      %v1210 = vpack.c.b16 %v1146, %v1146
      %v1211 = vpack.c.b16 %v1147, %v1147
      %v1212 = vpack.c.b16 %v1148, %v1148
      %v1213 = vpack.c.b16 %v1149, %v1149
      %v1214 = vpack.c.b16 %v1150, %v1150
      %v1215 = vpack.c.b16 %v1151, %v1151
      %v1216 = vpack.c.b16 %v1152, %v1152
      %v1217 = vpack.c.b16 %v1153, %v1153
      %v1218 = vpack.c.b16 %v1154, %v1154
      %v1219 = vpack.c.b16 %v1155, %v1155
      %v1220 = vpack.c.b16 %v1156, %v1156
      %v1221 = vpack.c.b16 %v1157, %v1157
      %v1222 = vpack.c.b16 %v1158, %v1158
      %v1223 = vpack.c.b16 %v1159, %v1159
      %v1224 = vpack.c.b16 %v1160, %v1160
      %v1225 = vpack.c.b16 %v1161, %v1161
      %v1226 = vpack.c.b16 %v1162, %v1162
      %v1227 = vpack.c.b16 %v1163, %v1163
      %v1228 = vpack.c.b16 %v1164, %v1164
      %v1229 = vpack.c.b16 %v1165, %v1165
      %v1230 = vpack.c.b16 %v1166, %v1166
      %v1231 = vpack.c.b16 %v1167, %v1167
      %v1232 = vpack.c.b16 %v1168, %v1168
      %v1233 = vpack.c.b16 %v1169, %v1169
      %v1234 = vpack.c.b16 %v1170, %v1170
      %v1235 = vpack.c.b16 %v1171, %v1171
      %v1236 = vpack.c.b16 %v1172, %v1172
      %v1237 = vpack.c.b16 %v1173, %v1173
      %v1238 = vpack.c.b16 %v1174, %v1174
      %v1239 = vpack.c.b16 %v1175, %v1175
      %v1240 = vpack.c.b16 %v1176, %v1176
      %v1241 = vpack.c.b16 %v1177, %v1177
      %v1242 = vpack.c.b16 %v1178, %v1178
      %v1243 = vpack.c.b16 %v1179, %v1179
      %v1244 = vpack.c.b16 %v1180, %v1180
      %v1245 = vpack.c.b16 %v1181, %v1181
      %v1246 = vpack.c.b16 %v1182, %v1182
      %v1247 = vpack.c.b16 %v1183, %v1183
      %v1248 = vpack.c.b16 %v1184, %v1184
      %v1249 = vpack.c.b16 %v1185, %v1185
      %1314 = vst [vmem:[%s199] sm:$0xf] %v1186
      %1315 = vst [vmem:[%s199 + $0x4] sm:$0xf] %v1187
      %1316 = vst [vmem:[%s199 + $0x8] sm:$0xf] %v1188
      %1317 = vst [vmem:[%s199 + $0xc] sm:$0xf] %v1189
      %1318 = vst [vmem:[%s199 + $0x10] sm:$0xf] %v1190
      %1319 = vst [vmem:[%s199 + $0x14] sm:$0xf] %v1191
      %1320 = vst [vmem:[%s199 + $0x18] sm:$0xf] %v1192
      %1321 = vst [vmem:[%s199 + $0x1c] sm:$0xf] %v1193
      %1322 = vst [vmem:[%s199 + $0x20] sm:$0xf] %v1194
      %1323 = vst [vmem:[%s199 + $0x24] sm:$0xf] %v1195
      %1324 = vst [vmem:[%s199 + $0x28] sm:$0xf] %v1196
      %1325 = vst [vmem:[%s199 + $0x2c] sm:$0xf] %v1197
      %1326 = vst [vmem:[%s199 + $0x30] sm:$0xf] %v1198
      %1327 = vst [vmem:[%s199 + $0x34] sm:$0xf] %v1199
      %1328 = vst [vmem:[%s199 + $0x38] sm:$0xf] %v1200
      %1329 = vst [vmem:[%s199 + $0x3c] sm:$0xf] %v1201
      %1330 = vst [vmem:[%s199 + $0x40] sm:$0xf] %v1202
      %1331 = vst [vmem:[%s199 + $0x44] sm:$0xf] %v1203
      %1332 = vst [vmem:[%s199 + $0x48] sm:$0xf] %v1204
      %1333 = vst [vmem:[%s199 + $0x4c] sm:$0xf] %v1205
      %1334 = vst [vmem:[%s199 + $0x50] sm:$0xf] %v1206
      %1335 = vst [vmem:[%s199 + $0x54] sm:$0xf] %v1207
      %1336 = vst [vmem:[%s199 + $0x58] sm:$0xf] %v1208
      %1337 = vst [vmem:[%s199 + $0x5c] sm:$0xf] %v1209
      %1338 = vst [vmem:[%s199 + $0x60] sm:$0xf] %v1210
      %1339 = vst [vmem:[%s199 + $0x64] sm:$0xf] %v1211
      %1340 = vst [vmem:[%s199 + $0x68] sm:$0xf] %v1212
      %1341 = vst [vmem:[%s199 + $0x6c] sm:$0xf] %v1213
      %1342 = vst [vmem:[%s199 + $0x70] sm:$0xf] %v1214
      %1343 = vst [vmem:[%s199 + $0x74] sm:$0xf] %v1215
      %1344 = vst [vmem:[%s199 + $0x78] sm:$0xf] %v1216
      %1345 = vst [vmem:[%s199 + $0x7c] sm:$0xf] %v1217
      %1346 = vst [vmem:[%s199 + $0x80] sm:$0xf] %v1218
      %1347 = vst [vmem:[%s199 + $0x84] sm:$0xf] %v1219
      %1348 = vst [vmem:[%s199 + $0x88] sm:$0xf] %v1220
      %1349 = vst [vmem:[%s199 + $0x8c] sm:$0xf] %v1221
      %1350 = vst [vmem:[%s199 + $0x90] sm:$0xf] %v1222
      %1351 = vst [vmem:[%s199 + $0x94] sm:$0xf] %v1223
      %1352 = vst [vmem:[%s199 + $0x98] sm:$0xf] %v1224
      %1353 = vst [vmem:[%s199 + $0x9c] sm:$0xf] %v1225
      %1354 = vst [vmem:[%s199 + $0xa0] sm:$0xf] %v1226
      %1355 = vst [vmem:[%s199 + $0xa4] sm:$0xf] %v1227
      %1356 = vst [vmem:[%s199 + $0xa8] sm:$0xf] %v1228
      %1357 = vst [vmem:[%s199 + $0xac] sm:$0xf] %v1229
      %1358 = vst [vmem:[%s199 + $0xb0] sm:$0xf] %v1230
      %1359 = vst [vmem:[%s199 + $0xb4] sm:$0xf] %v1231
      %1360 = vst [vmem:[%s199 + $0xb8] sm:$0xf] %v1232
      %1361 = vst [vmem:[%s199 + $0xbc] sm:$0xf] %v1233
      %1362 = vst [vmem:[%s199 + $0xc0] sm:$0xf] %v1234
      %1363 = vst [vmem:[%s199 + $0xc4] sm:$0xf] %v1235
      %1364 = vst [vmem:[%s199 + $0xc8] sm:$0xf] %v1236
      %1365 = vst [vmem:[%s199 + $0xcc] sm:$0xf] %v1237
      %1366 = vst [vmem:[%s199 + $0xd0] sm:$0xf] %v1238
      %1367 = vst [vmem:[%s199 + $0xd4] sm:$0xf] %v1239
      %1368 = vst [vmem:[%s199 + $0xd8] sm:$0xf] %v1240
      %1369 = vst [vmem:[%s199 + $0xdc] sm:$0xf] %v1241
      %1370 = vst [vmem:[%s199 + $0xe0] sm:$0xf] %v1242
      %1371 = vst [vmem:[%s199 + $0xe4] sm:$0xf] %v1243
      %1372 = vst [vmem:[%s199 + $0xe8] sm:$0xf] %v1244
      %1373 = vst [vmem:[%s199 + $0xec] sm:$0xf] %v1245
      %1374 = vst [vmem:[%s199 + $0xf0] sm:$0xf] %v1246
      %1375 = vst [vmem:[%s199 + $0xf4] sm:$0xf] %v1247
      %1376 = vst [vmem:[%s199 + $0xf8] sm:$0xf] %v1248
      %1377 = vst [vmem:[%s199 + $0xfc] sm:$0xf] %v1249
      %s1378 = smul.u32 64, %s15
      %p1379 = scmp.lt.s32.totalorder %s1378, 255
      %s1380 = scalar_select %p1379, %s1378, 255
      %s1381 = smul.addr %s1380, 4
      %s1382 = scalar_lea.vmem %s4, %s1381
      // Predicated region
      $region37: #{unet_seq_forward.19} parent=35 // pred_check
        %p1383 = pneg %p122
      $region38: #{unet_seq_forward.19} parent=35 // pred_check_branch
        %1385 = sbr.rel (%p1383) target = $region40
      $region39: #{unet_seq_forward.19} parent=35 // pred_region
        %s1386 = smul.u32 64, %s15
      $region40: #{unet_seq_forward.19} parent=35 // pred_fallthru
        _
    $region36: #{unet_seq_forward.19} parent=5 // pred_fallthru
      _
    %p1387 = scmp.le.s32.totalorder 2, %s10
    // Predicated region
    $region41: #{unet_seq_forward.19} parent=5 // pred_check
      %p1388 = pneg %p1387
    $region42: #{unet_seq_forward.19} parent=5 // pred_check_branch
      %1390 = sbr.rel (%p1388) target = $region44
    $region43: #{unet_seq_forward.19} parent=5 // pred_region
      %s1391 = ssub.s32 %s10, 2
      // Predicated region
      $region45: #{unet_seq_forward.19} parent=43 // pred_check
        %p1392 = pneg %p128
      $region46: #{unet_seq_forward.19} parent=43 // pred_check_branch
        %1394 = sbr.rel (%p1392) target = $region48
      $region47: #{unet_seq_forward.19} parent=43 // pred_region
        %s1395 = smul.u32 64, %s16
        %p1396 = scmp.lt.s32.totalorder %s1395, 255
        %s1397 = scalar_select %p1396, %s1395, 255
        %s1398 = smul.addr %s1397, 4
        %s1399 = scalar_lea.vmem %s4, %s1398
      $region48: #{unet_seq_forward.19} parent=43 // pred_fallthru
        _
    $region44: #{unet_seq_forward.19} parent=5 // pred_fallthru
      _
  $region6: #{unet_seq_forward.19} parent=0 // loop_footer
    %s14 = sadd.s32 1, %s10
  $region7: #{unet_seq_forward.19} parent=0 // loop_footer_branch
    %9 = sbr.rel target = $region3
  $region8: #{unet_seq_forward.19} parent=0 // loop_exit
    _

// kernel: unet_seq_forward.20
$region0: #{unet_seq_forward.20}
  #allocation0 [shape = 'u32[]', space=smem, size = 0x4, offset = 0x4, fixed_abs, tag = 'smem constant byte address 0x4 - core index']
  #allocation1 [shape = 'u32[144,128]{1,0:T(1,128)}', space=vmem, size = 0x12000, scoped, tag = 'internal scratch']
  %s0 = inlined_call_operand.vmem [shape: bf16[2048,80], index: 0, kind: input, shape index: {}]
  %s1 = inlined_call_operand.vmem [shape: bf16[80,128], index: 1, kind: input, shape index: {}]
  %s2 = inlined_call_operand.vmem [shape: f32[1,128], index: 2, kind: input, shape index: {}]
  %s3 = inlined_call_operand.vmem [shape: f32[1,128], index: 3, kind: input, shape index: {}]
  %s4 = inlined_call_operand.vmem [shape: bf16[2048,128], index: 4, kind: output, shape index: {}]
  %s5 = sld [smem:[#allocation0]]
  $region49: #{unet_seq_forward.20} parent=0
    _
  %s7 = ssub.s32 1, %s5
  %s8 = scalar_select 0, %s7, %s5
  loop: start=0, step=1, limit=6
  $region2: #{unet_seq_forward.20} parent=0 // loop_pre_header
    _
  $region3: #{unet_seq_forward.20} parent=0 // loop_header
    %s10 = sphi 0, %s14
    %p11 = scmp.ge.s32.totalorder %s10, 6
    %s20 = sphi 0, %s22
    %s23 = sphi 0, %s20
    %s24 = sphi 0, %s23
    %s40 = sphi 0, %s24
    %s44 = sphi 0, %s44
    %s46 = sphi 0, %s44
    %s47 = sphi 0, %s46
    %s61 = sphi 0, %s47
    %s65 = sphi 0, %s65
    %s67 = sphi 0, %s65
    %s68 = sphi 0, %s67
    %s82 = sphi 0, %s68
    %s86 = sphi 0, %s86
    %s88 = sphi 0, %s86
    %s89 = sphi 0, %s88
    %s103 = sphi 0, %s89
    %s109 = sphi 0, %s111
    %s112 = sphi 0, %s109
    %s113 = sphi 0, %s112
    %s129 = sphi 0, %s113
  $region4: #{unet_seq_forward.20} parent=0 // loop_header_branch
    %13 = sbr.rel (%p11) target = $region8
  $region5: #{unet_seq_forward.20} parent=0 // loop_body
    %s15 = ssub.s32 %s10, 1
    %s16 = ssub.s32 %s10, 2
    %s17 = sadd.s32 %s10, 1
    %s18 = ssub.s32 %s10, %s17
    %p19 = scmp.eq.s32.totalorder %s18, 0
    %s21 = sadd.s32 %s20, 1
    %s22 = scalar_select %p19, %s20, %s21
    %p25 = pneg %p19
    %p26 = scmp.eq.s32.totalorder %s10, 3
    %p27 = por %p25, %p26
    %p28 = scmp.ne.s32.totalorder %s20, %s23
    %p29 = scmp.eq.s32.totalorder %s10, 0
    %p30 = por %p28, %p29
    %p31 = scmp.ne.s32.totalorder %s20, %s23
    %p32 = scmp.eq.s32.totalorder %s15, 3
    %p33 = por %p31, %p32
    %p34 = scmp.ne.s32.totalorder %s23, %s24
    %p35 = scmp.eq.s32.totalorder %s15, 0
    %p36 = por %p34, %p35
    %p37 = scmp.ne.s32.totalorder %s23, %s24
    %p38 = scmp.eq.s32.totalorder %s16, 3
    %p39 = por %p37, %p38
    %p41 = scmp.ne.s32.totalorder %s24, %s40
    %p42 = scmp.eq.s32.totalorder %s16, 0
    %p43 = por %p41, %p42
    %s45 = sadd.s32 %s44, 1
    %p48 = scmp.eq.s32.totalorder %s10, 3
    %p49 = scmp.ne.s32.totalorder %s44, %s46
    %p50 = scmp.eq.s32.totalorder %s10, 0
    %p51 = por %p49, %p50
    %p52 = scmp.ne.s32.totalorder %s44, %s46
    %p53 = scmp.eq.s32.totalorder %s15, 3
    %p54 = por %p52, %p53
    %p55 = scmp.ne.s32.totalorder %s46, %s47
    %p56 = scmp.eq.s32.totalorder %s15, 0
    %p57 = por %p55, %p56
    %p58 = scmp.ne.s32.totalorder %s46, %s47
    %p59 = scmp.eq.s32.totalorder %s16, 3
    %p60 = por %p58, %p59
    %p62 = scmp.ne.s32.totalorder %s47, %s61
    %p63 = scmp.eq.s32.totalorder %s16, 0
    %p64 = por %p62, %p63
    %s66 = sadd.s32 %s65, 1
    %p69 = scmp.eq.s32.totalorder %s10, 3
    %p70 = scmp.ne.s32.totalorder %s65, %s67
    %p71 = scmp.eq.s32.totalorder %s10, 0
    %p72 = por %p70, %p71
    %p73 = scmp.ne.s32.totalorder %s65, %s67
    %p74 = scmp.eq.s32.totalorder %s15, 3
    %p75 = por %p73, %p74
    %p76 = scmp.ne.s32.totalorder %s67, %s68
    %p77 = scmp.eq.s32.totalorder %s15, 0
    %p78 = por %p76, %p77
    %p79 = scmp.ne.s32.totalorder %s67, %s68
    %p80 = scmp.eq.s32.totalorder %s16, 3
    %p81 = por %p79, %p80
    %p83 = scmp.ne.s32.totalorder %s68, %s82
    %p84 = scmp.eq.s32.totalorder %s16, 0
    %p85 = por %p83, %p84
    %s87 = sadd.s32 %s86, 1
    %p90 = scmp.eq.s32.totalorder %s10, 3
    %p91 = scmp.ne.s32.totalorder %s86, %s88
    %p92 = scmp.eq.s32.totalorder %s10, 0
    %p93 = por %p91, %p92
    %p94 = scmp.ne.s32.totalorder %s86, %s88
    %p95 = scmp.eq.s32.totalorder %s15, 3
    %p96 = por %p94, %p95
    %p97 = scmp.ne.s32.totalorder %s88, %s89
    %p98 = scmp.eq.s32.totalorder %s15, 0
    %p99 = por %p97, %p98
    %p100 = scmp.ne.s32.totalorder %s88, %s89
    %p101 = scmp.eq.s32.totalorder %s16, 3
    %p102 = por %p100, %p101
    %p104 = scmp.ne.s32.totalorder %s89, %s103
    %p105 = scmp.eq.s32.totalorder %s16, 0
    %p106 = por %p104, %p105
    %s107 = ssub.s32 %s10, %s17
    %p108 = scmp.eq.s32.totalorder %s107, 0
    %s110 = sadd.s32 %s109, 1
    %s111 = scalar_select %p108, %s109, %s110
    %p114 = pneg %p108
    %p115 = scmp.eq.s32.totalorder %s10, 3
    %p116 = por %p114, %p115
    %p117 = scmp.ne.s32.totalorder %s109, %s112
    %p118 = scmp.eq.s32.totalorder %s10, 0
    %p119 = por %p117, %p118
    %p120 = scmp.ne.s32.totalorder %s109, %s112
    %p121 = scmp.eq.s32.totalorder %s15, 3
    %p122 = por %p120, %p121
    %p123 = scmp.ne.s32.totalorder %s112, %s113
    %p124 = scmp.eq.s32.totalorder %s15, 0
    %p125 = por %p123, %p124
    %p126 = scmp.ne.s32.totalorder %s112, %s113
    %p127 = scmp.eq.s32.totalorder %s16, 3
    %p128 = por %p126, %p127
    %p130 = scmp.ne.s32.totalorder %s113, %s129
    %p131 = scmp.eq.s32.totalorder %s16, 0
    %p132 = por %p130, %p131
    %p133 = scmp.le.s32.totalorder 1, %s10
    %p134 = scmp.lt.s32.totalorder %s10, 5
    %p135 = pnand %p133, %p134
    %p136 = pneg %p135
    // Predicated region
    $region9: #{unet_seq_forward.20} parent=5 // pred_check
      _
    $region10: #{unet_seq_forward.20} parent=5 // pred_check_branch
      %138 = sbr.rel (%p135) target = $region12
    $region11: #{unet_seq_forward.20} parent=5 // pred_region
      %s139 = ssub.s32 %s10, 1
      // Predicated region
      $region13: #{unet_seq_forward.20} parent=11 // pred_check
        %p140 = pneg %p57
      $region14: #{unet_seq_forward.20} parent=11 // pred_check_branch
        %142 = sbr.rel (%p140) target = $region16
      $region15: #{unet_seq_forward.20} parent=11 // pred_region
        _
      $region16: #{unet_seq_forward.20} parent=11 // pred_fallthru
        _
      // Predicated region
      $region17: #{unet_seq_forward.20} parent=11 // pred_check
        %p143 = pneg %p78
      $region18: #{unet_seq_forward.20} parent=11 // pred_check_branch
        %145 = sbr.rel (%p143) target = $region20
      $region19: #{unet_seq_forward.20} parent=11 // pred_region
        _
      $region20: #{unet_seq_forward.20} parent=11 // pred_fallthru
        _
      // Predicated region
      $region21: #{unet_seq_forward.20} parent=11 // pred_check
        %p146 = pneg %p99
      $region22: #{unet_seq_forward.20} parent=11 // pred_check_branch
        %148 = sbr.rel (%p146) target = $region24
      $region23: #{unet_seq_forward.20} parent=11 // pred_region
        _
      $region24: #{unet_seq_forward.20} parent=11 // pred_fallthru
        _
    $region12: #{unet_seq_forward.20} parent=5 // pred_fallthru
      _
    %p149 = scmp.lt.s32.totalorder %s10, 4
    // Predicated region
    $region25: #{unet_seq_forward.20} parent=5 // pred_check
      %p150 = pneg %p149
    $region26: #{unet_seq_forward.20} parent=5 // pred_check_branch
      %152 = sbr.rel (%p150) target = $region28
    $region27: #{unet_seq_forward.20} parent=5 // pred_region
      // Predicated region
      $region29: #{unet_seq_forward.20} parent=27 // pred_check
        %p153 = pneg %p30
      $region30: #{unet_seq_forward.20} parent=27 // pred_check_branch
        %155 = sbr.rel (%p153) target = $region32
      $region31: #{unet_seq_forward.20} parent=27 // pred_region
        %s156 = smul.u32 64, %s10
        %p157 = scmp.lt.s32.totalorder %s156, 255
        %s158 = scalar_select %p157, %s156, 255
        %s159 = smul.addr %s158, 4
        %s160 = scalar_lea.vmem %s0, %s159
        %s161 = smul.u32 64, %s10
      $region32: #{unet_seq_forward.20} parent=27 // pred_fallthru
        _
    $region28: #{unet_seq_forward.20} parent=5 // pred_fallthru
      _
    %p162 = scmp.le.s32.totalorder 1, %s10
    %p163 = scmp.lt.s32.totalorder %s10, 5
    %p164 = pnand %p162, %p163
    %p165 = pneg %p164
    // Predicated region
    $region33: #{unet_seq_forward.20} parent=5 // pred_check
      _
    $region34: #{unet_seq_forward.20} parent=5 // pred_check_branch
      %167 = sbr.rel (%p164) target = $region36
    $region35: #{unet_seq_forward.20} parent=5 // pred_region
      %s168 = ssub.s32 %s10, 1
      %s169 = smul.u32 64, %s15
      %p170 = scmp.lt.s32.totalorder %s169, 255
      %s171 = scalar_select %p170, %s169, 255
      %s172 = smul.addr %s171, 4
      %s173 = scalar_lea.vmem %s0, %s172
      %p174 = pneg %p36
      %p175 = pneg %p33
      %p176 = pneg %p57
      %p177 = pneg %p54
      %p178 = pneg %p78
      %p179 = pneg %p75
      %p180 = pneg %p99
      %p181 = pneg %p96
      %p182 = pneg %p125
      %p183 = pneg %p122
      %s184 = smul.u32 64, %s15
      %p185 = scmp.lt.s32.totalorder %s184, 255
      %s186 = scalar_select %p185, %s184, 255
      %s187 = smul.addr %s186, 4
      %s188 = scalar_lea.vmem %s4, %s187
      %s189 = smul.u32 64, %s15
      %p190 = scmp.lt.s32.totalorder %s189, 255
      %s191 = scalar_select %p190, %s189, 255
      %s192 = smul.addr %s191, 4
      %s193 = scalar_lea.vmem %s0, %s192
      %s194 = smul.u32 64, %s15
      %s195 = smul.u32 64, %s15
      %p196 = scmp.lt.s32.totalorder %s195, 255
      %s197 = scalar_select %p196, %s195, 255
      %s198 = smul.addr %s197, 4
      %s199 = scalar_lea.vmem %s4, %s198
      %s200 = smul.u32 64, %s15
      %v202 = vld [vmem:[%s193] sm:$0xf]
      %v203 = vld [vmem:[%s193 + $0x4] sm:$0xf]
      %v204 = vld [vmem:[%s193 + $0x8] sm:$0xf]
      %v205 = vld [vmem:[%s193 + $0xc] sm:$0xf]
      %v206 = vld [vmem:[%s193 + $0x10] sm:$0xf]
      %v207 = vld [vmem:[%s193 + $0x14] sm:$0xf]
      %v208 = vld [vmem:[%s193 + $0x18] sm:$0xf]
      %v209 = vld [vmem:[%s193 + $0x1c] sm:$0xf]
      %v210 = vld [vmem:[%s193 + $0x20] sm:$0xf]
      %v211 = vld [vmem:[%s193 + $0x24] sm:$0xf]
      %v212 = vld [vmem:[%s193 + $0x28] sm:$0xf]
      %v213 = vld [vmem:[%s193 + $0x2c] sm:$0xf]
      %v214 = vld [vmem:[%s193 + $0x30] sm:$0xf]
      %v215 = vld [vmem:[%s193 + $0x34] sm:$0xf]
      %v216 = vld [vmem:[%s193 + $0x38] sm:$0xf]
      %v217 = vld [vmem:[%s193 + $0x3c] sm:$0xf]
      %v218 = vld [vmem:[%s193 + $0x40] sm:$0xf]
      %v219 = vld [vmem:[%s193 + $0x44] sm:$0xf]
      %v220 = vld [vmem:[%s193 + $0x48] sm:$0xf]
      %v221 = vld [vmem:[%s193 + $0x4c] sm:$0xf]
      %v222 = vld [vmem:[%s193 + $0x50] sm:$0xf]
      %v223 = vld [vmem:[%s193 + $0x54] sm:$0xf]
      %v224 = vld [vmem:[%s193 + $0x58] sm:$0xf]
      %v225 = vld [vmem:[%s193 + $0x5c] sm:$0xf]
      %v226 = vld [vmem:[%s193 + $0x60] sm:$0xf]
      %v227 = vld [vmem:[%s193 + $0x64] sm:$0xf]
      %v228 = vld [vmem:[%s193 + $0x68] sm:$0xf]
      %v229 = vld [vmem:[%s193 + $0x6c] sm:$0xf]
      %v230 = vld [vmem:[%s193 + $0x70] sm:$0xf]
      %v231 = vld [vmem:[%s193 + $0x74] sm:$0xf]
      %v232 = vld [vmem:[%s193 + $0x78] sm:$0xf]
      %v233 = vld [vmem:[%s193 + $0x7c] sm:$0xf]
      %v234 = vld [vmem:[%s193 + $0x80] sm:$0xf]
      %v235 = vld [vmem:[%s193 + $0x84] sm:$0xf]
      %v236 = vld [vmem:[%s193 + $0x88] sm:$0xf]
      %v237 = vld [vmem:[%s193 + $0x8c] sm:$0xf]
      %v238 = vld [vmem:[%s193 + $0x90] sm:$0xf]
      %v239 = vld [vmem:[%s193 + $0x94] sm:$0xf]
      %v240 = vld [vmem:[%s193 + $0x98] sm:$0xf]
      %v241 = vld [vmem:[%s193 + $0x9c] sm:$0xf]
      %v242 = vld [vmem:[%s193 + $0xa0] sm:$0xf]
      %v243 = vld [vmem:[%s193 + $0xa4] sm:$0xf]
      %v244 = vld [vmem:[%s193 + $0xa8] sm:$0xf]
      %v245 = vld [vmem:[%s193 + $0xac] sm:$0xf]
      %v246 = vld [vmem:[%s193 + $0xb0] sm:$0xf]
      %v247 = vld [vmem:[%s193 + $0xb4] sm:$0xf]
      %v248 = vld [vmem:[%s193 + $0xb8] sm:$0xf]
      %v249 = vld [vmem:[%s193 + $0xbc] sm:$0xf]
      %v250 = vld [vmem:[%s193 + $0xc0] sm:$0xf]
      %v251 = vld [vmem:[%s193 + $0xc4] sm:$0xf]
      %v252 = vld [vmem:[%s193 + $0xc8] sm:$0xf]
      %v253 = vld [vmem:[%s193 + $0xcc] sm:$0xf]
      %v254 = vld [vmem:[%s193 + $0xd0] sm:$0xf]
      %v255 = vld [vmem:[%s193 + $0xd4] sm:$0xf]
      %v256 = vld [vmem:[%s193 + $0xd8] sm:$0xf]
      %v257 = vld [vmem:[%s193 + $0xdc] sm:$0xf]
      %v258 = vld [vmem:[%s193 + $0xe0] sm:$0xf]
      %v259 = vld [vmem:[%s193 + $0xe4] sm:$0xf]
      %v260 = vld [vmem:[%s193 + $0xe8] sm:$0xf]
      %v261 = vld [vmem:[%s193 + $0xec] sm:$0xf]
      %v262 = vld [vmem:[%s193 + $0xf0] sm:$0xf]
      %v263 = vld [vmem:[%s193 + $0xf4] sm:$0xf]
      %v264 = vld [vmem:[%s193 + $0xf8] sm:$0xf]
      %v265 = vld [vmem:[%s193 + $0xfc] sm:$0xf]
      %v266 = vld [vmem:[%s1] sm:$0xf]
      %v267 = vld [vmem:[%s1 + $0x4] sm:$0xf]
      %v268 = vld [vmem:[%s1 + $0x8] sm:$0xf]
      %v269 = vld [vmem:[%s1 + $0xc] sm:$0xf]
      %v270 = vld [vmem:[%s1 + $0x10] sm:$0xf]
      %v271 = vld [vmem:[%s1 + $0x14] sm:$0xf]
      %v272 = vld [vmem:[%s1 + $0x18] sm:$0xf]
      %v273 = vld [vmem:[%s1 + $0x1c] sm:$0xf]
      %v274 = vld [vmem:[%s1 + $0x20] sm:$0xf]
      %v275 = vld [vmem:[%s1 + $0x24] sm:$0xf]
      %v340 = vunpack.c.l.b16 %v202
      %v341 = vunpack.c.l.b16 %v203
      %v342 = vunpack.c.l.b16 %v204
      %v343 = vunpack.c.l.b16 %v205
      %v344 = vunpack.c.l.b16 %v206
      %v345 = vunpack.c.l.b16 %v207
      %v346 = vunpack.c.l.b16 %v208
      %v347 = vunpack.c.l.b16 %v209
      %v348 = vunpack.c.l.b16 %v210
      %v349 = vunpack.c.l.b16 %v211
      %v350 = vunpack.c.l.b16 %v212
      %v351 = vunpack.c.l.b16 %v213
      %v352 = vunpack.c.l.b16 %v214
      %v353 = vunpack.c.l.b16 %v215
      %v354 = vunpack.c.l.b16 %v216
      %v355 = vunpack.c.l.b16 %v217
      %v356 = vunpack.c.l.b16 %v218
      %v357 = vunpack.c.l.b16 %v219
      %v358 = vunpack.c.l.b16 %v220
      %v359 = vunpack.c.l.b16 %v221
      %v360 = vunpack.c.l.b16 %v222
      %v361 = vunpack.c.l.b16 %v223
      %v362 = vunpack.c.l.b16 %v224
      %v363 = vunpack.c.l.b16 %v225
      %v364 = vunpack.c.l.b16 %v226
      %v365 = vunpack.c.l.b16 %v227
      %v366 = vunpack.c.l.b16 %v228
      %v367 = vunpack.c.l.b16 %v229
      %v368 = vunpack.c.l.b16 %v230
      %v369 = vunpack.c.l.b16 %v231
      %v370 = vunpack.c.l.b16 %v232
      %v371 = vunpack.c.l.b16 %v233
      %v372 = vunpack.c.l.b16 %v234
      %v373 = vunpack.c.l.b16 %v235
      %v374 = vunpack.c.l.b16 %v236
      %v375 = vunpack.c.l.b16 %v237
      %v376 = vunpack.c.l.b16 %v238
      %v377 = vunpack.c.l.b16 %v239
      %v378 = vunpack.c.l.b16 %v240
      %v379 = vunpack.c.l.b16 %v241
      %v380 = vunpack.c.l.b16 %v242
      %v381 = vunpack.c.l.b16 %v243
      %v382 = vunpack.c.l.b16 %v244
      %v383 = vunpack.c.l.b16 %v245
      %v384 = vunpack.c.l.b16 %v246
      %v385 = vunpack.c.l.b16 %v247
      %v386 = vunpack.c.l.b16 %v248
      %v387 = vunpack.c.l.b16 %v249
      %v388 = vunpack.c.l.b16 %v250
      %v389 = vunpack.c.l.b16 %v251
      %v390 = vunpack.c.l.b16 %v252
      %v391 = vunpack.c.l.b16 %v253
      %v392 = vunpack.c.l.b16 %v254
      %v393 = vunpack.c.l.b16 %v255
      %v394 = vunpack.c.l.b16 %v256
      %v395 = vunpack.c.l.b16 %v257
      %v396 = vunpack.c.l.b16 %v258
      %v397 = vunpack.c.l.b16 %v259
      %v398 = vunpack.c.l.b16 %v260
      %v399 = vunpack.c.l.b16 %v261
      %v400 = vunpack.c.l.b16 %v262
      %v401 = vunpack.c.l.b16 %v263
      %v402 = vunpack.c.l.b16 %v264
      %v403 = vunpack.c.l.b16 %v265
      %v404 = vpack.c.b16 %v341, %v340
      %v405 = vpack.c.b16 %v343, %v342
      %v406 = vpack.c.b16 %v345, %v344
      %v407 = vpack.c.b16 %v347, %v346
      %v408 = vpack.c.b16 %v349, %v348
      %v409 = vpack.c.b16 %v351, %v350
      %v410 = vpack.c.b16 %v353, %v352
      %v411 = vpack.c.b16 %v355, %v354
      %v412 = vpack.c.b16 %v357, %v356
      %v413 = vpack.c.b16 %v359, %v358
      %v414 = vpack.c.b16 %v361, %v360
      %v415 = vpack.c.b16 %v363, %v362
      %v416 = vpack.c.b16 %v365, %v364
      %v417 = vpack.c.b16 %v367, %v366
      %v418 = vpack.c.b16 %v369, %v368
      %v419 = vpack.c.b16 %v371, %v370
      %v420 = vpack.c.b16 %v373, %v372
      %v421 = vpack.c.b16 %v375, %v374
      %v422 = vpack.c.b16 %v377, %v376
      %v423 = vpack.c.b16 %v379, %v378
      %v424 = vpack.c.b16 %v381, %v380
      %v425 = vpack.c.b16 %v383, %v382
      %v426 = vpack.c.b16 %v385, %v384
      %v427 = vpack.c.b16 %v387, %v386
      %v428 = vpack.c.b16 %v389, %v388
      %v429 = vpack.c.b16 %v391, %v390
      %v430 = vpack.c.b16 %v393, %v392
      %v431 = vpack.c.b16 %v395, %v394
      %v432 = vpack.c.b16 %v397, %v396
      %v433 = vpack.c.b16 %v399, %v398
      %v434 = vpack.c.b16 %v401, %v400
      %v435 = vpack.c.b16 %v403, %v402
      %v446 = vunpack.c.l.b16 %v266
      %v447 = vunpack.c.l.b16 %v267
      %v448 = vunpack.c.l.b16 %v268
      %v449 = vunpack.c.l.b16 %v269
      %v450 = vunpack.c.l.b16 %v270
      %v451 = vunpack.c.l.b16 %v271
      %v452 = vunpack.c.l.b16 %v272
      %v453 = vunpack.c.l.b16 %v273
      %v454 = vunpack.c.l.b16 %v274
      %v455 = vunpack.c.l.b16 %v275
      %v456 = vpack.c.b16 %v447, %v446
      %v457 = vpack.c.b16 %v449, %v448
      %v458 = vpack.c.b16 %v451, %v450
      %v459 = vpack.c.b16 %v453, %v452
      %v460 = vpack.c.b16 %v455, %v454
      %vm466 = vcmask 654336
      %v468 = vsel %vm466, %v404, 0
      %v471 = vsel %vm466, %v405, 0
      %v474 = vsel %vm466, %v406, 0
      %v477 = vsel %vm466, %v407, 0
      %v480 = vsel %vm466, %v408, 0
      %v483 = vsel %vm466, %v409, 0
      %v486 = vsel %vm466, %v410, 0
      %v489 = vsel %vm466, %v411, 0
      %v492 = vsel %vm466, %v412, 0
      %v495 = vsel %vm466, %v413, 0
      %v498 = vsel %vm466, %v414, 0
      %v501 = vsel %vm466, %v415, 0
      %v504 = vsel %vm466, %v416, 0
      %v507 = vsel %vm466, %v417, 0
      %v510 = vsel %vm466, %v418, 0
      %v513 = vsel %vm466, %v419, 0
      %v516 = vsel %vm466, %v420, 0
      %v519 = vsel %vm466, %v421, 0
      %v522 = vsel %vm466, %v422, 0
      %v525 = vsel %vm466, %v423, 0
      %v528 = vsel %vm466, %v424, 0
      %v531 = vsel %vm466, %v425, 0
      %v534 = vsel %vm466, %v426, 0
      %v537 = vsel %vm466, %v427, 0
      %v540 = vsel %vm466, %v428, 0
      %v543 = vsel %vm466, %v429, 0
      %v546 = vsel %vm466, %v430, 0
      %v549 = vsel %vm466, %v431, 0
      %v552 = vsel %vm466, %v432, 0
      %v555 = vsel %vm466, %v433, 0
      %v558 = vsel %vm466, %v434, 0
      %v561 = vsel %vm466, %v435, 0
      %563 = vmatprep.subr.bf16.mxu0 0
      %564 = vmatpush1.bf16.msra.mxu0 0
      %565 = vmatprep.subr.bf16.mxu0 0
      %566 = vmatpush1.bf16.msra.mxu0 0
      %567 = vmatprep.subr.bf16.mxu0 0
      %568 = vmatpush1.bf16.msra.mxu0 0
      %569 = vmatprep.subr.bf16.mxu0 0
      %570 = vmatpush1.bf16.msra.mxu0 %v460
      %571 = vmatprep.subr.bf16.mxu0 0
      %572 = vmatpush1.bf16.msra.mxu0 %v459
      %573 = vmatprep.subr.bf16.mxu0 0
      %574 = vmatpush1.bf16.msra.mxu0 %v458
      %575 = vmatprep.subr.bf16.mxu0 0
      %576 = vmatpush1.bf16.msra.mxu0 %v457
      %577 = vmatprep.subr.bf16.mxu0 0
      %578 = vmatpush1.bf16.msra.mxu0 %v456
      %579 = vmatprep.subr.bf16.mxu0 0
      %580 = vmatpush2.bf16.msra.mxu0 0
      %581 = vmatprep.subr.bf16.mxu0 0
      %582 = vmatpush2.bf16.msra.mxu0 0
      %583 = vmatprep.subr.bf16.mxu0 0
      %584 = vmatpush2.bf16.msra.mxu0 0
      %585 = vmatprep.subr.bf16.mxu0 0
      %586 = vmatpush2.bf16.msra.mxu0 0
      %587 = vmatprep.subr.bf16.mxu0 0
      %588 = vmatpush2.bf16.msra.mxu0 0
      %589 = vmatprep.subr.bf16.mxu0 0
      %590 = vmatpush2.bf16.msra.mxu0 0
      %591 = vmatprep.subr.bf16.mxu0 0
      %592 = vmatpush2.bf16.msra.mxu0 0
      %593 = vmatprep.subr.bf16.mxu0 0
      %594 = vmatpush2.bf16.msra.mxu0 0
      %595 = vmatprep.mubr.bf16.mxu0 0
      %596 = vmatmul.mubr.bf16.gmra.mxu0 %v468
      %v597 = vpop.f32.mrf.mxu0
      %v598 = vadd.f32 0.0, %v597
      %v599 = vpop.f32.mrf.mxu0
      %v600 = vpop.f32.mrf.mxu0
      %v601 = vadd.f32 0.0, %v600
      %v602 = vpop.f32.mrf.mxu0
      %603 = vmatprep.mubr.bf16.mxu0 0
      %604 = vmatmul.mubr.bf16.gmra.mxu0 %v471
      %v605 = vpop.f32.mrf.mxu0
      %v606 = vadd.f32 0.0, %v605
      %v607 = vpop.f32.mrf.mxu0
      %v608 = vpop.f32.mrf.mxu0
      %v609 = vadd.f32 0.0, %v608
      %v610 = vpop.f32.mrf.mxu0
      %611 = vmatprep.mubr.bf16.mxu0 0
      %612 = vmatmul.mubr.bf16.gmra.mxu0 %v474
      %v613 = vpop.f32.mrf.mxu0
      %v614 = vadd.f32 0.0, %v613
      %v615 = vpop.f32.mrf.mxu0
      %v616 = vpop.f32.mrf.mxu0
      %v617 = vadd.f32 0.0, %v616
      %v618 = vpop.f32.mrf.mxu0
      %619 = vmatprep.mubr.bf16.mxu0 0
      %620 = vmatmul.mubr.bf16.gmra.mxu0 %v477
      %v621 = vpop.f32.mrf.mxu0
      %v622 = vadd.f32 0.0, %v621
      %v623 = vpop.f32.mrf.mxu0
      %v624 = vpop.f32.mrf.mxu0
      %v625 = vadd.f32 0.0, %v624
      %v626 = vpop.f32.mrf.mxu0
      %627 = vmatprep.mubr.bf16.mxu0 0
      %628 = vmatmul.mubr.bf16.gmra.mxu0 %v480
      %v629 = vpop.f32.mrf.mxu0
      %v630 = vadd.f32 0.0, %v629
      %v631 = vpop.f32.mrf.mxu0
      %v632 = vpop.f32.mrf.mxu0
      %v633 = vadd.f32 0.0, %v632
      %v634 = vpop.f32.mrf.mxu0
      %635 = vmatprep.mubr.bf16.mxu0 0
      %636 = vmatmul.mubr.bf16.gmra.mxu0 %v483
      %v637 = vpop.f32.mrf.mxu0
      %v638 = vadd.f32 0.0, %v637
      %v639 = vpop.f32.mrf.mxu0
      %v640 = vpop.f32.mrf.mxu0
      %v641 = vadd.f32 0.0, %v640
      %v642 = vpop.f32.mrf.mxu0
      %643 = vmatprep.mubr.bf16.mxu0 0
      %644 = vmatmul.mubr.bf16.gmra.mxu0 %v486
      %v645 = vpop.f32.mrf.mxu0
      %v646 = vadd.f32 0.0, %v645
      %v647 = vpop.f32.mrf.mxu0
      %v648 = vpop.f32.mrf.mxu0
      %v649 = vadd.f32 0.0, %v648
      %v650 = vpop.f32.mrf.mxu0
      %651 = vmatprep.mubr.bf16.mxu0 0
      %652 = vmatmul.mubr.bf16.gmra.mxu0 %v489
      %v653 = vpop.f32.mrf.mxu0
      %v654 = vadd.f32 0.0, %v653
      %v655 = vpop.f32.mrf.mxu0
      %v656 = vpop.f32.mrf.mxu0
      %v657 = vadd.f32 0.0, %v656
      %v658 = vpop.f32.mrf.mxu0
      %659 = vmatprep.mubr.bf16.mxu0 0
      %660 = vmatmul.mubr.bf16.gmra.mxu0 %v492
      %v661 = vpop.f32.mrf.mxu0
      %v662 = vadd.f32 0.0, %v661
      %v663 = vpop.f32.mrf.mxu0
      %v664 = vpop.f32.mrf.mxu0
      %v665 = vadd.f32 0.0, %v664
      %v666 = vpop.f32.mrf.mxu0
      %667 = vmatprep.mubr.bf16.mxu0 0
      %668 = vmatmul.mubr.bf16.gmra.mxu0 %v495
      %v669 = vpop.f32.mrf.mxu0
      %v670 = vadd.f32 0.0, %v669
      %v671 = vpop.f32.mrf.mxu0
      %v672 = vpop.f32.mrf.mxu0
      %v673 = vadd.f32 0.0, %v672
      %v674 = vpop.f32.mrf.mxu0
      %675 = vmatprep.mubr.bf16.mxu0 0
      %676 = vmatmul.mubr.bf16.gmra.mxu0 %v498
      %v677 = vpop.f32.mrf.mxu0
      %v678 = vadd.f32 0.0, %v677
      %v679 = vpop.f32.mrf.mxu0
      %v680 = vpop.f32.mrf.mxu0
      %v681 = vadd.f32 0.0, %v680
      %v682 = vpop.f32.mrf.mxu0
      %683 = vmatprep.mubr.bf16.mxu0 0
      %684 = vmatmul.mubr.bf16.gmra.mxu0 %v501
      %v685 = vpop.f32.mrf.mxu0
      %v686 = vadd.f32 0.0, %v685
      %v687 = vpop.f32.mrf.mxu0
      %v688 = vpop.f32.mrf.mxu0
      %v689 = vadd.f32 0.0, %v688
      %v690 = vpop.f32.mrf.mxu0
      %691 = vmatprep.mubr.bf16.mxu0 0
      %692 = vmatmul.mubr.bf16.gmra.mxu0 %v504
      %v693 = vpop.f32.mrf.mxu0
      %v694 = vadd.f32 0.0, %v693
      %v695 = vpop.f32.mrf.mxu0
      %v696 = vpop.f32.mrf.mxu0
      %v697 = vadd.f32 0.0, %v696
      %v698 = vpop.f32.mrf.mxu0
      %699 = vmatprep.mubr.bf16.mxu0 0
      %700 = vmatmul.mubr.bf16.gmra.mxu0 %v507
      %v701 = vpop.f32.mrf.mxu0
      %v702 = vadd.f32 0.0, %v701
      %v703 = vpop.f32.mrf.mxu0
      %v704 = vpop.f32.mrf.mxu0
      %v705 = vadd.f32 0.0, %v704
      %v706 = vpop.f32.mrf.mxu0
      %707 = vmatprep.mubr.bf16.mxu0 0
      %708 = vmatmul.mubr.bf16.gmra.mxu0 %v510
      %v709 = vpop.f32.mrf.mxu0
      %v710 = vadd.f32 0.0, %v709
      %v711 = vpop.f32.mrf.mxu0
      %v712 = vpop.f32.mrf.mxu0
      %v713 = vadd.f32 0.0, %v712
      %v714 = vpop.f32.mrf.mxu0
      %715 = vmatprep.mubr.bf16.mxu0 0
      %716 = vmatmul.mubr.bf16.gmra.mxu0 %v513
      %v717 = vpop.f32.mrf.mxu0
      %v718 = vadd.f32 0.0, %v717
      %v719 = vpop.f32.mrf.mxu0
      %v720 = vpop.f32.mrf.mxu0
      %v721 = vadd.f32 0.0, %v720
      %v722 = vpop.f32.mrf.mxu0
      %723 = vmatprep.mubr.bf16.mxu0 0
      %724 = vmatmul.mubr.bf16.gmra.mxu0 %v516
      %v725 = vpop.f32.mrf.mxu0
      %v726 = vadd.f32 0.0, %v725
      %v727 = vpop.f32.mrf.mxu0
      %v728 = vpop.f32.mrf.mxu0
      %v729 = vadd.f32 0.0, %v728
      %v730 = vpop.f32.mrf.mxu0
      %731 = vmatprep.mubr.bf16.mxu0 0
      %732 = vmatmul.mubr.bf16.gmra.mxu0 %v519
      %v733 = vpop.f32.mrf.mxu0
      %v734 = vadd.f32 0.0, %v733
      %v735 = vpop.f32.mrf.mxu0
      %v736 = vpop.f32.mrf.mxu0
      %v737 = vadd.f32 0.0, %v736
      %v738 = vpop.f32.mrf.mxu0
      %739 = vmatprep.mubr.bf16.mxu0 0
      %740 = vmatmul.mubr.bf16.gmra.mxu0 %v522
      %v741 = vpop.f32.mrf.mxu0
      %v742 = vadd.f32 0.0, %v741
      %v743 = vpop.f32.mrf.mxu0
      %v744 = vpop.f32.mrf.mxu0
      %v745 = vadd.f32 0.0, %v744
      %v746 = vpop.f32.mrf.mxu0
      %747 = vmatprep.mubr.bf16.mxu0 0
      %748 = vmatmul.mubr.bf16.gmra.mxu0 %v525
      %v749 = vpop.f32.mrf.mxu0
      %v750 = vadd.f32 0.0, %v749
      %v751 = vpop.f32.mrf.mxu0
      %v752 = vpop.f32.mrf.mxu0
      %v753 = vadd.f32 0.0, %v752
      %v754 = vpop.f32.mrf.mxu0
      %755 = vmatprep.mubr.bf16.mxu0 0
      %756 = vmatmul.mubr.bf16.gmra.mxu0 %v528
      %v757 = vpop.f32.mrf.mxu0
      %v758 = vadd.f32 0.0, %v757
      %v759 = vpop.f32.mrf.mxu0
      %v760 = vpop.f32.mrf.mxu0
      %v761 = vadd.f32 0.0, %v760
      %v762 = vpop.f32.mrf.mxu0
      %763 = vmatprep.mubr.bf16.mxu0 0
      %764 = vmatmul.mubr.bf16.gmra.mxu0 %v531
      %v765 = vpop.f32.mrf.mxu0
      %v766 = vadd.f32 0.0, %v765
      %v767 = vpop.f32.mrf.mxu0
      %v768 = vpop.f32.mrf.mxu0
      %v769 = vadd.f32 0.0, %v768
      %v770 = vpop.f32.mrf.mxu0
      %771 = vmatprep.mubr.bf16.mxu0 0
      %772 = vmatmul.mubr.bf16.gmra.mxu0 %v534
      %v773 = vpop.f32.mrf.mxu0
      %v774 = vadd.f32 0.0, %v773
      %v775 = vpop.f32.mrf.mxu0
      %v776 = vpop.f32.mrf.mxu0
      %v777 = vadd.f32 0.0, %v776
      %v778 = vpop.f32.mrf.mxu0
      %779 = vmatprep.mubr.bf16.mxu0 0
      %780 = vmatmul.mubr.bf16.gmra.mxu0 %v537
      %v781 = vpop.f32.mrf.mxu0
      %v782 = vadd.f32 0.0, %v781
      %v783 = vpop.f32.mrf.mxu0
      %v784 = vpop.f32.mrf.mxu0
      %v785 = vadd.f32 0.0, %v784
      %v786 = vpop.f32.mrf.mxu0
      %787 = vmatprep.mubr.bf16.mxu0 0
      %788 = vmatmul.mubr.bf16.gmra.mxu0 %v540
      %v789 = vpop.f32.mrf.mxu0
      %v790 = vadd.f32 0.0, %v789
      %v791 = vpop.f32.mrf.mxu0
      %v792 = vpop.f32.mrf.mxu0
      %v793 = vadd.f32 0.0, %v792
      %v794 = vpop.f32.mrf.mxu0
      %795 = vmatprep.mubr.bf16.mxu0 0
      %796 = vmatmul.mubr.bf16.gmra.mxu0 %v543
      %v797 = vpop.f32.mrf.mxu0
      %v798 = vadd.f32 0.0, %v797
      %v799 = vpop.f32.mrf.mxu0
      %v800 = vpop.f32.mrf.mxu0
      %v801 = vadd.f32 0.0, %v800
      %v802 = vpop.f32.mrf.mxu0
      %803 = vmatprep.mubr.bf16.mxu0 0
      %804 = vmatmul.mubr.bf16.gmra.mxu0 %v546
      %v805 = vpop.f32.mrf.mxu0
      %v806 = vadd.f32 0.0, %v805
      %v807 = vpop.f32.mrf.mxu0
      %v808 = vpop.f32.mrf.mxu0
      %v809 = vadd.f32 0.0, %v808
      %v810 = vpop.f32.mrf.mxu0
      %811 = vmatprep.mubr.bf16.mxu0 0
      %812 = vmatmul.mubr.bf16.gmra.mxu0 %v549
      %v813 = vpop.f32.mrf.mxu0
      %v814 = vadd.f32 0.0, %v813
      %v815 = vpop.f32.mrf.mxu0
      %v816 = vpop.f32.mrf.mxu0
      %v817 = vadd.f32 0.0, %v816
      %v818 = vpop.f32.mrf.mxu0
      %819 = vmatprep.mubr.bf16.mxu0 0
      %820 = vmatmul.mubr.bf16.gmra.mxu0 %v552
      %v821 = vpop.f32.mrf.mxu0
      %v822 = vadd.f32 0.0, %v821
      %v823 = vpop.f32.mrf.mxu0
      %v824 = vpop.f32.mrf.mxu0
      %v825 = vadd.f32 0.0, %v824
      %v826 = vpop.f32.mrf.mxu0
      %827 = vmatprep.mubr.bf16.mxu0 0
      %828 = vmatmul.mubr.bf16.gmra.mxu0 %v555
      %v829 = vpop.f32.mrf.mxu0
      %v830 = vadd.f32 0.0, %v829
      %v831 = vpop.f32.mrf.mxu0
      %v832 = vpop.f32.mrf.mxu0
      %v833 = vadd.f32 0.0, %v832
      %v834 = vpop.f32.mrf.mxu0
      %835 = vmatprep.mubr.bf16.mxu0 0
      %836 = vmatmul.mubr.bf16.gmra.mxu0 %v558
      %v837 = vpop.f32.mrf.mxu0
      %v838 = vadd.f32 0.0, %v837
      %v839 = vpop.f32.mrf.mxu0
      %v840 = vpop.f32.mrf.mxu0
      %v841 = vadd.f32 0.0, %v840
      %v842 = vpop.f32.mrf.mxu0
      %843 = vmatprep.mubr.bf16.mxu0 0
      %844 = vmatmul.mubr.bf16.gmra.mxu0 %v561
      %v845 = vpop.f32.mrf.mxu0
      %v846 = vadd.f32 0.0, %v845
      %v847 = vpop.f32.mrf.mxu0
      %v848 = vpop.f32.mrf.mxu0
      %v849 = vadd.f32 0.0, %v848
      %v850 = vpop.f32.mrf.mxu0
      %851 = vdwg.mxu0
      %v852 = vld [vmem:[%s2] sm:$0x1]
      %v854 = vlaneseq
      %v855 = vshrl.u32 %v854, 7
      %v856 = vsub.s32 0, %v855
      %v857 = vrot.slane %v852, %v856
      %v859 = vmul.f32 %v598, %v857
      %v860 = vmul.f32 %v601, %v857
      %v861 = vmul.f32 %v606, %v857
      %v862 = vmul.f32 %v609, %v857
      %v863 = vmul.f32 %v614, %v857
      %v864 = vmul.f32 %v617, %v857
      %v865 = vmul.f32 %v622, %v857
      %v866 = vmul.f32 %v625, %v857
      %v867 = vmul.f32 %v630, %v857
      %v868 = vmul.f32 %v633, %v857
      %v869 = vmul.f32 %v638, %v857
      %v870 = vmul.f32 %v641, %v857
      %v871 = vmul.f32 %v646, %v857
      %v872 = vmul.f32 %v649, %v857
      %v873 = vmul.f32 %v654, %v857
      %v874 = vmul.f32 %v657, %v857
      %v875 = vmul.f32 %v662, %v857
      %v876 = vmul.f32 %v665, %v857
      %v877 = vmul.f32 %v670, %v857
      %v878 = vmul.f32 %v673, %v857
      %v879 = vmul.f32 %v678, %v857
      %v880 = vmul.f32 %v681, %v857
      %v881 = vmul.f32 %v686, %v857
      %v882 = vmul.f32 %v689, %v857
      %v883 = vmul.f32 %v694, %v857
      %v884 = vmul.f32 %v697, %v857
      %v885 = vmul.f32 %v702, %v857
      %v886 = vmul.f32 %v705, %v857
      %v887 = vmul.f32 %v710, %v857
      %v888 = vmul.f32 %v713, %v857
      %v889 = vmul.f32 %v718, %v857
      %v890 = vmul.f32 %v721, %v857
      %v891 = vmul.f32 %v726, %v857
      %v892 = vmul.f32 %v729, %v857
      %v893 = vmul.f32 %v734, %v857
      %v894 = vmul.f32 %v737, %v857
      %v895 = vmul.f32 %v742, %v857
      %v896 = vmul.f32 %v745, %v857
      %v897 = vmul.f32 %v750, %v857
      %v898 = vmul.f32 %v753, %v857
      %v899 = vmul.f32 %v758, %v857
      %v900 = vmul.f32 %v761, %v857
      %v901 = vmul.f32 %v766, %v857
      %v902 = vmul.f32 %v769, %v857
      %v903 = vmul.f32 %v774, %v857
      %v904 = vmul.f32 %v777, %v857
      %v905 = vmul.f32 %v782, %v857
      %v906 = vmul.f32 %v785, %v857
      %v907 = vmul.f32 %v790, %v857
      %v908 = vmul.f32 %v793, %v857
      %v909 = vmul.f32 %v798, %v857
      %v910 = vmul.f32 %v801, %v857
      %v911 = vmul.f32 %v806, %v857
      %v912 = vmul.f32 %v809, %v857
      %v913 = vmul.f32 %v814, %v857
      %v914 = vmul.f32 %v817, %v857
      %v915 = vmul.f32 %v822, %v857
      %v916 = vmul.f32 %v825, %v857
      %v917 = vmul.f32 %v830, %v857
      %v918 = vmul.f32 %v833, %v857
      %v919 = vmul.f32 %v838, %v857
      %v920 = vmul.f32 %v841, %v857
      %v921 = vmul.f32 %v846, %v857
      %v922 = vmul.f32 %v849, %v857
      %v923 = vld [vmem:[%s3] sm:$0x1]
      %v925 = vlaneseq
      %v926 = vshrl.u32 %v925, 7
      %v927 = vsub.s32 0, %v926
      %v928 = vrot.slane %v923, %v927
      %v930 = vadd.f32 %v859, %v928
      %v931 = vadd.f32 %v860, %v928
      %v932 = vadd.f32 %v861, %v928
      %v933 = vadd.f32 %v862, %v928
      %v934 = vadd.f32 %v863, %v928
      %v935 = vadd.f32 %v864, %v928
      %v936 = vadd.f32 %v865, %v928
      %v937 = vadd.f32 %v866, %v928
      %v938 = vadd.f32 %v867, %v928
      %v939 = vadd.f32 %v868, %v928
      %v940 = vadd.f32 %v869, %v928
      %v941 = vadd.f32 %v870, %v928
      %v942 = vadd.f32 %v871, %v928
      %v943 = vadd.f32 %v872, %v928
      %v944 = vadd.f32 %v873, %v928
      %v945 = vadd.f32 %v874, %v928
      %v946 = vadd.f32 %v875, %v928
      %v947 = vadd.f32 %v876, %v928
      %v948 = vadd.f32 %v877, %v928
      %v949 = vadd.f32 %v878, %v928
      %v950 = vadd.f32 %v879, %v928
      %v951 = vadd.f32 %v880, %v928
      %v952 = vadd.f32 %v881, %v928
      %v953 = vadd.f32 %v882, %v928
      %v954 = vadd.f32 %v883, %v928
      %v955 = vadd.f32 %v884, %v928
      %v956 = vadd.f32 %v885, %v928
      %v957 = vadd.f32 %v886, %v928
      %v958 = vadd.f32 %v887, %v928
      %v959 = vadd.f32 %v888, %v928
      %v960 = vadd.f32 %v889, %v928
      %v961 = vadd.f32 %v890, %v928
      %v962 = vadd.f32 %v891, %v928
      %v963 = vadd.f32 %v892, %v928
      %v964 = vadd.f32 %v893, %v928
      %v965 = vadd.f32 %v894, %v928
      %v966 = vadd.f32 %v895, %v928
      %v967 = vadd.f32 %v896, %v928
      %v968 = vadd.f32 %v897, %v928
      %v969 = vadd.f32 %v898, %v928
      %v970 = vadd.f32 %v899, %v928
      %v971 = vadd.f32 %v900, %v928
      %v972 = vadd.f32 %v901, %v928
      %v973 = vadd.f32 %v902, %v928
      %v974 = vadd.f32 %v903, %v928
      %v975 = vadd.f32 %v904, %v928
      %v976 = vadd.f32 %v905, %v928
      %v977 = vadd.f32 %v906, %v928
      %v978 = vadd.f32 %v907, %v928
      %v979 = vadd.f32 %v908, %v928
      %v980 = vadd.f32 %v909, %v928
      %v981 = vadd.f32 %v910, %v928
      %v982 = vadd.f32 %v911, %v928
      %v983 = vadd.f32 %v912, %v928
      %v984 = vadd.f32 %v913, %v928
      %v985 = vadd.f32 %v914, %v928
      %v986 = vadd.f32 %v915, %v928
      %v987 = vadd.f32 %v916, %v928
      %v988 = vadd.f32 %v917, %v928
      %v989 = vadd.f32 %v918, %v928
      %v990 = vadd.f32 %v919, %v928
      %v991 = vadd.f32 %v920, %v928
      %v992 = vadd.f32 %v921, %v928
      %v993 = vadd.f32 %v922, %v928
      %v994 = vpack.c.bf16 %v931, %v930
      %v995 = vpack.c.bf16 %v933, %v932
      %v996 = vpack.c.bf16 %v935, %v934
      %v997 = vpack.c.bf16 %v937, %v936
      %v998 = vpack.c.bf16 %v939, %v938
      %v999 = vpack.c.bf16 %v941, %v940
      %v1000 = vpack.c.bf16 %v943, %v942
      %v1001 = vpack.c.bf16 %v945, %v944
      %v1002 = vpack.c.bf16 %v947, %v946
      %v1003 = vpack.c.bf16 %v949, %v948
      %v1004 = vpack.c.bf16 %v951, %v950
      %v1005 = vpack.c.bf16 %v953, %v952
      %v1006 = vpack.c.bf16 %v955, %v954
      %v1007 = vpack.c.bf16 %v957, %v956
      %v1008 = vpack.c.bf16 %v959, %v958
      %v1009 = vpack.c.bf16 %v961, %v960
      %v1010 = vpack.c.bf16 %v963, %v962
      %v1011 = vpack.c.bf16 %v965, %v964
      %v1012 = vpack.c.bf16 %v967, %v966
      %v1013 = vpack.c.bf16 %v969, %v968
      %v1014 = vpack.c.bf16 %v971, %v970
      %v1015 = vpack.c.bf16 %v973, %v972
      %v1016 = vpack.c.bf16 %v975, %v974
      %v1017 = vpack.c.bf16 %v977, %v976
      %v1018 = vpack.c.bf16 %v979, %v978
      %v1019 = vpack.c.bf16 %v981, %v980
      %v1020 = vpack.c.bf16 %v983, %v982
      %v1021 = vpack.c.bf16 %v985, %v984
      %v1022 = vpack.c.bf16 %v987, %v986
      %v1023 = vpack.c.bf16 %v989, %v988
      %v1024 = vpack.c.bf16 %v991, %v990
      %v1025 = vpack.c.bf16 %v993, %v992
      %v1058 = vunpack.c.l.b16 %v994
      %v1059 = vunpack.c.h.b16 %v994
      %v1060 = vunpack.c.l.b16 %v995
      %v1061 = vunpack.c.h.b16 %v995
      %v1062 = vunpack.c.l.b16 %v996
      %v1063 = vunpack.c.h.b16 %v996
      %v1064 = vunpack.c.l.b16 %v997
      %v1065 = vunpack.c.h.b16 %v997
      %v1066 = vunpack.c.l.b16 %v998
      %v1067 = vunpack.c.h.b16 %v998
      %v1068 = vunpack.c.l.b16 %v999
      %v1069 = vunpack.c.h.b16 %v999
      %v1070 = vunpack.c.l.b16 %v1000
      %v1071 = vunpack.c.h.b16 %v1000
      %v1072 = vunpack.c.l.b16 %v1001
      %v1073 = vunpack.c.h.b16 %v1001
      %v1074 = vunpack.c.l.b16 %v1002
      %v1075 = vunpack.c.h.b16 %v1002
      %v1076 = vunpack.c.l.b16 %v1003
      %v1077 = vunpack.c.h.b16 %v1003
      %v1078 = vunpack.c.l.b16 %v1004
      %v1079 = vunpack.c.h.b16 %v1004
      %v1080 = vunpack.c.l.b16 %v1005
      %v1081 = vunpack.c.h.b16 %v1005
      %v1082 = vunpack.c.l.b16 %v1006
      %v1083 = vunpack.c.h.b16 %v1006
      %v1084 = vunpack.c.l.b16 %v1007
      %v1085 = vunpack.c.h.b16 %v1007
      %v1086 = vunpack.c.l.b16 %v1008
      %v1087 = vunpack.c.h.b16 %v1008
      %v1088 = vunpack.c.l.b16 %v1009
      %v1089 = vunpack.c.h.b16 %v1009
      %v1090 = vunpack.c.l.b16 %v1010
      %v1091 = vunpack.c.h.b16 %v1010
      %v1092 = vunpack.c.l.b16 %v1011
      %v1093 = vunpack.c.h.b16 %v1011
      %v1094 = vunpack.c.l.b16 %v1012
      %v1095 = vunpack.c.h.b16 %v1012
      %v1096 = vunpack.c.l.b16 %v1013
      %v1097 = vunpack.c.h.b16 %v1013
      %v1098 = vunpack.c.l.b16 %v1014
      %v1099 = vunpack.c.h.b16 %v1014
      %v1100 = vunpack.c.l.b16 %v1015
      %v1101 = vunpack.c.h.b16 %v1015
      %v1102 = vunpack.c.l.b16 %v1016
      %v1103 = vunpack.c.h.b16 %v1016
      %v1104 = vunpack.c.l.b16 %v1017
      %v1105 = vunpack.c.h.b16 %v1017
      %v1106 = vunpack.c.l.b16 %v1018
      %v1107 = vunpack.c.h.b16 %v1018
      %v1108 = vunpack.c.l.b16 %v1019
      %v1109 = vunpack.c.h.b16 %v1019
      %v1110 = vunpack.c.l.b16 %v1020
      %v1111 = vunpack.c.h.b16 %v1020
      %v1112 = vunpack.c.l.b16 %v1021
      %v1113 = vunpack.c.h.b16 %v1021
      %v1114 = vunpack.c.l.b16 %v1022
      %v1115 = vunpack.c.h.b16 %v1022
      %v1116 = vunpack.c.l.b16 %v1023
      %v1117 = vunpack.c.h.b16 %v1023
      %v1118 = vunpack.c.l.b16 %v1024
      %v1119 = vunpack.c.h.b16 %v1024
      %v1120 = vunpack.c.l.b16 %v1025
      %v1121 = vunpack.c.h.b16 %v1025
      %v1122 = vpack.c.b16 %v1058, %v1058
      %v1123 = vpack.c.b16 %v1059, %v1059
      %v1124 = vpack.c.b16 %v1060, %v1060
      %v1125 = vpack.c.b16 %v1061, %v1061
      %v1126 = vpack.c.b16 %v1062, %v1062
      %v1127 = vpack.c.b16 %v1063, %v1063
      %v1128 = vpack.c.b16 %v1064, %v1064
      %v1129 = vpack.c.b16 %v1065, %v1065
      %v1130 = vpack.c.b16 %v1066, %v1066
      %v1131 = vpack.c.b16 %v1067, %v1067
      %v1132 = vpack.c.b16 %v1068, %v1068
      %v1133 = vpack.c.b16 %v1069, %v1069
      %v1134 = vpack.c.b16 %v1070, %v1070
      %v1135 = vpack.c.b16 %v1071, %v1071
      %v1136 = vpack.c.b16 %v1072, %v1072
      %v1137 = vpack.c.b16 %v1073, %v1073
      %v1138 = vpack.c.b16 %v1074, %v1074
      %v1139 = vpack.c.b16 %v1075, %v1075
      %v1140 = vpack.c.b16 %v1076, %v1076
      %v1141 = vpack.c.b16 %v1077, %v1077
      %v1142 = vpack.c.b16 %v1078, %v1078
      %v1143 = vpack.c.b16 %v1079, %v1079
      %v1144 = vpack.c.b16 %v1080, %v1080
      %v1145 = vpack.c.b16 %v1081, %v1081
      %v1146 = vpack.c.b16 %v1082, %v1082
      %v1147 = vpack.c.b16 %v1083, %v1083
      %v1148 = vpack.c.b16 %v1084, %v1084
      %v1149 = vpack.c.b16 %v1085, %v1085
      %v1150 = vpack.c.b16 %v1086, %v1086
      %v1151 = vpack.c.b16 %v1087, %v1087
      %v1152 = vpack.c.b16 %v1088, %v1088
      %v1153 = vpack.c.b16 %v1089, %v1089
      %v1154 = vpack.c.b16 %v1090, %v1090
      %v1155 = vpack.c.b16 %v1091, %v1091
      %v1156 = vpack.c.b16 %v1092, %v1092
      %v1157 = vpack.c.b16 %v1093, %v1093
      %v1158 = vpack.c.b16 %v1094, %v1094
      %v1159 = vpack.c.b16 %v1095, %v1095
      %v1160 = vpack.c.b16 %v1096, %v1096
      %v1161 = vpack.c.b16 %v1097, %v1097
      %v1162 = vpack.c.b16 %v1098, %v1098
      %v1163 = vpack.c.b16 %v1099, %v1099
      %v1164 = vpack.c.b16 %v1100, %v1100
      %v1165 = vpack.c.b16 %v1101, %v1101
      %v1166 = vpack.c.b16 %v1102, %v1102
      %v1167 = vpack.c.b16 %v1103, %v1103
      %v1168 = vpack.c.b16 %v1104, %v1104
      %v1169 = vpack.c.b16 %v1105, %v1105
      %v1170 = vpack.c.b16 %v1106, %v1106
      %v1171 = vpack.c.b16 %v1107, %v1107
      %v1172 = vpack.c.b16 %v1108, %v1108
      %v1173 = vpack.c.b16 %v1109, %v1109
      %v1174 = vpack.c.b16 %v1110, %v1110
      %v1175 = vpack.c.b16 %v1111, %v1111
      %v1176 = vpack.c.b16 %v1112, %v1112
      %v1177 = vpack.c.b16 %v1113, %v1113
      %v1178 = vpack.c.b16 %v1114, %v1114
      %v1179 = vpack.c.b16 %v1115, %v1115
      %v1180 = vpack.c.b16 %v1116, %v1116
      %v1181 = vpack.c.b16 %v1117, %v1117
      %v1182 = vpack.c.b16 %v1118, %v1118
      %v1183 = vpack.c.b16 %v1119, %v1119
      %v1184 = vpack.c.b16 %v1120, %v1120
      %v1185 = vpack.c.b16 %v1121, %v1121
      %1250 = vst [vmem:[%s199] sm:$0xf] %v1122
      %1251 = vst [vmem:[%s199 + $0x4] sm:$0xf] %v1123
      %1252 = vst [vmem:[%s199 + $0x8] sm:$0xf] %v1124
      %1253 = vst [vmem:[%s199 + $0xc] sm:$0xf] %v1125
      %1254 = vst [vmem:[%s199 + $0x10] sm:$0xf] %v1126
      %1255 = vst [vmem:[%s199 + $0x14] sm:$0xf] %v1127
      %1256 = vst [vmem:[%s199 + $0x18] sm:$0xf] %v1128
      %1257 = vst [vmem:[%s199 + $0x1c] sm:$0xf] %v1129
      %1258 = vst [vmem:[%s199 + $0x20] sm:$0xf] %v1130
      %1259 = vst [vmem:[%s199 + $0x24] sm:$0xf] %v1131
      %1260 = vst [vmem:[%s199 + $0x28] sm:$0xf] %v1132
      %1261 = vst [vmem:[%s199 + $0x2c] sm:$0xf] %v1133
      %1262 = vst [vmem:[%s199 + $0x30] sm:$0xf] %v1134
      %1263 = vst [vmem:[%s199 + $0x34] sm:$0xf] %v1135
      %1264 = vst [vmem:[%s199 + $0x38] sm:$0xf] %v1136
      %1265 = vst [vmem:[%s199 + $0x3c] sm:$0xf] %v1137
      %1266 = vst [vmem:[%s199 + $0x40] sm:$0xf] %v1138
      %1267 = vst [vmem:[%s199 + $0x44] sm:$0xf] %v1139
      %1268 = vst [vmem:[%s199 + $0x48] sm:$0xf] %v1140
      %1269 = vst [vmem:[%s199 + $0x4c] sm:$0xf] %v1141
      %1270 = vst [vmem:[%s199 + $0x50] sm:$0xf] %v1142
      %1271 = vst [vmem:[%s199 + $0x54] sm:$0xf] %v1143
      %1272 = vst [vmem:[%s199 + $0x58] sm:$0xf] %v1144
      %1273 = vst [vmem:[%s199 + $0x5c] sm:$0xf] %v1145
      %1274 = vst [vmem:[%s199 + $0x60] sm:$0xf] %v1146
      %1275 = vst [vmem:[%s199 + $0x64] sm:$0xf] %v1147
      %1276 = vst [vmem:[%s199 + $0x68] sm:$0xf] %v1148
      %1277 = vst [vmem:[%s199 + $0x6c] sm:$0xf] %v1149
      %1278 = vst [vmem:[%s199 + $0x70] sm:$0xf] %v1150
      %1279 = vst [vmem:[%s199 + $0x74] sm:$0xf] %v1151
      %1280 = vst [vmem:[%s199 + $0x78] sm:$0xf] %v1152
      %1281 = vst [vmem:[%s199 + $0x7c] sm:$0xf] %v1153
      %1282 = vst [vmem:[%s199 + $0x80] sm:$0xf] %v1154
      %1283 = vst [vmem:[%s199 + $0x84] sm:$0xf] %v1155
      %1284 = vst [vmem:[%s199 + $0x88] sm:$0xf] %v1156
      %1285 = vst [vmem:[%s199 + $0x8c] sm:$0xf] %v1157
      %1286 = vst [vmem:[%s199 + $0x90] sm:$0xf] %v1158
      %1287 = vst [vmem:[%s199 + $0x94] sm:$0xf] %v1159
      %1288 = vst [vmem:[%s199 + $0x98] sm:$0xf] %v1160
      %1289 = vst [vmem:[%s199 + $0x9c] sm:$0xf] %v1161
      %1290 = vst [vmem:[%s199 + $0xa0] sm:$0xf] %v1162
      %1291 = vst [vmem:[%s199 + $0xa4] sm:$0xf] %v1163
      %1292 = vst [vmem:[%s199 + $0xa8] sm:$0xf] %v1164
      %1293 = vst [vmem:[%s199 + $0xac] sm:$0xf] %v1165
      %1294 = vst [vmem:[%s199 + $0xb0] sm:$0xf] %v1166
      %1295 = vst [vmem:[%s199 + $0xb4] sm:$0xf] %v1167
      %1296 = vst [vmem:[%s199 + $0xb8] sm:$0xf] %v1168
      %1297 = vst [vmem:[%s199 + $0xbc] sm:$0xf] %v1169
      %1298 = vst [vmem:[%s199 + $0xc0] sm:$0xf] %v1170
      %1299 = vst [vmem:[%s199 + $0xc4] sm:$0xf] %v1171
      %1300 = vst [vmem:[%s199 + $0xc8] sm:$0xf] %v1172
      %1301 = vst [vmem:[%s199 + $0xcc] sm:$0xf] %v1173
      %1302 = vst [vmem:[%s199 + $0xd0] sm:$0xf] %v1174
      %1303 = vst [vmem:[%s199 + $0xd4] sm:$0xf] %v1175
      %1304 = vst [vmem:[%s199 + $0xd8] sm:$0xf] %v1176
      %1305 = vst [vmem:[%s199 + $0xdc] sm:$0xf] %v1177
      %1306 = vst [vmem:[%s199 + $0xe0] sm:$0xf] %v1178
      %1307 = vst [vmem:[%s199 + $0xe4] sm:$0xf] %v1179
      %1308 = vst [vmem:[%s199 + $0xe8] sm:$0xf] %v1180
      %1309 = vst [vmem:[%s199 + $0xec] sm:$0xf] %v1181
      %1310 = vst [vmem:[%s199 + $0xf0] sm:$0xf] %v1182
      %1311 = vst [vmem:[%s199 + $0xf4] sm:$0xf] %v1183
      %1312 = vst [vmem:[%s199 + $0xf8] sm:$0xf] %v1184
      %1313 = vst [vmem:[%s199 + $0xfc] sm:$0xf] %v1185
      %s1314 = smul.u32 64, %s15
      %p1315 = scmp.lt.s32.totalorder %s1314, 255
      %s1316 = scalar_select %p1315, %s1314, 255
      %s1317 = smul.addr %s1316, 4
      %s1318 = scalar_lea.vmem %s4, %s1317
      // Predicated region
      $region37: #{unet_seq_forward.20} parent=35 // pred_check
        %p1319 = pneg %p122
      $region38: #{unet_seq_forward.20} parent=35 // pred_check_branch
        %1321 = sbr.rel (%p1319) target = $region40
      $region39: #{unet_seq_forward.20} parent=35 // pred_region
        %s1322 = smul.u32 64, %s15
      $region40: #{unet_seq_forward.20} parent=35 // pred_fallthru
        _
    $region36: #{unet_seq_forward.20} parent=5 // pred_fallthru
      _
    %p1323 = scmp.le.s32.totalorder 2, %s10
    // Predicated region
    $region41: #{unet_seq_forward.20} parent=5 // pred_check
      %p1324 = pneg %p1323
    $region42: #{unet_seq_forward.20} parent=5 // pred_check_branch
      %1326 = sbr.rel (%p1324) target = $region44
    $region43: #{unet_seq_forward.20} parent=5 // pred_region
      %s1327 = ssub.s32 %s10, 2
      // Predicated region
      $region45: #{unet_seq_forward.20} parent=43 // pred_check
        %p1328 = pneg %p128
      $region46: #{unet_seq_forward.20} parent=43 // pred_check_branch
        %1330 = sbr.rel (%p1328) target = $region48
      $region47: #{unet_seq_forward.20} parent=43 // pred_region
        %s1331 = smul.u32 64, %s16
        %p1332 = scmp.lt.s32.totalorder %s1331, 255
        %s1333 = scalar_select %p1332, %s1331, 255
        %s1334 = smul.addr %s1333, 4
        %s1335 = scalar_lea.vmem %s4, %s1334
      $region48: #{unet_seq_forward.20} parent=43 // pred_fallthru
        _
    $region44: #{unet_seq_forward.20} parent=5 // pred_fallthru
      _
  $region6: #{unet_seq_forward.20} parent=0 // loop_footer
    %s14 = sadd.s32 1, %s10
  $region7: #{unet_seq_forward.20} parent=0 // loop_footer_branch
    %9 = sbr.rel target = $region3
  $region8: #{unet_seq_forward.20} parent=0 // loop_exit
    _

</llo_original>
